<compile_context>
chip_gen: v5e
topology: v5e:2x2
jax: 0.10.0
libtpu: 0.0.40
codegen_flags: <defaults>
</compile_context>

<pallas_src>
import math

import jax
import jax.numpy as jnp
from jax.experimental import pallas as pl
from jax.experimental.pallas import tpu as pltpu

E = 512     # embed dim (fixed by module)
H1 = 256
H2 = 128
OUT = 1     # output_size
EPS = 1e-5  # LayerNorm eps (PyTorch default)
NEG_INF = -1e30


def _ln_normalize(x):
    # f32 statistics; biased variance, eps=1e-5 (PyTorch LayerNorm). Affine terms are folded
    # into the adjacent matmuls at weight-prep time.
    mu = jnp.mean(x, axis=-1, keepdims=True)
    var = jnp.mean((x - mu) ** 2, axis=-1, keepdims=True)
    return (x - mu) * jax.lax.rsqrt(var + EPS)


def _gelu_exact(x):
    # nn.GELU() default = exact erf-based GELU
    return 0.5 * x * (1.0 + jax.lax.erf(x * (1.0 / math.sqrt(2.0))))


def disc_inst_kernel(q_ref, k_ref, v_ref,
                     wq_ref, wk_ref, wv_ref,
                     bq_ref, bk_ref, bv_ref,
                     wo_ref, bo_ref,
                     w1_ref, b1_ref,
                     w2_ref, b2_ref,
                     w3row_ref, b3_ref,
                     o_ref):
    L, B, _ = q_ref.shape      # (seq, batch_tile, embed); B is a power of two, multiple of 8
    R = L * B                  # rows fed to every weight matmul; L-major: row r <-> (r // B, r % B)

    # Dropout(p=0.3) on q and v -> identity in eval mode.
    # TODO(synk): training-mode stochastic dropout not implemented (would use pltpu.prng_*).

    # f32 inputs arrive in their native (L, N, E) layout; cast to bf16 here.  B % 8 == 0 keeps
    # the (L, B, E) -> (R, E) collapse layout-preserving.
    qb = q_ref[...].reshape(R, E).astype(jnp.bfloat16)
    kb = k_ref[...].reshape(R, E).astype(jnp.bfloat16)
    vb = v_ref[...].reshape(R, E).astype(jnp.bfloat16)

    # --- MultiheadAttention in_proj (num_heads=1); 1/sqrt(E) scale pre-folded into wq/bq ---
    qp = jnp.dot(qb, wq_ref[...], preferred_element_type=jnp.float32) + bq_ref[...]
    kp = jnp.dot(kb, wk_ref[...], preferred_element_type=jnp.float32) + bk_ref[...]
    vp = jnp.dot(vb, wv_ref[...], preferred_element_type=jnp.float32) + bv_ref[...]

    # --- attention: one block-diagonal-masked (R, R) score matmul (bf16 operands, f32 acc)
    #     instead of B tiny per-batch matmuls; softmax statistics stay in f32. ---
    s = jnp.einsum('qe,ke->qk', qp.astype(jnp.bfloat16), kp.astype(jnp.bfloat16),
                   preferred_element_type=jnp.float32)                       # (R, R)
    ri = jax.lax.broadcasted_iota(jnp.int32, (R, R), 0)
    ci = jax.lax.broadcasted_iota(jnp.int32, (R, R), 1)
    same_batch = (ri & (B - 1)) == (ci & (B - 1))   # rows are L-major with stride B (B = 2^k)
    s = jnp.where(same_batch, s, NEG_INF)

    m = jnp.max(s, axis=-1, keepdims=True)
    ex = jnp.exp(s - m)
    denom = jnp.sum(ex, axis=-1, keepdims=True)
    p = ex * pl.reciprocal(denom, approx=True)      # EUP slot; ~last-bit vs. exact division
    attn = jnp.dot(p.astype(jnp.bfloat16), vp.astype(jnp.bfloat16),
                   preferred_element_type=jnp.float32)                       # (R, E)

    a = jnp.dot(attn.astype(jnp.bfloat16), wo_ref[...],
                preferred_element_type=jnp.float32) + bo_ref[...]            # out_proj

    # --- linf head; LayerNorm affines folded into w1/b1 and w3row/b3 in the wrapper ---
    x = _ln_normalize(a)
    x = jnp.dot(x.astype(jnp.bfloat16), w1_ref[...],
                preferred_element_type=jnp.float32) + b1_ref[...]
    x = _gelu_exact(x)
    # Dropout(0.3) -> identity (eval)
    x = jnp.dot(x.astype(jnp.bfloat16), w2_ref[...],
                preferred_element_type=jnp.float32) + b2_ref[...]
    # Dropout(0.3) -> identity (eval)
    x = _ln_normalize(x)

    # Final Linear(128, 1) as a VPU/XLU reduction; result lands directly in (L, B) layout.
    y = jnp.sum(x.reshape(L, B, H2) * w3row_ref[...], axis=-1) + b3_ref[...]  # (L, B)
    o_ref[...] = y


def init_params(key):
    """Deterministic synthetic parameters (shapes match the PyTorch module).

    NOTE: weights are stored pre-transposed as (in, out).  Real PyTorch weights
    (in_proj_weight of shape (3E, E), nn.Linear weights of shape (out, in)) must
    be split / transposed into this layout before use.
    """
    ks = jax.random.split(key, 8)

    def w(k, shape, std=0.02):
        return std * jax.random.normal(k, shape, dtype=jnp.float32)

    params = dict(
        # MultiheadAttention in_proj (stored already transposed: (in, out))
        wq=w(ks[0], (E, E)), wk=w(ks[1], (E, E)), wv=w(ks[2], (E, E)),
        bq=jnp.zeros((1, E), jnp.float32),
        bk=jnp.zeros((1, E), jnp.float32),
        bv=jnp.zeros((1, E), jnp.float32),
        # out_proj
        wo=w(ks[3], (E, E)), bo=jnp.zeros((1, E), jnp.float32),
        # linf
        ln1w=jnp.ones((1, E), jnp.float32), ln1b=jnp.zeros((1, E), jnp.float32),
        w1=w(ks[4], (E, H1)), b1=jnp.zeros((1, H1), jnp.float32),
        w2=w(ks[5], (H1, H2)), b2=jnp.zeros((1, H2), jnp.float32),
        ln2w=jnp.ones((1, H2), jnp.float32), ln2b=jnp.zeros((1, H2), jnp.float32),
        w3=w(ks[6], (H2, OUT)), b3=jnp.zeros((1, OUT), jnp.float32),
    )
    return params


def _tensorcores_per_chip():
    # v7x has 2 TensorCores per chip; older generations used here have 1.
    try:
        kind = jax.devices()[0].device_kind.lower()
    except Exception:
        return 1
    return 2 if "7" in kind else 1


def discriminator_inst_forward(q, k, v, params, flat=True, rows_target=256):
    """q, k, v: (L, N, 512) float32 — PyTorch MHA layout (seq, batch, embed)."""
    L, N, emb = q.shape
    assert emb == E

    # ---- batch-tile selection ----
    # ~rows_target MXU rows per grid step.  b_tile is a power of two and a multiple of 8 so
    # (a) the input block satisfies the (8,128) sublane constraint, (b) the in-kernel
    # (L,B,E)->(R,E) collapse is layout-preserving, (c) the block-diagonal mask uses a cheap
    # bitwise AND.  (rows_target=512 amortizes better on v6e for large N; 256 is safe on all.)
    bt = max(8, rows_target // max(L, 1))
    b_tile = max(8, 1 << (bt.bit_length() - 1))
    while b_tile > 8 and b_tile >= 2 * N:          # don't pad tiny batches up to huge tiles
        b_tile //= 2
    n_pad = ((N + b_tile - 1) // b_tile) * b_tile
    grid = n_pad // b_tile

    # v7x: if the whole batch fits in one step, split it so both TensorCores get work.
    if grid == 1 and b_tile >= 16 and _tensorcores_per_chip() >= 2:
        b_tile //= 2
        n_pad = ((N + b_tile - 1) // b_tile) * b_tile
        grid = n_pad // b_tile

    R = b_tile * L
    # TODO(synk): very long sequences (L in the hundreds) force b_tile=8 -> R=8L and a large
    # (R,R) score matrix; a sequence-tiled / per-batch attention path would be needed there.

    # Inputs stay in (L, N, E) f32 layout (no transpose/cast pass); zero-pad the batch axis
    # only when N is not a multiple of b_tile (padded columns are masked out of attention by
    # the block-diagonal mask and discarded from the output).
    q = q.astype(jnp.float32)
    k = k.astype(jnp.float32)
    v = v.astype(jnp.float32)
    if n_pad != N:
        pad = ((0, 0), (0, n_pad - N), (0, 0))
        q, k, v = jnp.pad(q, pad), jnp.pad(k, pad), jnp.pad(v, pad)

    # ---- weights: fold 1/sqrt(E) into wq/bq, fold both LayerNorm affines into the adjacent
    #      matmuls (exact algebra), cast matmul weights to bf16 once. ----
    scale = 1.0 / math.sqrt(E)                     # head_dim == E for num_heads == 1
    f32 = lambda a: a.astype(jnp.float32)
    bf16 = lambda a: a.astype(jnp.bfloat16)

    ln1w, ln1b = f32(params["ln1w"]), f32(params["ln1b"])        # (1, E)
    ln2w, ln2b = f32(params["ln2w"]), f32(params["ln2b"])        # (1, H2)
    w1, b1 = f32(params["w1"]), f32(params["b1"])                # (E, H1), (1, H1)
    w3row = f32(params["w3"]).reshape(1, H2)                     # (1, H2)
    b3 = f32(params["b3"]).reshape(1, 1)

    w1_f = ln1w.reshape(E, 1) * w1                               # diag(ln1w) @ w1
    b1_f = b1 + ln1b @ w1                                        # ln1b @ w1 + b1
    w3_f = ln2w * w3row                                          # elementwise fold
    b3_f = b3 + jnp.sum(ln2b * w3row)                            # scalar shift

    weights = [
        bf16(params["wq"] * scale), bf16(params["wk"]), bf16(params["wv"]),
        f32(params["bq"] * scale), f32(params["bk"]), f32(params["bv"]),
        bf16(params["wo"]), f32(params["bo"]),
        bf16(w1_f), b1_f,
        bf16(params["w2"]), f32(params["b2"]),
        w3_f, b3_f,
    ]

    act_spec = pl.BlockSpec((L, b_tile, E), lambda i: (0, i, 0))

    def const_spec(arr):
        nd = arr.ndim
        return pl.BlockSpec(arr.shape, lambda i, _nd=nd: (0,) * _nd)

    # Advisory cost estimate so XLA schedules neighbouring ops around the custom call.
    w_bytes = sum(int(w.size) * w.dtype.itemsize for w in weights)
    flops = grid * (2 * R * (4 * E * E + E * H1 + H1 * H2) + 4 * R * R * E)
    trans = grid * (R * R + R * H1)
    bytes_acc = 3 * L * n_pad * E * 4 + w_bytes + L * n_pad * 4
    cost = pl.CostEstimate(flops=flops, transcendentals=trans, bytes_accessed=bytes_acc)

    out3 = pl.pallas_call(
        disc_inst_kernel,
        out_shape=jax.ShapeDtypeStruct((grid, L, b_tile), jnp.float32),
        grid=(grid,),
        in_specs=[act_spec] * 3 + [const_spec(w) for w in weights],
        out_specs=pl.BlockSpec((None, L, b_tile), lambda i: (i, 0, 0)),
        compiler_params=pltpu.CompilerParams(
            dimension_semantics=("parallel",),         # grid steps are independent
            vmem_limit_bytes=32 * 1024 * 1024),        # headroom over v5e's 16 MiB default
        cost_estimate=cost,
    )(q, k, v, *weights)

    # (grid, L, b_tile) -> (L, N): tiny reshuffle on the output only; matches torch.flatten.
    out_ln = jnp.transpose(out3, (1, 0, 2)).reshape(L, n_pad)[:, :N]
    if flat:
        return out_ln.reshape(-1)
    return out_ln[..., None]                           # (L, N, 1)


if __name__ == "__main__":
    key = jax.random.PRNGKey(0)
    kq, kk, kv, kp = jax.random.split(key, 4)

    L, N = 8, 2   # seq len, batch; embed dim is fixed at 512 by the module
    q = jax.random.normal(kq, (L, N, E), dtype=jnp.float32)
    k = jax.random.normal(kk, (L, N, E), dtype=jnp.float32)
    v = jax.random.normal(kv, (L, N, E), dtype=jnp.float32)

    params = init_params(kp)

    out = discriminator_inst_forward(q, k, v, params, flat=True)
    out = jax.block_until_ready(out)
    assert out.shape == (L * N * OUT,)
    print("KERNEL_OK")
</pallas_src>

<mosaic_0001>
module attributes {stable_mosaic.version = 11 : i64} {
  func.func @disc_inst_kernel(%arg0: i32, %arg1: memref<8x8x512xf32, #tpu.memory_space<vmem>>, %arg2: memref<8x8x512xf32, #tpu.memory_space<vmem>>, %arg3: memref<8x8x512xf32, #tpu.memory_space<vmem>>, %arg4: memref<512x512xbf16, #tpu.memory_space<vmem>>, %arg5: memref<512x512xbf16, #tpu.memory_space<vmem>>, %arg6: memref<512x512xbf16, #tpu.memory_space<vmem>>, %arg7: memref<1x512xf32, #tpu.memory_space<vmem>>, %arg8: memref<1x512xf32, #tpu.memory_space<vmem>>, %arg9: memref<1x512xf32, #tpu.memory_space<vmem>>, %arg10: memref<512x512xbf16, #tpu.memory_space<vmem>>, %arg11: memref<1x512xf32, #tpu.memory_space<vmem>>, %arg12: memref<512x256xbf16, #tpu.memory_space<vmem>>, %arg13: memref<1x256xf32, #tpu.memory_space<vmem>>, %arg14: memref<256x128xbf16, #tpu.memory_space<vmem>>, %arg15: memref<1x128xf32, #tpu.memory_space<vmem>>, %arg16: memref<1x128xf32, #tpu.memory_space<vmem>>, %arg17: memref<1x1xf32, #tpu.memory_space<vmem>>, %arg18: memref<1x8x8xf32, #tpu.memory_space<vmem>>) attributes {dimension_semantics = [#tpu.dimension_semantics<parallel>], iteration_bounds = array<i64: 1>, scalar_prefetch = 0 : i64, scratch_operands = 0 : i64, tpu.core_type = #tpu.core_type<tc>, window_params = [{transform_indices = @transform_0, window_bounds = array<i64: 8, 8, 512>}, {transform_indices = @transform_1, window_bounds = array<i64: 8, 8, 512>}, {transform_indices = @transform_2, window_bounds = array<i64: 8, 8, 512>}, {pipeline_mode = #tpu.pipeline_mode<synchronous>, transform_indices = @transform_3, window_bounds = array<i64: 512, 512>}, {pipeline_mode = #tpu.pipeline_mode<synchronous>, transform_indices = @transform_4, window_bounds = array<i64: 512, 512>}, {pipeline_mode = #tpu.pipeline_mode<synchronous>, transform_indices = @transform_5, window_bounds = array<i64: 512, 512>}, {pipeline_mode = #tpu.pipeline_mode<synchronous>, transform_indices = @transform_6, window_bounds = array<i64: 1, 512>}, {pipeline_mode = #tpu.pipeline_mode<synchronous>, transform_indices = @transform_7, window_bounds = array<i64: 1, 512>}, {pipeline_mode = #tpu.pipeline_mode<synchronous>, transform_indices = @transform_8, window_bounds = array<i64: 1, 512>}, {pipeline_mode = #tpu.pipeline_mode<synchronous>, transform_indices = @transform_9, window_bounds = array<i64: 512, 512>}, {pipeline_mode = #tpu.pipeline_mode<synchronous>, transform_indices = @transform_10, window_bounds = array<i64: 1, 512>}, {pipeline_mode = #tpu.pipeline_mode<synchronous>, transform_indices = @transform_11, window_bounds = array<i64: 512, 256>}, {pipeline_mode = #tpu.pipeline_mode<synchronous>, transform_indices = @transform_12, window_bounds = array<i64: 1, 256>}, {pipeline_mode = #tpu.pipeline_mode<synchronous>, transform_indices = @transform_13, window_bounds = array<i64: 256, 128>}, {pipeline_mode = #tpu.pipeline_mode<synchronous>, transform_indices = @transform_14, window_bounds = array<i64: 1, 128>}, {pipeline_mode = #tpu.pipeline_mode<synchronous>, transform_indices = @transform_15, window_bounds = array<i64: 1, 128>}, {pipeline_mode = #tpu.pipeline_mode<synchronous>, transform_indices = @transform_16, window_bounds = array<i64: 1, 1>}, {transform_indices = @transform_17, window_bounds = array<i64: 1, 8, 8>}]} {
    %c0 = arith.constant 0 : index
    %c0_0 = arith.constant 0 : index
    %c0_1 = arith.constant 0 : index
    %0 = vector.load %arg1[%c0, %c0_0, %c0_1] : memref<8x8x512xf32, #tpu.memory_space<vmem>>, vector<8x8x512xf32>
    %1 = vector.shape_cast %0 : vector<8x8x512xf32> to vector<64x512xf32>
    %2 = arith.truncf %1 : vector<64x512xf32> to vector<64x512xbf16>
    %c0_2 = arith.constant 0 : index
    %c0_3 = arith.constant 0 : index
    %c0_4 = arith.constant 0 : index
    %3 = vector.load %arg2[%c0_2, %c0_3, %c0_4] : memref<8x8x512xf32, #tpu.memory_space<vmem>>, vector<8x8x512xf32>
    %4 = vector.shape_cast %3 : vector<8x8x512xf32> to vector<64x512xf32>
    %5 = arith.truncf %4 : vector<64x512xf32> to vector<64x512xbf16>
    %c0_5 = arith.constant 0 : index
    %c0_6 = arith.constant 0 : index
    %c0_7 = arith.constant 0 : index
    %6 = vector.load %arg3[%c0_5, %c0_6, %c0_7] : memref<8x8x512xf32, #tpu.memory_space<vmem>>, vector<8x8x512xf32>
    %7 = vector.shape_cast %6 : vector<8x8x512xf32> to vector<64x512xf32>
    %8 = arith.truncf %7 : vector<64x512xf32> to vector<64x512xbf16>
    %c0_8 = arith.constant 0 : index
    %c0_9 = arith.constant 0 : index
    %9 = vector.load %arg4[%c0_8, %c0_9] : memref<512x512xbf16, #tpu.memory_space<vmem>>, vector<512x512xbf16>
    %cst = arith.constant dense<0.000000e+00> : vector<64x512xf32>
    %10 = tpu.matmul %2, %9, %cst {dimension_numbers = #tpu.dot_dimension_numbers<[1], [0], [0], [1], [0, 0, 1, 1], [], []>} : vector<64x512xbf16>, vector<512x512xbf16>, vector<64x512xf32> -> vector<64x512xf32>
    %c0_10 = arith.constant 0 : index
    %c0_11 = arith.constant 0 : index
    %11 = vector.load %arg7[%c0_10, %c0_11] : memref<1x512xf32, #tpu.memory_space<vmem>>, vector<1x512xf32>
    %12 = vector.broadcast %11 : vector<1x512xf32> to vector<64x512xf32>
    %13 = arith.addf %10, %12 : vector<64x512xf32>
    %c0_12 = arith.constant 0 : index
    %c0_13 = arith.constant 0 : index
    %14 = vector.load %arg5[%c0_12, %c0_13] : memref<512x512xbf16, #tpu.memory_space<vmem>>, vector<512x512xbf16>
    %cst_14 = arith.constant dense<0.000000e+00> : vector<64x512xf32>
    %15 = tpu.matmul %5, %14, %cst_14 {dimension_numbers = #tpu.dot_dimension_numbers<[1], [0], [0], [1], [0, 0, 1, 1], [], []>} : vector<64x512xbf16>, vector<512x512xbf16>, vector<64x512xf32> -> vector<64x512xf32>
    %c0_15 = arith.constant 0 : index
    %c0_16 = arith.constant 0 : index
    %16 = vector.load %arg8[%c0_15, %c0_16] : memref<1x512xf32, #tpu.memory_space<vmem>>, vector<1x512xf32>
    %17 = vector.broadcast %16 : vector<1x512xf32> to vector<64x512xf32>
    %18 = arith.addf %15, %17 : vector<64x512xf32>
    %c0_17 = arith.constant 0 : index
    %c0_18 = arith.constant 0 : index
    %19 = vector.load %arg6[%c0_17, %c0_18] : memref<512x512xbf16, #tpu.memory_space<vmem>>, vector<512x512xbf16>
    %cst_19 = arith.constant dense<0.000000e+00> : vector<64x512xf32>
    %20 = tpu.matmul %8, %19, %cst_19 {dimension_numbers = #tpu.dot_dimension_numbers<[1], [0], [0], [1], [0, 0, 1, 1], [], []>} : vector<64x512xbf16>, vector<512x512xbf16>, vector<64x512xf32> -> vector<64x512xf32>
    %c0_20 = arith.constant 0 : index
    %c0_21 = arith.constant 0 : index
    %21 = vector.load %arg9[%c0_20, %c0_21] : memref<1x512xf32, #tpu.memory_space<vmem>>, vector<1x512xf32>
    %22 = vector.broadcast %21 : vector<1x512xf32> to vector<64x512xf32>
    %23 = arith.addf %20, %22 : vector<64x512xf32>
    %24 = arith.truncf %13 : vector<64x512xf32> to vector<64x512xbf16>
    %25 = arith.truncf %18 : vector<64x512xf32> to vector<64x512xbf16>
    "tpu.trace_start"() <{level = 10 : i32, message = "qe,ke->qk"}> : () -> ()
    %cst_22 = arith.constant dense<0.000000e+00> : vector<64x64xf32>
    %26 = tpu.matmul %24, %25, %cst_22 {dimension_numbers = #tpu.dot_dimension_numbers<[1], [1], [0], [0], [0, 0, 1, 0], [], []>} : vector<64x512xbf16>, vector<64x512xbf16>, vector<64x64xf32> -> vector<64x64xf32>
    "tpu.trace_stop"() : () -> ()
    %27 = tpu.iota {dimensions = array<i32: 0>} : vector<64x64xi32>
    %28 = tpu.iota {dimensions = array<i32: 1>} : vector<64x64xi32>
    %c7_i32 = arith.constant 7 : i32
    %29 = vector.broadcast %c7_i32 : i32 to vector<64x64xi32>
    %30 = arith.andi %27, %29 : vector<64x64xi32>
    %c7_i32_23 = arith.constant 7 : i32
    %31 = vector.broadcast %c7_i32_23 : i32 to vector<64x64xi32>
    %32 = arith.andi %28, %31 : vector<64x64xi32>
    %33 = arith.cmpi eq, %30, %32 : vector<64x64xi32>
    %cst_24 = arith.constant -1.000000e+30 : f32
    %34 = vector.broadcast %cst_24 : f32 to vector<64x64xf32>
    %35 = arith.select %33, %26, %34 : vector<64x64xi1>, vector<64x64xf32>
    %cst_25 = arith.constant dense<0xFF800000> : vector<64xf32>
    %36 = vector.multi_reduction <maximumf>, %35, %cst_25 [1] : vector<64x64xf32> to vector<64xf32>
    %37 = vector.shape_cast %36 : vector<64xf32> to vector<64x1xf32>
    %38 = vector.broadcast %37 : vector<64x1xf32> to vector<64x64xf32>
    %39 = arith.subf %35, %38 : vector<64x64xf32>
    %40 = math.exp %39 : vector<64x64xf32>
    %cst_26 = arith.constant dense<0.000000e+00> : vector<64xf32>
    %41 = vector.multi_reduction <add>, %40, %cst_26 [1] : vector<64x64xf32> to vector<64xf32>
    %42 = vector.shape_cast %41 : vector<64xf32> to vector<64x1xf32>
    %43 = tpu.reciprocal %42 {approx = true} : vector<64x1xf32> -> vector<64x1xf32>
    %44 = vector.broadcast %43 : vector<64x1xf32> to vector<64x64xf32>
    %45 = arith.mulf %40, %44 : vector<64x64xf32>
    %46 = arith.truncf %45 : vector<64x64xf32> to vector<64x64xbf16>
    %47 = arith.truncf %23 : vector<64x512xf32> to vector<64x512xbf16>
    %cst_27 = arith.constant dense<0.000000e+00> : vector<64x512xf32>
    %48 = tpu.matmul %46, %47, %cst_27 {dimension_numbers = #tpu.dot_dimension_numbers<[1], [0], [0], [1], [0, 0, 1, 1], [], []>} : vector<64x64xbf16>, vector<64x512xbf16>, vector<64x512xf32> -> vector<64x512xf32>
    %49 = arith.truncf %48 : vector<64x512xf32> to vector<64x512xbf16>
    %c0_28 = arith.constant 0 : index
    %c0_29 = arith.constant 0 : index
    %50 = vector.load %arg10[%c0_28, %c0_29] : memref<512x512xbf16, #tpu.memory_space<vmem>>, vector<512x512xbf16>
    %cst_30 = arith.constant dense<0.000000e+00> : vector<64x512xf32>
    %51 = tpu.matmul %49, %50, %cst_30 {dimension_numbers = #tpu.dot_dimension_numbers<[1], [0], [0], [1], [0, 0, 1, 1], [], []>} : vector<64x512xbf16>, vector<512x512xbf16>, vector<64x512xf32> -> vector<64x512xf32>
    %c0_31 = arith.constant 0 : index
    %c0_32 = arith.constant 0 : index
    %52 = vector.load %arg11[%c0_31, %c0_32] : memref<1x512xf32, #tpu.memory_space<vmem>>, vector<1x512xf32>
    %53 = vector.broadcast %52 : vector<1x512xf32> to vector<64x512xf32>
    %54 = arith.addf %51, %53 : vector<64x512xf32>
    %cst_33 = arith.constant dense<0.000000e+00> : vector<64xf32>
    %55 = vector.multi_reduction <add>, %54, %cst_33 [1] : vector<64x512xf32> to vector<64xf32>
    %56 = vector.shape_cast %55 : vector<64xf32> to vector<64x1xf32>
    %cst_34 = arith.constant 5.120000e+02 : f32
    %57 = vector.broadcast %cst_34 : f32 to vector<64x1xf32>
    %58 = arith.divf %56, %57 : vector<64x1xf32>
    %59 = vector.broadcast %58 : vector<64x1xf32> to vector<64x512xf32>
    %60 = arith.subf %54, %59 : vector<64x512xf32>
    %61 = arith.mulf %60, %60 : vector<64x512xf32>
    %cst_35 = arith.constant dense<0.000000e+00> : vector<64xf32>
    %62 = vector.multi_reduction <add>, %61, %cst_35 [1] : vector<64x512xf32> to vector<64xf32>
    %63 = vector.shape_cast %62 : vector<64xf32> to vector<64x1xf32>
    %cst_36 = arith.constant 5.120000e+02 : f32
    %64 = vector.broadcast %cst_36 : f32 to vector<64x1xf32>
    %65 = arith.divf %63, %64 : vector<64x1xf32>
    %66 = vector.broadcast %58 : vector<64x1xf32> to vector<64x512xf32>
    %67 = arith.subf %54, %66 : vector<64x512xf32>
    %cst_37 = arith.constant 9.99999974E-6 : f32
    %68 = vector.broadcast %cst_37 : f32 to vector<64x1xf32>
    %69 = arith.addf %65, %68 : vector<64x1xf32>
    %70 = math.rsqrt %69 : vector<64x1xf32>
    %71 = vector.broadcast %70 : vector<64x1xf32> to vector<64x512xf32>
    %72 = arith.mulf %67, %71 : vector<64x512xf32>
    %73 = arith.truncf %72 : vector<64x512xf32> to vector<64x512xbf16>
    %c0_38 = arith.constant 0 : index
    %c0_39 = arith.constant 0 : index
    %74 = vector.load %arg12[%c0_38, %c0_39] : memref<512x256xbf16, #tpu.memory_space<vmem>>, vector<512x256xbf16>
    %cst_40 = arith.constant dense<0.000000e+00> : vector<64x256xf32>
    %75 = tpu.matmul %73, %74, %cst_40 {dimension_numbers = #tpu.dot_dimension_numbers<[1], [0], [0], [1], [0, 0, 1, 1], [], []>} : vector<64x512xbf16>, vector<512x256xbf16>, vector<64x256xf32> -> vector<64x256xf32>
    %c0_41 = arith.constant 0 : index
    %c0_42 = arith.constant 0 : index
    %76 = vector.load %arg13[%c0_41, %c0_42] : memref<1x256xf32, #tpu.memory_space<vmem>>, vector<1x256xf32>
    %77 = vector.broadcast %76 : vector<1x256xf32> to vector<64x256xf32>
    %78 = arith.addf %75, %77 : vector<64x256xf32>
    %cst_43 = arith.constant 5.000000e-01 : f32
    %79 = vector.broadcast %cst_43 : f32 to vector<64x256xf32>
    %80 = arith.mulf %79, %78 : vector<64x256xf32>
    %cst_44 = arith.constant 0.707106769 : f32
    %81 = vector.broadcast %cst_44 : f32 to vector<64x256xf32>
    %82 = arith.mulf %78, %81 : vector<64x256xf32>
    %83 = math.erf %82 : vector<64x256xf32>
    %cst_45 = arith.constant 1.000000e+00 : f32
    %84 = vector.broadcast %cst_45 : f32 to vector<64x256xf32>
    %85 = arith.addf %84, %83 : vector<64x256xf32>
    %86 = arith.mulf %80, %85 : vector<64x256xf32>
    %87 = arith.truncf %86 : vector<64x256xf32> to vector<64x256xbf16>
    %c0_46 = arith.constant 0 : index
    %c0_47 = arith.constant 0 : index
    %88 = vector.load %arg14[%c0_46, %c0_47] : memref<256x128xbf16, #tpu.memory_space<vmem>>, vector<256x128xbf16>
    %cst_48 = arith.constant dense<0.000000e+00> : vector<64x128xf32>
    %89 = tpu.matmul %87, %88, %cst_48 {dimension_numbers = #tpu.dot_dimension_numbers<[1], [0], [0], [1], [0, 0, 1, 1], [], []>} : vector<64x256xbf16>, vector<256x128xbf16>, vector<64x128xf32> -> vector<64x128xf32>
    %c0_49 = arith.constant 0 : index
    %c0_50 = arith.constant 0 : index
    %90 = vector.load %arg15[%c0_49, %c0_50] : memref<1x128xf32, #tpu.memory_space<vmem>>, vector<1x128xf32>
    %91 = vector.broadcast %90 : vector<1x128xf32> to vector<64x128xf32>
    %92 = arith.addf %89, %91 : vector<64x128xf32>
    %cst_51 = arith.constant dense<0.000000e+00> : vector<64xf32>
    %93 = vector.multi_reduction <add>, %92, %cst_51 [1] : vector<64x128xf32> to vector<64xf32>
    %94 = vector.shape_cast %93 : vector<64xf32> to vector<64x1xf32>
    %cst_52 = arith.constant 1.280000e+02 : f32
    %95 = vector.broadcast %cst_52 : f32 to vector<64x1xf32>
    %96 = arith.divf %94, %95 : vector<64x1xf32>
    %97 = vector.broadcast %96 : vector<64x1xf32> to vector<64x128xf32>
    %98 = arith.subf %92, %97 : vector<64x128xf32>
    %99 = arith.mulf %98, %98 : vector<64x128xf32>
    %cst_53 = arith.constant dense<0.000000e+00> : vector<64xf32>
    %100 = vector.multi_reduction <add>, %99, %cst_53 [1] : vector<64x128xf32> to vector<64xf32>
    %101 = vector.shape_cast %100 : vector<64xf32> to vector<64x1xf32>
    %cst_54 = arith.constant 1.280000e+02 : f32
    %102 = vector.broadcast %cst_54 : f32 to vector<64x1xf32>
    %103 = arith.divf %101, %102 : vector<64x1xf32>
    %104 = vector.broadcast %96 : vector<64x1xf32> to vector<64x128xf32>
    %105 = arith.subf %92, %104 : vector<64x128xf32>
    %cst_55 = arith.constant 9.99999974E-6 : f32
    %106 = vector.broadcast %cst_55 : f32 to vector<64x1xf32>
    %107 = arith.addf %103, %106 : vector<64x1xf32>
    %108 = math.rsqrt %107 : vector<64x1xf32>
    %109 = vector.broadcast %108 : vector<64x1xf32> to vector<64x128xf32>
    %110 = arith.mulf %105, %109 : vector<64x128xf32>
    %111 = vector.shape_cast %110 : vector<64x128xf32> to vector<8x8x128xf32>
    %c0_56 = arith.constant 0 : index
    %c0_57 = arith.constant 0 : index
    %112 = vector.load %arg16[%c0_56, %c0_57] : memref<1x128xf32, #tpu.memory_space<vmem>>, vector<1x128xf32>
    %113 = vector.shape_cast %112 : vector<1x128xf32> to vector<1x1x128xf32>
    %114 = vector.broadcast %113 : vector<1x1x128xf32> to vector<8x8x128xf32>
    %115 = arith.mulf %111, %114 : vector<8x8x128xf32>
    %cst_58 = arith.constant dense<0.000000e+00> : vector<8x8xf32>
    %116 = vector.multi_reduction <add>, %115, %cst_58 [2] : vector<8x8x128xf32> to vector<8x8xf32>
    %c0_59 = arith.constant 0 : index
    %c0_60 = arith.constant 0 : index
    %117 = vector.load %arg17[%c0_59, %c0_60] : memref<1x1xf32, #tpu.memory_space<vmem>>, vector<1x1xf32>
    %118 = vector.broadcast %117 : vector<1x1xf32> to vector<8x8xf32>
    %119 = arith.addf %116, %118 : vector<8x8xf32>
    %c0_61 = arith.constant 0 : index
    %c0_62 = arith.constant 0 : index
    %c0_63 = arith.constant 0 : index
    %120 = vector.load %arg18[%c0_61, %c0_62, %c0_63] : memref<1x8x8xf32, #tpu.memory_space<vmem>>, vector<1x8x8xf32>
    %121 = vector.shape_cast %120 : vector<1x8x8xf32> to vector<8x8xf32>
    %122 = vector.shape_cast %119 : vector<8x8xf32> to vector<1x8x8xf32>
    tpu.vector_store %arg18[%c0_61, %c0_62, %c0_63], %122 {strides = array<i32>} : memref<1x8x8xf32, #tpu.memory_space<vmem>>, vector<1x8x8xf32>,
    return
  }
  func.func @transform_0(%arg0: i32) -> (i32, i32, i32) {
    %c0_i32 = arith.constant 0 : i32
    %c0_i32_0 = arith.constant 0 : i32
    %c0_i32_1 = arith.constant 0 : i32
    return %c0_i32, %arg0, %c0_i32_0 : i32, i32, i32
  }
  func.func @transform_1(%arg0: i32) -> (i32, i32, i32) {
    %c0_i32 = arith.constant 0 : i32
    %c0_i32_0 = arith.constant 0 : i32
    %c0_i32_1 = arith.constant 0 : i32
    return %c0_i32, %arg0, %c0_i32_0 : i32, i32, i32
  }
  func.func @transform_2(%arg0: i32) -> (i32, i32, i32) {
    %c0_i32 = arith.constant 0 : i32
    %c0_i32_0 = arith.constant 0 : i32
    %c0_i32_1 = arith.constant 0 : i32
    return %c0_i32, %arg0, %c0_i32_0 : i32, i32, i32
  }
  func.func @transform_3(%arg0: i32) -> (i32, i32) {
    %c0_i32 = arith.constant 0 : i32
    %c0_i32_0 = arith.constant 0 : i32
    %c0_i32_1 = arith.constant 0 : i32
    return %c0_i32, %c0_i32_0 : i32, i32
  }
  func.func @transform_4(%arg0: i32) -> (i32, i32) {
    %c0_i32 = arith.constant 0 : i32
    %c0_i32_0 = arith.constant 0 : i32
    %c0_i32_1 = arith.constant 0 : i32
    return %c0_i32, %c0_i32_0 : i32, i32
  }
  func.func @transform_5(%arg0: i32) -> (i32, i32) {
    %c0_i32 = arith.constant 0 : i32
    %c0_i32_0 = arith.constant 0 : i32
    %c0_i32_1 = arith.constant 0 : i32
    return %c0_i32, %c0_i32_0 : i32, i32
  }
  func.func @transform_6(%arg0: i32) -> (i32, i32) {
    %c0_i32 = arith.constant 0 : i32
    %c0_i32_0 = arith.constant 0 : i32
    %c0_i32_1 = arith.constant 0 : i32
    return %c0_i32, %c0_i32_0 : i32, i32
  }
  func.func @transform_7(%arg0: i32) -> (i32, i32) {
    %c0_i32 = arith.constant 0 : i32
    %c0_i32_0 = arith.constant 0 : i32
    %c0_i32_1 = arith.constant 0 : i32
    return %c0_i32, %c0_i32_0 : i32, i32
  }
  func.func @transform_8(%arg0: i32) -> (i32, i32) {
    %c0_i32 = arith.constant 0 : i32
    %c0_i32_0 = arith.constant 0 : i32
    %c0_i32_1 = arith.constant 0 : i32
    return %c0_i32, %c0_i32_0 : i32, i32
  }
  func.func @transform_9(%arg0: i32) -> (i32, i32) {
    %c0_i32 = arith.constant 0 : i32
    %c0_i32_0 = arith.constant 0 : i32
    %c0_i32_1 = arith.constant 0 : i32
    return %c0_i32, %c0_i32_0 : i32, i32
  }
  func.func @transform_10(%arg0: i32) -> (i32, i32) {
    %c0_i32 = arith.constant 0 : i32
    %c0_i32_0 = arith.constant 0 : i32
    %c0_i32_1 = arith.constant 0 : i32
    return %c0_i32, %c0_i32_0 : i32, i32
  }
  func.func @transform_11(%arg0: i32) -> (i32, i32) {
    %c0_i32 = arith.constant 0 : i32
    %c0_i32_0 = arith.constant 0 : i32
    %c0_i32_1 = arith.constant 0 : i32
    return %c0_i32, %c0_i32_0 : i32, i32
  }
  func.func @transform_12(%arg0: i32) -> (i32, i32) {
    %c0_i32 = arith.constant 0 : i32
    %c0_i32_0 = arith.constant 0 : i32
    %c0_i32_1 = arith.constant 0 : i32
    return %c0_i32, %c0_i32_0 : i32, i32
  }
  func.func @transform_13(%arg0: i32) -> (i32, i32) {
    %c0_i32 = arith.constant 0 : i32
    %c0_i32_0 = arith.constant 0 : i32
    %c0_i32_1 = arith.constant 0 : i32
    return %c0_i32, %c0_i32_0 : i32, i32
  }
  func.func @transform_14(%arg0: i32) -> (i32, i32) {
    %c0_i32 = arith.constant 0 : i32
    %c0_i32_0 = arith.constant 0 : i32
    %c0_i32_1 = arith.constant 0 : i32
    return %c0_i32, %c0_i32_0 : i32, i32
  }
  func.func @transform_15(%arg0: i32) -> (i32, i32) {
    %c0_i32 = arith.constant 0 : i32
    %c0_i32_0 = arith.constant 0 : i32
    %c0_i32_1 = arith.constant 0 : i32
    return %c0_i32, %c0_i32_0 : i32, i32
  }
  func.func @transform_16(%arg0: i32) -> (i32, i32) {
    %c0_i32 = arith.constant 0 : i32
    %c0_i32_0 = arith.constant 0 : i32
    %c0_i32_1 = arith.constant 0 : i32
    return %c0_i32, %c0_i32_0 : i32, i32
  }
  func.func @transform_17(%arg0: i32) -> (i32, i32, i32) {
    %c0_i32 = arith.constant 0 : i32
    %c0_i32_0 = arith.constant 0 : i32
    %c0_i32_1 = arith.constant 0 : i32
    return %arg0, %c0_i32, %c0_i32_0 : i32, i32, i32
  }
}

</mosaic_0001>

<llo_original>
// kernel: tpu_custom_call.1
$region0: #{tpu_custom_call.1}
  #allocation0 [shape = 'u32[]', space=smem, size = 0x4, offset = 0x4, fixed_abs, tag = 'smem constant byte address 0x4 - core index']
  #allocation1 [shape = 'u32[72,128]{1,0:T(1,128)}', space=vmem, size = 0x9000, scoped, tag = 'internal scratch']
  #allocation2 [shape = 'f32[1,1]{1,0:T(1,128)S(1)}', space=vmem, size = 0x200, scoped, tag = 'scoped memory for tpu_custom_call.1']
  %s0 = inlined_call_operand.hbm [shape: f32[8,8,512], index: 0, kind: input, shape index: {}]
  %s1 = inlined_call_operand.hbm [shape: f32[8,8,512], index: 1, kind: input, shape index: {}]
  %s2 = inlined_call_operand.hbm [shape: f32[8,8,512], index: 2, kind: input, shape index: {}]
  %s3 = inlined_call_operand.hbm [shape: bf16[512,512], index: 3, kind: input, shape index: {}]
  %s4 = inlined_call_operand.hbm [shape: bf16[512,512], index: 4, kind: input, shape index: {}]
  %s5 = inlined_call_operand.hbm [shape: bf16[512,512], index: 5, kind: input, shape index: {}]
  %s6 = inlined_call_operand.vmem [shape: f32[1,512], index: 6, kind: input, shape index: {}]
  %s7 = inlined_call_operand.vmem [shape: f32[1,512], index: 7, kind: input, shape index: {}]
  %s8 = inlined_call_operand.hbm [shape: f32[1,512], index: 8, kind: input, shape index: {}]
  %s9 = inlined_call_operand.hbm [shape: bf16[512,512], index: 9, kind: input, shape index: {}]
  %s10 = inlined_call_operand.hbm [shape: f32[1,512], index: 10, kind: input, shape index: {}]
  %s11 = inlined_call_operand.hbm [shape: bf16[512,256], index: 11, kind: input, shape index: {}]
  %s12 = inlined_call_operand.vmem [shape: f32[1,256], index: 12, kind: input, shape index: {}]
  %s13 = inlined_call_operand.hbm [shape: bf16[256,128], index: 13, kind: input, shape index: {}]
  %s14 = inlined_call_operand.vmem [shape: f32[1,128], index: 14, kind: input, shape index: {}]
  %s15 = inlined_call_operand.vmem [shape: f32[1,128], index: 15, kind: input, shape index: {}]
  %s16 = inlined_call_operand.<no memory space> [shape: f32[1,1], index: 16, kind: input, shape index: {}]
  %s17 = inlined_call_operand.hbm [shape: f32[1,8,8], index: 17, kind: output, shape index: {}]
  %s18 = sld [smem:[#allocation0]]
  $region122: #{tpu_custom_call.1} parent=0
    _
  %s20 = ssub.s32 1, %s18
  %s21 = scalar_select 0, %s20, %s18
  %v22 = vstv %s16
  %23 = vst [vmem:[#allocation2] sm:$0x1] %v22
  $region1: #{tpu_custom_call.1} parent=0
    #allocation3 [shape = 'u8[131072]{0}', space=vmem, size = 0x20000, scoped, tag = 'input window, operand 0, single buffered']
    #allocation4 [shape = 's32[1]{0}', space=sflag, size = 0x4, scoped, tag = 'scoped memory for tpu_custom_call.1']
    #allocation5 [shape = 's32[1]{0}', space=sflag, size = 0x4, scoped, tag = 'scoped memory for tpu_custom_call.1']
    #allocation6 [shape = 'u8[131072]{0}', space=vmem, size = 0x20000, scoped, tag = 'input window, operand 1, single buffered']
    #allocation7 [shape = 's32[1]{0}', space=sflag, size = 0x4, scoped, tag = 'scoped memory for tpu_custom_call.1']
    #allocation8 [shape = 'u8[131072]{0}', space=vmem, size = 0x20000, scoped, tag = 'input window, operand 2, single buffered']
    #allocation9 [shape = 'u8[524288]{0}', space=vmem, size = 0x80000, scoped, tag = 'input window, operand 3, single buffered']
    #allocation10 [shape = 's32[1]{0}', space=sflag, size = 0x4, scoped, tag = 'scoped memory for tpu_custom_call.1']
    #allocation11 [shape = 'u8[524288]{0}', space=vmem, size = 0x80000, scoped, tag = 'input window, operand 4, single buffered']
    #allocation12 [shape = 'u8[524288]{0}', space=vmem, size = 0x80000, scoped, tag = 'input window, operand 5, single buffered']
    #allocation13 [shape = 's32[1]{0}', space=sflag, size = 0x4, scoped, tag = 'scoped memory for tpu_custom_call.1']
    #allocation14 [shape = 'u8[2048]{0}', space=vmem, size = 0x800, scoped, tag = 'input window, operand 8, single buffered']
    #allocation15 [shape = 'u8[524288]{0}', space=vmem, size = 0x80000, scoped, tag = 'input window, operand 9, single buffered']
    #allocation16 [shape = 's32[1]{0}', space=sflag, size = 0x4, scoped, tag = 'scoped memory for tpu_custom_call.1']
    #allocation17 [shape = 'u8[2048]{0}', space=vmem, size = 0x800, scoped, tag = 'input window, operand 10, single buffered']
    #allocation18 [shape = 'u8[262144]{0}', space=vmem, size = 0x40000, scoped, tag = 'input window, operand 11, single buffered']
    #allocation19 [shape = 's32[1]{0}', space=sflag, size = 0x4, scoped, tag = 'scoped memory for tpu_custom_call.1']
    #allocation20 [shape = 'u8[65536]{0}', space=vmem, size = 0x10000, scoped, tag = 'input window, operand 13, single buffered']
    #allocation21 [shape = 'u8[4096]{0}', space=vmem, size = 0x1000, scoped, tag = 'output window, operand 0, single buffered']
    %24 = vsyncpa [#allocation4], 0
    %25 = vsyncpa [#allocation7], 0
    %26 = vsyncpa [#allocation10], 0
    %27 = vsyncpa [#allocation13], 0
    %28 = vsyncpa [#allocation16], 0
    %29 = vsyncpa [#allocation19], 0
    %30 = vsyncpa [#allocation5], 0
    // Predicated region
    $region2: #{tpu_custom_call.1} parent=1 // pred_check
      _
    $region3: #{tpu_custom_call.1} parent=1 // pred_check_branch
      %32 = sbr.rel (0) target = $region5
    $region4: #{tpu_custom_call.1} parent=1 // pred_region
      %34 = vsyncadd [#allocation4], 0
      %s35 = sshll.u32 %s0, 4
      %s36 = int_to_ptr.hbm [resolvable:$true] %s35
      %s37 = sshll.u32 [#allocation3], 4
      %s38 = int_to_ptr.vmem [resolvable:$true] %s37
      %43 = dma.hbm_to_vmem [thread:$0]  %s36, 4096, %s38, [#allocation4], 512, 512, 32
    $region5: #{tpu_custom_call.1} parent=1 // pred_fallthru
      _
    // Predicated region
    $region6: #{tpu_custom_call.1} parent=1 // pred_check
      _
    $region7: #{tpu_custom_call.1} parent=1 // pred_check_branch
      %45 = sbr.rel (0) target = $region9
    $region8: #{tpu_custom_call.1} parent=1 // pred_region
      %47 = vsyncadd [#allocation7], 0
      %s48 = sshll.u32 %s1, 4
      %s49 = int_to_ptr.hbm [resolvable:$true] %s48
      %s50 = sshll.u32 [#allocation6], 4
      %s51 = int_to_ptr.vmem [resolvable:$true] %s50
      %56 = dma.hbm_to_vmem [thread:$0]  %s49, 4096, %s51, [#allocation7], 512, 512, 32
    $region9: #{tpu_custom_call.1} parent=1 // pred_fallthru
      _
    // Predicated region
    $region10: #{tpu_custom_call.1} parent=1 // pred_check
      _
    $region11: #{tpu_custom_call.1} parent=1 // pred_check_branch
      %58 = sbr.rel (0) target = $region13
    $region12: #{tpu_custom_call.1} parent=1 // pred_region
      %60 = vsyncadd [#allocation7], 0
      %s61 = sshll.u32 %s2, 4
      %s62 = int_to_ptr.hbm [resolvable:$true] %s61
      %s63 = sshll.u32 [#allocation8], 4
      %s64 = int_to_ptr.vmem [resolvable:$true] %s63
      %69 = dma.hbm_to_vmem [thread:$0]  %s62, 4096, %s64, [#allocation7], 512, 512, 32
    $region13: #{tpu_custom_call.1} parent=1 // pred_fallthru
      _
    // Predicated region
    $region14: #{tpu_custom_call.1} parent=1 // pred_check
      _
    $region15: #{tpu_custom_call.1} parent=1 // pred_check_branch
      %71 = sbr.rel (0) target = $region17
    $region16: #{tpu_custom_call.1} parent=1 // pred_region
      %73 = vsyncadd [#allocation10], 0
      %s74 = sshll.u32 %s3, 4
      %s75 = int_to_ptr.hbm [resolvable:$true] %s74
      %s76 = sshll.u32 [#allocation9], 4
      %s77 = int_to_ptr.vmem [resolvable:$true] %s76
      %82 = dma.hbm_to_vmem [thread:$0]  %s75, 16384, %s77, [#allocation10], 256, 256, 16
    $region17: #{tpu_custom_call.1} parent=1 // pred_fallthru
      _
    // Predicated region
    $region18: #{tpu_custom_call.1} parent=1 // pred_check
      _
    $region19: #{tpu_custom_call.1} parent=1 // pred_check_branch
      %84 = sbr.rel (0) target = $region21
    $region20: #{tpu_custom_call.1} parent=1 // pred_region
      %86 = vsyncadd [#allocation10], 0
      %s87 = sshll.u32 %s4, 4
      %s88 = int_to_ptr.hbm [resolvable:$true] %s87
      %s89 = sshll.u32 [#allocation11], 4
      %s90 = int_to_ptr.vmem [resolvable:$true] %s89
      %95 = dma.hbm_to_vmem [thread:$0]  %s88, 16384, %s90, [#allocation10], 256, 256, 16
    $region21: #{tpu_custom_call.1} parent=1 // pred_fallthru
      _
    // Predicated region
    $region22: #{tpu_custom_call.1} parent=1 // pred_check
      _
    $region23: #{tpu_custom_call.1} parent=1 // pred_check_branch
      %97 = sbr.rel (0) target = $region25
    $region24: #{tpu_custom_call.1} parent=1 // pred_region
      %99 = vsyncadd [#allocation13], 0
      %s100 = sshll.u32 %s5, 4
      %s101 = int_to_ptr.hbm [resolvable:$true] %s100
      %s102 = sshll.u32 [#allocation12], 4
      %s103 = int_to_ptr.vmem [resolvable:$true] %s102
      %108 = dma.hbm_to_vmem [thread:$0]  %s101, 16384, %s103, [#allocation13], 256, 256, 16
    $region25: #{tpu_custom_call.1} parent=1 // pred_fallthru
      _
    // Predicated region
    $region26: #{tpu_custom_call.1} parent=1 // pred_check
      _
    $region27: #{tpu_custom_call.1} parent=1 // pred_check_branch
      %110 = sbr.rel (0) target = $region29
    $region28: #{tpu_custom_call.1} parent=1 // pred_region
      _
    $region29: #{tpu_custom_call.1} parent=1 // pred_fallthru
      _
    // Predicated region
    $region30: #{tpu_custom_call.1} parent=1 // pred_check
      _
    $region31: #{tpu_custom_call.1} parent=1 // pred_check_branch
      %112 = sbr.rel (0) target = $region33
    $region32: #{tpu_custom_call.1} parent=1 // pred_region
      _
    $region33: #{tpu_custom_call.1} parent=1 // pred_fallthru
      _
    // Predicated region
    $region34: #{tpu_custom_call.1} parent=1 // pred_check
      _
    $region35: #{tpu_custom_call.1} parent=1 // pred_check_branch
      %114 = sbr.rel (0) target = $region37
    $region36: #{tpu_custom_call.1} parent=1 // pred_region
      %116 = vsyncadd [#allocation13], 0
      %s118 = sshll.u32 %s8, 4
      %s119 = int_to_ptr.hbm [resolvable:$true] %s118
      %s120 = sshll.u32 [#allocation14], 4
      %s121 = int_to_ptr.vmem [resolvable:$true] %s120
      %123 = dma.hbm_to_vmem [thread:$0]  %s119, 64, %s121, [#allocation13]
    $region37: #{tpu_custom_call.1} parent=1 // pred_fallthru
      _
    // Predicated region
    $region38: #{tpu_custom_call.1} parent=1 // pred_check
      _
    $region39: #{tpu_custom_call.1} parent=1 // pred_check_branch
      %125 = sbr.rel (0) target = $region41
    $region40: #{tpu_custom_call.1} parent=1 // pred_region
      %127 = vsyncadd [#allocation16], 0
      %s128 = sshll.u32 %s9, 4
      %s129 = int_to_ptr.hbm [resolvable:$true] %s128
      %s130 = sshll.u32 [#allocation15], 4
      %s131 = int_to_ptr.vmem [resolvable:$true] %s130
      %136 = dma.hbm_to_vmem [thread:$0]  %s129, 16384, %s131, [#allocation16], 256, 256, 16
    $region41: #{tpu_custom_call.1} parent=1 // pred_fallthru
      _
    // Predicated region
    $region42: #{tpu_custom_call.1} parent=1 // pred_check
      _
    $region43: #{tpu_custom_call.1} parent=1 // pred_check_branch
      %138 = sbr.rel (0) target = $region45
    $region44: #{tpu_custom_call.1} parent=1 // pred_region
      %140 = vsyncadd [#allocation16], 0
      %s142 = sshll.u32 %s10, 4
      %s143 = int_to_ptr.hbm [resolvable:$true] %s142
      %s144 = sshll.u32 [#allocation17], 4
      %s145 = int_to_ptr.vmem [resolvable:$true] %s144
      %147 = dma.hbm_to_vmem [thread:$0]  %s143, 64, %s145, [#allocation16]
    $region45: #{tpu_custom_call.1} parent=1 // pred_fallthru
      _
    // Predicated region
    $region46: #{tpu_custom_call.1} parent=1 // pred_check
      _
    $region47: #{tpu_custom_call.1} parent=1 // pred_check_branch
      %149 = sbr.rel (0) target = $region49
    $region48: #{tpu_custom_call.1} parent=1 // pred_region
      %151 = vsyncadd [#allocation19], 0
      %s152 = sshll.u32 %s11, 4
      %s153 = int_to_ptr.hbm [resolvable:$true] %s152
      %s154 = sshll.u32 [#allocation18], 4
      %s155 = int_to_ptr.vmem [resolvable:$true] %s154
      %160 = dma.hbm_to_vmem [thread:$0]  %s153, 8192, %s155, [#allocation19], 128, 128, 8
    $region49: #{tpu_custom_call.1} parent=1 // pred_fallthru
      _
    // Predicated region
    $region50: #{tpu_custom_call.1} parent=1 // pred_check
      _
    $region51: #{tpu_custom_call.1} parent=1 // pred_check_branch
      %162 = sbr.rel (0) target = $region53
    $region52: #{tpu_custom_call.1} parent=1 // pred_region
      _
    $region53: #{tpu_custom_call.1} parent=1 // pred_fallthru
      _
    // Predicated region
    $region54: #{tpu_custom_call.1} parent=1 // pred_check
      _
    $region55: #{tpu_custom_call.1} parent=1 // pred_check_branch
      %164 = sbr.rel (0) target = $region57
    $region56: #{tpu_custom_call.1} parent=1 // pred_region
      %166 = vsyncadd [#allocation19], 0
      %s167 = sshll.u32 %s13, 4
      %s168 = int_to_ptr.hbm [resolvable:$true] %s167
      %s169 = sshll.u32 [#allocation20], 4
      %s170 = int_to_ptr.vmem [resolvable:$true] %s169
      %175 = dma.hbm_to_vmem [thread:$0]  %s168, 2048, %s170, [#allocation19], 64, 64, 4
    $region57: #{tpu_custom_call.1} parent=1 // pred_fallthru
      _
    // Predicated region
    $region58: #{tpu_custom_call.1} parent=1 // pred_check
      _
    $region59: #{tpu_custom_call.1} parent=1 // pred_check_branch
      %177 = sbr.rel (0) target = $region61
    $region60: #{tpu_custom_call.1} parent=1 // pred_region
      _
    $region61: #{tpu_custom_call.1} parent=1 // pred_fallthru
      _
    // Predicated region
    $region62: #{tpu_custom_call.1} parent=1 // pred_check
      _
    $region63: #{tpu_custom_call.1} parent=1 // pred_check_branch
      %179 = sbr.rel (0) target = $region65
    $region64: #{tpu_custom_call.1} parent=1 // pred_region
      _
    $region65: #{tpu_custom_call.1} parent=1 // pred_fallthru
      _
    // Predicated region
    $region66: #{tpu_custom_call.1} parent=1 // pred_check
      _
    $region67: #{tpu_custom_call.1} parent=1 // pred_check_branch
      %181 = sbr.rel (0) target = $region69
    $region68: #{tpu_custom_call.1} parent=1 // pred_region
      _
    $region69: #{tpu_custom_call.1} parent=1 // pred_fallthru
      _
    // Predicated region
    $region70: #{tpu_custom_call.1} parent=1 // pred_check
      _
    $region71: #{tpu_custom_call.1} parent=1 // pred_check_branch
      %183 = sbr.rel (0) target = $region73
    $region72: #{tpu_custom_call.1} parent=1 // pred_region
      %185 = dma.done [#allocation4], 4096
    $region73: #{tpu_custom_call.1} parent=1 // pred_fallthru
      _
    // Predicated region
    $region74: #{tpu_custom_call.1} parent=1 // pred_check
      _
    $region75: #{tpu_custom_call.1} parent=1 // pred_check_branch
      %187 = sbr.rel (0) target = $region77
    $region76: #{tpu_custom_call.1} parent=1 // pred_region
      %189 = dma.done [#allocation7], 4096
    $region77: #{tpu_custom_call.1} parent=1 // pred_fallthru
      _
    // Predicated region
    $region78: #{tpu_custom_call.1} parent=1 // pred_check
      _
    $region79: #{tpu_custom_call.1} parent=1 // pred_check_branch
      %191 = sbr.rel (0) target = $region81
    $region80: #{tpu_custom_call.1} parent=1 // pred_region
      %193 = dma.done [#allocation7], 4096
    $region81: #{tpu_custom_call.1} parent=1 // pred_fallthru
      _
    // Predicated region
    $region82: #{tpu_custom_call.1} parent=1 // pred_check
      _
    $region83: #{tpu_custom_call.1} parent=1 // pred_check_branch
      %195 = sbr.rel (0) target = $region85
    $region84: #{tpu_custom_call.1} parent=1 // pred_region
      %197 = dma.done [#allocation10], 16384
    $region85: #{tpu_custom_call.1} parent=1 // pred_fallthru
      _
    // Predicated region
    $region86: #{tpu_custom_call.1} parent=1 // pred_check
      _
    $region87: #{tpu_custom_call.1} parent=1 // pred_check_branch
      %199 = sbr.rel (0) target = $region89
    $region88: #{tpu_custom_call.1} parent=1 // pred_region
      %201 = dma.done [#allocation10], 16384
    $region89: #{tpu_custom_call.1} parent=1 // pred_fallthru
      _
    // Predicated region
    $region90: #{tpu_custom_call.1} parent=1 // pred_check
      _
    $region91: #{tpu_custom_call.1} parent=1 // pred_check_branch
      %203 = sbr.rel (0) target = $region93
    $region92: #{tpu_custom_call.1} parent=1 // pred_region
      %205 = dma.done [#allocation13], 16384
    $region93: #{tpu_custom_call.1} parent=1 // pred_fallthru
      _
    // Predicated region
    $region94: #{tpu_custom_call.1} parent=1 // pred_check
      _
    $region95: #{tpu_custom_call.1} parent=1 // pred_check_branch
      %207 = sbr.rel (0) target = $region97
    $region96: #{tpu_custom_call.1} parent=1 // pred_region
      %209 = dma.done [#allocation13], 64
    $region97: #{tpu_custom_call.1} parent=1 // pred_fallthru
      _
    // Predicated region
    $region98: #{tpu_custom_call.1} parent=1 // pred_check
      _
    $region99: #{tpu_custom_call.1} parent=1 // pred_check_branch
      %211 = sbr.rel (0) target = $region101
    $region100: #{tpu_custom_call.1} parent=1 // pred_region
      %213 = dma.done [#allocation16], 16384
    $region101: #{tpu_custom_call.1} parent=1 // pred_fallthru
      _
    // Predicated region
    $region102: #{tpu_custom_call.1} parent=1 // pred_check
      _
    $region103: #{tpu_custom_call.1} parent=1 // pred_check_branch
      %215 = sbr.rel (0) target = $region105
    $region104: #{tpu_custom_call.1} parent=1 // pred_region
      %217 = dma.done [#allocation16], 64
    $region105: #{tpu_custom_call.1} parent=1 // pred_fallthru
      _
    // Predicated region
    $region106: #{tpu_custom_call.1} parent=1 // pred_check
      _
    $region107: #{tpu_custom_call.1} parent=1 // pred_check_branch
      %219 = sbr.rel (0) target = $region109
    $region108: #{tpu_custom_call.1} parent=1 // pred_region
      %221 = dma.done [#allocation19], 8192
    $region109: #{tpu_custom_call.1} parent=1 // pred_fallthru
      _
    // Predicated region
    $region110: #{tpu_custom_call.1} parent=1 // pred_check
      _
    $region111: #{tpu_custom_call.1} parent=1 // pred_check_branch
      %223 = sbr.rel (0) target = $region113
    $region112: #{tpu_custom_call.1} parent=1 // pred_region
      %225 = dma.done [#allocation19], 2048
    $region113: #{tpu_custom_call.1} parent=1 // pred_fallthru
      _
    %v227 = vld [vmem:[#allocation3] sm:$0xff]
    %v228 = vld [vmem:[#allocation3 + $0x8] sm:$0xff]
    %v229 = vld [vmem:[#allocation3 + $0x10] sm:$0xff]
    %v230 = vld [vmem:[#allocation3 + $0x18] sm:$0xff]
    %v231 = vld [vmem:[#allocation3 + $0x20] sm:$0xff]
    %v232 = vld [vmem:[#allocation3 + $0x28] sm:$0xff]
    %v233 = vld [vmem:[#allocation3 + $0x30] sm:$0xff]
    %v234 = vld [vmem:[#allocation3 + $0x38] sm:$0xff]
    %v235 = vld [vmem:[#allocation3 + $0x40] sm:$0xff]
    %v236 = vld [vmem:[#allocation3 + $0x48] sm:$0xff]
    %v237 = vld [vmem:[#allocation3 + $0x50] sm:$0xff]
    %v238 = vld [vmem:[#allocation3 + $0x58] sm:$0xff]
    %v239 = vld [vmem:[#allocation3 + $0x60] sm:$0xff]
    %v240 = vld [vmem:[#allocation3 + $0x68] sm:$0xff]
    %v241 = vld [vmem:[#allocation3 + $0x70] sm:$0xff]
    %v242 = vld [vmem:[#allocation3 + $0x78] sm:$0xff]
    %v243 = vld [vmem:[#allocation3 + $0x80] sm:$0xff]
    %v244 = vld [vmem:[#allocation3 + $0x88] sm:$0xff]
    %v245 = vld [vmem:[#allocation3 + $0x90] sm:$0xff]
    %v246 = vld [vmem:[#allocation3 + $0x98] sm:$0xff]
    %v247 = vld [vmem:[#allocation3 + $0xa0] sm:$0xff]
    %v248 = vld [vmem:[#allocation3 + $0xa8] sm:$0xff]
    %v249 = vld [vmem:[#allocation3 + $0xb0] sm:$0xff]
    %v250 = vld [vmem:[#allocation3 + $0xb8] sm:$0xff]
    %v251 = vld [vmem:[#allocation3 + $0xc0] sm:$0xff]
    %v252 = vld [vmem:[#allocation3 + $0xc8] sm:$0xff]
    %v253 = vld [vmem:[#allocation3 + $0xd0] sm:$0xff]
    %v254 = vld [vmem:[#allocation3 + $0xd8] sm:$0xff]
    %v255 = vld [vmem:[#allocation3 + $0xe0] sm:$0xff]
    %v256 = vld [vmem:[#allocation3 + $0xe8] sm:$0xff]
    %v257 = vld [vmem:[#allocation3 + $0xf0] sm:$0xff]
    %v258 = vld [vmem:[#allocation3 + $0xf8] sm:$0xff]
    %v259 = vpack.c.bf16 %v231, %v227
    %v260 = vpack.c.bf16 %v232, %v228
    %v261 = vpack.c.bf16 %v233, %v229
    %v262 = vpack.c.bf16 %v234, %v230
    %v263 = vpack.c.bf16 %v239, %v235
    %v264 = vpack.c.bf16 %v240, %v236
    %v265 = vpack.c.bf16 %v241, %v237
    %v266 = vpack.c.bf16 %v242, %v238
    %v267 = vpack.c.bf16 %v247, %v243
    %v268 = vpack.c.bf16 %v248, %v244
    %v269 = vpack.c.bf16 %v249, %v245
    %v270 = vpack.c.bf16 %v250, %v246
    %v271 = vpack.c.bf16 %v255, %v251
    %v272 = vpack.c.bf16 %v256, %v252
    %v273 = vpack.c.bf16 %v257, %v253
    %v274 = vpack.c.bf16 %v258, %v254
    %v275 = vld [vmem:[#allocation6] sm:$0xff]
    %v276 = vld [vmem:[#allocation6 + $0x8] sm:$0xff]
    %v277 = vld [vmem:[#allocation6 + $0x10] sm:$0xff]
    %v278 = vld [vmem:[#allocation6 + $0x18] sm:$0xff]
    %v279 = vld [vmem:[#allocation6 + $0x20] sm:$0xff]
    %v280 = vld [vmem:[#allocation6 + $0x28] sm:$0xff]
    %v281 = vld [vmem:[#allocation6 + $0x30] sm:$0xff]
    %v282 = vld [vmem:[#allocation6 + $0x38] sm:$0xff]
    %v283 = vld [vmem:[#allocation6 + $0x40] sm:$0xff]
    %v284 = vld [vmem:[#allocation6 + $0x48] sm:$0xff]
    %v285 = vld [vmem:[#allocation6 + $0x50] sm:$0xff]
    %v286 = vld [vmem:[#allocation6 + $0x58] sm:$0xff]
    %v287 = vld [vmem:[#allocation6 + $0x60] sm:$0xff]
    %v288 = vld [vmem:[#allocation6 + $0x68] sm:$0xff]
    %v289 = vld [vmem:[#allocation6 + $0x70] sm:$0xff]
    %v290 = vld [vmem:[#allocation6 + $0x78] sm:$0xff]
    %v291 = vld [vmem:[#allocation6 + $0x80] sm:$0xff]
    %v292 = vld [vmem:[#allocation6 + $0x88] sm:$0xff]
    %v293 = vld [vmem:[#allocation6 + $0x90] sm:$0xff]
    %v294 = vld [vmem:[#allocation6 + $0x98] sm:$0xff]
    %v295 = vld [vmem:[#allocation6 + $0xa0] sm:$0xff]
    %v296 = vld [vmem:[#allocation6 + $0xa8] sm:$0xff]
    %v297 = vld [vmem:[#allocation6 + $0xb0] sm:$0xff]
    %v298 = vld [vmem:[#allocation6 + $0xb8] sm:$0xff]
    %v299 = vld [vmem:[#allocation6 + $0xc0] sm:$0xff]
    %v300 = vld [vmem:[#allocation6 + $0xc8] sm:$0xff]
    %v301 = vld [vmem:[#allocation6 + $0xd0] sm:$0xff]
    %v302 = vld [vmem:[#allocation6 + $0xd8] sm:$0xff]
    %v303 = vld [vmem:[#allocation6 + $0xe0] sm:$0xff]
    %v304 = vld [vmem:[#allocation6 + $0xe8] sm:$0xff]
    %v305 = vld [vmem:[#allocation6 + $0xf0] sm:$0xff]
    %v306 = vld [vmem:[#allocation6 + $0xf8] sm:$0xff]
    %v307 = vpack.c.bf16 %v279, %v275
    %v308 = vpack.c.bf16 %v280, %v276
    %v309 = vpack.c.bf16 %v281, %v277
    %v310 = vpack.c.bf16 %v282, %v278
    %v311 = vpack.c.bf16 %v287, %v283
    %v312 = vpack.c.bf16 %v288, %v284
    %v313 = vpack.c.bf16 %v289, %v285
    %v314 = vpack.c.bf16 %v290, %v286
    %v315 = vpack.c.bf16 %v295, %v291
    %v316 = vpack.c.bf16 %v296, %v292
    %v317 = vpack.c.bf16 %v297, %v293
    %v318 = vpack.c.bf16 %v298, %v294
    %v319 = vpack.c.bf16 %v303, %v299
    %v320 = vpack.c.bf16 %v304, %v300
    %v321 = vpack.c.bf16 %v305, %v301
    %v322 = vpack.c.bf16 %v306, %v302
    %v323 = vld [vmem:[#allocation8] sm:$0xff]
    %v324 = vld [vmem:[#allocation8 + $0x8] sm:$0xff]
    %v325 = vld [vmem:[#allocation8 + $0x10] sm:$0xff]
    %v326 = vld [vmem:[#allocation8 + $0x18] sm:$0xff]
    %v327 = vld [vmem:[#allocation8 + $0x20] sm:$0xff]
    %v328 = vld [vmem:[#allocation8 + $0x28] sm:$0xff]
    %v329 = vld [vmem:[#allocation8 + $0x30] sm:$0xff]
    %v330 = vld [vmem:[#allocation8 + $0x38] sm:$0xff]
    %v331 = vld [vmem:[#allocation8 + $0x40] sm:$0xff]
    %v332 = vld [vmem:[#allocation8 + $0x48] sm:$0xff]
    %v333 = vld [vmem:[#allocation8 + $0x50] sm:$0xff]
    %v334 = vld [vmem:[#allocation8 + $0x58] sm:$0xff]
    %v335 = vld [vmem:[#allocation8 + $0x60] sm:$0xff]
    %v336 = vld [vmem:[#allocation8 + $0x68] sm:$0xff]
    %v337 = vld [vmem:[#allocation8 + $0x70] sm:$0xff]
    %v338 = vld [vmem:[#allocation8 + $0x78] sm:$0xff]
    %v339 = vld [vmem:[#allocation8 + $0x80] sm:$0xff]
    %v340 = vld [vmem:[#allocation8 + $0x88] sm:$0xff]
    %v341 = vld [vmem:[#allocation8 + $0x90] sm:$0xff]
    %v342 = vld [vmem:[#allocation8 + $0x98] sm:$0xff]
    %v343 = vld [vmem:[#allocation8 + $0xa0] sm:$0xff]
    %v344 = vld [vmem:[#allocation8 + $0xa8] sm:$0xff]
    %v345 = vld [vmem:[#allocation8 + $0xb0] sm:$0xff]
    %v346 = vld [vmem:[#allocation8 + $0xb8] sm:$0xff]
    %v347 = vld [vmem:[#allocation8 + $0xc0] sm:$0xff]
    %v348 = vld [vmem:[#allocation8 + $0xc8] sm:$0xff]
    %v349 = vld [vmem:[#allocation8 + $0xd0] sm:$0xff]
    %v350 = vld [vmem:[#allocation8 + $0xd8] sm:$0xff]
    %v351 = vld [vmem:[#allocation8 + $0xe0] sm:$0xff]
    %v352 = vld [vmem:[#allocation8 + $0xe8] sm:$0xff]
    %v353 = vld [vmem:[#allocation8 + $0xf0] sm:$0xff]
    %v354 = vld [vmem:[#allocation8 + $0xf8] sm:$0xff]
    %v355 = vpack.c.bf16 %v327, %v323
    %v356 = vpack.c.bf16 %v328, %v324
    %v357 = vpack.c.bf16 %v329, %v325
    %v358 = vpack.c.bf16 %v330, %v326
    %v359 = vpack.c.bf16 %v335, %v331
    %v360 = vpack.c.bf16 %v336, %v332
    %v361 = vpack.c.bf16 %v337, %v333
    %v362 = vpack.c.bf16 %v338, %v334
    %v363 = vpack.c.bf16 %v343, %v339
    %v364 = vpack.c.bf16 %v344, %v340
    %v365 = vpack.c.bf16 %v345, %v341
    %v366 = vpack.c.bf16 %v346, %v342
    %v367 = vpack.c.bf16 %v351, %v347
    %v368 = vpack.c.bf16 %v352, %v348
    %v369 = vpack.c.bf16 %v353, %v349
    %v370 = vpack.c.bf16 %v354, %v350
    %v371 = vld [vmem:[#allocation9] sm:$0xff]
    %v372 = vld [vmem:[#allocation9 + $0x8] sm:$0xff]
    %v373 = vld [vmem:[#allocation9 + $0x10] sm:$0xff]
    %v374 = vld [vmem:[#allocation9 + $0x18] sm:$0xff]
    %v375 = vld [vmem:[#allocation9 + $0x20] sm:$0xff]
    %v376 = vld [vmem:[#allocation9 + $0x28] sm:$0xff]
    %v377 = vld [vmem:[#allocation9 + $0x30] sm:$0xff]
    %v378 = vld [vmem:[#allocation9 + $0x38] sm:$0xff]
    %v379 = vld [vmem:[#allocation9 + $0x40] sm:$0xff]
    %v380 = vld [vmem:[#allocation9 + $0x48] sm:$0xff]
    %v381 = vld [vmem:[#allocation9 + $0x50] sm:$0xff]
    %v382 = vld [vmem:[#allocation9 + $0x58] sm:$0xff]
    %v383 = vld [vmem:[#allocation9 + $0x60] sm:$0xff]
    %v384 = vld [vmem:[#allocation9 + $0x68] sm:$0xff]
    %v385 = vld [vmem:[#allocation9 + $0x70] sm:$0xff]
    %v386 = vld [vmem:[#allocation9 + $0x78] sm:$0xff]
    %v387 = vld [vmem:[#allocation9 + $0x80] sm:$0xff]
    %v388 = vld [vmem:[#allocation9 + $0x88] sm:$0xff]
    %v389 = vld [vmem:[#allocation9 + $0x90] sm:$0xff]
    %v390 = vld [vmem:[#allocation9 + $0x98] sm:$0xff]
    %v391 = vld [vmem:[#allocation9 + $0xa0] sm:$0xff]
    %v392 = vld [vmem:[#allocation9 + $0xa8] sm:$0xff]
    %v393 = vld [vmem:[#allocation9 + $0xb0] sm:$0xff]
    %v394 = vld [vmem:[#allocation9 + $0xb8] sm:$0xff]
    %v395 = vld [vmem:[#allocation9 + $0xc0] sm:$0xff]
    %v396 = vld [vmem:[#allocation9 + $0xc8] sm:$0xff]
    %v397 = vld [vmem:[#allocation9 + $0xd0] sm:$0xff]
    %v398 = vld [vmem:[#allocation9 + $0xd8] sm:$0xff]
    %v399 = vld [vmem:[#allocation9 + $0xe0] sm:$0xff]
    %v400 = vld [vmem:[#allocation9 + $0xe8] sm:$0xff]
    %v401 = vld [vmem:[#allocation9 + $0xf0] sm:$0xff]
    %v402 = vld [vmem:[#allocation9 + $0xf8] sm:$0xff]
    %v403 = vld [vmem:[#allocation9 + $0x100] sm:$0xff]
    %v404 = vld [vmem:[#allocation9 + $0x108] sm:$0xff]
    %v405 = vld [vmem:[#allocation9 + $0x110] sm:$0xff]
    %v406 = vld [vmem:[#allocation9 + $0x118] sm:$0xff]
    %v407 = vld [vmem:[#allocation9 + $0x120] sm:$0xff]
    %v408 = vld [vmem:[#allocation9 + $0x128] sm:$0xff]
    %v409 = vld [vmem:[#allocation9 + $0x130] sm:$0xff]
    %v410 = vld [vmem:[#allocation9 + $0x138] sm:$0xff]
    %v411 = vld [vmem:[#allocation9 + $0x140] sm:$0xff]
    %v412 = vld [vmem:[#allocation9 + $0x148] sm:$0xff]
    %v413 = vld [vmem:[#allocation9 + $0x150] sm:$0xff]
    %v414 = vld [vmem:[#allocation9 + $0x158] sm:$0xff]
    %v415 = vld [vmem:[#allocation9 + $0x160] sm:$0xff]
    %v416 = vld [vmem:[#allocation9 + $0x168] sm:$0xff]
    %v417 = vld [vmem:[#allocation9 + $0x170] sm:$0xff]
    %v418 = vld [vmem:[#allocation9 + $0x178] sm:$0xff]
    %v419 = vld [vmem:[#allocation9 + $0x180] sm:$0xff]
    %v420 = vld [vmem:[#allocation9 + $0x188] sm:$0xff]
    %v421 = vld [vmem:[#allocation9 + $0x190] sm:$0xff]
    %v422 = vld [vmem:[#allocation9 + $0x198] sm:$0xff]
    %v423 = vld [vmem:[#allocation9 + $0x1a0] sm:$0xff]
    %v424 = vld [vmem:[#allocation9 + $0x1a8] sm:$0xff]
    %v425 = vld [vmem:[#allocation9 + $0x1b0] sm:$0xff]
    %v426 = vld [vmem:[#allocation9 + $0x1b8] sm:$0xff]
    %v427 = vld [vmem:[#allocation9 + $0x1c0] sm:$0xff]
    %v428 = vld [vmem:[#allocation9 + $0x1c8] sm:$0xff]
    %v429 = vld [vmem:[#allocation9 + $0x1d0] sm:$0xff]
    %v430 = vld [vmem:[#allocation9 + $0x1d8] sm:$0xff]
    %v431 = vld [vmem:[#allocation9 + $0x1e0] sm:$0xff]
    %v432 = vld [vmem:[#allocation9 + $0x1e8] sm:$0xff]
    %v433 = vld [vmem:[#allocation9 + $0x1f0] sm:$0xff]
    %v434 = vld [vmem:[#allocation9 + $0x1f8] sm:$0xff]
    %v435 = vld [vmem:[#allocation9 + $0x200] sm:$0xff]
    %v436 = vld [vmem:[#allocation9 + $0x208] sm:$0xff]
    %v437 = vld [vmem:[#allocation9 + $0x210] sm:$0xff]
    %v438 = vld [vmem:[#allocation9 + $0x218] sm:$0xff]
    %v439 = vld [vmem:[#allocation9 + $0x220] sm:$0xff]
    %v440 = vld [vmem:[#allocation9 + $0x228] sm:$0xff]
    %v441 = vld [vmem:[#allocation9 + $0x230] sm:$0xff]
    %v442 = vld [vmem:[#allocation9 + $0x238] sm:$0xff]
    %v443 = vld [vmem:[#allocation9 + $0x240] sm:$0xff]
    %v444 = vld [vmem:[#allocation9 + $0x248] sm:$0xff]
    %v445 = vld [vmem:[#allocation9 + $0x250] sm:$0xff]
    %v446 = vld [vmem:[#allocation9 + $0x258] sm:$0xff]
    %v447 = vld [vmem:[#allocation9 + $0x260] sm:$0xff]
    %v448 = vld [vmem:[#allocation9 + $0x268] sm:$0xff]
    %v449 = vld [vmem:[#allocation9 + $0x270] sm:$0xff]
    %v450 = vld [vmem:[#allocation9 + $0x278] sm:$0xff]
    %v451 = vld [vmem:[#allocation9 + $0x280] sm:$0xff]
    %v452 = vld [vmem:[#allocation9 + $0x288] sm:$0xff]
    %v453 = vld [vmem:[#allocation9 + $0x290] sm:$0xff]
    %v454 = vld [vmem:[#allocation9 + $0x298] sm:$0xff]
    %v455 = vld [vmem:[#allocation9 + $0x2a0] sm:$0xff]
    %v456 = vld [vmem:[#allocation9 + $0x2a8] sm:$0xff]
    %v457 = vld [vmem:[#allocation9 + $0x2b0] sm:$0xff]
    %v458 = vld [vmem:[#allocation9 + $0x2b8] sm:$0xff]
    %v459 = vld [vmem:[#allocation9 + $0x2c0] sm:$0xff]
    %v460 = vld [vmem:[#allocation9 + $0x2c8] sm:$0xff]
    %v461 = vld [vmem:[#allocation9 + $0x2d0] sm:$0xff]
    %v462 = vld [vmem:[#allocation9 + $0x2d8] sm:$0xff]
    %v463 = vld [vmem:[#allocation9 + $0x2e0] sm:$0xff]
    %v464 = vld [vmem:[#allocation9 + $0x2e8] sm:$0xff]
    %v465 = vld [vmem:[#allocation9 + $0x2f0] sm:$0xff]
    %v466 = vld [vmem:[#allocation9 + $0x2f8] sm:$0xff]
    %v467 = vld [vmem:[#allocation9 + $0x300] sm:$0xff]
    %v468 = vld [vmem:[#allocation9 + $0x308] sm:$0xff]
    %v469 = vld [vmem:[#allocation9 + $0x310] sm:$0xff]
    %v470 = vld [vmem:[#allocation9 + $0x318] sm:$0xff]
    %v471 = vld [vmem:[#allocation9 + $0x320] sm:$0xff]
    %v472 = vld [vmem:[#allocation9 + $0x328] sm:$0xff]
    %v473 = vld [vmem:[#allocation9 + $0x330] sm:$0xff]
    %v474 = vld [vmem:[#allocation9 + $0x338] sm:$0xff]
    %v475 = vld [vmem:[#allocation9 + $0x340] sm:$0xff]
    %v476 = vld [vmem:[#allocation9 + $0x348] sm:$0xff]
    %v477 = vld [vmem:[#allocation9 + $0x350] sm:$0xff]
    %v478 = vld [vmem:[#allocation9 + $0x358] sm:$0xff]
    %v479 = vld [vmem:[#allocation9 + $0x360] sm:$0xff]
    %v480 = vld [vmem:[#allocation9 + $0x368] sm:$0xff]
    %v481 = vld [vmem:[#allocation9 + $0x370] sm:$0xff]
    %v482 = vld [vmem:[#allocation9 + $0x378] sm:$0xff]
    %v483 = vld [vmem:[#allocation9 + $0x380] sm:$0xff]
    %v484 = vld [vmem:[#allocation9 + $0x388] sm:$0xff]
    %v485 = vld [vmem:[#allocation9 + $0x390] sm:$0xff]
    %v486 = vld [vmem:[#allocation9 + $0x398] sm:$0xff]
    %v487 = vld [vmem:[#allocation9 + $0x3a0] sm:$0xff]
    %v488 = vld [vmem:[#allocation9 + $0x3a8] sm:$0xff]
    %v489 = vld [vmem:[#allocation9 + $0x3b0] sm:$0xff]
    %v490 = vld [vmem:[#allocation9 + $0x3b8] sm:$0xff]
    %v491 = vld [vmem:[#allocation9 + $0x3c0] sm:$0xff]
    %v492 = vld [vmem:[#allocation9 + $0x3c8] sm:$0xff]
    %v493 = vld [vmem:[#allocation9 + $0x3d0] sm:$0xff]
    %v494 = vld [vmem:[#allocation9 + $0x3d8] sm:$0xff]
    %v495 = vld [vmem:[#allocation9 + $0x3e0] sm:$0xff]
    %v496 = vld [vmem:[#allocation9 + $0x3e8] sm:$0xff]
    %v497 = vld [vmem:[#allocation9 + $0x3f0] sm:$0xff]
    %v498 = vld [vmem:[#allocation9 + $0x3f8] sm:$0xff]
    %v499 = vld [vmem:[%s6] sm:$0xf]
    %v501 = vperm.slane %v499, 0
    %v502 = vperm.slane %v499, 1
    %v503 = vperm.slane %v499, 2
    %v504 = vperm.slane %v499, 3
    %v637 = vunpack.c.l.b16 %v371
    %v638 = vunpack.c.h.b16 %v371
    %v639 = vunpack.c.l.b16 %v372
    %v640 = vunpack.c.h.b16 %v372
    %v641 = vunpack.c.l.b16 %v373
    %v642 = vunpack.c.h.b16 %v373
    %v643 = vunpack.c.l.b16 %v374
    %v644 = vunpack.c.h.b16 %v374
    %v645 = vunpack.c.l.b16 %v375
    %v646 = vunpack.c.h.b16 %v375
    %v647 = vunpack.c.l.b16 %v376
    %v648 = vunpack.c.h.b16 %v376
    %v649 = vunpack.c.l.b16 %v377
    %v650 = vunpack.c.h.b16 %v377
    %v651 = vunpack.c.l.b16 %v378
    %v652 = vunpack.c.h.b16 %v378
    %v653 = vunpack.c.l.b16 %v379
    %v654 = vunpack.c.h.b16 %v379
    %v655 = vunpack.c.l.b16 %v380
    %v656 = vunpack.c.h.b16 %v380
    %v657 = vunpack.c.l.b16 %v381
    %v658 = vunpack.c.h.b16 %v381
    %v659 = vunpack.c.l.b16 %v382
    %v660 = vunpack.c.h.b16 %v382
    %v661 = vunpack.c.l.b16 %v383
    %v662 = vunpack.c.h.b16 %v383
    %v663 = vunpack.c.l.b16 %v384
    %v664 = vunpack.c.h.b16 %v384
    %v665 = vunpack.c.l.b16 %v385
    %v666 = vunpack.c.h.b16 %v385
    %v667 = vunpack.c.l.b16 %v386
    %v668 = vunpack.c.h.b16 %v386
    %v669 = vunpack.c.l.b16 %v387
    %v670 = vunpack.c.h.b16 %v387
    %v671 = vunpack.c.l.b16 %v388
    %v672 = vunpack.c.h.b16 %v388
    %v673 = vunpack.c.l.b16 %v389
    %v674 = vunpack.c.h.b16 %v389
    %v675 = vunpack.c.l.b16 %v390
    %v676 = vunpack.c.h.b16 %v390
    %v677 = vunpack.c.l.b16 %v391
    %v678 = vunpack.c.h.b16 %v391
    %v679 = vunpack.c.l.b16 %v392
    %v680 = vunpack.c.h.b16 %v392
    %v681 = vunpack.c.l.b16 %v393
    %v682 = vunpack.c.h.b16 %v393
    %v683 = vunpack.c.l.b16 %v394
    %v684 = vunpack.c.h.b16 %v394
    %v685 = vunpack.c.l.b16 %v395
    %v686 = vunpack.c.h.b16 %v395
    %v687 = vunpack.c.l.b16 %v396
    %v688 = vunpack.c.h.b16 %v396
    %v689 = vunpack.c.l.b16 %v397
    %v690 = vunpack.c.h.b16 %v397
    %v691 = vunpack.c.l.b16 %v398
    %v692 = vunpack.c.h.b16 %v398
    %v693 = vunpack.c.l.b16 %v399
    %v694 = vunpack.c.h.b16 %v399
    %v695 = vunpack.c.l.b16 %v400
    %v696 = vunpack.c.h.b16 %v400
    %v697 = vunpack.c.l.b16 %v401
    %v698 = vunpack.c.h.b16 %v401
    %v699 = vunpack.c.l.b16 %v402
    %v700 = vunpack.c.h.b16 %v402
    %v701 = vunpack.c.l.b16 %v403
    %v702 = vunpack.c.h.b16 %v403
    %v703 = vunpack.c.l.b16 %v404
    %v704 = vunpack.c.h.b16 %v404
    %v705 = vunpack.c.l.b16 %v405
    %v706 = vunpack.c.h.b16 %v405
    %v707 = vunpack.c.l.b16 %v406
    %v708 = vunpack.c.h.b16 %v406
    %v709 = vunpack.c.l.b16 %v407
    %v710 = vunpack.c.h.b16 %v407
    %v711 = vunpack.c.l.b16 %v408
    %v712 = vunpack.c.h.b16 %v408
    %v713 = vunpack.c.l.b16 %v409
    %v714 = vunpack.c.h.b16 %v409
    %v715 = vunpack.c.l.b16 %v410
    %v716 = vunpack.c.h.b16 %v410
    %v717 = vunpack.c.l.b16 %v411
    %v718 = vunpack.c.h.b16 %v411
    %v719 = vunpack.c.l.b16 %v412
    %v720 = vunpack.c.h.b16 %v412
    %v721 = vunpack.c.l.b16 %v413
    %v722 = vunpack.c.h.b16 %v413
    %v723 = vunpack.c.l.b16 %v414
    %v724 = vunpack.c.h.b16 %v414
    %v725 = vunpack.c.l.b16 %v415
    %v726 = vunpack.c.h.b16 %v415
    %v727 = vunpack.c.l.b16 %v416
    %v728 = vunpack.c.h.b16 %v416
    %v729 = vunpack.c.l.b16 %v417
    %v730 = vunpack.c.h.b16 %v417
    %v731 = vunpack.c.l.b16 %v418
    %v732 = vunpack.c.h.b16 %v418
    %v733 = vunpack.c.l.b16 %v419
    %v734 = vunpack.c.h.b16 %v419
    %v735 = vunpack.c.l.b16 %v420
    %v736 = vunpack.c.h.b16 %v420
    %v737 = vunpack.c.l.b16 %v421
    %v738 = vunpack.c.h.b16 %v421
    %v739 = vunpack.c.l.b16 %v422
    %v740 = vunpack.c.h.b16 %v422
    %v741 = vunpack.c.l.b16 %v423
    %v742 = vunpack.c.h.b16 %v423
    %v743 = vunpack.c.l.b16 %v424
    %v744 = vunpack.c.h.b16 %v424
    %v745 = vunpack.c.l.b16 %v425
    %v746 = vunpack.c.h.b16 %v425
    %v747 = vunpack.c.l.b16 %v426
    %v748 = vunpack.c.h.b16 %v426
    %v749 = vunpack.c.l.b16 %v427
    %v750 = vunpack.c.h.b16 %v427
    %v751 = vunpack.c.l.b16 %v428
    %v752 = vunpack.c.h.b16 %v428
    %v753 = vunpack.c.l.b16 %v429
    %v754 = vunpack.c.h.b16 %v429
    %v755 = vunpack.c.l.b16 %v430
    %v756 = vunpack.c.h.b16 %v430
    %v757 = vunpack.c.l.b16 %v431
    %v758 = vunpack.c.h.b16 %v431
    %v759 = vunpack.c.l.b16 %v432
    %v760 = vunpack.c.h.b16 %v432
    %v761 = vunpack.c.l.b16 %v433
    %v762 = vunpack.c.h.b16 %v433
    %v763 = vunpack.c.l.b16 %v434
    %v764 = vunpack.c.h.b16 %v434
    %v765 = vunpack.c.l.b16 %v435
    %v766 = vunpack.c.h.b16 %v435
    %v767 = vunpack.c.l.b16 %v436
    %v768 = vunpack.c.h.b16 %v436
    %v769 = vunpack.c.l.b16 %v437
    %v770 = vunpack.c.h.b16 %v437
    %v771 = vunpack.c.l.b16 %v438
    %v772 = vunpack.c.h.b16 %v438
    %v773 = vunpack.c.l.b16 %v439
    %v774 = vunpack.c.h.b16 %v439
    %v775 = vunpack.c.l.b16 %v440
    %v776 = vunpack.c.h.b16 %v440
    %v777 = vunpack.c.l.b16 %v441
    %v778 = vunpack.c.h.b16 %v441
    %v779 = vunpack.c.l.b16 %v442
    %v780 = vunpack.c.h.b16 %v442
    %v781 = vunpack.c.l.b16 %v443
    %v782 = vunpack.c.h.b16 %v443
    %v783 = vunpack.c.l.b16 %v444
    %v784 = vunpack.c.h.b16 %v444
    %v785 = vunpack.c.l.b16 %v445
    %v786 = vunpack.c.h.b16 %v445
    %v787 = vunpack.c.l.b16 %v446
    %v788 = vunpack.c.h.b16 %v446
    %v789 = vunpack.c.l.b16 %v447
    %v790 = vunpack.c.h.b16 %v447
    %v791 = vunpack.c.l.b16 %v448
    %v792 = vunpack.c.h.b16 %v448
    %v793 = vunpack.c.l.b16 %v449
    %v794 = vunpack.c.h.b16 %v449
    %v795 = vunpack.c.l.b16 %v450
    %v796 = vunpack.c.h.b16 %v450
    %v797 = vunpack.c.l.b16 %v451
    %v798 = vunpack.c.h.b16 %v451
    %v799 = vunpack.c.l.b16 %v452
    %v800 = vunpack.c.h.b16 %v452
    %v801 = vunpack.c.l.b16 %v453
    %v802 = vunpack.c.h.b16 %v453
    %v803 = vunpack.c.l.b16 %v454
    %v804 = vunpack.c.h.b16 %v454
    %v805 = vunpack.c.l.b16 %v455
    %v806 = vunpack.c.h.b16 %v455
    %v807 = vunpack.c.l.b16 %v456
    %v808 = vunpack.c.h.b16 %v456
    %v809 = vunpack.c.l.b16 %v457
    %v810 = vunpack.c.h.b16 %v457
    %v811 = vunpack.c.l.b16 %v458
    %v812 = vunpack.c.h.b16 %v458
    %v813 = vunpack.c.l.b16 %v459
    %v814 = vunpack.c.h.b16 %v459
    %v815 = vunpack.c.l.b16 %v460
    %v816 = vunpack.c.h.b16 %v460
    %v817 = vunpack.c.l.b16 %v461
    %v818 = vunpack.c.h.b16 %v461
    %v819 = vunpack.c.l.b16 %v462
    %v820 = vunpack.c.h.b16 %v462
    %v821 = vunpack.c.l.b16 %v463
    %v822 = vunpack.c.h.b16 %v463
    %v823 = vunpack.c.l.b16 %v464
    %v824 = vunpack.c.h.b16 %v464
    %v825 = vunpack.c.l.b16 %v465
    %v826 = vunpack.c.h.b16 %v465
    %v827 = vunpack.c.l.b16 %v466
    %v828 = vunpack.c.h.b16 %v466
    %v829 = vunpack.c.l.b16 %v467
    %v830 = vunpack.c.h.b16 %v467
    %v831 = vunpack.c.l.b16 %v468
    %v832 = vunpack.c.h.b16 %v468
    %v833 = vunpack.c.l.b16 %v469
    %v834 = vunpack.c.h.b16 %v469
    %v835 = vunpack.c.l.b16 %v470
    %v836 = vunpack.c.h.b16 %v470
    %v837 = vunpack.c.l.b16 %v471
    %v838 = vunpack.c.h.b16 %v471
    %v839 = vunpack.c.l.b16 %v472
    %v840 = vunpack.c.h.b16 %v472
    %v841 = vunpack.c.l.b16 %v473
    %v842 = vunpack.c.h.b16 %v473
    %v843 = vunpack.c.l.b16 %v474
    %v844 = vunpack.c.h.b16 %v474
    %v845 = vunpack.c.l.b16 %v475
    %v846 = vunpack.c.h.b16 %v475
    %v847 = vunpack.c.l.b16 %v476
    %v848 = vunpack.c.h.b16 %v476
    %v849 = vunpack.c.l.b16 %v477
    %v850 = vunpack.c.h.b16 %v477
    %v851 = vunpack.c.l.b16 %v478
    %v852 = vunpack.c.h.b16 %v478
    %v853 = vunpack.c.l.b16 %v479
    %v854 = vunpack.c.h.b16 %v479
    %v855 = vunpack.c.l.b16 %v480
    %v856 = vunpack.c.h.b16 %v480
    %v857 = vunpack.c.l.b16 %v481
    %v858 = vunpack.c.h.b16 %v481
    %v859 = vunpack.c.l.b16 %v482
    %v860 = vunpack.c.h.b16 %v482
    %v861 = vunpack.c.l.b16 %v483
    %v862 = vunpack.c.h.b16 %v483
    %v863 = vunpack.c.l.b16 %v484
    %v864 = vunpack.c.h.b16 %v484
    %v865 = vunpack.c.l.b16 %v485
    %v866 = vunpack.c.h.b16 %v485
    %v867 = vunpack.c.l.b16 %v486
    %v868 = vunpack.c.h.b16 %v486
    %v869 = vunpack.c.l.b16 %v487
    %v870 = vunpack.c.h.b16 %v487
    %v871 = vunpack.c.l.b16 %v488
    %v872 = vunpack.c.h.b16 %v488
    %v873 = vunpack.c.l.b16 %v489
    %v874 = vunpack.c.h.b16 %v489
    %v875 = vunpack.c.l.b16 %v490
    %v876 = vunpack.c.h.b16 %v490
    %v877 = vunpack.c.l.b16 %v491
    %v878 = vunpack.c.h.b16 %v491
    %v879 = vunpack.c.l.b16 %v492
    %v880 = vunpack.c.h.b16 %v492
    %v881 = vunpack.c.l.b16 %v493
    %v882 = vunpack.c.h.b16 %v493
    %v883 = vunpack.c.l.b16 %v494
    %v884 = vunpack.c.h.b16 %v494
    %v885 = vunpack.c.l.b16 %v495
    %v886 = vunpack.c.h.b16 %v495
    %v887 = vunpack.c.l.b16 %v496
    %v888 = vunpack.c.h.b16 %v496
    %v889 = vunpack.c.l.b16 %v497
    %v890 = vunpack.c.h.b16 %v497
    %v891 = vunpack.c.l.b16 %v498
    %v892 = vunpack.c.h.b16 %v498
    %v893 = vpack.c.b16 %v641, %v637
    %v894 = vpack.c.b16 %v642, %v638
    %v895 = vpack.c.b16 %v643, %v639
    %v896 = vpack.c.b16 %v644, %v640
    %v897 = vpack.c.b16 %v649, %v645
    %v898 = vpack.c.b16 %v650, %v646
    %v899 = vpack.c.b16 %v651, %v647
    %v900 = vpack.c.b16 %v652, %v648
    %v901 = vpack.c.b16 %v657, %v653
    %v902 = vpack.c.b16 %v658, %v654
    %v903 = vpack.c.b16 %v659, %v655
    %v904 = vpack.c.b16 %v660, %v656
    %v905 = vpack.c.b16 %v665, %v661
    %v906 = vpack.c.b16 %v666, %v662
    %v907 = vpack.c.b16 %v667, %v663
    %v908 = vpack.c.b16 %v668, %v664
    %v909 = vpack.c.b16 %v673, %v669
    %v910 = vpack.c.b16 %v674, %v670
    %v911 = vpack.c.b16 %v675, %v671
    %v912 = vpack.c.b16 %v676, %v672
    %v913 = vpack.c.b16 %v681, %v677
    %v914 = vpack.c.b16 %v682, %v678
    %v915 = vpack.c.b16 %v683, %v679
    %v916 = vpack.c.b16 %v684, %v680
    %v917 = vpack.c.b16 %v689, %v685
    %v918 = vpack.c.b16 %v690, %v686
    %v919 = vpack.c.b16 %v691, %v687
    %v920 = vpack.c.b16 %v692, %v688
    %v921 = vpack.c.b16 %v697, %v693
    %v922 = vpack.c.b16 %v698, %v694
    %v923 = vpack.c.b16 %v699, %v695
    %v924 = vpack.c.b16 %v700, %v696
    %v925 = vpack.c.b16 %v705, %v701
    %v926 = vpack.c.b16 %v706, %v702
    %v927 = vpack.c.b16 %v707, %v703
    %v928 = vpack.c.b16 %v708, %v704
    %v929 = vpack.c.b16 %v713, %v709
    %v930 = vpack.c.b16 %v714, %v710
    %v931 = vpack.c.b16 %v715, %v711
    %v932 = vpack.c.b16 %v716, %v712
    %v933 = vpack.c.b16 %v721, %v717
    %v934 = vpack.c.b16 %v722, %v718
    %v935 = vpack.c.b16 %v723, %v719
    %v936 = vpack.c.b16 %v724, %v720
    %v937 = vpack.c.b16 %v729, %v725
    %v938 = vpack.c.b16 %v730, %v726
    %v939 = vpack.c.b16 %v731, %v727
    %v940 = vpack.c.b16 %v732, %v728
    %v941 = vpack.c.b16 %v737, %v733
    %v942 = vpack.c.b16 %v738, %v734
    %v943 = vpack.c.b16 %v739, %v735
    %v944 = vpack.c.b16 %v740, %v736
    %v945 = vpack.c.b16 %v745, %v741
    %v946 = vpack.c.b16 %v746, %v742
    %v947 = vpack.c.b16 %v747, %v743
    %v948 = vpack.c.b16 %v748, %v744
    %v949 = vpack.c.b16 %v753, %v749
    %v950 = vpack.c.b16 %v754, %v750
    %v951 = vpack.c.b16 %v755, %v751
    %v952 = vpack.c.b16 %v756, %v752
    %v953 = vpack.c.b16 %v761, %v757
    %v954 = vpack.c.b16 %v762, %v758
    %v955 = vpack.c.b16 %v763, %v759
    %v956 = vpack.c.b16 %v764, %v760
    %v957 = vpack.c.b16 %v769, %v765
    %v958 = vpack.c.b16 %v770, %v766
    %v959 = vpack.c.b16 %v771, %v767
    %v960 = vpack.c.b16 %v772, %v768
    %v961 = vpack.c.b16 %v777, %v773
    %v962 = vpack.c.b16 %v778, %v774
    %v963 = vpack.c.b16 %v779, %v775
    %v964 = vpack.c.b16 %v780, %v776
    %v965 = vpack.c.b16 %v785, %v781
    %v966 = vpack.c.b16 %v786, %v782
    %v967 = vpack.c.b16 %v787, %v783
    %v968 = vpack.c.b16 %v788, %v784
    %v969 = vpack.c.b16 %v793, %v789
    %v970 = vpack.c.b16 %v794, %v790
    %v971 = vpack.c.b16 %v795, %v791
    %v972 = vpack.c.b16 %v796, %v792
    %v973 = vpack.c.b16 %v801, %v797
    %v974 = vpack.c.b16 %v802, %v798
    %v975 = vpack.c.b16 %v803, %v799
    %v976 = vpack.c.b16 %v804, %v800
    %v977 = vpack.c.b16 %v809, %v805
    %v978 = vpack.c.b16 %v810, %v806
    %v979 = vpack.c.b16 %v811, %v807
    %v980 = vpack.c.b16 %v812, %v808
    %v981 = vpack.c.b16 %v817, %v813
    %v982 = vpack.c.b16 %v818, %v814
    %v983 = vpack.c.b16 %v819, %v815
    %v984 = vpack.c.b16 %v820, %v816
    %v985 = vpack.c.b16 %v825, %v821
    %v986 = vpack.c.b16 %v826, %v822
    %v987 = vpack.c.b16 %v827, %v823
    %v988 = vpack.c.b16 %v828, %v824
    %v989 = vpack.c.b16 %v833, %v829
    %v990 = vpack.c.b16 %v834, %v830
    %v991 = vpack.c.b16 %v835, %v831
    %v992 = vpack.c.b16 %v836, %v832
    %v993 = vpack.c.b16 %v841, %v837
    %v994 = vpack.c.b16 %v842, %v838
    %v995 = vpack.c.b16 %v843, %v839
    %v996 = vpack.c.b16 %v844, %v840
    %v997 = vpack.c.b16 %v849, %v845
    %v998 = vpack.c.b16 %v850, %v846
    %v999 = vpack.c.b16 %v851, %v847
    %v1000 = vpack.c.b16 %v852, %v848
    %v1001 = vpack.c.b16 %v857, %v853
    %v1002 = vpack.c.b16 %v858, %v854
    %v1003 = vpack.c.b16 %v859, %v855
    %v1004 = vpack.c.b16 %v860, %v856
    %v1005 = vpack.c.b16 %v865, %v861
    %v1006 = vpack.c.b16 %v866, %v862
    %v1007 = vpack.c.b16 %v867, %v863
    %v1008 = vpack.c.b16 %v868, %v864
    %v1009 = vpack.c.b16 %v873, %v869
    %v1010 = vpack.c.b16 %v874, %v870
    %v1011 = vpack.c.b16 %v875, %v871
    %v1012 = vpack.c.b16 %v876, %v872
    %v1013 = vpack.c.b16 %v881, %v877
    %v1014 = vpack.c.b16 %v882, %v878
    %v1015 = vpack.c.b16 %v883, %v879
    %v1016 = vpack.c.b16 %v884, %v880
    %v1017 = vpack.c.b16 %v889, %v885
    %v1018 = vpack.c.b16 %v890, %v886
    %v1019 = vpack.c.b16 %v891, %v887
    %v1020 = vpack.c.b16 %v892, %v888
    %1149 = vmatpush.bf16.msra.mxu0 %v921
    %1150 = vmatpush.bf16.msra.mxu0 %v917
    %1151 = vmatpush.bf16.msra.mxu0 %v913
    %1152 = vmatpush.bf16.msra.mxu0 %v909
    %1153 = vmatpush.bf16.msra.mxu0 %v905
    %1154 = vmatpush.bf16.msra.mxu0 %v901
    %1155 = vmatpush.bf16.msra.mxu0 %v897
    %1156 = vmatpush.bf16.msra.mxu0 %v893
    %1157 = vmatmul.bf16.gmra.mxu0 %v259
    %v1158 = vpop.f32.mrf.mxu0
    %v1159 = vadd.f32 %v501, %v1158
    %v1160 = vpop.f32.mrf.mxu0
    %v1161 = vadd.f32 %v501, %v1160
    %1162 = vmatmul.bf16.gmra.mxu0 %v263
    %v1163 = vpop.f32.mrf.mxu0
    %v1164 = vadd.f32 %v501, %v1163
    %v1165 = vpop.f32.mrf.mxu0
    %v1166 = vadd.f32 %v501, %v1165
    %1167 = vmatmul.bf16.gmra.mxu0 %v267
    %v1168 = vpop.f32.mrf.mxu0
    %v1169 = vadd.f32 %v501, %v1168
    %v1170 = vpop.f32.mrf.mxu0
    %v1171 = vadd.f32 %v501, %v1170
    %1172 = vmatmul.bf16.gmra.mxu0 %v271
    %v1173 = vpop.f32.mrf.mxu0
    %v1174 = vadd.f32 %v501, %v1173
    %v1175 = vpop.f32.mrf.mxu0
    %v1176 = vadd.f32 %v501, %v1175
    %1177 = vdwg.mxu0
    %1178 = vmatpush.bf16.msra.mxu0 %v953
    %1179 = vmatpush.bf16.msra.mxu0 %v949
    %1180 = vmatpush.bf16.msra.mxu0 %v945
    %1181 = vmatpush.bf16.msra.mxu0 %v941
    %1182 = vmatpush.bf16.msra.mxu0 %v937
    %1183 = vmatpush.bf16.msra.mxu0 %v933
    %1184 = vmatpush.bf16.msra.mxu0 %v929
    %1185 = vmatpush.bf16.msra.mxu0 %v925
    %1186 = vmatmul.bf16.gmra.mxu0 %v260
    %v1187 = vpop.f32.mrf.mxu0
    %v1188 = vadd.f32 %v1159, %v1187
    %v1189 = vpop.f32.mrf.mxu0
    %v1190 = vadd.f32 %v1161, %v1189
    %1191 = vmatmul.bf16.gmra.mxu0 %v264
    %v1192 = vpop.f32.mrf.mxu0
    %v1193 = vadd.f32 %v1164, %v1192
    %v1194 = vpop.f32.mrf.mxu0
    %v1195 = vadd.f32 %v1166, %v1194
    %1196 = vmatmul.bf16.gmra.mxu0 %v268
    %v1197 = vpop.f32.mrf.mxu0
    %v1198 = vadd.f32 %v1169, %v1197
    %v1199 = vpop.f32.mrf.mxu0
    %v1200 = vadd.f32 %v1171, %v1199
    %1201 = vmatmul.bf16.gmra.mxu0 %v272
    %v1202 = vpop.f32.mrf.mxu0
    %v1203 = vadd.f32 %v1174, %v1202
    %v1204 = vpop.f32.mrf.mxu0
    %v1205 = vadd.f32 %v1176, %v1204
    %1206 = vdwg.mxu0
    %1207 = vmatpush.bf16.msra.mxu0 %v985
    %1208 = vmatpush.bf16.msra.mxu0 %v981
    %1209 = vmatpush.bf16.msra.mxu0 %v977
    %1210 = vmatpush.bf16.msra.mxu0 %v973
    %1211 = vmatpush.bf16.msra.mxu0 %v969
    %1212 = vmatpush.bf16.msra.mxu0 %v965
    %1213 = vmatpush.bf16.msra.mxu0 %v961
    %1214 = vmatpush.bf16.msra.mxu0 %v957
    %1215 = vmatmul.bf16.gmra.mxu0 %v261
    %v1216 = vpop.f32.mrf.mxu0
    %v1217 = vadd.f32 %v1188, %v1216
    %v1218 = vpop.f32.mrf.mxu0
    %v1219 = vadd.f32 %v1190, %v1218
    %1220 = vmatmul.bf16.gmra.mxu0 %v265
    %v1221 = vpop.f32.mrf.mxu0
    %v1222 = vadd.f32 %v1193, %v1221
    %v1223 = vpop.f32.mrf.mxu0
    %v1224 = vadd.f32 %v1195, %v1223
    %1225 = vmatmul.bf16.gmra.mxu0 %v269
    %v1226 = vpop.f32.mrf.mxu0
    %v1227 = vadd.f32 %v1198, %v1226
    %v1228 = vpop.f32.mrf.mxu0
    %v1229 = vadd.f32 %v1200, %v1228
    %1230 = vmatmul.bf16.gmra.mxu0 %v273
    %v1231 = vpop.f32.mrf.mxu0
    %v1232 = vadd.f32 %v1203, %v1231
    %v1233 = vpop.f32.mrf.mxu0
    %v1234 = vadd.f32 %v1205, %v1233
    %1235 = vdwg.mxu0
    %1236 = vmatpush.bf16.msra.mxu0 %v1017
    %1237 = vmatpush.bf16.msra.mxu0 %v1013
    %1238 = vmatpush.bf16.msra.mxu0 %v1009
    %1239 = vmatpush.bf16.msra.mxu0 %v1005
    %1240 = vmatpush.bf16.msra.mxu0 %v1001
    %1241 = vmatpush.bf16.msra.mxu0 %v997
    %1242 = vmatpush.bf16.msra.mxu0 %v993
    %1243 = vmatpush.bf16.msra.mxu0 %v989
    %1244 = vmatmul.bf16.gmra.mxu0 %v262
    %v1245 = vpop.f32.mrf.mxu0
    %v1246 = vadd.f32 %v1217, %v1245
    %v1247 = vpop.f32.mrf.mxu0
    %v1248 = vadd.f32 %v1219, %v1247
    %1249 = vmatmul.bf16.gmra.mxu0 %v266
    %v1250 = vpop.f32.mrf.mxu0
    %v1251 = vadd.f32 %v1222, %v1250
    %v1252 = vpop.f32.mrf.mxu0
    %v1253 = vadd.f32 %v1224, %v1252
    %1254 = vmatmul.bf16.gmra.mxu0 %v270
    %v1255 = vpop.f32.mrf.mxu0
    %v1256 = vadd.f32 %v1227, %v1255
    %v1257 = vpop.f32.mrf.mxu0
    %v1258 = vadd.f32 %v1229, %v1257
    %1259 = vmatmul.bf16.gmra.mxu0 %v274
    %v1260 = vpop.f32.mrf.mxu0
    %v1261 = vadd.f32 %v1232, %v1260
    %v1262 = vpop.f32.mrf.mxu0
    %v1263 = vadd.f32 %v1234, %v1262
    %1264 = vdwg.mxu0
    %1265 = vmatpush.bf16.msra.mxu0 %v922
    %1266 = vmatpush.bf16.msra.mxu0 %v918
    %1267 = vmatpush.bf16.msra.mxu0 %v914
    %1268 = vmatpush.bf16.msra.mxu0 %v910
    %1269 = vmatpush.bf16.msra.mxu0 %v906
    %1270 = vmatpush.bf16.msra.mxu0 %v902
    %1271 = vmatpush.bf16.msra.mxu0 %v898
    %1272 = vmatpush.bf16.msra.mxu0 %v894
    %1273 = vmatmul.bf16.gmra.mxu0 %v259
    %v1274 = vpop.f32.mrf.mxu0
    %v1275 = vadd.f32 %v502, %v1274
    %v1276 = vpop.f32.mrf.mxu0
    %v1277 = vadd.f32 %v502, %v1276
    %1278 = vmatmul.bf16.gmra.mxu0 %v263
    %v1279 = vpop.f32.mrf.mxu0
    %v1280 = vadd.f32 %v502, %v1279
    %v1281 = vpop.f32.mrf.mxu0
    %v1282 = vadd.f32 %v502, %v1281
    %1283 = vmatmul.bf16.gmra.mxu0 %v267
    %v1284 = vpop.f32.mrf.mxu0
    %v1285 = vadd.f32 %v502, %v1284
    %v1286 = vpop.f32.mrf.mxu0
    %v1287 = vadd.f32 %v502, %v1286
    %1288 = vmatmul.bf16.gmra.mxu0 %v271
    %v1289 = vpop.f32.mrf.mxu0
    %v1290 = vadd.f32 %v502, %v1289
    %v1291 = vpop.f32.mrf.mxu0
    %v1292 = vadd.f32 %v502, %v1291
    %1293 = vdwg.mxu0
    %1294 = vmatpush.bf16.msra.mxu0 %v954
    %1295 = vmatpush.bf16.msra.mxu0 %v950
    %1296 = vmatpush.bf16.msra.mxu0 %v946
    %1297 = vmatpush.bf16.msra.mxu0 %v942
    %1298 = vmatpush.bf16.msra.mxu0 %v938
    %1299 = vmatpush.bf16.msra.mxu0 %v934
    %1300 = vmatpush.bf16.msra.mxu0 %v930
    %1301 = vmatpush.bf16.msra.mxu0 %v926
    %1302 = vmatmul.bf16.gmra.mxu0 %v260
    %v1303 = vpop.f32.mrf.mxu0
    %v1304 = vadd.f32 %v1275, %v1303
    %v1305 = vpop.f32.mrf.mxu0
    %v1306 = vadd.f32 %v1277, %v1305
    %1307 = vmatmul.bf16.gmra.mxu0 %v264
    %v1308 = vpop.f32.mrf.mxu0
    %v1309 = vadd.f32 %v1280, %v1308
    %v1310 = vpop.f32.mrf.mxu0
    %v1311 = vadd.f32 %v1282, %v1310
    %1312 = vmatmul.bf16.gmra.mxu0 %v268
    %v1313 = vpop.f32.mrf.mxu0
    %v1314 = vadd.f32 %v1285, %v1313
    %v1315 = vpop.f32.mrf.mxu0
    %v1316 = vadd.f32 %v1287, %v1315
    %1317 = vmatmul.bf16.gmra.mxu0 %v272
    %v1318 = vpop.f32.mrf.mxu0
    %v1319 = vadd.f32 %v1290, %v1318
    %v1320 = vpop.f32.mrf.mxu0
    %v1321 = vadd.f32 %v1292, %v1320
    %1322 = vdwg.mxu0
    %1323 = vmatpush.bf16.msra.mxu0 %v986
    %1324 = vmatpush.bf16.msra.mxu0 %v982
    %1325 = vmatpush.bf16.msra.mxu0 %v978
    %1326 = vmatpush.bf16.msra.mxu0 %v974
    %1327 = vmatpush.bf16.msra.mxu0 %v970
    %1328 = vmatpush.bf16.msra.mxu0 %v966
    %1329 = vmatpush.bf16.msra.mxu0 %v962
    %1330 = vmatpush.bf16.msra.mxu0 %v958
    %1331 = vmatmul.bf16.gmra.mxu0 %v261
    %v1332 = vpop.f32.mrf.mxu0
    %v1333 = vadd.f32 %v1304, %v1332
    %v1334 = vpop.f32.mrf.mxu0
    %v1335 = vadd.f32 %v1306, %v1334
    %1336 = vmatmul.bf16.gmra.mxu0 %v265
    %v1337 = vpop.f32.mrf.mxu0
    %v1338 = vadd.f32 %v1309, %v1337
    %v1339 = vpop.f32.mrf.mxu0
    %v1340 = vadd.f32 %v1311, %v1339
    %1341 = vmatmul.bf16.gmra.mxu0 %v269
    %v1342 = vpop.f32.mrf.mxu0
    %v1343 = vadd.f32 %v1314, %v1342
    %v1344 = vpop.f32.mrf.mxu0
    %v1345 = vadd.f32 %v1316, %v1344
    %1346 = vmatmul.bf16.gmra.mxu0 %v273
    %v1347 = vpop.f32.mrf.mxu0
    %v1348 = vadd.f32 %v1319, %v1347
    %v1349 = vpop.f32.mrf.mxu0
    %v1350 = vadd.f32 %v1321, %v1349
    %1351 = vdwg.mxu0
    %1352 = vmatpush.bf16.msra.mxu0 %v1018
    %1353 = vmatpush.bf16.msra.mxu0 %v1014
    %1354 = vmatpush.bf16.msra.mxu0 %v1010
    %1355 = vmatpush.bf16.msra.mxu0 %v1006
    %1356 = vmatpush.bf16.msra.mxu0 %v1002
    %1357 = vmatpush.bf16.msra.mxu0 %v998
    %1358 = vmatpush.bf16.msra.mxu0 %v994
    %1359 = vmatpush.bf16.msra.mxu0 %v990
    %1360 = vmatmul.bf16.gmra.mxu0 %v262
    %v1361 = vpop.f32.mrf.mxu0
    %v1362 = vadd.f32 %v1333, %v1361
    %v1363 = vpop.f32.mrf.mxu0
    %v1364 = vadd.f32 %v1335, %v1363
    %1365 = vmatmul.bf16.gmra.mxu0 %v266
    %v1366 = vpop.f32.mrf.mxu0
    %v1367 = vadd.f32 %v1338, %v1366
    %v1368 = vpop.f32.mrf.mxu0
    %v1369 = vadd.f32 %v1340, %v1368
    %1370 = vmatmul.bf16.gmra.mxu0 %v270
    %v1371 = vpop.f32.mrf.mxu0
    %v1372 = vadd.f32 %v1343, %v1371
    %v1373 = vpop.f32.mrf.mxu0
    %v1374 = vadd.f32 %v1345, %v1373
    %1375 = vmatmul.bf16.gmra.mxu0 %v274
    %v1376 = vpop.f32.mrf.mxu0
    %v1377 = vadd.f32 %v1348, %v1376
    %v1378 = vpop.f32.mrf.mxu0
    %v1379 = vadd.f32 %v1350, %v1378
    %1380 = vdwg.mxu0
    %1381 = vmatpush.bf16.msra.mxu0 %v923
    %1382 = vmatpush.bf16.msra.mxu0 %v919
    %1383 = vmatpush.bf16.msra.mxu0 %v915
    %1384 = vmatpush.bf16.msra.mxu0 %v911
    %1385 = vmatpush.bf16.msra.mxu0 %v907
    %1386 = vmatpush.bf16.msra.mxu0 %v903
    %1387 = vmatpush.bf16.msra.mxu0 %v899
    %1388 = vmatpush.bf16.msra.mxu0 %v895
    %1389 = vmatmul.bf16.gmra.mxu0 %v259
    %v1390 = vpop.f32.mrf.mxu0
    %v1391 = vadd.f32 %v503, %v1390
    %v1392 = vpop.f32.mrf.mxu0
    %v1393 = vadd.f32 %v503, %v1392
    %1394 = vmatmul.bf16.gmra.mxu0 %v263
    %v1395 = vpop.f32.mrf.mxu0
    %v1396 = vadd.f32 %v503, %v1395
    %v1397 = vpop.f32.mrf.mxu0
    %v1398 = vadd.f32 %v503, %v1397
    %1399 = vmatmul.bf16.gmra.mxu0 %v267
    %v1400 = vpop.f32.mrf.mxu0
    %v1401 = vadd.f32 %v503, %v1400
    %v1402 = vpop.f32.mrf.mxu0
    %v1403 = vadd.f32 %v503, %v1402
    %1404 = vmatmul.bf16.gmra.mxu0 %v271
    %v1405 = vpop.f32.mrf.mxu0
    %v1406 = vadd.f32 %v503, %v1405
    %v1407 = vpop.f32.mrf.mxu0
    %v1408 = vadd.f32 %v503, %v1407
    %1409 = vdwg.mxu0
    %1410 = vmatpush.bf16.msra.mxu0 %v955
    %1411 = vmatpush.bf16.msra.mxu0 %v951
    %1412 = vmatpush.bf16.msra.mxu0 %v947
    %1413 = vmatpush.bf16.msra.mxu0 %v943
    %1414 = vmatpush.bf16.msra.mxu0 %v939
    %1415 = vmatpush.bf16.msra.mxu0 %v935
    %1416 = vmatpush.bf16.msra.mxu0 %v931
    %1417 = vmatpush.bf16.msra.mxu0 %v927
    %1418 = vmatmul.bf16.gmra.mxu0 %v260
    %v1419 = vpop.f32.mrf.mxu0
    %v1420 = vadd.f32 %v1391, %v1419
    %v1421 = vpop.f32.mrf.mxu0
    %v1422 = vadd.f32 %v1393, %v1421
    %1423 = vmatmul.bf16.gmra.mxu0 %v264
    %v1424 = vpop.f32.mrf.mxu0
    %v1425 = vadd.f32 %v1396, %v1424
    %v1426 = vpop.f32.mrf.mxu0
    %v1427 = vadd.f32 %v1398, %v1426
    %1428 = vmatmul.bf16.gmra.mxu0 %v268
    %v1429 = vpop.f32.mrf.mxu0
    %v1430 = vadd.f32 %v1401, %v1429
    %v1431 = vpop.f32.mrf.mxu0
    %v1432 = vadd.f32 %v1403, %v1431
    %1433 = vmatmul.bf16.gmra.mxu0 %v272
    %v1434 = vpop.f32.mrf.mxu0
    %v1435 = vadd.f32 %v1406, %v1434
    %v1436 = vpop.f32.mrf.mxu0
    %v1437 = vadd.f32 %v1408, %v1436
    %1438 = vdwg.mxu0
    %1439 = vmatpush.bf16.msra.mxu0 %v987
    %1440 = vmatpush.bf16.msra.mxu0 %v983
    %1441 = vmatpush.bf16.msra.mxu0 %v979
    %1442 = vmatpush.bf16.msra.mxu0 %v975
    %1443 = vmatpush.bf16.msra.mxu0 %v971
    %1444 = vmatpush.bf16.msra.mxu0 %v967
    %1445 = vmatpush.bf16.msra.mxu0 %v963
    %1446 = vmatpush.bf16.msra.mxu0 %v959
    %1447 = vmatmul.bf16.gmra.mxu0 %v261
    %v1448 = vpop.f32.mrf.mxu0
    %v1449 = vadd.f32 %v1420, %v1448
    %v1450 = vpop.f32.mrf.mxu0
    %v1451 = vadd.f32 %v1422, %v1450
    %1452 = vmatmul.bf16.gmra.mxu0 %v265
    %v1453 = vpop.f32.mrf.mxu0
    %v1454 = vadd.f32 %v1425, %v1453
    %v1455 = vpop.f32.mrf.mxu0
    %v1456 = vadd.f32 %v1427, %v1455
    %1457 = vmatmul.bf16.gmra.mxu0 %v269
    %v1458 = vpop.f32.mrf.mxu0
    %v1459 = vadd.f32 %v1430, %v1458
    %v1460 = vpop.f32.mrf.mxu0
    %v1461 = vadd.f32 %v1432, %v1460
    %1462 = vmatmul.bf16.gmra.mxu0 %v273
    %v1463 = vpop.f32.mrf.mxu0
    %v1464 = vadd.f32 %v1435, %v1463
    %v1465 = vpop.f32.mrf.mxu0
    %v1466 = vadd.f32 %v1437, %v1465
    %1467 = vdwg.mxu0
    %1468 = vmatpush.bf16.msra.mxu0 %v1019
    %1469 = vmatpush.bf16.msra.mxu0 %v1015
    %1470 = vmatpush.bf16.msra.mxu0 %v1011
    %1471 = vmatpush.bf16.msra.mxu0 %v1007
    %1472 = vmatpush.bf16.msra.mxu0 %v1003
    %1473 = vmatpush.bf16.msra.mxu0 %v999
    %1474 = vmatpush.bf16.msra.mxu0 %v995
    %1475 = vmatpush.bf16.msra.mxu0 %v991
    %1476 = vmatmul.bf16.gmra.mxu0 %v262
    %v1477 = vpop.f32.mrf.mxu0
    %v1478 = vadd.f32 %v1449, %v1477
    %v1479 = vpop.f32.mrf.mxu0
    %v1480 = vadd.f32 %v1451, %v1479
    %1481 = vmatmul.bf16.gmra.mxu0 %v266
    %v1482 = vpop.f32.mrf.mxu0
    %v1483 = vadd.f32 %v1454, %v1482
    %v1484 = vpop.f32.mrf.mxu0
    %v1485 = vadd.f32 %v1456, %v1484
    %1486 = vmatmul.bf16.gmra.mxu0 %v270
    %v1487 = vpop.f32.mrf.mxu0
    %v1488 = vadd.f32 %v1459, %v1487
    %v1489 = vpop.f32.mrf.mxu0
    %v1490 = vadd.f32 %v1461, %v1489
    %1491 = vmatmul.bf16.gmra.mxu0 %v274
    %v1492 = vpop.f32.mrf.mxu0
    %v1493 = vadd.f32 %v1464, %v1492
    %v1494 = vpop.f32.mrf.mxu0
    %v1495 = vadd.f32 %v1466, %v1494
    %1496 = vdwg.mxu0
    %1497 = vmatpush.bf16.msra.mxu0 %v924
    %1498 = vmatpush.bf16.msra.mxu0 %v920
    %1499 = vmatpush.bf16.msra.mxu0 %v916
    %1500 = vmatpush.bf16.msra.mxu0 %v912
    %1501 = vmatpush.bf16.msra.mxu0 %v908
    %1502 = vmatpush.bf16.msra.mxu0 %v904
    %1503 = vmatpush.bf16.msra.mxu0 %v900
    %1504 = vmatpush.bf16.msra.mxu0 %v896
    %1505 = vmatmul.bf16.gmra.mxu0 %v259
    %v1506 = vpop.f32.mrf.mxu0
    %v1507 = vadd.f32 %v504, %v1506
    %v1508 = vpop.f32.mrf.mxu0
    %v1509 = vadd.f32 %v504, %v1508
    %1510 = vmatmul.bf16.gmra.mxu0 %v263
    %v1511 = vpop.f32.mrf.mxu0
    %v1512 = vadd.f32 %v504, %v1511
    %v1513 = vpop.f32.mrf.mxu0
    %v1514 = vadd.f32 %v504, %v1513
    %1515 = vmatmul.bf16.gmra.mxu0 %v267
    %v1516 = vpop.f32.mrf.mxu0
    %v1517 = vadd.f32 %v504, %v1516
    %v1518 = vpop.f32.mrf.mxu0
    %v1519 = vadd.f32 %v504, %v1518
    %1520 = vmatmul.bf16.gmra.mxu0 %v271
    %v1521 = vpop.f32.mrf.mxu0
    %v1522 = vadd.f32 %v504, %v1521
    %v1523 = vpop.f32.mrf.mxu0
    %v1524 = vadd.f32 %v504, %v1523
    %1525 = vdwg.mxu0
    %1526 = vmatpush.bf16.msra.mxu0 %v956
    %1527 = vmatpush.bf16.msra.mxu0 %v952
    %1528 = vmatpush.bf16.msra.mxu0 %v948
    %1529 = vmatpush.bf16.msra.mxu0 %v944
    %1530 = vmatpush.bf16.msra.mxu0 %v940
    %1531 = vmatpush.bf16.msra.mxu0 %v936
    %1532 = vmatpush.bf16.msra.mxu0 %v932
    %1533 = vmatpush.bf16.msra.mxu0 %v928
    %1534 = vmatmul.bf16.gmra.mxu0 %v260
    %v1535 = vpop.f32.mrf.mxu0
    %v1536 = vadd.f32 %v1507, %v1535
    %v1537 = vpop.f32.mrf.mxu0
    %v1538 = vadd.f32 %v1509, %v1537
    %1539 = vmatmul.bf16.gmra.mxu0 %v264
    %v1540 = vpop.f32.mrf.mxu0
    %v1541 = vadd.f32 %v1512, %v1540
    %v1542 = vpop.f32.mrf.mxu0
    %v1543 = vadd.f32 %v1514, %v1542
    %1544 = vmatmul.bf16.gmra.mxu0 %v268
    %v1545 = vpop.f32.mrf.mxu0
    %v1546 = vadd.f32 %v1517, %v1545
    %v1547 = vpop.f32.mrf.mxu0
    %v1548 = vadd.f32 %v1519, %v1547
    %1549 = vmatmul.bf16.gmra.mxu0 %v272
    %v1550 = vpop.f32.mrf.mxu0
    %v1551 = vadd.f32 %v1522, %v1550
    %v1552 = vpop.f32.mrf.mxu0
    %v1553 = vadd.f32 %v1524, %v1552
    %1554 = vdwg.mxu0
    %1555 = vmatpush.bf16.msra.mxu0 %v988
    %1556 = vmatpush.bf16.msra.mxu0 %v984
    %1557 = vmatpush.bf16.msra.mxu0 %v980
    %1558 = vmatpush.bf16.msra.mxu0 %v976
    %1559 = vmatpush.bf16.msra.mxu0 %v972
    %1560 = vmatpush.bf16.msra.mxu0 %v968
    %1561 = vmatpush.bf16.msra.mxu0 %v964
    %1562 = vmatpush.bf16.msra.mxu0 %v960
    %1563 = vmatmul.bf16.gmra.mxu0 %v261
    %v1564 = vpop.f32.mrf.mxu0
    %v1565 = vadd.f32 %v1536, %v1564
    %v1566 = vpop.f32.mrf.mxu0
    %v1567 = vadd.f32 %v1538, %v1566
    %1568 = vmatmul.bf16.gmra.mxu0 %v265
    %v1569 = vpop.f32.mrf.mxu0
    %v1570 = vadd.f32 %v1541, %v1569
    %v1571 = vpop.f32.mrf.mxu0
    %v1572 = vadd.f32 %v1543, %v1571
    %1573 = vmatmul.bf16.gmra.mxu0 %v269
    %v1574 = vpop.f32.mrf.mxu0
    %v1575 = vadd.f32 %v1546, %v1574
    %v1576 = vpop.f32.mrf.mxu0
    %v1577 = vadd.f32 %v1548, %v1576
    %1578 = vmatmul.bf16.gmra.mxu0 %v273
    %v1579 = vpop.f32.mrf.mxu0
    %v1580 = vadd.f32 %v1551, %v1579
    %v1581 = vpop.f32.mrf.mxu0
    %v1582 = vadd.f32 %v1553, %v1581
    %1583 = vdwg.mxu0
    %1584 = vmatpush.bf16.msra.mxu0 %v1020
    %1585 = vmatpush.bf16.msra.mxu0 %v1016
    %1586 = vmatpush.bf16.msra.mxu0 %v1012
    %1587 = vmatpush.bf16.msra.mxu0 %v1008
    %1588 = vmatpush.bf16.msra.mxu0 %v1004
    %1589 = vmatpush.bf16.msra.mxu0 %v1000
    %1590 = vmatpush.bf16.msra.mxu0 %v996
    %1591 = vmatpush.bf16.msra.mxu0 %v992
    %1592 = vmatmul.bf16.gmra.mxu0 %v262
    %v1593 = vpop.f32.mrf.mxu0
    %v1594 = vadd.f32 %v1565, %v1593
    %v1595 = vpop.f32.mrf.mxu0
    %v1596 = vadd.f32 %v1567, %v1595
    %1597 = vmatmul.bf16.gmra.mxu0 %v266
    %v1598 = vpop.f32.mrf.mxu0
    %v1599 = vadd.f32 %v1570, %v1598
    %v1600 = vpop.f32.mrf.mxu0
    %v1601 = vadd.f32 %v1572, %v1600
    %1602 = vmatmul.bf16.gmra.mxu0 %v270
    %v1603 = vpop.f32.mrf.mxu0
    %v1604 = vadd.f32 %v1575, %v1603
    %v1605 = vpop.f32.mrf.mxu0
    %v1606 = vadd.f32 %v1577, %v1605
    %1607 = vmatmul.bf16.gmra.mxu0 %v274
    %v1608 = vpop.f32.mrf.mxu0
    %v1609 = vadd.f32 %v1580, %v1608
    %v1610 = vpop.f32.mrf.mxu0
    %v1611 = vadd.f32 %v1582, %v1610
    %1612 = vdwg.mxu0
    %v1613 = vld [vmem:[#allocation11] sm:$0xff]
    %v1614 = vld [vmem:[#allocation11 + $0x8] sm:$0xff]
    %v1615 = vld [vmem:[#allocation11 + $0x10] sm:$0xff]
    %v1616 = vld [vmem:[#allocation11 + $0x18] sm:$0xff]
    %v1617 = vld [vmem:[#allocation11 + $0x20] sm:$0xff]
    %v1618 = vld [vmem:[#allocation11 + $0x28] sm:$0xff]
    %v1619 = vld [vmem:[#allocation11 + $0x30] sm:$0xff]
    %v1620 = vld [vmem:[#allocation11 + $0x38] sm:$0xff]
    %v1621 = vld [vmem:[#allocation11 + $0x40] sm:$0xff]
    %v1622 = vld [vmem:[#allocation11 + $0x48] sm:$0xff]
    %v1623 = vld [vmem:[#allocation11 + $0x50] sm:$0xff]
    %v1624 = vld [vmem:[#allocation11 + $0x58] sm:$0xff]
    %v1625 = vld [vmem:[#allocation11 + $0x60] sm:$0xff]
    %v1626 = vld [vmem:[#allocation11 + $0x68] sm:$0xff]
    %v1627 = vld [vmem:[#allocation11 + $0x70] sm:$0xff]
    %v1628 = vld [vmem:[#allocation11 + $0x78] sm:$0xff]
    %v1629 = vld [vmem:[#allocation11 + $0x80] sm:$0xff]
    %v1630 = vld [vmem:[#allocation11 + $0x88] sm:$0xff]
    %v1631 = vld [vmem:[#allocation11 + $0x90] sm:$0xff]
    %v1632 = vld [vmem:[#allocation11 + $0x98] sm:$0xff]
    %v1633 = vld [vmem:[#allocation11 + $0xa0] sm:$0xff]
    %v1634 = vld [vmem:[#allocation11 + $0xa8] sm:$0xff]
    %v1635 = vld [vmem:[#allocation11 + $0xb0] sm:$0xff]
    %v1636 = vld [vmem:[#allocation11 + $0xb8] sm:$0xff]
    %v1637 = vld [vmem:[#allocation11 + $0xc0] sm:$0xff]
    %v1638 = vld [vmem:[#allocation11 + $0xc8] sm:$0xff]
    %v1639 = vld [vmem:[#allocation11 + $0xd0] sm:$0xff]
    %v1640 = vld [vmem:[#allocation11 + $0xd8] sm:$0xff]
    %v1641 = vld [vmem:[#allocation11 + $0xe0] sm:$0xff]
    %v1642 = vld [vmem:[#allocation11 + $0xe8] sm:$0xff]
    %v1643 = vld [vmem:[#allocation11 + $0xf0] sm:$0xff]
    %v1644 = vld [vmem:[#allocation11 + $0xf8] sm:$0xff]
    %v1645 = vld [vmem:[#allocation11 + $0x100] sm:$0xff]
    %v1646 = vld [vmem:[#allocation11 + $0x108] sm:$0xff]
    %v1647 = vld [vmem:[#allocation11 + $0x110] sm:$0xff]
    %v1648 = vld [vmem:[#allocation11 + $0x118] sm:$0xff]
    %v1649 = vld [vmem:[#allocation11 + $0x120] sm:$0xff]
    %v1650 = vld [vmem:[#allocation11 + $0x128] sm:$0xff]
    %v1651 = vld [vmem:[#allocation11 + $0x130] sm:$0xff]
    %v1652 = vld [vmem:[#allocation11 + $0x138] sm:$0xff]
    %v1653 = vld [vmem:[#allocation11 + $0x140] sm:$0xff]
    %v1654 = vld [vmem:[#allocation11 + $0x148] sm:$0xff]
    %v1655 = vld [vmem:[#allocation11 + $0x150] sm:$0xff]
    %v1656 = vld [vmem:[#allocation11 + $0x158] sm:$0xff]
    %v1657 = vld [vmem:[#allocation11 + $0x160] sm:$0xff]
    %v1658 = vld [vmem:[#allocation11 + $0x168] sm:$0xff]
    %v1659 = vld [vmem:[#allocation11 + $0x170] sm:$0xff]
    %v1660 = vld [vmem:[#allocation11 + $0x178] sm:$0xff]
    %v1661 = vld [vmem:[#allocation11 + $0x180] sm:$0xff]
    %v1662 = vld [vmem:[#allocation11 + $0x188] sm:$0xff]
    %v1663 = vld [vmem:[#allocation11 + $0x190] sm:$0xff]
    %v1664 = vld [vmem:[#allocation11 + $0x198] sm:$0xff]
    %v1665 = vld [vmem:[#allocation11 + $0x1a0] sm:$0xff]
    %v1666 = vld [vmem:[#allocation11 + $0x1a8] sm:$0xff]
    %v1667 = vld [vmem:[#allocation11 + $0x1b0] sm:$0xff]
    %v1668 = vld [vmem:[#allocation11 + $0x1b8] sm:$0xff]
    %v1669 = vld [vmem:[#allocation11 + $0x1c0] sm:$0xff]
    %v1670 = vld [vmem:[#allocation11 + $0x1c8] sm:$0xff]
    %v1671 = vld [vmem:[#allocation11 + $0x1d0] sm:$0xff]
    %v1672 = vld [vmem:[#allocation11 + $0x1d8] sm:$0xff]
    %v1673 = vld [vmem:[#allocation11 + $0x1e0] sm:$0xff]
    %v1674 = vld [vmem:[#allocation11 + $0x1e8] sm:$0xff]
    %v1675 = vld [vmem:[#allocation11 + $0x1f0] sm:$0xff]
    %v1676 = vld [vmem:[#allocation11 + $0x1f8] sm:$0xff]
    %v1677 = vld [vmem:[#allocation11 + $0x200] sm:$0xff]
    %v1678 = vld [vmem:[#allocation11 + $0x208] sm:$0xff]
    %v1679 = vld [vmem:[#allocation11 + $0x210] sm:$0xff]
    %v1680 = vld [vmem:[#allocation11 + $0x218] sm:$0xff]
    %v1681 = vld [vmem:[#allocation11 + $0x220] sm:$0xff]
    %v1682 = vld [vmem:[#allocation11 + $0x228] sm:$0xff]
    %v1683 = vld [vmem:[#allocation11 + $0x230] sm:$0xff]
    %v1684 = vld [vmem:[#allocation11 + $0x238] sm:$0xff]
    %v1685 = vld [vmem:[#allocation11 + $0x240] sm:$0xff]
    %v1686 = vld [vmem:[#allocation11 + $0x248] sm:$0xff]
    %v1687 = vld [vmem:[#allocation11 + $0x250] sm:$0xff]
    %v1688 = vld [vmem:[#allocation11 + $0x258] sm:$0xff]
    %v1689 = vld [vmem:[#allocation11 + $0x260] sm:$0xff]
    %v1690 = vld [vmem:[#allocation11 + $0x268] sm:$0xff]
    %v1691 = vld [vmem:[#allocation11 + $0x270] sm:$0xff]
    %v1692 = vld [vmem:[#allocation11 + $0x278] sm:$0xff]
    %v1693 = vld [vmem:[#allocation11 + $0x280] sm:$0xff]
    %v1694 = vld [vmem:[#allocation11 + $0x288] sm:$0xff]
    %v1695 = vld [vmem:[#allocation11 + $0x290] sm:$0xff]
    %v1696 = vld [vmem:[#allocation11 + $0x298] sm:$0xff]
    %v1697 = vld [vmem:[#allocation11 + $0x2a0] sm:$0xff]
    %v1698 = vld [vmem:[#allocation11 + $0x2a8] sm:$0xff]
    %v1699 = vld [vmem:[#allocation11 + $0x2b0] sm:$0xff]
    %v1700 = vld [vmem:[#allocation11 + $0x2b8] sm:$0xff]
    %v1701 = vld [vmem:[#allocation11 + $0x2c0] sm:$0xff]
    %v1702 = vld [vmem:[#allocation11 + $0x2c8] sm:$0xff]
    %v1703 = vld [vmem:[#allocation11 + $0x2d0] sm:$0xff]
    %v1704 = vld [vmem:[#allocation11 + $0x2d8] sm:$0xff]
    %v1705 = vld [vmem:[#allocation11 + $0x2e0] sm:$0xff]
    %v1706 = vld [vmem:[#allocation11 + $0x2e8] sm:$0xff]
    %v1707 = vld [vmem:[#allocation11 + $0x2f0] sm:$0xff]
    %v1708 = vld [vmem:[#allocation11 + $0x2f8] sm:$0xff]
    %v1709 = vld [vmem:[#allocation11 + $0x300] sm:$0xff]
    %v1710 = vld [vmem:[#allocation11 + $0x308] sm:$0xff]
    %v1711 = vld [vmem:[#allocation11 + $0x310] sm:$0xff]
    %v1712 = vld [vmem:[#allocation11 + $0x318] sm:$0xff]
    %v1713 = vld [vmem:[#allocation11 + $0x320] sm:$0xff]
    %v1714 = vld [vmem:[#allocation11 + $0x328] sm:$0xff]
    %v1715 = vld [vmem:[#allocation11 + $0x330] sm:$0xff]
    %v1716 = vld [vmem:[#allocation11 + $0x338] sm:$0xff]
    %v1717 = vld [vmem:[#allocation11 + $0x340] sm:$0xff]
    %v1718 = vld [vmem:[#allocation11 + $0x348] sm:$0xff]
    %v1719 = vld [vmem:[#allocation11 + $0x350] sm:$0xff]
    %v1720 = vld [vmem:[#allocation11 + $0x358] sm:$0xff]
    %v1721 = vld [vmem:[#allocation11 + $0x360] sm:$0xff]
    %v1722 = vld [vmem:[#allocation11 + $0x368] sm:$0xff]
    %v1723 = vld [vmem:[#allocation11 + $0x370] sm:$0xff]
    %v1724 = vld [vmem:[#allocation11 + $0x378] sm:$0xff]
    %v1725 = vld [vmem:[#allocation11 + $0x380] sm:$0xff]
    %v1726 = vld [vmem:[#allocation11 + $0x388] sm:$0xff]
    %v1727 = vld [vmem:[#allocation11 + $0x390] sm:$0xff]
    %v1728 = vld [vmem:[#allocation11 + $0x398] sm:$0xff]
    %v1729 = vld [vmem:[#allocation11 + $0x3a0] sm:$0xff]
    %v1730 = vld [vmem:[#allocation11 + $0x3a8] sm:$0xff]
    %v1731 = vld [vmem:[#allocation11 + $0x3b0] sm:$0xff]
    %v1732 = vld [vmem:[#allocation11 + $0x3b8] sm:$0xff]
    %v1733 = vld [vmem:[#allocation11 + $0x3c0] sm:$0xff]
    %v1734 = vld [vmem:[#allocation11 + $0x3c8] sm:$0xff]
    %v1735 = vld [vmem:[#allocation11 + $0x3d0] sm:$0xff]
    %v1736 = vld [vmem:[#allocation11 + $0x3d8] sm:$0xff]
    %v1737 = vld [vmem:[#allocation11 + $0x3e0] sm:$0xff]
    %v1738 = vld [vmem:[#allocation11 + $0x3e8] sm:$0xff]
    %v1739 = vld [vmem:[#allocation11 + $0x3f0] sm:$0xff]
    %v1740 = vld [vmem:[#allocation11 + $0x3f8] sm:$0xff]
    %v1741 = vld [vmem:[%s7] sm:$0xf]
    %v1743 = vperm.slane %v1741, 0
    %v1744 = vperm.slane %v1741, 1
    %v1745 = vperm.slane %v1741, 2
    %v1746 = vperm.slane %v1741, 3
    %v1879 = vunpack.c.l.b16 %v1613
    %v1880 = vunpack.c.h.b16 %v1613
    %v1881 = vunpack.c.l.b16 %v1614
    %v1882 = vunpack.c.h.b16 %v1614
    %v1883 = vunpack.c.l.b16 %v1615
    %v1884 = vunpack.c.h.b16 %v1615
    %v1885 = vunpack.c.l.b16 %v1616
    %v1886 = vunpack.c.h.b16 %v1616
    %v1887 = vunpack.c.l.b16 %v1617
    %v1888 = vunpack.c.h.b16 %v1617
    %v1889 = vunpack.c.l.b16 %v1618
    %v1890 = vunpack.c.h.b16 %v1618
    %v1891 = vunpack.c.l.b16 %v1619
    %v1892 = vunpack.c.h.b16 %v1619
    %v1893 = vunpack.c.l.b16 %v1620
    %v1894 = vunpack.c.h.b16 %v1620
    %v1895 = vunpack.c.l.b16 %v1621
    %v1896 = vunpack.c.h.b16 %v1621
    %v1897 = vunpack.c.l.b16 %v1622
    %v1898 = vunpack.c.h.b16 %v1622
    %v1899 = vunpack.c.l.b16 %v1623
    %v1900 = vunpack.c.h.b16 %v1623
    %v1901 = vunpack.c.l.b16 %v1624
    %v1902 = vunpack.c.h.b16 %v1624
    %v1903 = vunpack.c.l.b16 %v1625
    %v1904 = vunpack.c.h.b16 %v1625
    %v1905 = vunpack.c.l.b16 %v1626
    %v1906 = vunpack.c.h.b16 %v1626
    %v1907 = vunpack.c.l.b16 %v1627
    %v1908 = vunpack.c.h.b16 %v1627
    %v1909 = vunpack.c.l.b16 %v1628
    %v1910 = vunpack.c.h.b16 %v1628
    %v1911 = vunpack.c.l.b16 %v1629
    %v1912 = vunpack.c.h.b16 %v1629
    %v1913 = vunpack.c.l.b16 %v1630
    %v1914 = vunpack.c.h.b16 %v1630
    %v1915 = vunpack.c.l.b16 %v1631
    %v1916 = vunpack.c.h.b16 %v1631
    %v1917 = vunpack.c.l.b16 %v1632
    %v1918 = vunpack.c.h.b16 %v1632
    %v1919 = vunpack.c.l.b16 %v1633
    %v1920 = vunpack.c.h.b16 %v1633
    %v1921 = vunpack.c.l.b16 %v1634
    %v1922 = vunpack.c.h.b16 %v1634
    %v1923 = vunpack.c.l.b16 %v1635
    %v1924 = vunpack.c.h.b16 %v1635
    %v1925 = vunpack.c.l.b16 %v1636
    %v1926 = vunpack.c.h.b16 %v1636
    %v1927 = vunpack.c.l.b16 %v1637
    %v1928 = vunpack.c.h.b16 %v1637
    %v1929 = vunpack.c.l.b16 %v1638
    %v1930 = vunpack.c.h.b16 %v1638
    %v1931 = vunpack.c.l.b16 %v1639
    %v1932 = vunpack.c.h.b16 %v1639
    %v1933 = vunpack.c.l.b16 %v1640
    %v1934 = vunpack.c.h.b16 %v1640
    %v1935 = vunpack.c.l.b16 %v1641
    %v1936 = vunpack.c.h.b16 %v1641
    %v1937 = vunpack.c.l.b16 %v1642
    %v1938 = vunpack.c.h.b16 %v1642
    %v1939 = vunpack.c.l.b16 %v1643
    %v1940 = vunpack.c.h.b16 %v1643
    %v1941 = vunpack.c.l.b16 %v1644
    %v1942 = vunpack.c.h.b16 %v1644
    %v1943 = vunpack.c.l.b16 %v1645
    %v1944 = vunpack.c.h.b16 %v1645
    %v1945 = vunpack.c.l.b16 %v1646
    %v1946 = vunpack.c.h.b16 %v1646
    %v1947 = vunpack.c.l.b16 %v1647
    %v1948 = vunpack.c.h.b16 %v1647
    %v1949 = vunpack.c.l.b16 %v1648
    %v1950 = vunpack.c.h.b16 %v1648
    %v1951 = vunpack.c.l.b16 %v1649
    %v1952 = vunpack.c.h.b16 %v1649
    %v1953 = vunpack.c.l.b16 %v1650
    %v1954 = vunpack.c.h.b16 %v1650
    %v1955 = vunpack.c.l.b16 %v1651
    %v1956 = vunpack.c.h.b16 %v1651
    %v1957 = vunpack.c.l.b16 %v1652
    %v1958 = vunpack.c.h.b16 %v1652
    %v1959 = vunpack.c.l.b16 %v1653
    %v1960 = vunpack.c.h.b16 %v1653
    %v1961 = vunpack.c.l.b16 %v1654
    %v1962 = vunpack.c.h.b16 %v1654
    %v1963 = vunpack.c.l.b16 %v1655
    %v1964 = vunpack.c.h.b16 %v1655
    %v1965 = vunpack.c.l.b16 %v1656
    %v1966 = vunpack.c.h.b16 %v1656
    %v1967 = vunpack.c.l.b16 %v1657
    %v1968 = vunpack.c.h.b16 %v1657
    %v1969 = vunpack.c.l.b16 %v1658
    %v1970 = vunpack.c.h.b16 %v1658
    %v1971 = vunpack.c.l.b16 %v1659
    %v1972 = vunpack.c.h.b16 %v1659
    %v1973 = vunpack.c.l.b16 %v1660
    %v1974 = vunpack.c.h.b16 %v1660
    %v1975 = vunpack.c.l.b16 %v1661
    %v1976 = vunpack.c.h.b16 %v1661
    %v1977 = vunpack.c.l.b16 %v1662
    %v1978 = vunpack.c.h.b16 %v1662
    %v1979 = vunpack.c.l.b16 %v1663
    %v1980 = vunpack.c.h.b16 %v1663
    %v1981 = vunpack.c.l.b16 %v1664
    %v1982 = vunpack.c.h.b16 %v1664
    %v1983 = vunpack.c.l.b16 %v1665
    %v1984 = vunpack.c.h.b16 %v1665
    %v1985 = vunpack.c.l.b16 %v1666
    %v1986 = vunpack.c.h.b16 %v1666
    %v1987 = vunpack.c.l.b16 %v1667
    %v1988 = vunpack.c.h.b16 %v1667
    %v1989 = vunpack.c.l.b16 %v1668
    %v1990 = vunpack.c.h.b16 %v1668
    %v1991 = vunpack.c.l.b16 %v1669
    %v1992 = vunpack.c.h.b16 %v1669
    %v1993 = vunpack.c.l.b16 %v1670
    %v1994 = vunpack.c.h.b16 %v1670
    %v1995 = vunpack.c.l.b16 %v1671
    %v1996 = vunpack.c.h.b16 %v1671
    %v1997 = vunpack.c.l.b16 %v1672
    %v1998 = vunpack.c.h.b16 %v1672
    %v1999 = vunpack.c.l.b16 %v1673
    %v2000 = vunpack.c.h.b16 %v1673
    %v2001 = vunpack.c.l.b16 %v1674
    %v2002 = vunpack.c.h.b16 %v1674
    %v2003 = vunpack.c.l.b16 %v1675
    %v2004 = vunpack.c.h.b16 %v1675
    %v2005 = vunpack.c.l.b16 %v1676
    %v2006 = vunpack.c.h.b16 %v1676
    %v2007 = vunpack.c.l.b16 %v1677
    %v2008 = vunpack.c.h.b16 %v1677
    %v2009 = vunpack.c.l.b16 %v1678
    %v2010 = vunpack.c.h.b16 %v1678
    %v2011 = vunpack.c.l.b16 %v1679
    %v2012 = vunpack.c.h.b16 %v1679
    %v2013 = vunpack.c.l.b16 %v1680
    %v2014 = vunpack.c.h.b16 %v1680
    %v2015 = vunpack.c.l.b16 %v1681
    %v2016 = vunpack.c.h.b16 %v1681
    %v2017 = vunpack.c.l.b16 %v1682
    %v2018 = vunpack.c.h.b16 %v1682
    %v2019 = vunpack.c.l.b16 %v1683
    %v2020 = vunpack.c.h.b16 %v1683
    %v2021 = vunpack.c.l.b16 %v1684
    %v2022 = vunpack.c.h.b16 %v1684
    %v2023 = vunpack.c.l.b16 %v1685
    %v2024 = vunpack.c.h.b16 %v1685
    %v2025 = vunpack.c.l.b16 %v1686
    %v2026 = vunpack.c.h.b16 %v1686
    %v2027 = vunpack.c.l.b16 %v1687
    %v2028 = vunpack.c.h.b16 %v1687
    %v2029 = vunpack.c.l.b16 %v1688
    %v2030 = vunpack.c.h.b16 %v1688
    %v2031 = vunpack.c.l.b16 %v1689
    %v2032 = vunpack.c.h.b16 %v1689
    %v2033 = vunpack.c.l.b16 %v1690
    %v2034 = vunpack.c.h.b16 %v1690
    %v2035 = vunpack.c.l.b16 %v1691
    %v2036 = vunpack.c.h.b16 %v1691
    %v2037 = vunpack.c.l.b16 %v1692
    %v2038 = vunpack.c.h.b16 %v1692
    %v2039 = vunpack.c.l.b16 %v1693
    %v2040 = vunpack.c.h.b16 %v1693
    %v2041 = vunpack.c.l.b16 %v1694
    %v2042 = vunpack.c.h.b16 %v1694
    %v2043 = vunpack.c.l.b16 %v1695
    %v2044 = vunpack.c.h.b16 %v1695
    %v2045 = vunpack.c.l.b16 %v1696
    %v2046 = vunpack.c.h.b16 %v1696
    %v2047 = vunpack.c.l.b16 %v1697
    %v2048 = vunpack.c.h.b16 %v1697
    %v2049 = vunpack.c.l.b16 %v1698
    %v2050 = vunpack.c.h.b16 %v1698
    %v2051 = vunpack.c.l.b16 %v1699
    %v2052 = vunpack.c.h.b16 %v1699
    %v2053 = vunpack.c.l.b16 %v1700
    %v2054 = vunpack.c.h.b16 %v1700
    %v2055 = vunpack.c.l.b16 %v1701
    %v2056 = vunpack.c.h.b16 %v1701
    %v2057 = vunpack.c.l.b16 %v1702
    %v2058 = vunpack.c.h.b16 %v1702
    %v2059 = vunpack.c.l.b16 %v1703
    %v2060 = vunpack.c.h.b16 %v1703
    %v2061 = vunpack.c.l.b16 %v1704
    %v2062 = vunpack.c.h.b16 %v1704
    %v2063 = vunpack.c.l.b16 %v1705
    %v2064 = vunpack.c.h.b16 %v1705
    %v2065 = vunpack.c.l.b16 %v1706
    %v2066 = vunpack.c.h.b16 %v1706
    %v2067 = vunpack.c.l.b16 %v1707
    %v2068 = vunpack.c.h.b16 %v1707
    %v2069 = vunpack.c.l.b16 %v1708
    %v2070 = vunpack.c.h.b16 %v1708
    %v2071 = vunpack.c.l.b16 %v1709
    %v2072 = vunpack.c.h.b16 %v1709
    %v2073 = vunpack.c.l.b16 %v1710
    %v2074 = vunpack.c.h.b16 %v1710
    %v2075 = vunpack.c.l.b16 %v1711
    %v2076 = vunpack.c.h.b16 %v1711
    %v2077 = vunpack.c.l.b16 %v1712
    %v2078 = vunpack.c.h.b16 %v1712
    %v2079 = vunpack.c.l.b16 %v1713
    %v2080 = vunpack.c.h.b16 %v1713
    %v2081 = vunpack.c.l.b16 %v1714
    %v2082 = vunpack.c.h.b16 %v1714
    %v2083 = vunpack.c.l.b16 %v1715
    %v2084 = vunpack.c.h.b16 %v1715
    %v2085 = vunpack.c.l.b16 %v1716
    %v2086 = vunpack.c.h.b16 %v1716
    %v2087 = vunpack.c.l.b16 %v1717
    %v2088 = vunpack.c.h.b16 %v1717
    %v2089 = vunpack.c.l.b16 %v1718
    %v2090 = vunpack.c.h.b16 %v1718
    %v2091 = vunpack.c.l.b16 %v1719
    %v2092 = vunpack.c.h.b16 %v1719
    %v2093 = vunpack.c.l.b16 %v1720
    %v2094 = vunpack.c.h.b16 %v1720
    %v2095 = vunpack.c.l.b16 %v1721
    %v2096 = vunpack.c.h.b16 %v1721
    %v2097 = vunpack.c.l.b16 %v1722
    %v2098 = vunpack.c.h.b16 %v1722
    %v2099 = vunpack.c.l.b16 %v1723
    %v2100 = vunpack.c.h.b16 %v1723
    %v2101 = vunpack.c.l.b16 %v1724
    %v2102 = vunpack.c.h.b16 %v1724
    %v2103 = vunpack.c.l.b16 %v1725
    %v2104 = vunpack.c.h.b16 %v1725
    %v2105 = vunpack.c.l.b16 %v1726
    %v2106 = vunpack.c.h.b16 %v1726
    %v2107 = vunpack.c.l.b16 %v1727
    %v2108 = vunpack.c.h.b16 %v1727
    %v2109 = vunpack.c.l.b16 %v1728
    %v2110 = vunpack.c.h.b16 %v1728
    %v2111 = vunpack.c.l.b16 %v1729
    %v2112 = vunpack.c.h.b16 %v1729
    %v2113 = vunpack.c.l.b16 %v1730
    %v2114 = vunpack.c.h.b16 %v1730
    %v2115 = vunpack.c.l.b16 %v1731
    %v2116 = vunpack.c.h.b16 %v1731
    %v2117 = vunpack.c.l.b16 %v1732
    %v2118 = vunpack.c.h.b16 %v1732
    %v2119 = vunpack.c.l.b16 %v1733
    %v2120 = vunpack.c.h.b16 %v1733
    %v2121 = vunpack.c.l.b16 %v1734
    %v2122 = vunpack.c.h.b16 %v1734
    %v2123 = vunpack.c.l.b16 %v1735
    %v2124 = vunpack.c.h.b16 %v1735
    %v2125 = vunpack.c.l.b16 %v1736
    %v2126 = vunpack.c.h.b16 %v1736
    %v2127 = vunpack.c.l.b16 %v1737
    %v2128 = vunpack.c.h.b16 %v1737
    %v2129 = vunpack.c.l.b16 %v1738
    %v2130 = vunpack.c.h.b16 %v1738
    %v2131 = vunpack.c.l.b16 %v1739
    %v2132 = vunpack.c.h.b16 %v1739
    %v2133 = vunpack.c.l.b16 %v1740
    %v2134 = vunpack.c.h.b16 %v1740
    %v2135 = vpack.c.b16 %v1883, %v1879
    %v2136 = vpack.c.b16 %v1884, %v1880
    %v2137 = vpack.c.b16 %v1885, %v1881
    %v2138 = vpack.c.b16 %v1886, %v1882
    %v2139 = vpack.c.b16 %v1891, %v1887
    %v2140 = vpack.c.b16 %v1892, %v1888
    %v2141 = vpack.c.b16 %v1893, %v1889
    %v2142 = vpack.c.b16 %v1894, %v1890
    %v2143 = vpack.c.b16 %v1899, %v1895
    %v2144 = vpack.c.b16 %v1900, %v1896
    %v2145 = vpack.c.b16 %v1901, %v1897
    %v2146 = vpack.c.b16 %v1902, %v1898
    %v2147 = vpack.c.b16 %v1907, %v1903
    %v2148 = vpack.c.b16 %v1908, %v1904
    %v2149 = vpack.c.b16 %v1909, %v1905
    %v2150 = vpack.c.b16 %v1910, %v1906
    %v2151 = vpack.c.b16 %v1915, %v1911
    %v2152 = vpack.c.b16 %v1916, %v1912
    %v2153 = vpack.c.b16 %v1917, %v1913
    %v2154 = vpack.c.b16 %v1918, %v1914
    %v2155 = vpack.c.b16 %v1923, %v1919
    %v2156 = vpack.c.b16 %v1924, %v1920
    %v2157 = vpack.c.b16 %v1925, %v1921
    %v2158 = vpack.c.b16 %v1926, %v1922
    %v2159 = vpack.c.b16 %v1931, %v1927
    %v2160 = vpack.c.b16 %v1932, %v1928
    %v2161 = vpack.c.b16 %v1933, %v1929
    %v2162 = vpack.c.b16 %v1934, %v1930
    %v2163 = vpack.c.b16 %v1939, %v1935
    %v2164 = vpack.c.b16 %v1940, %v1936
    %v2165 = vpack.c.b16 %v1941, %v1937
    %v2166 = vpack.c.b16 %v1942, %v1938
    %v2167 = vpack.c.b16 %v1947, %v1943
    %v2168 = vpack.c.b16 %v1948, %v1944
    %v2169 = vpack.c.b16 %v1949, %v1945
    %v2170 = vpack.c.b16 %v1950, %v1946
    %v2171 = vpack.c.b16 %v1955, %v1951
    %v2172 = vpack.c.b16 %v1956, %v1952
    %v2173 = vpack.c.b16 %v1957, %v1953
    %v2174 = vpack.c.b16 %v1958, %v1954
    %v2175 = vpack.c.b16 %v1963, %v1959
    %v2176 = vpack.c.b16 %v1964, %v1960
    %v2177 = vpack.c.b16 %v1965, %v1961
    %v2178 = vpack.c.b16 %v1966, %v1962
    %v2179 = vpack.c.b16 %v1971, %v1967
    %v2180 = vpack.c.b16 %v1972, %v1968
    %v2181 = vpack.c.b16 %v1973, %v1969
    %v2182 = vpack.c.b16 %v1974, %v1970
    %v2183 = vpack.c.b16 %v1979, %v1975
    %v2184 = vpack.c.b16 %v1980, %v1976
    %v2185 = vpack.c.b16 %v1981, %v1977
    %v2186 = vpack.c.b16 %v1982, %v1978
    %v2187 = vpack.c.b16 %v1987, %v1983
    %v2188 = vpack.c.b16 %v1988, %v1984
    %v2189 = vpack.c.b16 %v1989, %v1985
    %v2190 = vpack.c.b16 %v1990, %v1986
    %v2191 = vpack.c.b16 %v1995, %v1991
    %v2192 = vpack.c.b16 %v1996, %v1992
    %v2193 = vpack.c.b16 %v1997, %v1993
    %v2194 = vpack.c.b16 %v1998, %v1994
    %v2195 = vpack.c.b16 %v2003, %v1999
    %v2196 = vpack.c.b16 %v2004, %v2000
    %v2197 = vpack.c.b16 %v2005, %v2001
    %v2198 = vpack.c.b16 %v2006, %v2002
    %v2199 = vpack.c.b16 %v2011, %v2007
    %v2200 = vpack.c.b16 %v2012, %v2008
    %v2201 = vpack.c.b16 %v2013, %v2009
    %v2202 = vpack.c.b16 %v2014, %v2010
    %v2203 = vpack.c.b16 %v2019, %v2015
    %v2204 = vpack.c.b16 %v2020, %v2016
    %v2205 = vpack.c.b16 %v2021, %v2017
    %v2206 = vpack.c.b16 %v2022, %v2018
    %v2207 = vpack.c.b16 %v2027, %v2023
    %v2208 = vpack.c.b16 %v2028, %v2024
    %v2209 = vpack.c.b16 %v2029, %v2025
    %v2210 = vpack.c.b16 %v2030, %v2026
    %v2211 = vpack.c.b16 %v2035, %v2031
    %v2212 = vpack.c.b16 %v2036, %v2032
    %v2213 = vpack.c.b16 %v2037, %v2033
    %v2214 = vpack.c.b16 %v2038, %v2034
    %v2215 = vpack.c.b16 %v2043, %v2039
    %v2216 = vpack.c.b16 %v2044, %v2040
    %v2217 = vpack.c.b16 %v2045, %v2041
    %v2218 = vpack.c.b16 %v2046, %v2042
    %v2219 = vpack.c.b16 %v2051, %v2047
    %v2220 = vpack.c.b16 %v2052, %v2048
    %v2221 = vpack.c.b16 %v2053, %v2049
    %v2222 = vpack.c.b16 %v2054, %v2050
    %v2223 = vpack.c.b16 %v2059, %v2055
    %v2224 = vpack.c.b16 %v2060, %v2056
    %v2225 = vpack.c.b16 %v2061, %v2057
    %v2226 = vpack.c.b16 %v2062, %v2058
    %v2227 = vpack.c.b16 %v2067, %v2063
    %v2228 = vpack.c.b16 %v2068, %v2064
    %v2229 = vpack.c.b16 %v2069, %v2065
    %v2230 = vpack.c.b16 %v2070, %v2066
    %v2231 = vpack.c.b16 %v2075, %v2071
    %v2232 = vpack.c.b16 %v2076, %v2072
    %v2233 = vpack.c.b16 %v2077, %v2073
    %v2234 = vpack.c.b16 %v2078, %v2074
    %v2235 = vpack.c.b16 %v2083, %v2079
    %v2236 = vpack.c.b16 %v2084, %v2080
    %v2237 = vpack.c.b16 %v2085, %v2081
    %v2238 = vpack.c.b16 %v2086, %v2082
    %v2239 = vpack.c.b16 %v2091, %v2087
    %v2240 = vpack.c.b16 %v2092, %v2088
    %v2241 = vpack.c.b16 %v2093, %v2089
    %v2242 = vpack.c.b16 %v2094, %v2090
    %v2243 = vpack.c.b16 %v2099, %v2095
    %v2244 = vpack.c.b16 %v2100, %v2096
    %v2245 = vpack.c.b16 %v2101, %v2097
    %v2246 = vpack.c.b16 %v2102, %v2098
    %v2247 = vpack.c.b16 %v2107, %v2103
    %v2248 = vpack.c.b16 %v2108, %v2104
    %v2249 = vpack.c.b16 %v2109, %v2105
    %v2250 = vpack.c.b16 %v2110, %v2106
    %v2251 = vpack.c.b16 %v2115, %v2111
    %v2252 = vpack.c.b16 %v2116, %v2112
    %v2253 = vpack.c.b16 %v2117, %v2113
    %v2254 = vpack.c.b16 %v2118, %v2114
    %v2255 = vpack.c.b16 %v2123, %v2119
    %v2256 = vpack.c.b16 %v2124, %v2120
    %v2257 = vpack.c.b16 %v2125, %v2121
    %v2258 = vpack.c.b16 %v2126, %v2122
    %v2259 = vpack.c.b16 %v2131, %v2127
    %v2260 = vpack.c.b16 %v2132, %v2128
    %v2261 = vpack.c.b16 %v2133, %v2129
    %v2262 = vpack.c.b16 %v2134, %v2130
    %2391 = vmatpush.bf16.msra.mxu0 %v2163
    %2392 = vmatpush.bf16.msra.mxu0 %v2159
    %2393 = vmatpush.bf16.msra.mxu0 %v2155
    %2394 = vmatpush.bf16.msra.mxu0 %v2151
    %2395 = vmatpush.bf16.msra.mxu0 %v2147
    %2396 = vmatpush.bf16.msra.mxu0 %v2143
    %2397 = vmatpush.bf16.msra.mxu0 %v2139
    %2398 = vmatpush.bf16.msra.mxu0 %v2135
    %2399 = vmatmul.bf16.gmra.mxu0 %v307
    %v2400 = vpop.f32.mrf.mxu0
    %v2401 = vadd.f32 %v1743, %v2400
    %v2402 = vpop.f32.mrf.mxu0
    %v2403 = vadd.f32 %v1743, %v2402
    %2404 = vmatmul.bf16.gmra.mxu0 %v311
    %v2405 = vpop.f32.mrf.mxu0
    %v2406 = vadd.f32 %v1743, %v2405
    %v2407 = vpop.f32.mrf.mxu0
    %v2408 = vadd.f32 %v1743, %v2407
    %2409 = vmatmul.bf16.gmra.mxu0 %v315
    %v2410 = vpop.f32.mrf.mxu0
    %v2411 = vadd.f32 %v1743, %v2410
    %v2412 = vpop.f32.mrf.mxu0
    %v2413 = vadd.f32 %v1743, %v2412
    %2414 = vmatmul.bf16.gmra.mxu0 %v319
    %v2415 = vpop.f32.mrf.mxu0
    %v2416 = vadd.f32 %v1743, %v2415
    %v2417 = vpop.f32.mrf.mxu0
    %v2418 = vadd.f32 %v1743, %v2417
    %2419 = vdwg.mxu0
    %2420 = vmatpush.bf16.msra.mxu0 %v2195
    %2421 = vmatpush.bf16.msra.mxu0 %v2191
    %2422 = vmatpush.bf16.msra.mxu0 %v2187
    %2423 = vmatpush.bf16.msra.mxu0 %v2183
    %2424 = vmatpush.bf16.msra.mxu0 %v2179
    %2425 = vmatpush.bf16.msra.mxu0 %v2175
    %2426 = vmatpush.bf16.msra.mxu0 %v2171
    %2427 = vmatpush.bf16.msra.mxu0 %v2167
    %2428 = vmatmul.bf16.gmra.mxu0 %v308
    %v2429 = vpop.f32.mrf.mxu0
    %v2430 = vadd.f32 %v2401, %v2429
    %v2431 = vpop.f32.mrf.mxu0
    %v2432 = vadd.f32 %v2403, %v2431
    %2433 = vmatmul.bf16.gmra.mxu0 %v312
    %v2434 = vpop.f32.mrf.mxu0
    %v2435 = vadd.f32 %v2406, %v2434
    %v2436 = vpop.f32.mrf.mxu0
    %v2437 = vadd.f32 %v2408, %v2436
    %2438 = vmatmul.bf16.gmra.mxu0 %v316
    %v2439 = vpop.f32.mrf.mxu0
    %v2440 = vadd.f32 %v2411, %v2439
    %v2441 = vpop.f32.mrf.mxu0
    %v2442 = vadd.f32 %v2413, %v2441
    %2443 = vmatmul.bf16.gmra.mxu0 %v320
    %v2444 = vpop.f32.mrf.mxu0
    %v2445 = vadd.f32 %v2416, %v2444
    %v2446 = vpop.f32.mrf.mxu0
    %v2447 = vadd.f32 %v2418, %v2446
    %2448 = vdwg.mxu0
    %2449 = vmatpush.bf16.msra.mxu0 %v2227
    %2450 = vmatpush.bf16.msra.mxu0 %v2223
    %2451 = vmatpush.bf16.msra.mxu0 %v2219
    %2452 = vmatpush.bf16.msra.mxu0 %v2215
    %2453 = vmatpush.bf16.msra.mxu0 %v2211
    %2454 = vmatpush.bf16.msra.mxu0 %v2207
    %2455 = vmatpush.bf16.msra.mxu0 %v2203
    %2456 = vmatpush.bf16.msra.mxu0 %v2199
    %2457 = vmatmul.bf16.gmra.mxu0 %v309
    %v2458 = vpop.f32.mrf.mxu0
    %v2459 = vadd.f32 %v2430, %v2458
    %v2460 = vpop.f32.mrf.mxu0
    %v2461 = vadd.f32 %v2432, %v2460
    %2462 = vmatmul.bf16.gmra.mxu0 %v313
    %v2463 = vpop.f32.mrf.mxu0
    %v2464 = vadd.f32 %v2435, %v2463
    %v2465 = vpop.f32.mrf.mxu0
    %v2466 = vadd.f32 %v2437, %v2465
    %2467 = vmatmul.bf16.gmra.mxu0 %v317
    %v2468 = vpop.f32.mrf.mxu0
    %v2469 = vadd.f32 %v2440, %v2468
    %v2470 = vpop.f32.mrf.mxu0
    %v2471 = vadd.f32 %v2442, %v2470
    %2472 = vmatmul.bf16.gmra.mxu0 %v321
    %v2473 = vpop.f32.mrf.mxu0
    %v2474 = vadd.f32 %v2445, %v2473
    %v2475 = vpop.f32.mrf.mxu0
    %v2476 = vadd.f32 %v2447, %v2475
    %2477 = vdwg.mxu0
    %2478 = vmatpush.bf16.msra.mxu0 %v2259
    %2479 = vmatpush.bf16.msra.mxu0 %v2255
    %2480 = vmatpush.bf16.msra.mxu0 %v2251
    %2481 = vmatpush.bf16.msra.mxu0 %v2247
    %2482 = vmatpush.bf16.msra.mxu0 %v2243
    %2483 = vmatpush.bf16.msra.mxu0 %v2239
    %2484 = vmatpush.bf16.msra.mxu0 %v2235
    %2485 = vmatpush.bf16.msra.mxu0 %v2231
    %2486 = vmatmul.bf16.gmra.mxu0 %v310
    %v2487 = vpop.f32.mrf.mxu0
    %v2488 = vadd.f32 %v2459, %v2487
    %v2489 = vpop.f32.mrf.mxu0
    %v2490 = vadd.f32 %v2461, %v2489
    %2491 = vmatmul.bf16.gmra.mxu0 %v314
    %v2492 = vpop.f32.mrf.mxu0
    %v2493 = vadd.f32 %v2464, %v2492
    %v2494 = vpop.f32.mrf.mxu0
    %v2495 = vadd.f32 %v2466, %v2494
    %2496 = vmatmul.bf16.gmra.mxu0 %v318
    %v2497 = vpop.f32.mrf.mxu0
    %v2498 = vadd.f32 %v2469, %v2497
    %v2499 = vpop.f32.mrf.mxu0
    %v2500 = vadd.f32 %v2471, %v2499
    %2501 = vmatmul.bf16.gmra.mxu0 %v322
    %v2502 = vpop.f32.mrf.mxu0
    %v2503 = vadd.f32 %v2474, %v2502
    %v2504 = vpop.f32.mrf.mxu0
    %v2505 = vadd.f32 %v2476, %v2504
    %2506 = vdwg.mxu0
    %2507 = vmatpush.bf16.msra.mxu0 %v2164
    %2508 = vmatpush.bf16.msra.mxu0 %v2160
    %2509 = vmatpush.bf16.msra.mxu0 %v2156
    %2510 = vmatpush.bf16.msra.mxu0 %v2152
    %2511 = vmatpush.bf16.msra.mxu0 %v2148
    %2512 = vmatpush.bf16.msra.mxu0 %v2144
    %2513 = vmatpush.bf16.msra.mxu0 %v2140
    %2514 = vmatpush.bf16.msra.mxu0 %v2136
    %2515 = vmatmul.bf16.gmra.mxu0 %v307
    %v2516 = vpop.f32.mrf.mxu0
    %v2517 = vadd.f32 %v1744, %v2516
    %v2518 = vpop.f32.mrf.mxu0
    %v2519 = vadd.f32 %v1744, %v2518
    %2520 = vmatmul.bf16.gmra.mxu0 %v311
    %v2521 = vpop.f32.mrf.mxu0
    %v2522 = vadd.f32 %v1744, %v2521
    %v2523 = vpop.f32.mrf.mxu0
    %v2524 = vadd.f32 %v1744, %v2523
    %2525 = vmatmul.bf16.gmra.mxu0 %v315
    %v2526 = vpop.f32.mrf.mxu0
    %v2527 = vadd.f32 %v1744, %v2526
    %v2528 = vpop.f32.mrf.mxu0
    %v2529 = vadd.f32 %v1744, %v2528
    %2530 = vmatmul.bf16.gmra.mxu0 %v319
    %v2531 = vpop.f32.mrf.mxu0
    %v2532 = vadd.f32 %v1744, %v2531
    %v2533 = vpop.f32.mrf.mxu0
    %v2534 = vadd.f32 %v1744, %v2533
    %2535 = vdwg.mxu0
    %2536 = vmatpush.bf16.msra.mxu0 %v2196
    %2537 = vmatpush.bf16.msra.mxu0 %v2192
    %2538 = vmatpush.bf16.msra.mxu0 %v2188
    %2539 = vmatpush.bf16.msra.mxu0 %v2184
    %2540 = vmatpush.bf16.msra.mxu0 %v2180
    %2541 = vmatpush.bf16.msra.mxu0 %v2176
    %2542 = vmatpush.bf16.msra.mxu0 %v2172
    %2543 = vmatpush.bf16.msra.mxu0 %v2168
    %2544 = vmatmul.bf16.gmra.mxu0 %v308
    %v2545 = vpop.f32.mrf.mxu0
    %v2546 = vadd.f32 %v2517, %v2545
    %v2547 = vpop.f32.mrf.mxu0
    %v2548 = vadd.f32 %v2519, %v2547
    %2549 = vmatmul.bf16.gmra.mxu0 %v312
    %v2550 = vpop.f32.mrf.mxu0
    %v2551 = vadd.f32 %v2522, %v2550
    %v2552 = vpop.f32.mrf.mxu0
    %v2553 = vadd.f32 %v2524, %v2552
    %2554 = vmatmul.bf16.gmra.mxu0 %v316
    %v2555 = vpop.f32.mrf.mxu0
    %v2556 = vadd.f32 %v2527, %v2555
    %v2557 = vpop.f32.mrf.mxu0
    %v2558 = vadd.f32 %v2529, %v2557
    %2559 = vmatmul.bf16.gmra.mxu0 %v320
    %v2560 = vpop.f32.mrf.mxu0
    %v2561 = vadd.f32 %v2532, %v2560
    %v2562 = vpop.f32.mrf.mxu0
    %v2563 = vadd.f32 %v2534, %v2562
    %2564 = vdwg.mxu0
    %2565 = vmatpush.bf16.msra.mxu0 %v2228
    %2566 = vmatpush.bf16.msra.mxu0 %v2224
    %2567 = vmatpush.bf16.msra.mxu0 %v2220
    %2568 = vmatpush.bf16.msra.mxu0 %v2216
    %2569 = vmatpush.bf16.msra.mxu0 %v2212
    %2570 = vmatpush.bf16.msra.mxu0 %v2208
    %2571 = vmatpush.bf16.msra.mxu0 %v2204
    %2572 = vmatpush.bf16.msra.mxu0 %v2200
    %2573 = vmatmul.bf16.gmra.mxu0 %v309
    %v2574 = vpop.f32.mrf.mxu0
    %v2575 = vadd.f32 %v2546, %v2574
    %v2576 = vpop.f32.mrf.mxu0
    %v2577 = vadd.f32 %v2548, %v2576
    %2578 = vmatmul.bf16.gmra.mxu0 %v313
    %v2579 = vpop.f32.mrf.mxu0
    %v2580 = vadd.f32 %v2551, %v2579
    %v2581 = vpop.f32.mrf.mxu0
    %v2582 = vadd.f32 %v2553, %v2581
    %2583 = vmatmul.bf16.gmra.mxu0 %v317
    %v2584 = vpop.f32.mrf.mxu0
    %v2585 = vadd.f32 %v2556, %v2584
    %v2586 = vpop.f32.mrf.mxu0
    %v2587 = vadd.f32 %v2558, %v2586
    %2588 = vmatmul.bf16.gmra.mxu0 %v321
    %v2589 = vpop.f32.mrf.mxu0
    %v2590 = vadd.f32 %v2561, %v2589
    %v2591 = vpop.f32.mrf.mxu0
    %v2592 = vadd.f32 %v2563, %v2591
    %2593 = vdwg.mxu0
    %2594 = vmatpush.bf16.msra.mxu0 %v2260
    %2595 = vmatpush.bf16.msra.mxu0 %v2256
    %2596 = vmatpush.bf16.msra.mxu0 %v2252
    %2597 = vmatpush.bf16.msra.mxu0 %v2248
    %2598 = vmatpush.bf16.msra.mxu0 %v2244
    %2599 = vmatpush.bf16.msra.mxu0 %v2240
    %2600 = vmatpush.bf16.msra.mxu0 %v2236
    %2601 = vmatpush.bf16.msra.mxu0 %v2232
    %2602 = vmatmul.bf16.gmra.mxu0 %v310
    %v2603 = vpop.f32.mrf.mxu0
    %v2604 = vadd.f32 %v2575, %v2603
    %v2605 = vpop.f32.mrf.mxu0
    %v2606 = vadd.f32 %v2577, %v2605
    %2607 = vmatmul.bf16.gmra.mxu0 %v314
    %v2608 = vpop.f32.mrf.mxu0
    %v2609 = vadd.f32 %v2580, %v2608
    %v2610 = vpop.f32.mrf.mxu0
    %v2611 = vadd.f32 %v2582, %v2610
    %2612 = vmatmul.bf16.gmra.mxu0 %v318
    %v2613 = vpop.f32.mrf.mxu0
    %v2614 = vadd.f32 %v2585, %v2613
    %v2615 = vpop.f32.mrf.mxu0
    %v2616 = vadd.f32 %v2587, %v2615
    %2617 = vmatmul.bf16.gmra.mxu0 %v322
    %v2618 = vpop.f32.mrf.mxu0
    %v2619 = vadd.f32 %v2590, %v2618
    %v2620 = vpop.f32.mrf.mxu0
    %v2621 = vadd.f32 %v2592, %v2620
    %2622 = vdwg.mxu0
    %2623 = vmatpush.bf16.msra.mxu0 %v2165
    %2624 = vmatpush.bf16.msra.mxu0 %v2161
    %2625 = vmatpush.bf16.msra.mxu0 %v2157
    %2626 = vmatpush.bf16.msra.mxu0 %v2153
    %2627 = vmatpush.bf16.msra.mxu0 %v2149
    %2628 = vmatpush.bf16.msra.mxu0 %v2145
    %2629 = vmatpush.bf16.msra.mxu0 %v2141
    %2630 = vmatpush.bf16.msra.mxu0 %v2137
    %2631 = vmatmul.bf16.gmra.mxu0 %v307
    %v2632 = vpop.f32.mrf.mxu0
    %v2633 = vadd.f32 %v1745, %v2632
    %v2634 = vpop.f32.mrf.mxu0
    %v2635 = vadd.f32 %v1745, %v2634
    %2636 = vmatmul.bf16.gmra.mxu0 %v311
    %v2637 = vpop.f32.mrf.mxu0
    %v2638 = vadd.f32 %v1745, %v2637
    %v2639 = vpop.f32.mrf.mxu0
    %v2640 = vadd.f32 %v1745, %v2639
    %2641 = vmatmul.bf16.gmra.mxu0 %v315
    %v2642 = vpop.f32.mrf.mxu0
    %v2643 = vadd.f32 %v1745, %v2642
    %v2644 = vpop.f32.mrf.mxu0
    %v2645 = vadd.f32 %v1745, %v2644
    %2646 = vmatmul.bf16.gmra.mxu0 %v319
    %v2647 = vpop.f32.mrf.mxu0
    %v2648 = vadd.f32 %v1745, %v2647
    %v2649 = vpop.f32.mrf.mxu0
    %v2650 = vadd.f32 %v1745, %v2649
    %2651 = vdwg.mxu0
    %2652 = vmatpush.bf16.msra.mxu0 %v2197
    %2653 = vmatpush.bf16.msra.mxu0 %v2193
    %2654 = vmatpush.bf16.msra.mxu0 %v2189
    %2655 = vmatpush.bf16.msra.mxu0 %v2185
    %2656 = vmatpush.bf16.msra.mxu0 %v2181
    %2657 = vmatpush.bf16.msra.mxu0 %v2177
    %2658 = vmatpush.bf16.msra.mxu0 %v2173
    %2659 = vmatpush.bf16.msra.mxu0 %v2169
    %2660 = vmatmul.bf16.gmra.mxu0 %v308
    %v2661 = vpop.f32.mrf.mxu0
    %v2662 = vadd.f32 %v2633, %v2661
    %v2663 = vpop.f32.mrf.mxu0
    %v2664 = vadd.f32 %v2635, %v2663
    %2665 = vmatmul.bf16.gmra.mxu0 %v312
    %v2666 = vpop.f32.mrf.mxu0
    %v2667 = vadd.f32 %v2638, %v2666
    %v2668 = vpop.f32.mrf.mxu0
    %v2669 = vadd.f32 %v2640, %v2668
    %2670 = vmatmul.bf16.gmra.mxu0 %v316
    %v2671 = vpop.f32.mrf.mxu0
    %v2672 = vadd.f32 %v2643, %v2671
    %v2673 = vpop.f32.mrf.mxu0
    %v2674 = vadd.f32 %v2645, %v2673
    %2675 = vmatmul.bf16.gmra.mxu0 %v320
    %v2676 = vpop.f32.mrf.mxu0
    %v2677 = vadd.f32 %v2648, %v2676
    %v2678 = vpop.f32.mrf.mxu0
    %v2679 = vadd.f32 %v2650, %v2678
    %2680 = vdwg.mxu0
    %2681 = vmatpush.bf16.msra.mxu0 %v2229
    %2682 = vmatpush.bf16.msra.mxu0 %v2225
    %2683 = vmatpush.bf16.msra.mxu0 %v2221
    %2684 = vmatpush.bf16.msra.mxu0 %v2217
    %2685 = vmatpush.bf16.msra.mxu0 %v2213
    %2686 = vmatpush.bf16.msra.mxu0 %v2209
    %2687 = vmatpush.bf16.msra.mxu0 %v2205
    %2688 = vmatpush.bf16.msra.mxu0 %v2201
    %2689 = vmatmul.bf16.gmra.mxu0 %v309
    %v2690 = vpop.f32.mrf.mxu0
    %v2691 = vadd.f32 %v2662, %v2690
    %v2692 = vpop.f32.mrf.mxu0
    %v2693 = vadd.f32 %v2664, %v2692
    %2694 = vmatmul.bf16.gmra.mxu0 %v313
    %v2695 = vpop.f32.mrf.mxu0
    %v2696 = vadd.f32 %v2667, %v2695
    %v2697 = vpop.f32.mrf.mxu0
    %v2698 = vadd.f32 %v2669, %v2697
    %2699 = vmatmul.bf16.gmra.mxu0 %v317
    %v2700 = vpop.f32.mrf.mxu0
    %v2701 = vadd.f32 %v2672, %v2700
    %v2702 = vpop.f32.mrf.mxu0
    %v2703 = vadd.f32 %v2674, %v2702
    %2704 = vmatmul.bf16.gmra.mxu0 %v321
    %v2705 = vpop.f32.mrf.mxu0
    %v2706 = vadd.f32 %v2677, %v2705
    %v2707 = vpop.f32.mrf.mxu0
    %v2708 = vadd.f32 %v2679, %v2707
    %2709 = vdwg.mxu0
    %2710 = vmatpush.bf16.msra.mxu0 %v2261
    %2711 = vmatpush.bf16.msra.mxu0 %v2257
    %2712 = vmatpush.bf16.msra.mxu0 %v2253
    %2713 = vmatpush.bf16.msra.mxu0 %v2249
    %2714 = vmatpush.bf16.msra.mxu0 %v2245
    %2715 = vmatpush.bf16.msra.mxu0 %v2241
    %2716 = vmatpush.bf16.msra.mxu0 %v2237
    %2717 = vmatpush.bf16.msra.mxu0 %v2233
    %2718 = vmatmul.bf16.gmra.mxu0 %v310
    %v2719 = vpop.f32.mrf.mxu0
    %v2720 = vadd.f32 %v2691, %v2719
    %v2721 = vpop.f32.mrf.mxu0
    %v2722 = vadd.f32 %v2693, %v2721
    %2723 = vmatmul.bf16.gmra.mxu0 %v314
    %v2724 = vpop.f32.mrf.mxu0
    %v2725 = vadd.f32 %v2696, %v2724
    %v2726 = vpop.f32.mrf.mxu0
    %v2727 = vadd.f32 %v2698, %v2726
    %2728 = vmatmul.bf16.gmra.mxu0 %v318
    %v2729 = vpop.f32.mrf.mxu0
    %v2730 = vadd.f32 %v2701, %v2729
    %v2731 = vpop.f32.mrf.mxu0
    %v2732 = vadd.f32 %v2703, %v2731
    %2733 = vmatmul.bf16.gmra.mxu0 %v322
    %v2734 = vpop.f32.mrf.mxu0
    %v2735 = vadd.f32 %v2706, %v2734
    %v2736 = vpop.f32.mrf.mxu0
    %v2737 = vadd.f32 %v2708, %v2736
    %2738 = vdwg.mxu0
    %2739 = vmatpush.bf16.msra.mxu0 %v2166
    %2740 = vmatpush.bf16.msra.mxu0 %v2162
    %2741 = vmatpush.bf16.msra.mxu0 %v2158
    %2742 = vmatpush.bf16.msra.mxu0 %v2154
    %2743 = vmatpush.bf16.msra.mxu0 %v2150
    %2744 = vmatpush.bf16.msra.mxu0 %v2146
    %2745 = vmatpush.bf16.msra.mxu0 %v2142
    %2746 = vmatpush.bf16.msra.mxu0 %v2138
    %2747 = vmatmul.bf16.gmra.mxu0 %v307
    %v2748 = vpop.f32.mrf.mxu0
    %v2749 = vadd.f32 %v1746, %v2748
    %v2750 = vpop.f32.mrf.mxu0
    %v2751 = vadd.f32 %v1746, %v2750
    %2752 = vmatmul.bf16.gmra.mxu0 %v311
    %v2753 = vpop.f32.mrf.mxu0
    %v2754 = vadd.f32 %v1746, %v2753
    %v2755 = vpop.f32.mrf.mxu0
    %v2756 = vadd.f32 %v1746, %v2755
    %2757 = vmatmul.bf16.gmra.mxu0 %v315
    %v2758 = vpop.f32.mrf.mxu0
    %v2759 = vadd.f32 %v1746, %v2758
    %v2760 = vpop.f32.mrf.mxu0
    %v2761 = vadd.f32 %v1746, %v2760
    %2762 = vmatmul.bf16.gmra.mxu0 %v319
    %v2763 = vpop.f32.mrf.mxu0
    %v2764 = vadd.f32 %v1746, %v2763
    %v2765 = vpop.f32.mrf.mxu0
    %v2766 = vadd.f32 %v1746, %v2765
    %2767 = vdwg.mxu0
    %2768 = vmatpush.bf16.msra.mxu0 %v2198
    %2769 = vmatpush.bf16.msra.mxu0 %v2194
    %2770 = vmatpush.bf16.msra.mxu0 %v2190
    %2771 = vmatpush.bf16.msra.mxu0 %v2186
    %2772 = vmatpush.bf16.msra.mxu0 %v2182
    %2773 = vmatpush.bf16.msra.mxu0 %v2178
    %2774 = vmatpush.bf16.msra.mxu0 %v2174
    %2775 = vmatpush.bf16.msra.mxu0 %v2170
    %2776 = vmatmul.bf16.gmra.mxu0 %v308
    %v2777 = vpop.f32.mrf.mxu0
    %v2778 = vadd.f32 %v2749, %v2777
    %v2779 = vpop.f32.mrf.mxu0
    %v2780 = vadd.f32 %v2751, %v2779
    %2781 = vmatmul.bf16.gmra.mxu0 %v312
    %v2782 = vpop.f32.mrf.mxu0
    %v2783 = vadd.f32 %v2754, %v2782
    %v2784 = vpop.f32.mrf.mxu0
    %v2785 = vadd.f32 %v2756, %v2784
    %2786 = vmatmul.bf16.gmra.mxu0 %v316
    %v2787 = vpop.f32.mrf.mxu0
    %v2788 = vadd.f32 %v2759, %v2787
    %v2789 = vpop.f32.mrf.mxu0
    %v2790 = vadd.f32 %v2761, %v2789
    %2791 = vmatmul.bf16.gmra.mxu0 %v320
    %v2792 = vpop.f32.mrf.mxu0
    %v2793 = vadd.f32 %v2764, %v2792
    %v2794 = vpop.f32.mrf.mxu0
    %v2795 = vadd.f32 %v2766, %v2794
    %2796 = vdwg.mxu0
    %2797 = vmatpush.bf16.msra.mxu0 %v2230
    %2798 = vmatpush.bf16.msra.mxu0 %v2226
    %2799 = vmatpush.bf16.msra.mxu0 %v2222
    %2800 = vmatpush.bf16.msra.mxu0 %v2218
    %2801 = vmatpush.bf16.msra.mxu0 %v2214
    %2802 = vmatpush.bf16.msra.mxu0 %v2210
    %2803 = vmatpush.bf16.msra.mxu0 %v2206
    %2804 = vmatpush.bf16.msra.mxu0 %v2202
    %2805 = vmatmul.bf16.gmra.mxu0 %v309
    %v2806 = vpop.f32.mrf.mxu0
    %v2807 = vadd.f32 %v2778, %v2806
    %v2808 = vpop.f32.mrf.mxu0
    %v2809 = vadd.f32 %v2780, %v2808
    %2810 = vmatmul.bf16.gmra.mxu0 %v313
    %v2811 = vpop.f32.mrf.mxu0
    %v2812 = vadd.f32 %v2783, %v2811
    %v2813 = vpop.f32.mrf.mxu0
    %v2814 = vadd.f32 %v2785, %v2813
    %2815 = vmatmul.bf16.gmra.mxu0 %v317
    %v2816 = vpop.f32.mrf.mxu0
    %v2817 = vadd.f32 %v2788, %v2816
    %v2818 = vpop.f32.mrf.mxu0
    %v2819 = vadd.f32 %v2790, %v2818
    %2820 = vmatmul.bf16.gmra.mxu0 %v321
    %v2821 = vpop.f32.mrf.mxu0
    %v2822 = vadd.f32 %v2793, %v2821
    %v2823 = vpop.f32.mrf.mxu0
    %v2824 = vadd.f32 %v2795, %v2823
    %2825 = vdwg.mxu0
    %2826 = vmatpush.bf16.msra.mxu0 %v2262
    %2827 = vmatpush.bf16.msra.mxu0 %v2258
    %2828 = vmatpush.bf16.msra.mxu0 %v2254
    %2829 = vmatpush.bf16.msra.mxu0 %v2250
    %2830 = vmatpush.bf16.msra.mxu0 %v2246
    %2831 = vmatpush.bf16.msra.mxu0 %v2242
    %2832 = vmatpush.bf16.msra.mxu0 %v2238
    %2833 = vmatpush.bf16.msra.mxu0 %v2234
    %2834 = vmatmul.bf16.gmra.mxu0 %v310
    %v2835 = vpop.f32.mrf.mxu0
    %v2836 = vadd.f32 %v2807, %v2835
    %v2837 = vpop.f32.mrf.mxu0
    %v2838 = vadd.f32 %v2809, %v2837
    %2839 = vmatmul.bf16.gmra.mxu0 %v314
    %v2840 = vpop.f32.mrf.mxu0
    %v2841 = vadd.f32 %v2812, %v2840
    %v2842 = vpop.f32.mrf.mxu0
    %v2843 = vadd.f32 %v2814, %v2842
    %2844 = vmatmul.bf16.gmra.mxu0 %v318
    %v2845 = vpop.f32.mrf.mxu0
    %v2846 = vadd.f32 %v2817, %v2845
    %v2847 = vpop.f32.mrf.mxu0
    %v2848 = vadd.f32 %v2819, %v2847
    %2849 = vmatmul.bf16.gmra.mxu0 %v322
    %v2850 = vpop.f32.mrf.mxu0
    %v2851 = vadd.f32 %v2822, %v2850
    %v2852 = vpop.f32.mrf.mxu0
    %v2853 = vadd.f32 %v2824, %v2852
    %2854 = vdwg.mxu0
    %v2855 = vld [vmem:[#allocation12] sm:$0xff]
    %v2856 = vld [vmem:[#allocation12 + $0x8] sm:$0xff]
    %v2857 = vld [vmem:[#allocation12 + $0x10] sm:$0xff]
    %v2858 = vld [vmem:[#allocation12 + $0x18] sm:$0xff]
    %v2859 = vld [vmem:[#allocation12 + $0x20] sm:$0xff]
    %v2860 = vld [vmem:[#allocation12 + $0x28] sm:$0xff]
    %v2861 = vld [vmem:[#allocation12 + $0x30] sm:$0xff]
    %v2862 = vld [vmem:[#allocation12 + $0x38] sm:$0xff]
    %v2863 = vld [vmem:[#allocation12 + $0x40] sm:$0xff]
    %v2864 = vld [vmem:[#allocation12 + $0x48] sm:$0xff]
    %v2865 = vld [vmem:[#allocation12 + $0x50] sm:$0xff]
    %v2866 = vld [vmem:[#allocation12 + $0x58] sm:$0xff]
    %v2867 = vld [vmem:[#allocation12 + $0x60] sm:$0xff]
    %v2868 = vld [vmem:[#allocation12 + $0x68] sm:$0xff]
    %v2869 = vld [vmem:[#allocation12 + $0x70] sm:$0xff]
    %v2870 = vld [vmem:[#allocation12 + $0x78] sm:$0xff]
    %v2871 = vld [vmem:[#allocation12 + $0x80] sm:$0xff]
    %v2872 = vld [vmem:[#allocation12 + $0x88] sm:$0xff]
    %v2873 = vld [vmem:[#allocation12 + $0x90] sm:$0xff]
    %v2874 = vld [vmem:[#allocation12 + $0x98] sm:$0xff]
    %v2875 = vld [vmem:[#allocation12 + $0xa0] sm:$0xff]
    %v2876 = vld [vmem:[#allocation12 + $0xa8] sm:$0xff]
    %v2877 = vld [vmem:[#allocation12 + $0xb0] sm:$0xff]
    %v2878 = vld [vmem:[#allocation12 + $0xb8] sm:$0xff]
    %v2879 = vld [vmem:[#allocation12 + $0xc0] sm:$0xff]
    %v2880 = vld [vmem:[#allocation12 + $0xc8] sm:$0xff]
    %v2881 = vld [vmem:[#allocation12 + $0xd0] sm:$0xff]
    %v2882 = vld [vmem:[#allocation12 + $0xd8] sm:$0xff]
    %v2883 = vld [vmem:[#allocation12 + $0xe0] sm:$0xff]
    %v2884 = vld [vmem:[#allocation12 + $0xe8] sm:$0xff]
    %v2885 = vld [vmem:[#allocation12 + $0xf0] sm:$0xff]
    %v2886 = vld [vmem:[#allocation12 + $0xf8] sm:$0xff]
    %v2887 = vld [vmem:[#allocation12 + $0x100] sm:$0xff]
    %v2888 = vld [vmem:[#allocation12 + $0x108] sm:$0xff]
    %v2889 = vld [vmem:[#allocation12 + $0x110] sm:$0xff]
    %v2890 = vld [vmem:[#allocation12 + $0x118] sm:$0xff]
    %v2891 = vld [vmem:[#allocation12 + $0x120] sm:$0xff]
    %v2892 = vld [vmem:[#allocation12 + $0x128] sm:$0xff]
    %v2893 = vld [vmem:[#allocation12 + $0x130] sm:$0xff]
    %v2894 = vld [vmem:[#allocation12 + $0x138] sm:$0xff]
    %v2895 = vld [vmem:[#allocation12 + $0x140] sm:$0xff]
    %v2896 = vld [vmem:[#allocation12 + $0x148] sm:$0xff]
    %v2897 = vld [vmem:[#allocation12 + $0x150] sm:$0xff]
    %v2898 = vld [vmem:[#allocation12 + $0x158] sm:$0xff]
    %v2899 = vld [vmem:[#allocation12 + $0x160] sm:$0xff]
    %v2900 = vld [vmem:[#allocation12 + $0x168] sm:$0xff]
    %v2901 = vld [vmem:[#allocation12 + $0x170] sm:$0xff]
    %v2902 = vld [vmem:[#allocation12 + $0x178] sm:$0xff]
    %v2903 = vld [vmem:[#allocation12 + $0x180] sm:$0xff]
    %v2904 = vld [vmem:[#allocation12 + $0x188] sm:$0xff]
    %v2905 = vld [vmem:[#allocation12 + $0x190] sm:$0xff]
    %v2906 = vld [vmem:[#allocation12 + $0x198] sm:$0xff]
    %v2907 = vld [vmem:[#allocation12 + $0x1a0] sm:$0xff]
    %v2908 = vld [vmem:[#allocation12 + $0x1a8] sm:$0xff]
    %v2909 = vld [vmem:[#allocation12 + $0x1b0] sm:$0xff]
    %v2910 = vld [vmem:[#allocation12 + $0x1b8] sm:$0xff]
    %v2911 = vld [vmem:[#allocation12 + $0x1c0] sm:$0xff]
    %v2912 = vld [vmem:[#allocation12 + $0x1c8] sm:$0xff]
    %v2913 = vld [vmem:[#allocation12 + $0x1d0] sm:$0xff]
    %v2914 = vld [vmem:[#allocation12 + $0x1d8] sm:$0xff]
    %v2915 = vld [vmem:[#allocation12 + $0x1e0] sm:$0xff]
    %v2916 = vld [vmem:[#allocation12 + $0x1e8] sm:$0xff]
    %v2917 = vld [vmem:[#allocation12 + $0x1f0] sm:$0xff]
    %v2918 = vld [vmem:[#allocation12 + $0x1f8] sm:$0xff]
    %v2919 = vld [vmem:[#allocation12 + $0x200] sm:$0xff]
    %v2920 = vld [vmem:[#allocation12 + $0x208] sm:$0xff]
    %v2921 = vld [vmem:[#allocation12 + $0x210] sm:$0xff]
    %v2922 = vld [vmem:[#allocation12 + $0x218] sm:$0xff]
    %v2923 = vld [vmem:[#allocation12 + $0x220] sm:$0xff]
    %v2924 = vld [vmem:[#allocation12 + $0x228] sm:$0xff]
    %v2925 = vld [vmem:[#allocation12 + $0x230] sm:$0xff]
    %v2926 = vld [vmem:[#allocation12 + $0x238] sm:$0xff]
    %v2927 = vld [vmem:[#allocation12 + $0x240] sm:$0xff]
    %v2928 = vld [vmem:[#allocation12 + $0x248] sm:$0xff]
    %v2929 = vld [vmem:[#allocation12 + $0x250] sm:$0xff]
    %v2930 = vld [vmem:[#allocation12 + $0x258] sm:$0xff]
    %v2931 = vld [vmem:[#allocation12 + $0x260] sm:$0xff]
    %v2932 = vld [vmem:[#allocation12 + $0x268] sm:$0xff]
    %v2933 = vld [vmem:[#allocation12 + $0x270] sm:$0xff]
    %v2934 = vld [vmem:[#allocation12 + $0x278] sm:$0xff]
    %v2935 = vld [vmem:[#allocation12 + $0x280] sm:$0xff]
    %v2936 = vld [vmem:[#allocation12 + $0x288] sm:$0xff]
    %v2937 = vld [vmem:[#allocation12 + $0x290] sm:$0xff]
    %v2938 = vld [vmem:[#allocation12 + $0x298] sm:$0xff]
    %v2939 = vld [vmem:[#allocation12 + $0x2a0] sm:$0xff]
    %v2940 = vld [vmem:[#allocation12 + $0x2a8] sm:$0xff]
    %v2941 = vld [vmem:[#allocation12 + $0x2b0] sm:$0xff]
    %v2942 = vld [vmem:[#allocation12 + $0x2b8] sm:$0xff]
    %v2943 = vld [vmem:[#allocation12 + $0x2c0] sm:$0xff]
    %v2944 = vld [vmem:[#allocation12 + $0x2c8] sm:$0xff]
    %v2945 = vld [vmem:[#allocation12 + $0x2d0] sm:$0xff]
    %v2946 = vld [vmem:[#allocation12 + $0x2d8] sm:$0xff]
    %v2947 = vld [vmem:[#allocation12 + $0x2e0] sm:$0xff]
    %v2948 = vld [vmem:[#allocation12 + $0x2e8] sm:$0xff]
    %v2949 = vld [vmem:[#allocation12 + $0x2f0] sm:$0xff]
    %v2950 = vld [vmem:[#allocation12 + $0x2f8] sm:$0xff]
    %v2951 = vld [vmem:[#allocation12 + $0x300] sm:$0xff]
    %v2952 = vld [vmem:[#allocation12 + $0x308] sm:$0xff]
    %v2953 = vld [vmem:[#allocation12 + $0x310] sm:$0xff]
    %v2954 = vld [vmem:[#allocation12 + $0x318] sm:$0xff]
    %v2955 = vld [vmem:[#allocation12 + $0x320] sm:$0xff]
    %v2956 = vld [vmem:[#allocation12 + $0x328] sm:$0xff]
    %v2957 = vld [vmem:[#allocation12 + $0x330] sm:$0xff]
    %v2958 = vld [vmem:[#allocation12 + $0x338] sm:$0xff]
    %v2959 = vld [vmem:[#allocation12 + $0x340] sm:$0xff]
    %v2960 = vld [vmem:[#allocation12 + $0x348] sm:$0xff]
    %v2961 = vld [vmem:[#allocation12 + $0x350] sm:$0xff]
    %v2962 = vld [vmem:[#allocation12 + $0x358] sm:$0xff]
    %v2963 = vld [vmem:[#allocation12 + $0x360] sm:$0xff]
    %v2964 = vld [vmem:[#allocation12 + $0x368] sm:$0xff]
    %v2965 = vld [vmem:[#allocation12 + $0x370] sm:$0xff]
    %v2966 = vld [vmem:[#allocation12 + $0x378] sm:$0xff]
    %v2967 = vld [vmem:[#allocation12 + $0x380] sm:$0xff]
    %v2968 = vld [vmem:[#allocation12 + $0x388] sm:$0xff]
    %v2969 = vld [vmem:[#allocation12 + $0x390] sm:$0xff]
    %v2970 = vld [vmem:[#allocation12 + $0x398] sm:$0xff]
    %v2971 = vld [vmem:[#allocation12 + $0x3a0] sm:$0xff]
    %v2972 = vld [vmem:[#allocation12 + $0x3a8] sm:$0xff]
    %v2973 = vld [vmem:[#allocation12 + $0x3b0] sm:$0xff]
    %v2974 = vld [vmem:[#allocation12 + $0x3b8] sm:$0xff]
    %v2975 = vld [vmem:[#allocation12 + $0x3c0] sm:$0xff]
    %v2976 = vld [vmem:[#allocation12 + $0x3c8] sm:$0xff]
    %v2977 = vld [vmem:[#allocation12 + $0x3d0] sm:$0xff]
    %v2978 = vld [vmem:[#allocation12 + $0x3d8] sm:$0xff]
    %v2979 = vld [vmem:[#allocation12 + $0x3e0] sm:$0xff]
    %v2980 = vld [vmem:[#allocation12 + $0x3e8] sm:$0xff]
    %v2981 = vld [vmem:[#allocation12 + $0x3f0] sm:$0xff]
    %v2982 = vld [vmem:[#allocation12 + $0x3f8] sm:$0xff]
    %v2983 = vld [vmem:[#allocation14] sm:$0xf]
    %v2985 = vperm.slane %v2983, 0
    %v2986 = vperm.slane %v2983, 1
    %v2987 = vperm.slane %v2983, 2
    %v2988 = vperm.slane %v2983, 3
    %v3121 = vunpack.c.l.b16 %v2855
    %v3122 = vunpack.c.h.b16 %v2855
    %v3123 = vunpack.c.l.b16 %v2856
    %v3124 = vunpack.c.h.b16 %v2856
    %v3125 = vunpack.c.l.b16 %v2857
    %v3126 = vunpack.c.h.b16 %v2857
    %v3127 = vunpack.c.l.b16 %v2858
    %v3128 = vunpack.c.h.b16 %v2858
    %v3129 = vunpack.c.l.b16 %v2859
    %v3130 = vunpack.c.h.b16 %v2859
    %v3131 = vunpack.c.l.b16 %v2860
    %v3132 = vunpack.c.h.b16 %v2860
    %v3133 = vunpack.c.l.b16 %v2861
    %v3134 = vunpack.c.h.b16 %v2861
    %v3135 = vunpack.c.l.b16 %v2862
    %v3136 = vunpack.c.h.b16 %v2862
    %v3137 = vunpack.c.l.b16 %v2863
    %v3138 = vunpack.c.h.b16 %v2863
    %v3139 = vunpack.c.l.b16 %v2864
    %v3140 = vunpack.c.h.b16 %v2864
    %v3141 = vunpack.c.l.b16 %v2865
    %v3142 = vunpack.c.h.b16 %v2865
    %v3143 = vunpack.c.l.b16 %v2866
    %v3144 = vunpack.c.h.b16 %v2866
    %v3145 = vunpack.c.l.b16 %v2867
    %v3146 = vunpack.c.h.b16 %v2867
    %v3147 = vunpack.c.l.b16 %v2868
    %v3148 = vunpack.c.h.b16 %v2868
    %v3149 = vunpack.c.l.b16 %v2869
    %v3150 = vunpack.c.h.b16 %v2869
    %v3151 = vunpack.c.l.b16 %v2870
    %v3152 = vunpack.c.h.b16 %v2870
    %v3153 = vunpack.c.l.b16 %v2871
    %v3154 = vunpack.c.h.b16 %v2871
    %v3155 = vunpack.c.l.b16 %v2872
    %v3156 = vunpack.c.h.b16 %v2872
    %v3157 = vunpack.c.l.b16 %v2873
    %v3158 = vunpack.c.h.b16 %v2873
    %v3159 = vunpack.c.l.b16 %v2874
    %v3160 = vunpack.c.h.b16 %v2874
    %v3161 = vunpack.c.l.b16 %v2875
    %v3162 = vunpack.c.h.b16 %v2875
    %v3163 = vunpack.c.l.b16 %v2876
    %v3164 = vunpack.c.h.b16 %v2876
    %v3165 = vunpack.c.l.b16 %v2877
    %v3166 = vunpack.c.h.b16 %v2877
    %v3167 = vunpack.c.l.b16 %v2878
    %v3168 = vunpack.c.h.b16 %v2878
    %v3169 = vunpack.c.l.b16 %v2879
    %v3170 = vunpack.c.h.b16 %v2879
    %v3171 = vunpack.c.l.b16 %v2880
    %v3172 = vunpack.c.h.b16 %v2880
    %v3173 = vunpack.c.l.b16 %v2881
    %v3174 = vunpack.c.h.b16 %v2881
    %v3175 = vunpack.c.l.b16 %v2882
    %v3176 = vunpack.c.h.b16 %v2882
    %v3177 = vunpack.c.l.b16 %v2883
    %v3178 = vunpack.c.h.b16 %v2883
    %v3179 = vunpack.c.l.b16 %v2884
    %v3180 = vunpack.c.h.b16 %v2884
    %v3181 = vunpack.c.l.b16 %v2885
    %v3182 = vunpack.c.h.b16 %v2885
    %v3183 = vunpack.c.l.b16 %v2886
    %v3184 = vunpack.c.h.b16 %v2886
    %v3185 = vunpack.c.l.b16 %v2887
    %v3186 = vunpack.c.h.b16 %v2887
    %v3187 = vunpack.c.l.b16 %v2888
    %v3188 = vunpack.c.h.b16 %v2888
    %v3189 = vunpack.c.l.b16 %v2889
    %v3190 = vunpack.c.h.b16 %v2889
    %v3191 = vunpack.c.l.b16 %v2890
    %v3192 = vunpack.c.h.b16 %v2890
    %v3193 = vunpack.c.l.b16 %v2891
    %v3194 = vunpack.c.h.b16 %v2891
    %v3195 = vunpack.c.l.b16 %v2892
    %v3196 = vunpack.c.h.b16 %v2892
    %v3197 = vunpack.c.l.b16 %v2893
    %v3198 = vunpack.c.h.b16 %v2893
    %v3199 = vunpack.c.l.b16 %v2894
    %v3200 = vunpack.c.h.b16 %v2894
    %v3201 = vunpack.c.l.b16 %v2895
    %v3202 = vunpack.c.h.b16 %v2895
    %v3203 = vunpack.c.l.b16 %v2896
    %v3204 = vunpack.c.h.b16 %v2896
    %v3205 = vunpack.c.l.b16 %v2897
    %v3206 = vunpack.c.h.b16 %v2897
    %v3207 = vunpack.c.l.b16 %v2898
    %v3208 = vunpack.c.h.b16 %v2898
    %v3209 = vunpack.c.l.b16 %v2899
    %v3210 = vunpack.c.h.b16 %v2899
    %v3211 = vunpack.c.l.b16 %v2900
    %v3212 = vunpack.c.h.b16 %v2900
    %v3213 = vunpack.c.l.b16 %v2901
    %v3214 = vunpack.c.h.b16 %v2901
    %v3215 = vunpack.c.l.b16 %v2902
    %v3216 = vunpack.c.h.b16 %v2902
    %v3217 = vunpack.c.l.b16 %v2903
    %v3218 = vunpack.c.h.b16 %v2903
    %v3219 = vunpack.c.l.b16 %v2904
    %v3220 = vunpack.c.h.b16 %v2904
    %v3221 = vunpack.c.l.b16 %v2905
    %v3222 = vunpack.c.h.b16 %v2905
    %v3223 = vunpack.c.l.b16 %v2906
    %v3224 = vunpack.c.h.b16 %v2906
    %v3225 = vunpack.c.l.b16 %v2907
    %v3226 = vunpack.c.h.b16 %v2907
    %v3227 = vunpack.c.l.b16 %v2908
    %v3228 = vunpack.c.h.b16 %v2908
    %v3229 = vunpack.c.l.b16 %v2909
    %v3230 = vunpack.c.h.b16 %v2909
    %v3231 = vunpack.c.l.b16 %v2910
    %v3232 = vunpack.c.h.b16 %v2910
    %v3233 = vunpack.c.l.b16 %v2911
    %v3234 = vunpack.c.h.b16 %v2911
    %v3235 = vunpack.c.l.b16 %v2912
    %v3236 = vunpack.c.h.b16 %v2912
    %v3237 = vunpack.c.l.b16 %v2913
    %v3238 = vunpack.c.h.b16 %v2913
    %v3239 = vunpack.c.l.b16 %v2914
    %v3240 = vunpack.c.h.b16 %v2914
    %v3241 = vunpack.c.l.b16 %v2915
    %v3242 = vunpack.c.h.b16 %v2915
    %v3243 = vunpack.c.l.b16 %v2916
    %v3244 = vunpack.c.h.b16 %v2916
    %v3245 = vunpack.c.l.b16 %v2917
    %v3246 = vunpack.c.h.b16 %v2917
    %v3247 = vunpack.c.l.b16 %v2918
    %v3248 = vunpack.c.h.b16 %v2918
    %v3249 = vunpack.c.l.b16 %v2919
    %v3250 = vunpack.c.h.b16 %v2919
    %v3251 = vunpack.c.l.b16 %v2920
    %v3252 = vunpack.c.h.b16 %v2920
    %v3253 = vunpack.c.l.b16 %v2921
    %v3254 = vunpack.c.h.b16 %v2921
    %v3255 = vunpack.c.l.b16 %v2922
    %v3256 = vunpack.c.h.b16 %v2922
    %v3257 = vunpack.c.l.b16 %v2923
    %v3258 = vunpack.c.h.b16 %v2923
    %v3259 = vunpack.c.l.b16 %v2924
    %v3260 = vunpack.c.h.b16 %v2924
    %v3261 = vunpack.c.l.b16 %v2925
    %v3262 = vunpack.c.h.b16 %v2925
    %v3263 = vunpack.c.l.b16 %v2926
    %v3264 = vunpack.c.h.b16 %v2926
    %v3265 = vunpack.c.l.b16 %v2927
    %v3266 = vunpack.c.h.b16 %v2927
    %v3267 = vunpack.c.l.b16 %v2928
    %v3268 = vunpack.c.h.b16 %v2928
    %v3269 = vunpack.c.l.b16 %v2929
    %v3270 = vunpack.c.h.b16 %v2929
    %v3271 = vunpack.c.l.b16 %v2930
    %v3272 = vunpack.c.h.b16 %v2930
    %v3273 = vunpack.c.l.b16 %v2931
    %v3274 = vunpack.c.h.b16 %v2931
    %v3275 = vunpack.c.l.b16 %v2932
    %v3276 = vunpack.c.h.b16 %v2932
    %v3277 = vunpack.c.l.b16 %v2933
    %v3278 = vunpack.c.h.b16 %v2933
    %v3279 = vunpack.c.l.b16 %v2934
    %v3280 = vunpack.c.h.b16 %v2934
    %v3281 = vunpack.c.l.b16 %v2935
    %v3282 = vunpack.c.h.b16 %v2935
    %v3283 = vunpack.c.l.b16 %v2936
    %v3284 = vunpack.c.h.b16 %v2936
    %v3285 = vunpack.c.l.b16 %v2937
    %v3286 = vunpack.c.h.b16 %v2937
    %v3287 = vunpack.c.l.b16 %v2938
    %v3288 = vunpack.c.h.b16 %v2938
    %v3289 = vunpack.c.l.b16 %v2939
    %v3290 = vunpack.c.h.b16 %v2939
    %v3291 = vunpack.c.l.b16 %v2940
    %v3292 = vunpack.c.h.b16 %v2940
    %v3293 = vunpack.c.l.b16 %v2941
    %v3294 = vunpack.c.h.b16 %v2941
    %v3295 = vunpack.c.l.b16 %v2942
    %v3296 = vunpack.c.h.b16 %v2942
    %v3297 = vunpack.c.l.b16 %v2943
    %v3298 = vunpack.c.h.b16 %v2943
    %v3299 = vunpack.c.l.b16 %v2944
    %v3300 = vunpack.c.h.b16 %v2944
    %v3301 = vunpack.c.l.b16 %v2945
    %v3302 = vunpack.c.h.b16 %v2945
    %v3303 = vunpack.c.l.b16 %v2946
    %v3304 = vunpack.c.h.b16 %v2946
    %v3305 = vunpack.c.l.b16 %v2947
    %v3306 = vunpack.c.h.b16 %v2947
    %v3307 = vunpack.c.l.b16 %v2948
    %v3308 = vunpack.c.h.b16 %v2948
    %v3309 = vunpack.c.l.b16 %v2949
    %v3310 = vunpack.c.h.b16 %v2949
    %v3311 = vunpack.c.l.b16 %v2950
    %v3312 = vunpack.c.h.b16 %v2950
    %v3313 = vunpack.c.l.b16 %v2951
    %v3314 = vunpack.c.h.b16 %v2951
    %v3315 = vunpack.c.l.b16 %v2952
    %v3316 = vunpack.c.h.b16 %v2952
    %v3317 = vunpack.c.l.b16 %v2953
    %v3318 = vunpack.c.h.b16 %v2953
    %v3319 = vunpack.c.l.b16 %v2954
    %v3320 = vunpack.c.h.b16 %v2954
    %v3321 = vunpack.c.l.b16 %v2955
    %v3322 = vunpack.c.h.b16 %v2955
    %v3323 = vunpack.c.l.b16 %v2956
    %v3324 = vunpack.c.h.b16 %v2956
    %v3325 = vunpack.c.l.b16 %v2957
    %v3326 = vunpack.c.h.b16 %v2957
    %v3327 = vunpack.c.l.b16 %v2958
    %v3328 = vunpack.c.h.b16 %v2958
    %v3329 = vunpack.c.l.b16 %v2959
    %v3330 = vunpack.c.h.b16 %v2959
    %v3331 = vunpack.c.l.b16 %v2960
    %v3332 = vunpack.c.h.b16 %v2960
    %v3333 = vunpack.c.l.b16 %v2961
    %v3334 = vunpack.c.h.b16 %v2961
    %v3335 = vunpack.c.l.b16 %v2962
    %v3336 = vunpack.c.h.b16 %v2962
    %v3337 = vunpack.c.l.b16 %v2963
    %v3338 = vunpack.c.h.b16 %v2963
    %v3339 = vunpack.c.l.b16 %v2964
    %v3340 = vunpack.c.h.b16 %v2964
    %v3341 = vunpack.c.l.b16 %v2965
    %v3342 = vunpack.c.h.b16 %v2965
    %v3343 = vunpack.c.l.b16 %v2966
    %v3344 = vunpack.c.h.b16 %v2966
    %v3345 = vunpack.c.l.b16 %v2967
    %v3346 = vunpack.c.h.b16 %v2967
    %v3347 = vunpack.c.l.b16 %v2968
    %v3348 = vunpack.c.h.b16 %v2968
    %v3349 = vunpack.c.l.b16 %v2969
    %v3350 = vunpack.c.h.b16 %v2969
    %v3351 = vunpack.c.l.b16 %v2970
    %v3352 = vunpack.c.h.b16 %v2970
    %v3353 = vunpack.c.l.b16 %v2971
    %v3354 = vunpack.c.h.b16 %v2971
    %v3355 = vunpack.c.l.b16 %v2972
    %v3356 = vunpack.c.h.b16 %v2972
    %v3357 = vunpack.c.l.b16 %v2973
    %v3358 = vunpack.c.h.b16 %v2973
    %v3359 = vunpack.c.l.b16 %v2974
    %v3360 = vunpack.c.h.b16 %v2974
    %v3361 = vunpack.c.l.b16 %v2975
    %v3362 = vunpack.c.h.b16 %v2975
    %v3363 = vunpack.c.l.b16 %v2976
    %v3364 = vunpack.c.h.b16 %v2976
    %v3365 = vunpack.c.l.b16 %v2977
    %v3366 = vunpack.c.h.b16 %v2977
    %v3367 = vunpack.c.l.b16 %v2978
    %v3368 = vunpack.c.h.b16 %v2978
    %v3369 = vunpack.c.l.b16 %v2979
    %v3370 = vunpack.c.h.b16 %v2979
    %v3371 = vunpack.c.l.b16 %v2980
    %v3372 = vunpack.c.h.b16 %v2980
    %v3373 = vunpack.c.l.b16 %v2981
    %v3374 = vunpack.c.h.b16 %v2981
    %v3375 = vunpack.c.l.b16 %v2982
    %v3376 = vunpack.c.h.b16 %v2982
    %v3377 = vpack.c.b16 %v3125, %v3121
    %v3378 = vpack.c.b16 %v3126, %v3122
    %v3379 = vpack.c.b16 %v3127, %v3123
    %v3380 = vpack.c.b16 %v3128, %v3124
    %v3381 = vpack.c.b16 %v3133, %v3129
    %v3382 = vpack.c.b16 %v3134, %v3130
    %v3383 = vpack.c.b16 %v3135, %v3131
    %v3384 = vpack.c.b16 %v3136, %v3132
    %v3385 = vpack.c.b16 %v3141, %v3137
    %v3386 = vpack.c.b16 %v3142, %v3138
    %v3387 = vpack.c.b16 %v3143, %v3139
    %v3388 = vpack.c.b16 %v3144, %v3140
    %v3389 = vpack.c.b16 %v3149, %v3145
    %v3390 = vpack.c.b16 %v3150, %v3146
    %v3391 = vpack.c.b16 %v3151, %v3147
    %v3392 = vpack.c.b16 %v3152, %v3148
    %v3393 = vpack.c.b16 %v3157, %v3153
    %v3394 = vpack.c.b16 %v3158, %v3154
    %v3395 = vpack.c.b16 %v3159, %v3155
    %v3396 = vpack.c.b16 %v3160, %v3156
    %v3397 = vpack.c.b16 %v3165, %v3161
    %v3398 = vpack.c.b16 %v3166, %v3162
    %v3399 = vpack.c.b16 %v3167, %v3163
    %v3400 = vpack.c.b16 %v3168, %v3164
    %v3401 = vpack.c.b16 %v3173, %v3169
    %v3402 = vpack.c.b16 %v3174, %v3170
    %v3403 = vpack.c.b16 %v3175, %v3171
    %v3404 = vpack.c.b16 %v3176, %v3172
    %v3405 = vpack.c.b16 %v3181, %v3177
    %v3406 = vpack.c.b16 %v3182, %v3178
    %v3407 = vpack.c.b16 %v3183, %v3179
    %v3408 = vpack.c.b16 %v3184, %v3180
    %v3409 = vpack.c.b16 %v3189, %v3185
    %v3410 = vpack.c.b16 %v3190, %v3186
    %v3411 = vpack.c.b16 %v3191, %v3187
    %v3412 = vpack.c.b16 %v3192, %v3188
    %v3413 = vpack.c.b16 %v3197, %v3193
    %v3414 = vpack.c.b16 %v3198, %v3194
    %v3415 = vpack.c.b16 %v3199, %v3195
    %v3416 = vpack.c.b16 %v3200, %v3196
    %v3417 = vpack.c.b16 %v3205, %v3201
    %v3418 = vpack.c.b16 %v3206, %v3202
    %v3419 = vpack.c.b16 %v3207, %v3203
    %v3420 = vpack.c.b16 %v3208, %v3204
    %v3421 = vpack.c.b16 %v3213, %v3209
    %v3422 = vpack.c.b16 %v3214, %v3210
    %v3423 = vpack.c.b16 %v3215, %v3211
    %v3424 = vpack.c.b16 %v3216, %v3212
    %v3425 = vpack.c.b16 %v3221, %v3217
    %v3426 = vpack.c.b16 %v3222, %v3218
    %v3427 = vpack.c.b16 %v3223, %v3219
    %v3428 = vpack.c.b16 %v3224, %v3220
    %v3429 = vpack.c.b16 %v3229, %v3225
    %v3430 = vpack.c.b16 %v3230, %v3226
    %v3431 = vpack.c.b16 %v3231, %v3227
    %v3432 = vpack.c.b16 %v3232, %v3228
    %v3433 = vpack.c.b16 %v3237, %v3233
    %v3434 = vpack.c.b16 %v3238, %v3234
    %v3435 = vpack.c.b16 %v3239, %v3235
    %v3436 = vpack.c.b16 %v3240, %v3236
    %v3437 = vpack.c.b16 %v3245, %v3241
    %v3438 = vpack.c.b16 %v3246, %v3242
    %v3439 = vpack.c.b16 %v3247, %v3243
    %v3440 = vpack.c.b16 %v3248, %v3244
    %v3441 = vpack.c.b16 %v3253, %v3249
    %v3442 = vpack.c.b16 %v3254, %v3250
    %v3443 = vpack.c.b16 %v3255, %v3251
    %v3444 = vpack.c.b16 %v3256, %v3252
    %v3445 = vpack.c.b16 %v3261, %v3257
    %v3446 = vpack.c.b16 %v3262, %v3258
    %v3447 = vpack.c.b16 %v3263, %v3259
    %v3448 = vpack.c.b16 %v3264, %v3260
    %v3449 = vpack.c.b16 %v3269, %v3265
    %v3450 = vpack.c.b16 %v3270, %v3266
    %v3451 = vpack.c.b16 %v3271, %v3267
    %v3452 = vpack.c.b16 %v3272, %v3268
    %v3453 = vpack.c.b16 %v3277, %v3273
    %v3454 = vpack.c.b16 %v3278, %v3274
    %v3455 = vpack.c.b16 %v3279, %v3275
    %v3456 = vpack.c.b16 %v3280, %v3276
    %v3457 = vpack.c.b16 %v3285, %v3281
    %v3458 = vpack.c.b16 %v3286, %v3282
    %v3459 = vpack.c.b16 %v3287, %v3283
    %v3460 = vpack.c.b16 %v3288, %v3284
    %v3461 = vpack.c.b16 %v3293, %v3289
    %v3462 = vpack.c.b16 %v3294, %v3290
    %v3463 = vpack.c.b16 %v3295, %v3291
    %v3464 = vpack.c.b16 %v3296, %v3292
    %v3465 = vpack.c.b16 %v3301, %v3297
    %v3466 = vpack.c.b16 %v3302, %v3298
    %v3467 = vpack.c.b16 %v3303, %v3299
    %v3468 = vpack.c.b16 %v3304, %v3300
    %v3469 = vpack.c.b16 %v3309, %v3305
    %v3470 = vpack.c.b16 %v3310, %v3306
    %v3471 = vpack.c.b16 %v3311, %v3307
    %v3472 = vpack.c.b16 %v3312, %v3308
    %v3473 = vpack.c.b16 %v3317, %v3313
    %v3474 = vpack.c.b16 %v3318, %v3314
    %v3475 = vpack.c.b16 %v3319, %v3315
    %v3476 = vpack.c.b16 %v3320, %v3316
    %v3477 = vpack.c.b16 %v3325, %v3321
    %v3478 = vpack.c.b16 %v3326, %v3322
    %v3479 = vpack.c.b16 %v3327, %v3323
    %v3480 = vpack.c.b16 %v3328, %v3324
    %v3481 = vpack.c.b16 %v3333, %v3329
    %v3482 = vpack.c.b16 %v3334, %v3330
    %v3483 = vpack.c.b16 %v3335, %v3331
    %v3484 = vpack.c.b16 %v3336, %v3332
    %v3485 = vpack.c.b16 %v3341, %v3337
    %v3486 = vpack.c.b16 %v3342, %v3338
    %v3487 = vpack.c.b16 %v3343, %v3339
    %v3488 = vpack.c.b16 %v3344, %v3340
    %v3489 = vpack.c.b16 %v3349, %v3345
    %v3490 = vpack.c.b16 %v3350, %v3346
    %v3491 = vpack.c.b16 %v3351, %v3347
    %v3492 = vpack.c.b16 %v3352, %v3348
    %v3493 = vpack.c.b16 %v3357, %v3353
    %v3494 = vpack.c.b16 %v3358, %v3354
    %v3495 = vpack.c.b16 %v3359, %v3355
    %v3496 = vpack.c.b16 %v3360, %v3356
    %v3497 = vpack.c.b16 %v3365, %v3361
    %v3498 = vpack.c.b16 %v3366, %v3362
    %v3499 = vpack.c.b16 %v3367, %v3363
    %v3500 = vpack.c.b16 %v3368, %v3364
    %v3501 = vpack.c.b16 %v3373, %v3369
    %v3502 = vpack.c.b16 %v3374, %v3370
    %v3503 = vpack.c.b16 %v3375, %v3371
    %v3504 = vpack.c.b16 %v3376, %v3372
    %3633 = vmatpush.bf16.msra.mxu0 %v3405
    %3634 = vmatpush.bf16.msra.mxu0 %v3401
    %3635 = vmatpush.bf16.msra.mxu0 %v3397
    %3636 = vmatpush.bf16.msra.mxu0 %v3393
    %3637 = vmatpush.bf16.msra.mxu0 %v3389
    %3638 = vmatpush.bf16.msra.mxu0 %v3385
    %3639 = vmatpush.bf16.msra.mxu0 %v3381
    %3640 = vmatpush.bf16.msra.mxu0 %v3377
    %3641 = vmatmul.bf16.gmra.mxu0 %v355
    %v3642 = vpop.f32.mrf.mxu0
    %v3643 = vadd.f32 %v2985, %v3642
    %v3644 = vpop.f32.mrf.mxu0
    %v3645 = vadd.f32 %v2985, %v3644
    %3646 = vmatmul.bf16.gmra.mxu0 %v359
    %v3647 = vpop.f32.mrf.mxu0
    %v3648 = vadd.f32 %v2985, %v3647
    %v3649 = vpop.f32.mrf.mxu0
    %v3650 = vadd.f32 %v2985, %v3649
    %3651 = vmatmul.bf16.gmra.mxu0 %v363
    %v3652 = vpop.f32.mrf.mxu0
    %v3653 = vadd.f32 %v2985, %v3652
    %v3654 = vpop.f32.mrf.mxu0
    %v3655 = vadd.f32 %v2985, %v3654
    %3656 = vmatmul.bf16.gmra.mxu0 %v367
    %v3657 = vpop.f32.mrf.mxu0
    %v3658 = vadd.f32 %v2985, %v3657
    %v3659 = vpop.f32.mrf.mxu0
    %v3660 = vadd.f32 %v2985, %v3659
    %3661 = vdwg.mxu0
    %3662 = vmatpush.bf16.msra.mxu0 %v3437
    %3663 = vmatpush.bf16.msra.mxu0 %v3433
    %3664 = vmatpush.bf16.msra.mxu0 %v3429
    %3665 = vmatpush.bf16.msra.mxu0 %v3425
    %3666 = vmatpush.bf16.msra.mxu0 %v3421
    %3667 = vmatpush.bf16.msra.mxu0 %v3417
    %3668 = vmatpush.bf16.msra.mxu0 %v3413
    %3669 = vmatpush.bf16.msra.mxu0 %v3409
    %3670 = vmatmul.bf16.gmra.mxu0 %v356
    %v3671 = vpop.f32.mrf.mxu0
    %v3672 = vadd.f32 %v3643, %v3671
    %v3673 = vpop.f32.mrf.mxu0
    %v3674 = vadd.f32 %v3645, %v3673
    %3675 = vmatmul.bf16.gmra.mxu0 %v360
    %v3676 = vpop.f32.mrf.mxu0
    %v3677 = vadd.f32 %v3648, %v3676
    %v3678 = vpop.f32.mrf.mxu0
    %v3679 = vadd.f32 %v3650, %v3678
    %3680 = vmatmul.bf16.gmra.mxu0 %v364
    %v3681 = vpop.f32.mrf.mxu0
    %v3682 = vadd.f32 %v3653, %v3681
    %v3683 = vpop.f32.mrf.mxu0
    %v3684 = vadd.f32 %v3655, %v3683
    %3685 = vmatmul.bf16.gmra.mxu0 %v368
    %v3686 = vpop.f32.mrf.mxu0
    %v3687 = vadd.f32 %v3658, %v3686
    %v3688 = vpop.f32.mrf.mxu0
    %v3689 = vadd.f32 %v3660, %v3688
    %3690 = vdwg.mxu0
    %3691 = vmatpush.bf16.msra.mxu0 %v3469
    %3692 = vmatpush.bf16.msra.mxu0 %v3465
    %3693 = vmatpush.bf16.msra.mxu0 %v3461
    %3694 = vmatpush.bf16.msra.mxu0 %v3457
    %3695 = vmatpush.bf16.msra.mxu0 %v3453
    %3696 = vmatpush.bf16.msra.mxu0 %v3449
    %3697 = vmatpush.bf16.msra.mxu0 %v3445
    %3698 = vmatpush.bf16.msra.mxu0 %v3441
    %3699 = vmatmul.bf16.gmra.mxu0 %v357
    %v3700 = vpop.f32.mrf.mxu0
    %v3701 = vadd.f32 %v3672, %v3700
    %v3702 = vpop.f32.mrf.mxu0
    %v3703 = vadd.f32 %v3674, %v3702
    %3704 = vmatmul.bf16.gmra.mxu0 %v361
    %v3705 = vpop.f32.mrf.mxu0
    %v3706 = vadd.f32 %v3677, %v3705
    %v3707 = vpop.f32.mrf.mxu0
    %v3708 = vadd.f32 %v3679, %v3707
    %3709 = vmatmul.bf16.gmra.mxu0 %v365
    %v3710 = vpop.f32.mrf.mxu0
    %v3711 = vadd.f32 %v3682, %v3710
    %v3712 = vpop.f32.mrf.mxu0
    %v3713 = vadd.f32 %v3684, %v3712
    %3714 = vmatmul.bf16.gmra.mxu0 %v369
    %v3715 = vpop.f32.mrf.mxu0
    %v3716 = vadd.f32 %v3687, %v3715
    %v3717 = vpop.f32.mrf.mxu0
    %v3718 = vadd.f32 %v3689, %v3717
    %3719 = vdwg.mxu0
    %3720 = vmatpush.bf16.msra.mxu0 %v3501
    %3721 = vmatpush.bf16.msra.mxu0 %v3497
    %3722 = vmatpush.bf16.msra.mxu0 %v3493
    %3723 = vmatpush.bf16.msra.mxu0 %v3489
    %3724 = vmatpush.bf16.msra.mxu0 %v3485
    %3725 = vmatpush.bf16.msra.mxu0 %v3481
    %3726 = vmatpush.bf16.msra.mxu0 %v3477
    %3727 = vmatpush.bf16.msra.mxu0 %v3473
    %3728 = vmatmul.bf16.gmra.mxu0 %v358
    %v3729 = vpop.f32.mrf.mxu0
    %v3730 = vadd.f32 %v3701, %v3729
    %v3731 = vpop.f32.mrf.mxu0
    %v3732 = vadd.f32 %v3703, %v3731
    %3733 = vmatmul.bf16.gmra.mxu0 %v362
    %v3734 = vpop.f32.mrf.mxu0
    %v3735 = vadd.f32 %v3706, %v3734
    %v3736 = vpop.f32.mrf.mxu0
    %v3737 = vadd.f32 %v3708, %v3736
    %3738 = vmatmul.bf16.gmra.mxu0 %v366
    %v3739 = vpop.f32.mrf.mxu0
    %v3740 = vadd.f32 %v3711, %v3739
    %v3741 = vpop.f32.mrf.mxu0
    %v3742 = vadd.f32 %v3713, %v3741
    %3743 = vmatmul.bf16.gmra.mxu0 %v370
    %v3744 = vpop.f32.mrf.mxu0
    %v3745 = vadd.f32 %v3716, %v3744
    %v3746 = vpop.f32.mrf.mxu0
    %v3747 = vadd.f32 %v3718, %v3746
    %3748 = vdwg.mxu0
    %3749 = vmatpush.bf16.msra.mxu0 %v3406
    %3750 = vmatpush.bf16.msra.mxu0 %v3402
    %3751 = vmatpush.bf16.msra.mxu0 %v3398
    %3752 = vmatpush.bf16.msra.mxu0 %v3394
    %3753 = vmatpush.bf16.msra.mxu0 %v3390
    %3754 = vmatpush.bf16.msra.mxu0 %v3386
    %3755 = vmatpush.bf16.msra.mxu0 %v3382
    %3756 = vmatpush.bf16.msra.mxu0 %v3378
    %3757 = vmatmul.bf16.gmra.mxu0 %v355
    %v3758 = vpop.f32.mrf.mxu0
    %v3759 = vadd.f32 %v2986, %v3758
    %v3760 = vpop.f32.mrf.mxu0
    %v3761 = vadd.f32 %v2986, %v3760
    %3762 = vmatmul.bf16.gmra.mxu0 %v359
    %v3763 = vpop.f32.mrf.mxu0
    %v3764 = vadd.f32 %v2986, %v3763
    %v3765 = vpop.f32.mrf.mxu0
    %v3766 = vadd.f32 %v2986, %v3765
    %3767 = vmatmul.bf16.gmra.mxu0 %v363
    %v3768 = vpop.f32.mrf.mxu0
    %v3769 = vadd.f32 %v2986, %v3768
    %v3770 = vpop.f32.mrf.mxu0
    %v3771 = vadd.f32 %v2986, %v3770
    %3772 = vmatmul.bf16.gmra.mxu0 %v367
    %v3773 = vpop.f32.mrf.mxu0
    %v3774 = vadd.f32 %v2986, %v3773
    %v3775 = vpop.f32.mrf.mxu0
    %v3776 = vadd.f32 %v2986, %v3775
    %3777 = vdwg.mxu0
    %3778 = vmatpush.bf16.msra.mxu0 %v3438
    %3779 = vmatpush.bf16.msra.mxu0 %v3434
    %3780 = vmatpush.bf16.msra.mxu0 %v3430
    %3781 = vmatpush.bf16.msra.mxu0 %v3426
    %3782 = vmatpush.bf16.msra.mxu0 %v3422
    %3783 = vmatpush.bf16.msra.mxu0 %v3418
    %3784 = vmatpush.bf16.msra.mxu0 %v3414
    %3785 = vmatpush.bf16.msra.mxu0 %v3410
    %3786 = vmatmul.bf16.gmra.mxu0 %v356
    %v3787 = vpop.f32.mrf.mxu0
    %v3788 = vadd.f32 %v3759, %v3787
    %v3789 = vpop.f32.mrf.mxu0
    %v3790 = vadd.f32 %v3761, %v3789
    %3791 = vmatmul.bf16.gmra.mxu0 %v360
    %v3792 = vpop.f32.mrf.mxu0
    %v3793 = vadd.f32 %v3764, %v3792
    %v3794 = vpop.f32.mrf.mxu0
    %v3795 = vadd.f32 %v3766, %v3794
    %3796 = vmatmul.bf16.gmra.mxu0 %v364
    %v3797 = vpop.f32.mrf.mxu0
    %v3798 = vadd.f32 %v3769, %v3797
    %v3799 = vpop.f32.mrf.mxu0
    %v3800 = vadd.f32 %v3771, %v3799
    %3801 = vmatmul.bf16.gmra.mxu0 %v368
    %v3802 = vpop.f32.mrf.mxu0
    %v3803 = vadd.f32 %v3774, %v3802
    %v3804 = vpop.f32.mrf.mxu0
    %v3805 = vadd.f32 %v3776, %v3804
    %3806 = vdwg.mxu0
    %3807 = vmatpush.bf16.msra.mxu0 %v3470
    %3808 = vmatpush.bf16.msra.mxu0 %v3466
    %3809 = vmatpush.bf16.msra.mxu0 %v3462
    %3810 = vmatpush.bf16.msra.mxu0 %v3458
    %3811 = vmatpush.bf16.msra.mxu0 %v3454
    %3812 = vmatpush.bf16.msra.mxu0 %v3450
    %3813 = vmatpush.bf16.msra.mxu0 %v3446
    %3814 = vmatpush.bf16.msra.mxu0 %v3442
    %3815 = vmatmul.bf16.gmra.mxu0 %v357
    %v3816 = vpop.f32.mrf.mxu0
    %v3817 = vadd.f32 %v3788, %v3816
    %v3818 = vpop.f32.mrf.mxu0
    %v3819 = vadd.f32 %v3790, %v3818
    %3820 = vmatmul.bf16.gmra.mxu0 %v361
    %v3821 = vpop.f32.mrf.mxu0
    %v3822 = vadd.f32 %v3793, %v3821
    %v3823 = vpop.f32.mrf.mxu0
    %v3824 = vadd.f32 %v3795, %v3823
    %3825 = vmatmul.bf16.gmra.mxu0 %v365
    %v3826 = vpop.f32.mrf.mxu0
    %v3827 = vadd.f32 %v3798, %v3826
    %v3828 = vpop.f32.mrf.mxu0
    %v3829 = vadd.f32 %v3800, %v3828
    %3830 = vmatmul.bf16.gmra.mxu0 %v369
    %v3831 = vpop.f32.mrf.mxu0
    %v3832 = vadd.f32 %v3803, %v3831
    %v3833 = vpop.f32.mrf.mxu0
    %v3834 = vadd.f32 %v3805, %v3833
    %3835 = vdwg.mxu0
    %3836 = vmatpush.bf16.msra.mxu0 %v3502
    %3837 = vmatpush.bf16.msra.mxu0 %v3498
    %3838 = vmatpush.bf16.msra.mxu0 %v3494
    %3839 = vmatpush.bf16.msra.mxu0 %v3490
    %3840 = vmatpush.bf16.msra.mxu0 %v3486
    %3841 = vmatpush.bf16.msra.mxu0 %v3482
    %3842 = vmatpush.bf16.msra.mxu0 %v3478
    %3843 = vmatpush.bf16.msra.mxu0 %v3474
    %3844 = vmatmul.bf16.gmra.mxu0 %v358
    %v3845 = vpop.f32.mrf.mxu0
    %v3846 = vadd.f32 %v3817, %v3845
    %v3847 = vpop.f32.mrf.mxu0
    %v3848 = vadd.f32 %v3819, %v3847
    %3849 = vmatmul.bf16.gmra.mxu0 %v362
    %v3850 = vpop.f32.mrf.mxu0
    %v3851 = vadd.f32 %v3822, %v3850
    %v3852 = vpop.f32.mrf.mxu0
    %v3853 = vadd.f32 %v3824, %v3852
    %3854 = vmatmul.bf16.gmra.mxu0 %v366
    %v3855 = vpop.f32.mrf.mxu0
    %v3856 = vadd.f32 %v3827, %v3855
    %v3857 = vpop.f32.mrf.mxu0
    %v3858 = vadd.f32 %v3829, %v3857
    %3859 = vmatmul.bf16.gmra.mxu0 %v370
    %v3860 = vpop.f32.mrf.mxu0
    %v3861 = vadd.f32 %v3832, %v3860
    %v3862 = vpop.f32.mrf.mxu0
    %v3863 = vadd.f32 %v3834, %v3862
    %3864 = vdwg.mxu0
    %3865 = vmatpush.bf16.msra.mxu0 %v3407
    %3866 = vmatpush.bf16.msra.mxu0 %v3403
    %3867 = vmatpush.bf16.msra.mxu0 %v3399
    %3868 = vmatpush.bf16.msra.mxu0 %v3395
    %3869 = vmatpush.bf16.msra.mxu0 %v3391
    %3870 = vmatpush.bf16.msra.mxu0 %v3387
    %3871 = vmatpush.bf16.msra.mxu0 %v3383
    %3872 = vmatpush.bf16.msra.mxu0 %v3379
    %3873 = vmatmul.bf16.gmra.mxu0 %v355
    %v3874 = vpop.f32.mrf.mxu0
    %v3875 = vadd.f32 %v2987, %v3874
    %v3876 = vpop.f32.mrf.mxu0
    %v3877 = vadd.f32 %v2987, %v3876
    %3878 = vmatmul.bf16.gmra.mxu0 %v359
    %v3879 = vpop.f32.mrf.mxu0
    %v3880 = vadd.f32 %v2987, %v3879
    %v3881 = vpop.f32.mrf.mxu0
    %v3882 = vadd.f32 %v2987, %v3881
    %3883 = vmatmul.bf16.gmra.mxu0 %v363
    %v3884 = vpop.f32.mrf.mxu0
    %v3885 = vadd.f32 %v2987, %v3884
    %v3886 = vpop.f32.mrf.mxu0
    %v3887 = vadd.f32 %v2987, %v3886
    %3888 = vmatmul.bf16.gmra.mxu0 %v367
    %v3889 = vpop.f32.mrf.mxu0
    %v3890 = vadd.f32 %v2987, %v3889
    %v3891 = vpop.f32.mrf.mxu0
    %v3892 = vadd.f32 %v2987, %v3891
    %3893 = vdwg.mxu0
    %3894 = vmatpush.bf16.msra.mxu0 %v3439
    %3895 = vmatpush.bf16.msra.mxu0 %v3435
    %3896 = vmatpush.bf16.msra.mxu0 %v3431
    %3897 = vmatpush.bf16.msra.mxu0 %v3427
    %3898 = vmatpush.bf16.msra.mxu0 %v3423
    %3899 = vmatpush.bf16.msra.mxu0 %v3419
    %3900 = vmatpush.bf16.msra.mxu0 %v3415
    %3901 = vmatpush.bf16.msra.mxu0 %v3411
    %3902 = vmatmul.bf16.gmra.mxu0 %v356
    %v3903 = vpop.f32.mrf.mxu0
    %v3904 = vadd.f32 %v3875, %v3903
    %v3905 = vpop.f32.mrf.mxu0
    %v3906 = vadd.f32 %v3877, %v3905
    %3907 = vmatmul.bf16.gmra.mxu0 %v360
    %v3908 = vpop.f32.mrf.mxu0
    %v3909 = vadd.f32 %v3880, %v3908
    %v3910 = vpop.f32.mrf.mxu0
    %v3911 = vadd.f32 %v3882, %v3910
    %3912 = vmatmul.bf16.gmra.mxu0 %v364
    %v3913 = vpop.f32.mrf.mxu0
    %v3914 = vadd.f32 %v3885, %v3913
    %v3915 = vpop.f32.mrf.mxu0
    %v3916 = vadd.f32 %v3887, %v3915
    %3917 = vmatmul.bf16.gmra.mxu0 %v368
    %v3918 = vpop.f32.mrf.mxu0
    %v3919 = vadd.f32 %v3890, %v3918
    %v3920 = vpop.f32.mrf.mxu0
    %v3921 = vadd.f32 %v3892, %v3920
    %3922 = vdwg.mxu0
    %3923 = vmatpush.bf16.msra.mxu0 %v3471
    %3924 = vmatpush.bf16.msra.mxu0 %v3467
    %3925 = vmatpush.bf16.msra.mxu0 %v3463
    %3926 = vmatpush.bf16.msra.mxu0 %v3459
    %3927 = vmatpush.bf16.msra.mxu0 %v3455
    %3928 = vmatpush.bf16.msra.mxu0 %v3451
    %3929 = vmatpush.bf16.msra.mxu0 %v3447
    %3930 = vmatpush.bf16.msra.mxu0 %v3443
    %3931 = vmatmul.bf16.gmra.mxu0 %v357
    %v3932 = vpop.f32.mrf.mxu0
    %v3933 = vadd.f32 %v3904, %v3932
    %v3934 = vpop.f32.mrf.mxu0
    %v3935 = vadd.f32 %v3906, %v3934
    %3936 = vmatmul.bf16.gmra.mxu0 %v361
    %v3937 = vpop.f32.mrf.mxu0
    %v3938 = vadd.f32 %v3909, %v3937
    %v3939 = vpop.f32.mrf.mxu0
    %v3940 = vadd.f32 %v3911, %v3939
    %3941 = vmatmul.bf16.gmra.mxu0 %v365
    %v3942 = vpop.f32.mrf.mxu0
    %v3943 = vadd.f32 %v3914, %v3942
    %v3944 = vpop.f32.mrf.mxu0
    %v3945 = vadd.f32 %v3916, %v3944
    %3946 = vmatmul.bf16.gmra.mxu0 %v369
    %v3947 = vpop.f32.mrf.mxu0
    %v3948 = vadd.f32 %v3919, %v3947
    %v3949 = vpop.f32.mrf.mxu0
    %v3950 = vadd.f32 %v3921, %v3949
    %3951 = vdwg.mxu0
    %3952 = vmatpush.bf16.msra.mxu0 %v3503
    %3953 = vmatpush.bf16.msra.mxu0 %v3499
    %3954 = vmatpush.bf16.msra.mxu0 %v3495
    %3955 = vmatpush.bf16.msra.mxu0 %v3491
    %3956 = vmatpush.bf16.msra.mxu0 %v3487
    %3957 = vmatpush.bf16.msra.mxu0 %v3483
    %3958 = vmatpush.bf16.msra.mxu0 %v3479
    %3959 = vmatpush.bf16.msra.mxu0 %v3475
    %3960 = vmatmul.bf16.gmra.mxu0 %v358
    %v3961 = vpop.f32.mrf.mxu0
    %v3962 = vadd.f32 %v3933, %v3961
    %v3963 = vpop.f32.mrf.mxu0
    %v3964 = vadd.f32 %v3935, %v3963
    %3965 = vmatmul.bf16.gmra.mxu0 %v362
    %v3966 = vpop.f32.mrf.mxu0
    %v3967 = vadd.f32 %v3938, %v3966
    %v3968 = vpop.f32.mrf.mxu0
    %v3969 = vadd.f32 %v3940, %v3968
    %3970 = vmatmul.bf16.gmra.mxu0 %v366
    %v3971 = vpop.f32.mrf.mxu0
    %v3972 = vadd.f32 %v3943, %v3971
    %v3973 = vpop.f32.mrf.mxu0
    %v3974 = vadd.f32 %v3945, %v3973
    %3975 = vmatmul.bf16.gmra.mxu0 %v370
    %v3976 = vpop.f32.mrf.mxu0
    %v3977 = vadd.f32 %v3948, %v3976
    %v3978 = vpop.f32.mrf.mxu0
    %v3979 = vadd.f32 %v3950, %v3978
    %3980 = vdwg.mxu0
    %3981 = vmatpush.bf16.msra.mxu0 %v3408
    %3982 = vmatpush.bf16.msra.mxu0 %v3404
    %3983 = vmatpush.bf16.msra.mxu0 %v3400
    %3984 = vmatpush.bf16.msra.mxu0 %v3396
    %3985 = vmatpush.bf16.msra.mxu0 %v3392
    %3986 = vmatpush.bf16.msra.mxu0 %v3388
    %3987 = vmatpush.bf16.msra.mxu0 %v3384
    %3988 = vmatpush.bf16.msra.mxu0 %v3380
    %3989 = vmatmul.bf16.gmra.mxu0 %v355
    %v3990 = vpop.f32.mrf.mxu0
    %v3991 = vadd.f32 %v2988, %v3990
    %v3992 = vpop.f32.mrf.mxu0
    %v3993 = vadd.f32 %v2988, %v3992
    %3994 = vmatmul.bf16.gmra.mxu0 %v359
    %v3995 = vpop.f32.mrf.mxu0
    %v3996 = vadd.f32 %v2988, %v3995
    %v3997 = vpop.f32.mrf.mxu0
    %v3998 = vadd.f32 %v2988, %v3997
    %3999 = vmatmul.bf16.gmra.mxu0 %v363
    %v4000 = vpop.f32.mrf.mxu0
    %v4001 = vadd.f32 %v2988, %v4000
    %v4002 = vpop.f32.mrf.mxu0
    %v4003 = vadd.f32 %v2988, %v4002
    %4004 = vmatmul.bf16.gmra.mxu0 %v367
    %v4005 = vpop.f32.mrf.mxu0
    %v4006 = vadd.f32 %v2988, %v4005
    %v4007 = vpop.f32.mrf.mxu0
    %v4008 = vadd.f32 %v2988, %v4007
    %4009 = vdwg.mxu0
    %4010 = vmatpush.bf16.msra.mxu0 %v3440
    %4011 = vmatpush.bf16.msra.mxu0 %v3436
    %4012 = vmatpush.bf16.msra.mxu0 %v3432
    %4013 = vmatpush.bf16.msra.mxu0 %v3428
    %4014 = vmatpush.bf16.msra.mxu0 %v3424
    %4015 = vmatpush.bf16.msra.mxu0 %v3420
    %4016 = vmatpush.bf16.msra.mxu0 %v3416
    %4017 = vmatpush.bf16.msra.mxu0 %v3412
    %4018 = vmatmul.bf16.gmra.mxu0 %v356
    %v4019 = vpop.f32.mrf.mxu0
    %v4020 = vadd.f32 %v3991, %v4019
    %v4021 = vpop.f32.mrf.mxu0
    %v4022 = vadd.f32 %v3993, %v4021
    %4023 = vmatmul.bf16.gmra.mxu0 %v360
    %v4024 = vpop.f32.mrf.mxu0
    %v4025 = vadd.f32 %v3996, %v4024
    %v4026 = vpop.f32.mrf.mxu0
    %v4027 = vadd.f32 %v3998, %v4026
    %4028 = vmatmul.bf16.gmra.mxu0 %v364
    %v4029 = vpop.f32.mrf.mxu0
    %v4030 = vadd.f32 %v4001, %v4029
    %v4031 = vpop.f32.mrf.mxu0
    %v4032 = vadd.f32 %v4003, %v4031
    %4033 = vmatmul.bf16.gmra.mxu0 %v368
    %v4034 = vpop.f32.mrf.mxu0
    %v4035 = vadd.f32 %v4006, %v4034
    %v4036 = vpop.f32.mrf.mxu0
    %v4037 = vadd.f32 %v4008, %v4036
    %4038 = vdwg.mxu0
    %4039 = vmatpush.bf16.msra.mxu0 %v3472
    %4040 = vmatpush.bf16.msra.mxu0 %v3468
    %4041 = vmatpush.bf16.msra.mxu0 %v3464
    %4042 = vmatpush.bf16.msra.mxu0 %v3460
    %4043 = vmatpush.bf16.msra.mxu0 %v3456
    %4044 = vmatpush.bf16.msra.mxu0 %v3452
    %4045 = vmatpush.bf16.msra.mxu0 %v3448
    %4046 = vmatpush.bf16.msra.mxu0 %v3444
    %4047 = vmatmul.bf16.gmra.mxu0 %v357
    %v4048 = vpop.f32.mrf.mxu0
    %v4049 = vadd.f32 %v4020, %v4048
    %v4050 = vpop.f32.mrf.mxu0
    %v4051 = vadd.f32 %v4022, %v4050
    %4052 = vmatmul.bf16.gmra.mxu0 %v361
    %v4053 = vpop.f32.mrf.mxu0
    %v4054 = vadd.f32 %v4025, %v4053
    %v4055 = vpop.f32.mrf.mxu0
    %v4056 = vadd.f32 %v4027, %v4055
    %4057 = vmatmul.bf16.gmra.mxu0 %v365
    %v4058 = vpop.f32.mrf.mxu0
    %v4059 = vadd.f32 %v4030, %v4058
    %v4060 = vpop.f32.mrf.mxu0
    %v4061 = vadd.f32 %v4032, %v4060
    %4062 = vmatmul.bf16.gmra.mxu0 %v369
    %v4063 = vpop.f32.mrf.mxu0
    %v4064 = vadd.f32 %v4035, %v4063
    %v4065 = vpop.f32.mrf.mxu0
    %v4066 = vadd.f32 %v4037, %v4065
    %4067 = vdwg.mxu0
    %4068 = vmatpush.bf16.msra.mxu0 %v3504
    %4069 = vmatpush.bf16.msra.mxu0 %v3500
    %4070 = vmatpush.bf16.msra.mxu0 %v3496
    %4071 = vmatpush.bf16.msra.mxu0 %v3492
    %4072 = vmatpush.bf16.msra.mxu0 %v3488
    %4073 = vmatpush.bf16.msra.mxu0 %v3484
    %4074 = vmatpush.bf16.msra.mxu0 %v3480
    %4075 = vmatpush.bf16.msra.mxu0 %v3476
    %4076 = vmatmul.bf16.gmra.mxu0 %v358
    %v4077 = vpop.f32.mrf.mxu0
    %v4078 = vadd.f32 %v4049, %v4077
    %v4079 = vpop.f32.mrf.mxu0
    %v4080 = vadd.f32 %v4051, %v4079
    %4081 = vmatmul.bf16.gmra.mxu0 %v362
    %v4082 = vpop.f32.mrf.mxu0
    %v4083 = vadd.f32 %v4054, %v4082
    %v4084 = vpop.f32.mrf.mxu0
    %v4085 = vadd.f32 %v4056, %v4084
    %4086 = vmatmul.bf16.gmra.mxu0 %v366
    %v4087 = vpop.f32.mrf.mxu0
    %v4088 = vadd.f32 %v4059, %v4087
    %v4089 = vpop.f32.mrf.mxu0
    %v4090 = vadd.f32 %v4061, %v4089
    %4091 = vmatmul.bf16.gmra.mxu0 %v370
    %v4092 = vpop.f32.mrf.mxu0
    %v4093 = vadd.f32 %v4064, %v4092
    %v4094 = vpop.f32.mrf.mxu0
    %v4095 = vadd.f32 %v4066, %v4094
    %4096 = vdwg.mxu0
    %v4097 = vpack.c.bf16 %v1248, %v1246
    %v4098 = vpack.c.bf16 %v1364, %v1362
    %v4099 = vpack.c.bf16 %v1480, %v1478
    %v4100 = vpack.c.bf16 %v1596, %v1594
    %v4101 = vpack.c.bf16 %v1253, %v1251
    %v4102 = vpack.c.bf16 %v1369, %v1367
    %v4103 = vpack.c.bf16 %v1485, %v1483
    %v4104 = vpack.c.bf16 %v1601, %v1599
    %v4105 = vpack.c.bf16 %v1258, %v1256
    %v4106 = vpack.c.bf16 %v1374, %v1372
    %v4107 = vpack.c.bf16 %v1490, %v1488
    %v4108 = vpack.c.bf16 %v1606, %v1604
    %v4109 = vpack.c.bf16 %v1263, %v1261
    %v4110 = vpack.c.bf16 %v1379, %v1377
    %v4111 = vpack.c.bf16 %v1495, %v1493
    %v4112 = vpack.c.bf16 %v1611, %v1609
    %v4113 = vpack.c.bf16 %v2490, %v2488
    %v4114 = vpack.c.bf16 %v2606, %v2604
    %v4115 = vpack.c.bf16 %v2722, %v2720
    %v4116 = vpack.c.bf16 %v2838, %v2836
    %v4117 = vpack.c.bf16 %v2495, %v2493
    %v4118 = vpack.c.bf16 %v2611, %v2609
    %v4119 = vpack.c.bf16 %v2727, %v2725
    %v4120 = vpack.c.bf16 %v2843, %v2841
    %v4121 = vpack.c.bf16 %v2500, %v2498
    %v4122 = vpack.c.bf16 %v2616, %v2614
    %v4123 = vpack.c.bf16 %v2732, %v2730
    %v4124 = vpack.c.bf16 %v2848, %v2846
    %v4125 = vpack.c.bf16 %v2505, %v2503
    %v4126 = vpack.c.bf16 %v2621, %v2619
    %v4127 = vpack.c.bf16 %v2737, %v2735
    %v4128 = vpack.c.bf16 %v2853, %v2851
    %4129 = vmatpush.bf16.xpose.msra.mxu0 0
    %4130 = vmatpush.bf16.xpose.msra.mxu0 0
    %4131 = vmatpush.bf16.xpose.msra.mxu0 0
    %4132 = vmatpush.bf16.xpose.msra.mxu0 0
    %4133 = vmatpush.bf16.xpose.msra.mxu0 %v4125
    %4134 = vmatpush.bf16.xpose.msra.mxu0 %v4121
    %4135 = vmatpush.bf16.xpose.msra.mxu0 %v4117
    %4136 = vmatpush.bf16.xpose.msra.mxu0 %v4113
    %4137 = vmatmul.bf16.gmra.mxu0 %v4097
    %v4138 = vpop.f32.mrf.mxu0
    %v4139 = vadd.f32 0.0, %v4138
    %v4140 = vpop.f32.mrf.mxu0
    %v4141 = vadd.f32 0.0, %v4140
    %4142 = vmatmul.bf16.gmra.mxu0 %v4101
    %v4143 = vpop.f32.mrf.mxu0
    %v4144 = vadd.f32 0.0, %v4143
    %v4145 = vpop.f32.mrf.mxu0
    %v4146 = vadd.f32 0.0, %v4145
    %4147 = vmatmul.bf16.gmra.mxu0 %v4105
    %v4148 = vpop.f32.mrf.mxu0
    %v4149 = vadd.f32 0.0, %v4148
    %v4150 = vpop.f32.mrf.mxu0
    %v4151 = vadd.f32 0.0, %v4150
    %4152 = vmatmul.bf16.gmra.mxu0 %v4109
    %v4153 = vpop.f32.mrf.mxu0
    %v4154 = vadd.f32 0.0, %v4153
    %v4155 = vpop.f32.mrf.mxu0
    %v4156 = vadd.f32 0.0, %v4155
    %4157 = vdwg.mxu0
    %4158 = vmatpush.bf16.xpose.msra.mxu0 0
    %4159 = vmatpush.bf16.xpose.msra.mxu0 0
    %4160 = vmatpush.bf16.xpose.msra.mxu0 0
    %4161 = vmatpush.bf16.xpose.msra.mxu0 0
    %4162 = vmatpush.bf16.xpose.msra.mxu0 %v4126
    %4163 = vmatpush.bf16.xpose.msra.mxu0 %v4122
    %4164 = vmatpush.bf16.xpose.msra.mxu0 %v4118
    %4165 = vmatpush.bf16.xpose.msra.mxu0 %v4114
    %4166 = vmatmul.bf16.gmra.mxu0 %v4098
    %v4167 = vpop.f32.mrf.mxu0
    %v4168 = vadd.f32 %v4139, %v4167
    %v4169 = vpop.f32.mrf.mxu0
    %v4170 = vadd.f32 %v4141, %v4169
    %4171 = vmatmul.bf16.gmra.mxu0 %v4102
    %v4172 = vpop.f32.mrf.mxu0
    %v4173 = vadd.f32 %v4144, %v4172
    %v4174 = vpop.f32.mrf.mxu0
    %v4175 = vadd.f32 %v4146, %v4174
    %4176 = vmatmul.bf16.gmra.mxu0 %v4106
    %v4177 = vpop.f32.mrf.mxu0
    %v4178 = vadd.f32 %v4149, %v4177
    %v4179 = vpop.f32.mrf.mxu0
    %v4180 = vadd.f32 %v4151, %v4179
    %4181 = vmatmul.bf16.gmra.mxu0 %v4110
    %v4182 = vpop.f32.mrf.mxu0
    %v4183 = vadd.f32 %v4154, %v4182
    %v4184 = vpop.f32.mrf.mxu0
    %v4185 = vadd.f32 %v4156, %v4184
    %4186 = vdwg.mxu0
    %4187 = vmatpush.bf16.xpose.msra.mxu0 0
    %4188 = vmatpush.bf16.xpose.msra.mxu0 0
    %4189 = vmatpush.bf16.xpose.msra.mxu0 0
    %4190 = vmatpush.bf16.xpose.msra.mxu0 0
    %4191 = vmatpush.bf16.xpose.msra.mxu0 %v4127
    %4192 = vmatpush.bf16.xpose.msra.mxu0 %v4123
    %4193 = vmatpush.bf16.xpose.msra.mxu0 %v4119
    %4194 = vmatpush.bf16.xpose.msra.mxu0 %v4115
    %4195 = vmatmul.bf16.gmra.mxu0 %v4099
    %v4196 = vpop.f32.mrf.mxu0
    %v4197 = vadd.f32 %v4168, %v4196
    %v4198 = vpop.f32.mrf.mxu0
    %v4199 = vadd.f32 %v4170, %v4198
    %4200 = vmatmul.bf16.gmra.mxu0 %v4103
    %v4201 = vpop.f32.mrf.mxu0
    %v4202 = vadd.f32 %v4173, %v4201
    %v4203 = vpop.f32.mrf.mxu0
    %v4204 = vadd.f32 %v4175, %v4203
    %4205 = vmatmul.bf16.gmra.mxu0 %v4107
    %v4206 = vpop.f32.mrf.mxu0
    %v4207 = vadd.f32 %v4178, %v4206
    %v4208 = vpop.f32.mrf.mxu0
    %v4209 = vadd.f32 %v4180, %v4208
    %4210 = vmatmul.bf16.gmra.mxu0 %v4111
    %v4211 = vpop.f32.mrf.mxu0
    %v4212 = vadd.f32 %v4183, %v4211
    %v4213 = vpop.f32.mrf.mxu0
    %v4214 = vadd.f32 %v4185, %v4213
    %4215 = vdwg.mxu0
    %4216 = vmatpush.bf16.xpose.msra.mxu0 0
    %4217 = vmatpush.bf16.xpose.msra.mxu0 0
    %4218 = vmatpush.bf16.xpose.msra.mxu0 0
    %4219 = vmatpush.bf16.xpose.msra.mxu0 0
    %4220 = vmatpush.bf16.xpose.msra.mxu0 %v4128
    %4221 = vmatpush.bf16.xpose.msra.mxu0 %v4124
    %4222 = vmatpush.bf16.xpose.msra.mxu0 %v4120
    %4223 = vmatpush.bf16.xpose.msra.mxu0 %v4116
    %4224 = vmatmul.bf16.gmra.mxu0 %v4100
    %v4225 = vpop.f32.mrf.mxu0
    %v4226 = vadd.f32 %v4197, %v4225
    %v4227 = vpop.f32.mrf.mxu0
    %v4228 = vadd.f32 %v4199, %v4227
    %4229 = vmatmul.bf16.gmra.mxu0 %v4104
    %v4230 = vpop.f32.mrf.mxu0
    %v4231 = vadd.f32 %v4202, %v4230
    %v4232 = vpop.f32.mrf.mxu0
    %v4233 = vadd.f32 %v4204, %v4232
    %4234 = vmatmul.bf16.gmra.mxu0 %v4108
    %v4235 = vpop.f32.mrf.mxu0
    %v4236 = vadd.f32 %v4207, %v4235
    %v4237 = vpop.f32.mrf.mxu0
    %v4238 = vadd.f32 %v4209, %v4237
    %4239 = vmatmul.bf16.gmra.mxu0 %v4112
    %v4240 = vpop.f32.mrf.mxu0
    %v4241 = vadd.f32 %v4212, %v4240
    %v4242 = vpop.f32.mrf.mxu0
    %v4243 = vadd.f32 %v4214, %v4242
    %4244 = vdwg.mxu0
    %v4245 = vlaneseq
    %v4246 = vshrl.u32 %v4245, 7
    %v4247 = vadd.s32 %v4246, 8
    %v4248 = vadd.s32 %v4246, 16
    %v4249 = vadd.s32 %v4246, 24
    %v4250 = vadd.s32 %v4246, 32
    %v4251 = vadd.s32 %v4246, 40
    %v4252 = vadd.s32 %v4246, 48
    %v4253 = vadd.s32 %v4246, 56
    %v4254 = vlaneseq
    %v4255 = vand.u32 %v4254, 127
    %v4256 = vand.u32 %v4246, 7
    %v4257 = vand.u32 %v4247, 7
    %v4258 = vand.u32 %v4248, 7
    %v4259 = vand.u32 %v4249, 7
    %v4260 = vand.u32 %v4250, 7
    %v4261 = vand.u32 %v4251, 7
    %v4262 = vand.u32 %v4252, 7
    %v4263 = vand.u32 %v4253, 7
    %v4264 = vand.u32 %v4255, 7
    %vm4265 = vcmp.eq.s32.totalorder %v4256, %v4264
    %vm4266 = vcmp.eq.s32.totalorder %v4257, %v4264
    %vm4267 = vcmp.eq.s32.totalorder %v4258, %v4264
    %vm4268 = vcmp.eq.s32.totalorder %v4259, %v4264
    %vm4269 = vcmp.eq.s32.totalorder %v4260, %v4264
    %vm4270 = vcmp.eq.s32.totalorder %v4261, %v4264
    %vm4271 = vcmp.eq.s32.totalorder %v4262, %v4264
    %vm4272 = vcmp.eq.s32.totalorder %v4263, %v4264
    %v4273 = vsel %vm4265, %v4226, -1e+30
    %v4274 = vsel %vm4266, %v4228, -1e+30
    %v4275 = vsel %vm4267, %v4231, -1e+30
    %v4276 = vsel %vm4268, %v4233, -1e+30
    %v4277 = vsel %vm4269, %v4236, -1e+30
    %v4278 = vsel %vm4270, %v4238, -1e+30
    %v4279 = vsel %vm4271, %v4241, -1e+30
    %v4280 = vsel %vm4272, %v4243, -1e+30
    %vm4281 = vcmask 523264
    %v4282 = vsel %vm4281, %v4273, -inf
    %4283 = vmax.xlane.f32.xlu0 %v4282
    %v4284 = vpop.xlane.xlu0 %4283
    %v4285 = vsel %vm4281, %v4274, -inf
    %4286 = vmax.xlane.f32.xlu0 %v4285
    %v4287 = vpop.xlane.xlu0 %4286
    %v4288 = vsel %vm4281, %v4275, -inf
    %4289 = vmax.xlane.f32.xlu0 %v4288
    %v4290 = vpop.xlane.xlu0 %4289
    %v4291 = vsel %vm4281, %v4276, -inf
    %4292 = vmax.xlane.f32.xlu0 %v4291
    %v4293 = vpop.xlane.xlu0 %4292
    %v4294 = vsel %vm4281, %v4277, -inf
    %4295 = vmax.xlane.f32.xlu0 %v4294
    %v4296 = vpop.xlane.xlu0 %4295
    %v4297 = vsel %vm4281, %v4278, -inf
    %4298 = vmax.xlane.f32.xlu0 %v4297
    %v4299 = vpop.xlane.xlu0 %4298
    %v4300 = vsel %vm4281, %v4279, -inf
    %4301 = vmax.xlane.f32.xlu0 %v4300
    %v4302 = vpop.xlane.xlu0 %4301
    %v4303 = vsel %vm4281, %v4280, -inf
    %4304 = vmax.xlane.f32.xlu0 %v4303
    %v4305 = vpop.xlane.xlu0 %4304
    %v4306 = vsub.f32 %v4273, %v4284
    %v4307 = vsub.f32 %v4274, %v4287
    %v4308 = vsub.f32 %v4275, %v4290
    %v4309 = vsub.f32 %v4276, %v4293
    %v4310 = vsub.f32 %v4277, %v4296
    %v4311 = vsub.f32 %v4278, %v4299
    %v4312 = vsub.f32 %v4279, %v4302
    %v4313 = vsub.f32 %v4280, %v4305
    %v4314 = vmul.f32 %v4306, 1.442695
    %v4315 = vpow.pop %v4314
    %v4316 = vmul.f32 %v4307, 1.442695
    %v4317 = vpow.pop %v4316
    %v4318 = vmul.f32 %v4308, 1.442695
    %v4319 = vpow.pop %v4318
    %v4320 = vmul.f32 %v4309, 1.442695
    %v4321 = vpow.pop %v4320
    %v4322 = vmul.f32 %v4310, 1.442695
    %v4323 = vpow.pop %v4322
    %v4324 = vmul.f32 %v4311, 1.442695
    %v4325 = vpow.pop %v4324
    %v4326 = vmul.f32 %v4312, 1.442695
    %v4327 = vpow.pop %v4326
    %v4328 = vmul.f32 %v4313, 1.442695
    %v4329 = vpow.pop %v4328
    %v4330 = vsel %vm4281, %v4315, 0.0
    %4331 = vadd.xlane.f32.xlu0 %v4330
    %v4332 = vpop.xlane.xlu0 %4331
    %v4333 = vsel %vm4281, %v4317, 0.0
    %4334 = vadd.xlane.f32.xlu0 %v4333
    %v4335 = vpop.xlane.xlu0 %4334
    %v4336 = vsel %vm4281, %v4319, 0.0
    %4337 = vadd.xlane.f32.xlu0 %v4336
    %v4338 = vpop.xlane.xlu0 %4337
    %v4339 = vsel %vm4281, %v4321, 0.0
    %4340 = vadd.xlane.f32.xlu0 %v4339
    %v4341 = vpop.xlane.xlu0 %4340
    %v4342 = vsel %vm4281, %v4323, 0.0
    %4343 = vadd.xlane.f32.xlu0 %v4342
    %v4344 = vpop.xlane.xlu0 %4343
    %v4345 = vsel %vm4281, %v4325, 0.0
    %4346 = vadd.xlane.f32.xlu0 %v4345
    %v4347 = vpop.xlane.xlu0 %4346
    %v4348 = vsel %vm4281, %v4327, 0.0
    %4349 = vadd.xlane.f32.xlu0 %v4348
    %v4350 = vpop.xlane.xlu0 %4349
    %v4351 = vsel %vm4281, %v4329, 0.0
    %4352 = vadd.xlane.f32.xlu0 %v4351
    %v4353 = vpop.xlane.xlu0 %4352
    %v4354 = vrcp.pop %v4332
    %v4355 = vrcp.pop %v4335
    %v4356 = vrcp.pop %v4338
    %v4357 = vrcp.pop %v4341
    %v4358 = vrcp.pop %v4344
    %v4359 = vrcp.pop %v4347
    %v4360 = vrcp.pop %v4350
    %v4361 = vrcp.pop %v4353
    %v4362 = vmul.f32 %v4315, %v4354
    %v4363 = vmul.f32 %v4317, %v4355
    %v4364 = vmul.f32 %v4319, %v4356
    %v4365 = vmul.f32 %v4321, %v4357
    %v4366 = vmul.f32 %v4323, %v4358
    %v4367 = vmul.f32 %v4325, %v4359
    %v4368 = vmul.f32 %v4327, %v4360
    %v4369 = vmul.f32 %v4329, %v4361
    %v4370 = vpack.c.bf16 %v4363, %v4362
    %v4371 = vpack.c.bf16 %v4365, %v4364
    %v4372 = vpack.c.bf16 %v4367, %v4366
    %v4373 = vpack.c.bf16 %v4369, %v4368
    %v4374 = vpack.c.bf16 %v3732, %v3730
    %v4375 = vpack.c.bf16 %v3848, %v3846
    %v4376 = vpack.c.bf16 %v3964, %v3962
    %v4377 = vpack.c.bf16 %v4080, %v4078
    %v4378 = vpack.c.bf16 %v3737, %v3735
    %v4379 = vpack.c.bf16 %v3853, %v3851
    %v4380 = vpack.c.bf16 %v3969, %v3967
    %v4381 = vpack.c.bf16 %v4085, %v4083
    %v4382 = vpack.c.bf16 %v3742, %v3740
    %v4383 = vpack.c.bf16 %v3858, %v3856
    %v4384 = vpack.c.bf16 %v3974, %v3972
    %v4385 = vpack.c.bf16 %v4090, %v4088
    %v4386 = vpack.c.bf16 %v3747, %v3745
    %v4387 = vpack.c.bf16 %v3863, %v3861
    %v4388 = vpack.c.bf16 %v3979, %v3977
    %v4389 = vpack.c.bf16 %v4095, %v4093
    %v4391 = vsel %vm4281, %v4370, 0
    %v4394 = vsel %vm4281, %v4371, 0
    %v4397 = vsel %vm4281, %v4372, 0
    %v4400 = vsel %vm4281, %v4373, 0
    %4402 = vmatpush.bf16.msra.mxu0 0
    %4403 = vmatpush.bf16.msra.mxu0 0
    %4404 = vmatpush.bf16.msra.mxu0 0
    %4405 = vmatpush.bf16.msra.mxu0 0
    %4406 = vmatpush.bf16.msra.mxu0 %v4386
    %4407 = vmatpush.bf16.msra.mxu0 %v4382
    %4408 = vmatpush.bf16.msra.mxu0 %v4378
    %4409 = vmatpush.bf16.msra.mxu0 %v4374
    %4410 = vmatmul.bf16.gmra.mxu0 %v4391
    %v4411 = vpop.f32.mrf.mxu0
    %v4412 = vadd.f32 0.0, %v4411
    %v4413 = vpop.f32.mrf.mxu0
    %v4414 = vadd.f32 0.0, %v4413
    %4415 = vmatmul.bf16.gmra.mxu0 %v4394
    %v4416 = vpop.f32.mrf.mxu0
    %v4417 = vadd.f32 0.0, %v4416
    %v4418 = vpop.f32.mrf.mxu0
    %v4419 = vadd.f32 0.0, %v4418
    %4420 = vmatmul.bf16.gmra.mxu0 %v4397
    %v4421 = vpop.f32.mrf.mxu0
    %v4422 = vadd.f32 0.0, %v4421
    %v4423 = vpop.f32.mrf.mxu0
    %v4424 = vadd.f32 0.0, %v4423
    %4425 = vmatmul.bf16.gmra.mxu0 %v4400
    %v4426 = vpop.f32.mrf.mxu0
    %v4427 = vadd.f32 0.0, %v4426
    %v4428 = vpop.f32.mrf.mxu0
    %v4429 = vadd.f32 0.0, %v4428
    %4430 = vdwg.mxu0
    %4431 = vmatpush.bf16.msra.mxu0 0
    %4432 = vmatpush.bf16.msra.mxu0 0
    %4433 = vmatpush.bf16.msra.mxu0 0
    %4434 = vmatpush.bf16.msra.mxu0 0
    %4435 = vmatpush.bf16.msra.mxu0 %v4387
    %4436 = vmatpush.bf16.msra.mxu0 %v4383
    %4437 = vmatpush.bf16.msra.mxu0 %v4379
    %4438 = vmatpush.bf16.msra.mxu0 %v4375
    %4439 = vmatmul.bf16.gmra.mxu0 %v4391
    %v4440 = vpop.f32.mrf.mxu0
    %v4441 = vadd.f32 0.0, %v4440
    %v4442 = vpop.f32.mrf.mxu0
    %v4443 = vadd.f32 0.0, %v4442
    %4444 = vmatmul.bf16.gmra.mxu0 %v4394
    %v4445 = vpop.f32.mrf.mxu0
    %v4446 = vadd.f32 0.0, %v4445
    %v4447 = vpop.f32.mrf.mxu0
    %v4448 = vadd.f32 0.0, %v4447
    %4449 = vmatmul.bf16.gmra.mxu0 %v4397
    %v4450 = vpop.f32.mrf.mxu0
    %v4451 = vadd.f32 0.0, %v4450
    %v4452 = vpop.f32.mrf.mxu0
    %v4453 = vadd.f32 0.0, %v4452
    %4454 = vmatmul.bf16.gmra.mxu0 %v4400
    %v4455 = vpop.f32.mrf.mxu0
    %v4456 = vadd.f32 0.0, %v4455
    %v4457 = vpop.f32.mrf.mxu0
    %v4458 = vadd.f32 0.0, %v4457
    %4459 = vdwg.mxu0
    %4460 = vmatpush.bf16.msra.mxu0 0
    %4461 = vmatpush.bf16.msra.mxu0 0
    %4462 = vmatpush.bf16.msra.mxu0 0
    %4463 = vmatpush.bf16.msra.mxu0 0
    %4464 = vmatpush.bf16.msra.mxu0 %v4388
    %4465 = vmatpush.bf16.msra.mxu0 %v4384
    %4466 = vmatpush.bf16.msra.mxu0 %v4380
    %4467 = vmatpush.bf16.msra.mxu0 %v4376
    %4468 = vmatmul.bf16.gmra.mxu0 %v4391
    %v4469 = vpop.f32.mrf.mxu0
    %v4470 = vadd.f32 0.0, %v4469
    %v4471 = vpop.f32.mrf.mxu0
    %v4472 = vadd.f32 0.0, %v4471
    %4473 = vmatmul.bf16.gmra.mxu0 %v4394
    %v4474 = vpop.f32.mrf.mxu0
    %v4475 = vadd.f32 0.0, %v4474
    %v4476 = vpop.f32.mrf.mxu0
    %v4477 = vadd.f32 0.0, %v4476
    %4478 = vmatmul.bf16.gmra.mxu0 %v4397
    %v4479 = vpop.f32.mrf.mxu0
    %v4480 = vadd.f32 0.0, %v4479
    %v4481 = vpop.f32.mrf.mxu0
    %v4482 = vadd.f32 0.0, %v4481
    %4483 = vmatmul.bf16.gmra.mxu0 %v4400
    %v4484 = vpop.f32.mrf.mxu0
    %v4485 = vadd.f32 0.0, %v4484
    %v4486 = vpop.f32.mrf.mxu0
    %v4487 = vadd.f32 0.0, %v4486
    %4488 = vdwg.mxu0
    %4489 = vmatpush.bf16.msra.mxu0 0
    %4490 = vmatpush.bf16.msra.mxu0 0
    %4491 = vmatpush.bf16.msra.mxu0 0
    %4492 = vmatpush.bf16.msra.mxu0 0
    %4493 = vmatpush.bf16.msra.mxu0 %v4389
    %4494 = vmatpush.bf16.msra.mxu0 %v4385
    %4495 = vmatpush.bf16.msra.mxu0 %v4381
    %4496 = vmatpush.bf16.msra.mxu0 %v4377
    %4497 = vmatmul.bf16.gmra.mxu0 %v4391
    %v4498 = vpop.f32.mrf.mxu0
    %v4499 = vadd.f32 0.0, %v4498
    %v4500 = vpop.f32.mrf.mxu0
    %v4501 = vadd.f32 0.0, %v4500
    %4502 = vmatmul.bf16.gmra.mxu0 %v4394
    %v4503 = vpop.f32.mrf.mxu0
    %v4504 = vadd.f32 0.0, %v4503
    %v4505 = vpop.f32.mrf.mxu0
    %v4506 = vadd.f32 0.0, %v4505
    %4507 = vmatmul.bf16.gmra.mxu0 %v4397
    %v4508 = vpop.f32.mrf.mxu0
    %v4509 = vadd.f32 0.0, %v4508
    %v4510 = vpop.f32.mrf.mxu0
    %v4511 = vadd.f32 0.0, %v4510
    %4512 = vmatmul.bf16.gmra.mxu0 %v4400
    %v4513 = vpop.f32.mrf.mxu0
    %v4514 = vadd.f32 0.0, %v4513
    %v4515 = vpop.f32.mrf.mxu0
    %v4516 = vadd.f32 0.0, %v4515
    %4517 = vdwg.mxu0
    %v4518 = vpack.c.bf16 %v4414, %v4412
    %v4519 = vpack.c.bf16 %v4443, %v4441
    %v4520 = vpack.c.bf16 %v4472, %v4470
    %v4521 = vpack.c.bf16 %v4501, %v4499
    %v4522 = vpack.c.bf16 %v4419, %v4417
    %v4523 = vpack.c.bf16 %v4448, %v4446
    %v4524 = vpack.c.bf16 %v4477, %v4475
    %v4525 = vpack.c.bf16 %v4506, %v4504
    %v4526 = vpack.c.bf16 %v4424, %v4422
    %v4527 = vpack.c.bf16 %v4453, %v4451
    %v4528 = vpack.c.bf16 %v4482, %v4480
    %v4529 = vpack.c.bf16 %v4511, %v4509
    %v4530 = vpack.c.bf16 %v4429, %v4427
    %v4531 = vpack.c.bf16 %v4458, %v4456
    %v4532 = vpack.c.bf16 %v4487, %v4485
    %v4533 = vpack.c.bf16 %v4516, %v4514
    %v4534 = vld [vmem:[#allocation15] sm:$0xff]
    %v4535 = vld [vmem:[#allocation15 + $0x8] sm:$0xff]
    %v4536 = vld [vmem:[#allocation15 + $0x10] sm:$0xff]
    %v4537 = vld [vmem:[#allocation15 + $0x18] sm:$0xff]
    %v4538 = vld [vmem:[#allocation15 + $0x20] sm:$0xff]
    %v4539 = vld [vmem:[#allocation15 + $0x28] sm:$0xff]
    %v4540 = vld [vmem:[#allocation15 + $0x30] sm:$0xff]
    %v4541 = vld [vmem:[#allocation15 + $0x38] sm:$0xff]
    %v4542 = vld [vmem:[#allocation15 + $0x40] sm:$0xff]
    %v4543 = vld [vmem:[#allocation15 + $0x48] sm:$0xff]
    %v4544 = vld [vmem:[#allocation15 + $0x50] sm:$0xff]
    %v4545 = vld [vmem:[#allocation15 + $0x58] sm:$0xff]
    %v4546 = vld [vmem:[#allocation15 + $0x60] sm:$0xff]
    %v4547 = vld [vmem:[#allocation15 + $0x68] sm:$0xff]
    %v4548 = vld [vmem:[#allocation15 + $0x70] sm:$0xff]
    %v4549 = vld [vmem:[#allocation15 + $0x78] sm:$0xff]
    %v4550 = vld [vmem:[#allocation15 + $0x80] sm:$0xff]
    %v4551 = vld [vmem:[#allocation15 + $0x88] sm:$0xff]
    %v4552 = vld [vmem:[#allocation15 + $0x90] sm:$0xff]
    %v4553 = vld [vmem:[#allocation15 + $0x98] sm:$0xff]
    %v4554 = vld [vmem:[#allocation15 + $0xa0] sm:$0xff]
    %v4555 = vld [vmem:[#allocation15 + $0xa8] sm:$0xff]
    %v4556 = vld [vmem:[#allocation15 + $0xb0] sm:$0xff]
    %v4557 = vld [vmem:[#allocation15 + $0xb8] sm:$0xff]
    %v4558 = vld [vmem:[#allocation15 + $0xc0] sm:$0xff]
    %v4559 = vld [vmem:[#allocation15 + $0xc8] sm:$0xff]
    %v4560 = vld [vmem:[#allocation15 + $0xd0] sm:$0xff]
    %v4561 = vld [vmem:[#allocation15 + $0xd8] sm:$0xff]
    %v4562 = vld [vmem:[#allocation15 + $0xe0] sm:$0xff]
    %v4563 = vld [vmem:[#allocation15 + $0xe8] sm:$0xff]
    %v4564 = vld [vmem:[#allocation15 + $0xf0] sm:$0xff]
    %v4565 = vld [vmem:[#allocation15 + $0xf8] sm:$0xff]
    %v4566 = vld [vmem:[#allocation15 + $0x100] sm:$0xff]
    %v4567 = vld [vmem:[#allocation15 + $0x108] sm:$0xff]
    %v4568 = vld [vmem:[#allocation15 + $0x110] sm:$0xff]
    %v4569 = vld [vmem:[#allocation15 + $0x118] sm:$0xff]
    %v4570 = vld [vmem:[#allocation15 + $0x120] sm:$0xff]
    %v4571 = vld [vmem:[#allocation15 + $0x128] sm:$0xff]
    %v4572 = vld [vmem:[#allocation15 + $0x130] sm:$0xff]
    %v4573 = vld [vmem:[#allocation15 + $0x138] sm:$0xff]
    %v4574 = vld [vmem:[#allocation15 + $0x140] sm:$0xff]
    %v4575 = vld [vmem:[#allocation15 + $0x148] sm:$0xff]
    %v4576 = vld [vmem:[#allocation15 + $0x150] sm:$0xff]
    %v4577 = vld [vmem:[#allocation15 + $0x158] sm:$0xff]
    %v4578 = vld [vmem:[#allocation15 + $0x160] sm:$0xff]
    %v4579 = vld [vmem:[#allocation15 + $0x168] sm:$0xff]
    %v4580 = vld [vmem:[#allocation15 + $0x170] sm:$0xff]
    %v4581 = vld [vmem:[#allocation15 + $0x178] sm:$0xff]
    %v4582 = vld [vmem:[#allocation15 + $0x180] sm:$0xff]
    %v4583 = vld [vmem:[#allocation15 + $0x188] sm:$0xff]
    %v4584 = vld [vmem:[#allocation15 + $0x190] sm:$0xff]
    %v4585 = vld [vmem:[#allocation15 + $0x198] sm:$0xff]
    %v4586 = vld [vmem:[#allocation15 + $0x1a0] sm:$0xff]
    %v4587 = vld [vmem:[#allocation15 + $0x1a8] sm:$0xff]
    %v4588 = vld [vmem:[#allocation15 + $0x1b0] sm:$0xff]
    %v4589 = vld [vmem:[#allocation15 + $0x1b8] sm:$0xff]
    %v4590 = vld [vmem:[#allocation15 + $0x1c0] sm:$0xff]
    %v4591 = vld [vmem:[#allocation15 + $0x1c8] sm:$0xff]
    %v4592 = vld [vmem:[#allocation15 + $0x1d0] sm:$0xff]
    %v4593 = vld [vmem:[#allocation15 + $0x1d8] sm:$0xff]
    %v4594 = vld [vmem:[#allocation15 + $0x1e0] sm:$0xff]
    %v4595 = vld [vmem:[#allocation15 + $0x1e8] sm:$0xff]
    %v4596 = vld [vmem:[#allocation15 + $0x1f0] sm:$0xff]
    %v4597 = vld [vmem:[#allocation15 + $0x1f8] sm:$0xff]
    %v4598 = vld [vmem:[#allocation15 + $0x200] sm:$0xff]
    %v4599 = vld [vmem:[#allocation15 + $0x208] sm:$0xff]
    %v4600 = vld [vmem:[#allocation15 + $0x210] sm:$0xff]
    %v4601 = vld [vmem:[#allocation15 + $0x218] sm:$0xff]
    %v4602 = vld [vmem:[#allocation15 + $0x220] sm:$0xff]
    %v4603 = vld [vmem:[#allocation15 + $0x228] sm:$0xff]
    %v4604 = vld [vmem:[#allocation15 + $0x230] sm:$0xff]
    %v4605 = vld [vmem:[#allocation15 + $0x238] sm:$0xff]
    %v4606 = vld [vmem:[#allocation15 + $0x240] sm:$0xff]
    %v4607 = vld [vmem:[#allocation15 + $0x248] sm:$0xff]
    %v4608 = vld [vmem:[#allocation15 + $0x250] sm:$0xff]
    %v4609 = vld [vmem:[#allocation15 + $0x258] sm:$0xff]
    %v4610 = vld [vmem:[#allocation15 + $0x260] sm:$0xff]
    %v4611 = vld [vmem:[#allocation15 + $0x268] sm:$0xff]
    %v4612 = vld [vmem:[#allocation15 + $0x270] sm:$0xff]
    %v4613 = vld [vmem:[#allocation15 + $0x278] sm:$0xff]
    %v4614 = vld [vmem:[#allocation15 + $0x280] sm:$0xff]
    %v4615 = vld [vmem:[#allocation15 + $0x288] sm:$0xff]
    %v4616 = vld [vmem:[#allocation15 + $0x290] sm:$0xff]
    %v4617 = vld [vmem:[#allocation15 + $0x298] sm:$0xff]
    %v4618 = vld [vmem:[#allocation15 + $0x2a0] sm:$0xff]
    %v4619 = vld [vmem:[#allocation15 + $0x2a8] sm:$0xff]
    %v4620 = vld [vmem:[#allocation15 + $0x2b0] sm:$0xff]
    %v4621 = vld [vmem:[#allocation15 + $0x2b8] sm:$0xff]
    %v4622 = vld [vmem:[#allocation15 + $0x2c0] sm:$0xff]
    %v4623 = vld [vmem:[#allocation15 + $0x2c8] sm:$0xff]
    %v4624 = vld [vmem:[#allocation15 + $0x2d0] sm:$0xff]
    %v4625 = vld [vmem:[#allocation15 + $0x2d8] sm:$0xff]
    %v4626 = vld [vmem:[#allocation15 + $0x2e0] sm:$0xff]
    %v4627 = vld [vmem:[#allocation15 + $0x2e8] sm:$0xff]
    %v4628 = vld [vmem:[#allocation15 + $0x2f0] sm:$0xff]
    %v4629 = vld [vmem:[#allocation15 + $0x2f8] sm:$0xff]
    %v4630 = vld [vmem:[#allocation15 + $0x300] sm:$0xff]
    %v4631 = vld [vmem:[#allocation15 + $0x308] sm:$0xff]
    %v4632 = vld [vmem:[#allocation15 + $0x310] sm:$0xff]
    %v4633 = vld [vmem:[#allocation15 + $0x318] sm:$0xff]
    %v4634 = vld [vmem:[#allocation15 + $0x320] sm:$0xff]
    %v4635 = vld [vmem:[#allocation15 + $0x328] sm:$0xff]
    %v4636 = vld [vmem:[#allocation15 + $0x330] sm:$0xff]
    %v4637 = vld [vmem:[#allocation15 + $0x338] sm:$0xff]
    %v4638 = vld [vmem:[#allocation15 + $0x340] sm:$0xff]
    %v4639 = vld [vmem:[#allocation15 + $0x348] sm:$0xff]
    %v4640 = vld [vmem:[#allocation15 + $0x350] sm:$0xff]
    %v4641 = vld [vmem:[#allocation15 + $0x358] sm:$0xff]
    %v4642 = vld [vmem:[#allocation15 + $0x360] sm:$0xff]
    %v4643 = vld [vmem:[#allocation15 + $0x368] sm:$0xff]
    %v4644 = vld [vmem:[#allocation15 + $0x370] sm:$0xff]
    %v4645 = vld [vmem:[#allocation15 + $0x378] sm:$0xff]
    %v4646 = vld [vmem:[#allocation15 + $0x380] sm:$0xff]
    %v4647 = vld [vmem:[#allocation15 + $0x388] sm:$0xff]
    %v4648 = vld [vmem:[#allocation15 + $0x390] sm:$0xff]
    %v4649 = vld [vmem:[#allocation15 + $0x398] sm:$0xff]
    %v4650 = vld [vmem:[#allocation15 + $0x3a0] sm:$0xff]
    %v4651 = vld [vmem:[#allocation15 + $0x3a8] sm:$0xff]
    %v4652 = vld [vmem:[#allocation15 + $0x3b0] sm:$0xff]
    %v4653 = vld [vmem:[#allocation15 + $0x3b8] sm:$0xff]
    %v4654 = vld [vmem:[#allocation15 + $0x3c0] sm:$0xff]
    %v4655 = vld [vmem:[#allocation15 + $0x3c8] sm:$0xff]
    %v4656 = vld [vmem:[#allocation15 + $0x3d0] sm:$0xff]
    %v4657 = vld [vmem:[#allocation15 + $0x3d8] sm:$0xff]
    %v4658 = vld [vmem:[#allocation15 + $0x3e0] sm:$0xff]
    %v4659 = vld [vmem:[#allocation15 + $0x3e8] sm:$0xff]
    %v4660 = vld [vmem:[#allocation15 + $0x3f0] sm:$0xff]
    %v4661 = vld [vmem:[#allocation15 + $0x3f8] sm:$0xff]
    %v4662 = vld [vmem:[#allocation17] sm:$0xf]
    %v4664 = vperm.slane %v4662, 0
    %v4665 = vperm.slane %v4662, 1
    %v4666 = vperm.slane %v4662, 2
    %v4667 = vperm.slane %v4662, 3
    %v4800 = vunpack.c.l.b16 %v4534
    %v4801 = vunpack.c.h.b16 %v4534
    %v4802 = vunpack.c.l.b16 %v4535
    %v4803 = vunpack.c.h.b16 %v4535
    %v4804 = vunpack.c.l.b16 %v4536
    %v4805 = vunpack.c.h.b16 %v4536
    %v4806 = vunpack.c.l.b16 %v4537
    %v4807 = vunpack.c.h.b16 %v4537
    %v4808 = vunpack.c.l.b16 %v4538
    %v4809 = vunpack.c.h.b16 %v4538
    %v4810 = vunpack.c.l.b16 %v4539
    %v4811 = vunpack.c.h.b16 %v4539
    %v4812 = vunpack.c.l.b16 %v4540
    %v4813 = vunpack.c.h.b16 %v4540
    %v4814 = vunpack.c.l.b16 %v4541
    %v4815 = vunpack.c.h.b16 %v4541
    %v4816 = vunpack.c.l.b16 %v4542
    %v4817 = vunpack.c.h.b16 %v4542
    %v4818 = vunpack.c.l.b16 %v4543
    %v4819 = vunpack.c.h.b16 %v4543
    %v4820 = vunpack.c.l.b16 %v4544
    %v4821 = vunpack.c.h.b16 %v4544
    %v4822 = vunpack.c.l.b16 %v4545
    %v4823 = vunpack.c.h.b16 %v4545
    %v4824 = vunpack.c.l.b16 %v4546
    %v4825 = vunpack.c.h.b16 %v4546
    %v4826 = vunpack.c.l.b16 %v4547
    %v4827 = vunpack.c.h.b16 %v4547
    %v4828 = vunpack.c.l.b16 %v4548
    %v4829 = vunpack.c.h.b16 %v4548
    %v4830 = vunpack.c.l.b16 %v4549
    %v4831 = vunpack.c.h.b16 %v4549
    %v4832 = vunpack.c.l.b16 %v4550
    %v4833 = vunpack.c.h.b16 %v4550
    %v4834 = vunpack.c.l.b16 %v4551
    %v4835 = vunpack.c.h.b16 %v4551
    %v4836 = vunpack.c.l.b16 %v4552
    %v4837 = vunpack.c.h.b16 %v4552
    %v4838 = vunpack.c.l.b16 %v4553
    %v4839 = vunpack.c.h.b16 %v4553
    %v4840 = vunpack.c.l.b16 %v4554
    %v4841 = vunpack.c.h.b16 %v4554
    %v4842 = vunpack.c.l.b16 %v4555
    %v4843 = vunpack.c.h.b16 %v4555
    %v4844 = vunpack.c.l.b16 %v4556
    %v4845 = vunpack.c.h.b16 %v4556
    %v4846 = vunpack.c.l.b16 %v4557
    %v4847 = vunpack.c.h.b16 %v4557
    %v4848 = vunpack.c.l.b16 %v4558
    %v4849 = vunpack.c.h.b16 %v4558
    %v4850 = vunpack.c.l.b16 %v4559
    %v4851 = vunpack.c.h.b16 %v4559
    %v4852 = vunpack.c.l.b16 %v4560
    %v4853 = vunpack.c.h.b16 %v4560
    %v4854 = vunpack.c.l.b16 %v4561
    %v4855 = vunpack.c.h.b16 %v4561
    %v4856 = vunpack.c.l.b16 %v4562
    %v4857 = vunpack.c.h.b16 %v4562
    %v4858 = vunpack.c.l.b16 %v4563
    %v4859 = vunpack.c.h.b16 %v4563
    %v4860 = vunpack.c.l.b16 %v4564
    %v4861 = vunpack.c.h.b16 %v4564
    %v4862 = vunpack.c.l.b16 %v4565
    %v4863 = vunpack.c.h.b16 %v4565
    %v4864 = vunpack.c.l.b16 %v4566
    %v4865 = vunpack.c.h.b16 %v4566
    %v4866 = vunpack.c.l.b16 %v4567
    %v4867 = vunpack.c.h.b16 %v4567
    %v4868 = vunpack.c.l.b16 %v4568
    %v4869 = vunpack.c.h.b16 %v4568
    %v4870 = vunpack.c.l.b16 %v4569
    %v4871 = vunpack.c.h.b16 %v4569
    %v4872 = vunpack.c.l.b16 %v4570
    %v4873 = vunpack.c.h.b16 %v4570
    %v4874 = vunpack.c.l.b16 %v4571
    %v4875 = vunpack.c.h.b16 %v4571
    %v4876 = vunpack.c.l.b16 %v4572
    %v4877 = vunpack.c.h.b16 %v4572
    %v4878 = vunpack.c.l.b16 %v4573
    %v4879 = vunpack.c.h.b16 %v4573
    %v4880 = vunpack.c.l.b16 %v4574
    %v4881 = vunpack.c.h.b16 %v4574
    %v4882 = vunpack.c.l.b16 %v4575
    %v4883 = vunpack.c.h.b16 %v4575
    %v4884 = vunpack.c.l.b16 %v4576
    %v4885 = vunpack.c.h.b16 %v4576
    %v4886 = vunpack.c.l.b16 %v4577
    %v4887 = vunpack.c.h.b16 %v4577
    %v4888 = vunpack.c.l.b16 %v4578
    %v4889 = vunpack.c.h.b16 %v4578
    %v4890 = vunpack.c.l.b16 %v4579
    %v4891 = vunpack.c.h.b16 %v4579
    %v4892 = vunpack.c.l.b16 %v4580
    %v4893 = vunpack.c.h.b16 %v4580
    %v4894 = vunpack.c.l.b16 %v4581
    %v4895 = vunpack.c.h.b16 %v4581
    %v4896 = vunpack.c.l.b16 %v4582
    %v4897 = vunpack.c.h.b16 %v4582
    %v4898 = vunpack.c.l.b16 %v4583
    %v4899 = vunpack.c.h.b16 %v4583
    %v4900 = vunpack.c.l.b16 %v4584
    %v4901 = vunpack.c.h.b16 %v4584
    %v4902 = vunpack.c.l.b16 %v4585
    %v4903 = vunpack.c.h.b16 %v4585
    %v4904 = vunpack.c.l.b16 %v4586
    %v4905 = vunpack.c.h.b16 %v4586
    %v4906 = vunpack.c.l.b16 %v4587
    %v4907 = vunpack.c.h.b16 %v4587
    %v4908 = vunpack.c.l.b16 %v4588
    %v4909 = vunpack.c.h.b16 %v4588
    %v4910 = vunpack.c.l.b16 %v4589
    %v4911 = vunpack.c.h.b16 %v4589
    %v4912 = vunpack.c.l.b16 %v4590
    %v4913 = vunpack.c.h.b16 %v4590
    %v4914 = vunpack.c.l.b16 %v4591
    %v4915 = vunpack.c.h.b16 %v4591
    %v4916 = vunpack.c.l.b16 %v4592
    %v4917 = vunpack.c.h.b16 %v4592
    %v4918 = vunpack.c.l.b16 %v4593
    %v4919 = vunpack.c.h.b16 %v4593
    %v4920 = vunpack.c.l.b16 %v4594
    %v4921 = vunpack.c.h.b16 %v4594
    %v4922 = vunpack.c.l.b16 %v4595
    %v4923 = vunpack.c.h.b16 %v4595
    %v4924 = vunpack.c.l.b16 %v4596
    %v4925 = vunpack.c.h.b16 %v4596
    %v4926 = vunpack.c.l.b16 %v4597
    %v4927 = vunpack.c.h.b16 %v4597
    %v4928 = vunpack.c.l.b16 %v4598
    %v4929 = vunpack.c.h.b16 %v4598
    %v4930 = vunpack.c.l.b16 %v4599
    %v4931 = vunpack.c.h.b16 %v4599
    %v4932 = vunpack.c.l.b16 %v4600
    %v4933 = vunpack.c.h.b16 %v4600
    %v4934 = vunpack.c.l.b16 %v4601
    %v4935 = vunpack.c.h.b16 %v4601
    %v4936 = vunpack.c.l.b16 %v4602
    %v4937 = vunpack.c.h.b16 %v4602
    %v4938 = vunpack.c.l.b16 %v4603
    %v4939 = vunpack.c.h.b16 %v4603
    %v4940 = vunpack.c.l.b16 %v4604
    %v4941 = vunpack.c.h.b16 %v4604
    %v4942 = vunpack.c.l.b16 %v4605
    %v4943 = vunpack.c.h.b16 %v4605
    %v4944 = vunpack.c.l.b16 %v4606
    %v4945 = vunpack.c.h.b16 %v4606
    %v4946 = vunpack.c.l.b16 %v4607
    %v4947 = vunpack.c.h.b16 %v4607
    %v4948 = vunpack.c.l.b16 %v4608
    %v4949 = vunpack.c.h.b16 %v4608
    %v4950 = vunpack.c.l.b16 %v4609
    %v4951 = vunpack.c.h.b16 %v4609
    %v4952 = vunpack.c.l.b16 %v4610
    %v4953 = vunpack.c.h.b16 %v4610
    %v4954 = vunpack.c.l.b16 %v4611
    %v4955 = vunpack.c.h.b16 %v4611
    %v4956 = vunpack.c.l.b16 %v4612
    %v4957 = vunpack.c.h.b16 %v4612
    %v4958 = vunpack.c.l.b16 %v4613
    %v4959 = vunpack.c.h.b16 %v4613
    %v4960 = vunpack.c.l.b16 %v4614
    %v4961 = vunpack.c.h.b16 %v4614
    %v4962 = vunpack.c.l.b16 %v4615
    %v4963 = vunpack.c.h.b16 %v4615
    %v4964 = vunpack.c.l.b16 %v4616
    %v4965 = vunpack.c.h.b16 %v4616
    %v4966 = vunpack.c.l.b16 %v4617
    %v4967 = vunpack.c.h.b16 %v4617
    %v4968 = vunpack.c.l.b16 %v4618
    %v4969 = vunpack.c.h.b16 %v4618
    %v4970 = vunpack.c.l.b16 %v4619
    %v4971 = vunpack.c.h.b16 %v4619
    %v4972 = vunpack.c.l.b16 %v4620
    %v4973 = vunpack.c.h.b16 %v4620
    %v4974 = vunpack.c.l.b16 %v4621
    %v4975 = vunpack.c.h.b16 %v4621
    %v4976 = vunpack.c.l.b16 %v4622
    %v4977 = vunpack.c.h.b16 %v4622
    %v4978 = vunpack.c.l.b16 %v4623
    %v4979 = vunpack.c.h.b16 %v4623
    %v4980 = vunpack.c.l.b16 %v4624
    %v4981 = vunpack.c.h.b16 %v4624
    %v4982 = vunpack.c.l.b16 %v4625
    %v4983 = vunpack.c.h.b16 %v4625
    %v4984 = vunpack.c.l.b16 %v4626
    %v4985 = vunpack.c.h.b16 %v4626
    %v4986 = vunpack.c.l.b16 %v4627
    %v4987 = vunpack.c.h.b16 %v4627
    %v4988 = vunpack.c.l.b16 %v4628
    %v4989 = vunpack.c.h.b16 %v4628
    %v4990 = vunpack.c.l.b16 %v4629
    %v4991 = vunpack.c.h.b16 %v4629
    %v4992 = vunpack.c.l.b16 %v4630
    %v4993 = vunpack.c.h.b16 %v4630
    %v4994 = vunpack.c.l.b16 %v4631
    %v4995 = vunpack.c.h.b16 %v4631
    %v4996 = vunpack.c.l.b16 %v4632
    %v4997 = vunpack.c.h.b16 %v4632
    %v4998 = vunpack.c.l.b16 %v4633
    %v4999 = vunpack.c.h.b16 %v4633
    %v5000 = vunpack.c.l.b16 %v4634
    %v5001 = vunpack.c.h.b16 %v4634
    %v5002 = vunpack.c.l.b16 %v4635
    %v5003 = vunpack.c.h.b16 %v4635
    %v5004 = vunpack.c.l.b16 %v4636
    %v5005 = vunpack.c.h.b16 %v4636
    %v5006 = vunpack.c.l.b16 %v4637
    %v5007 = vunpack.c.h.b16 %v4637
    %v5008 = vunpack.c.l.b16 %v4638
    %v5009 = vunpack.c.h.b16 %v4638
    %v5010 = vunpack.c.l.b16 %v4639
    %v5011 = vunpack.c.h.b16 %v4639
    %v5012 = vunpack.c.l.b16 %v4640
    %v5013 = vunpack.c.h.b16 %v4640
    %v5014 = vunpack.c.l.b16 %v4641
    %v5015 = vunpack.c.h.b16 %v4641
    %v5016 = vunpack.c.l.b16 %v4642
    %v5017 = vunpack.c.h.b16 %v4642
    %v5018 = vunpack.c.l.b16 %v4643
    %v5019 = vunpack.c.h.b16 %v4643
    %v5020 = vunpack.c.l.b16 %v4644
    %v5021 = vunpack.c.h.b16 %v4644
    %v5022 = vunpack.c.l.b16 %v4645
    %v5023 = vunpack.c.h.b16 %v4645
    %v5024 = vunpack.c.l.b16 %v4646
    %v5025 = vunpack.c.h.b16 %v4646
    %v5026 = vunpack.c.l.b16 %v4647
    %v5027 = vunpack.c.h.b16 %v4647
    %v5028 = vunpack.c.l.b16 %v4648
    %v5029 = vunpack.c.h.b16 %v4648
    %v5030 = vunpack.c.l.b16 %v4649
    %v5031 = vunpack.c.h.b16 %v4649
    %v5032 = vunpack.c.l.b16 %v4650
    %v5033 = vunpack.c.h.b16 %v4650
    %v5034 = vunpack.c.l.b16 %v4651
    %v5035 = vunpack.c.h.b16 %v4651
    %v5036 = vunpack.c.l.b16 %v4652
    %v5037 = vunpack.c.h.b16 %v4652
    %v5038 = vunpack.c.l.b16 %v4653
    %v5039 = vunpack.c.h.b16 %v4653
    %v5040 = vunpack.c.l.b16 %v4654
    %v5041 = vunpack.c.h.b16 %v4654
    %v5042 = vunpack.c.l.b16 %v4655
    %v5043 = vunpack.c.h.b16 %v4655
    %v5044 = vunpack.c.l.b16 %v4656
    %v5045 = vunpack.c.h.b16 %v4656
    %v5046 = vunpack.c.l.b16 %v4657
    %v5047 = vunpack.c.h.b16 %v4657
    %v5048 = vunpack.c.l.b16 %v4658
    %v5049 = vunpack.c.h.b16 %v4658
    %v5050 = vunpack.c.l.b16 %v4659
    %v5051 = vunpack.c.h.b16 %v4659
    %v5052 = vunpack.c.l.b16 %v4660
    %v5053 = vunpack.c.h.b16 %v4660
    %v5054 = vunpack.c.l.b16 %v4661
    %v5055 = vunpack.c.h.b16 %v4661
    %v5056 = vpack.c.b16 %v4804, %v4800
    %v5057 = vpack.c.b16 %v4805, %v4801
    %v5058 = vpack.c.b16 %v4806, %v4802
    %v5059 = vpack.c.b16 %v4807, %v4803
    %v5060 = vpack.c.b16 %v4812, %v4808
    %v5061 = vpack.c.b16 %v4813, %v4809
    %v5062 = vpack.c.b16 %v4814, %v4810
    %v5063 = vpack.c.b16 %v4815, %v4811
    %v5064 = vpack.c.b16 %v4820, %v4816
    %v5065 = vpack.c.b16 %v4821, %v4817
    %v5066 = vpack.c.b16 %v4822, %v4818
    %v5067 = vpack.c.b16 %v4823, %v4819
    %v5068 = vpack.c.b16 %v4828, %v4824
    %v5069 = vpack.c.b16 %v4829, %v4825
    %v5070 = vpack.c.b16 %v4830, %v4826
    %v5071 = vpack.c.b16 %v4831, %v4827
    %v5072 = vpack.c.b16 %v4836, %v4832
    %v5073 = vpack.c.b16 %v4837, %v4833
    %v5074 = vpack.c.b16 %v4838, %v4834
    %v5075 = vpack.c.b16 %v4839, %v4835
    %v5076 = vpack.c.b16 %v4844, %v4840
    %v5077 = vpack.c.b16 %v4845, %v4841
    %v5078 = vpack.c.b16 %v4846, %v4842
    %v5079 = vpack.c.b16 %v4847, %v4843
    %v5080 = vpack.c.b16 %v4852, %v4848
    %v5081 = vpack.c.b16 %v4853, %v4849
    %v5082 = vpack.c.b16 %v4854, %v4850
    %v5083 = vpack.c.b16 %v4855, %v4851
    %v5084 = vpack.c.b16 %v4860, %v4856
    %v5085 = vpack.c.b16 %v4861, %v4857
    %v5086 = vpack.c.b16 %v4862, %v4858
    %v5087 = vpack.c.b16 %v4863, %v4859
    %v5088 = vpack.c.b16 %v4868, %v4864
    %v5089 = vpack.c.b16 %v4869, %v4865
    %v5090 = vpack.c.b16 %v4870, %v4866
    %v5091 = vpack.c.b16 %v4871, %v4867
    %v5092 = vpack.c.b16 %v4876, %v4872
    %v5093 = vpack.c.b16 %v4877, %v4873
    %v5094 = vpack.c.b16 %v4878, %v4874
    %v5095 = vpack.c.b16 %v4879, %v4875
    %v5096 = vpack.c.b16 %v4884, %v4880
    %v5097 = vpack.c.b16 %v4885, %v4881
    %v5098 = vpack.c.b16 %v4886, %v4882
    %v5099 = vpack.c.b16 %v4887, %v4883
    %v5100 = vpack.c.b16 %v4892, %v4888
    %v5101 = vpack.c.b16 %v4893, %v4889
    %v5102 = vpack.c.b16 %v4894, %v4890
    %v5103 = vpack.c.b16 %v4895, %v4891
    %v5104 = vpack.c.b16 %v4900, %v4896
    %v5105 = vpack.c.b16 %v4901, %v4897
    %v5106 = vpack.c.b16 %v4902, %v4898
    %v5107 = vpack.c.b16 %v4903, %v4899
    %v5108 = vpack.c.b16 %v4908, %v4904
    %v5109 = vpack.c.b16 %v4909, %v4905
    %v5110 = vpack.c.b16 %v4910, %v4906
    %v5111 = vpack.c.b16 %v4911, %v4907
    %v5112 = vpack.c.b16 %v4916, %v4912
    %v5113 = vpack.c.b16 %v4917, %v4913
    %v5114 = vpack.c.b16 %v4918, %v4914
    %v5115 = vpack.c.b16 %v4919, %v4915
    %v5116 = vpack.c.b16 %v4924, %v4920
    %v5117 = vpack.c.b16 %v4925, %v4921
    %v5118 = vpack.c.b16 %v4926, %v4922
    %v5119 = vpack.c.b16 %v4927, %v4923
    %v5120 = vpack.c.b16 %v4932, %v4928
    %v5121 = vpack.c.b16 %v4933, %v4929
    %v5122 = vpack.c.b16 %v4934, %v4930
    %v5123 = vpack.c.b16 %v4935, %v4931
    %v5124 = vpack.c.b16 %v4940, %v4936
    %v5125 = vpack.c.b16 %v4941, %v4937
    %v5126 = vpack.c.b16 %v4942, %v4938
    %v5127 = vpack.c.b16 %v4943, %v4939
    %v5128 = vpack.c.b16 %v4948, %v4944
    %v5129 = vpack.c.b16 %v4949, %v4945
    %v5130 = vpack.c.b16 %v4950, %v4946
    %v5131 = vpack.c.b16 %v4951, %v4947
    %v5132 = vpack.c.b16 %v4956, %v4952
    %v5133 = vpack.c.b16 %v4957, %v4953
    %v5134 = vpack.c.b16 %v4958, %v4954
    %v5135 = vpack.c.b16 %v4959, %v4955
    %v5136 = vpack.c.b16 %v4964, %v4960
    %v5137 = vpack.c.b16 %v4965, %v4961
    %v5138 = vpack.c.b16 %v4966, %v4962
    %v5139 = vpack.c.b16 %v4967, %v4963
    %v5140 = vpack.c.b16 %v4972, %v4968
    %v5141 = vpack.c.b16 %v4973, %v4969
    %v5142 = vpack.c.b16 %v4974, %v4970
    %v5143 = vpack.c.b16 %v4975, %v4971
    %v5144 = vpack.c.b16 %v4980, %v4976
    %v5145 = vpack.c.b16 %v4981, %v4977
    %v5146 = vpack.c.b16 %v4982, %v4978
    %v5147 = vpack.c.b16 %v4983, %v4979
    %v5148 = vpack.c.b16 %v4988, %v4984
    %v5149 = vpack.c.b16 %v4989, %v4985
    %v5150 = vpack.c.b16 %v4990, %v4986
    %v5151 = vpack.c.b16 %v4991, %v4987
    %v5152 = vpack.c.b16 %v4996, %v4992
    %v5153 = vpack.c.b16 %v4997, %v4993
    %v5154 = vpack.c.b16 %v4998, %v4994
    %v5155 = vpack.c.b16 %v4999, %v4995
    %v5156 = vpack.c.b16 %v5004, %v5000
    %v5157 = vpack.c.b16 %v5005, %v5001
    %v5158 = vpack.c.b16 %v5006, %v5002
    %v5159 = vpack.c.b16 %v5007, %v5003
    %v5160 = vpack.c.b16 %v5012, %v5008
    %v5161 = vpack.c.b16 %v5013, %v5009
    %v5162 = vpack.c.b16 %v5014, %v5010
    %v5163 = vpack.c.b16 %v5015, %v5011
    %v5164 = vpack.c.b16 %v5020, %v5016
    %v5165 = vpack.c.b16 %v5021, %v5017
    %v5166 = vpack.c.b16 %v5022, %v5018
    %v5167 = vpack.c.b16 %v5023, %v5019
    %v5168 = vpack.c.b16 %v5028, %v5024
    %v5169 = vpack.c.b16 %v5029, %v5025
    %v5170 = vpack.c.b16 %v5030, %v5026
    %v5171 = vpack.c.b16 %v5031, %v5027
    %v5172 = vpack.c.b16 %v5036, %v5032
    %v5173 = vpack.c.b16 %v5037, %v5033
    %v5174 = vpack.c.b16 %v5038, %v5034
    %v5175 = vpack.c.b16 %v5039, %v5035
    %v5176 = vpack.c.b16 %v5044, %v5040
    %v5177 = vpack.c.b16 %v5045, %v5041
    %v5178 = vpack.c.b16 %v5046, %v5042
    %v5179 = vpack.c.b16 %v5047, %v5043
    %v5180 = vpack.c.b16 %v5052, %v5048
    %v5181 = vpack.c.b16 %v5053, %v5049
    %v5182 = vpack.c.b16 %v5054, %v5050
    %v5183 = vpack.c.b16 %v5055, %v5051
    %5312 = vmatpush.bf16.msra.mxu0 %v5084
    %5313 = vmatpush.bf16.msra.mxu0 %v5080
    %5314 = vmatpush.bf16.msra.mxu0 %v5076
    %5315 = vmatpush.bf16.msra.mxu0 %v5072
    %5316 = vmatpush.bf16.msra.mxu0 %v5068
    %5317 = vmatpush.bf16.msra.mxu0 %v5064
    %5318 = vmatpush.bf16.msra.mxu0 %v5060
    %5319 = vmatpush.bf16.msra.mxu0 %v5056
    %5320 = vmatmul.bf16.gmra.mxu0 %v4518
    %v5321 = vpop.f32.mrf.mxu0
    %v5322 = vadd.f32 %v4664, %v5321
    %v5323 = vpop.f32.mrf.mxu0
    %v5324 = vadd.f32 %v4664, %v5323
    %5325 = vmatmul.bf16.gmra.mxu0 %v4522
    %v5326 = vpop.f32.mrf.mxu0
    %v5327 = vadd.f32 %v4664, %v5326
    %v5328 = vpop.f32.mrf.mxu0
    %v5329 = vadd.f32 %v4664, %v5328
    %5330 = vmatmul.bf16.gmra.mxu0 %v4526
    %v5331 = vpop.f32.mrf.mxu0
    %v5332 = vadd.f32 %v4664, %v5331
    %v5333 = vpop.f32.mrf.mxu0
    %v5334 = vadd.f32 %v4664, %v5333
    %5335 = vmatmul.bf16.gmra.mxu0 %v4530
    %v5336 = vpop.f32.mrf.mxu0
    %v5337 = vadd.f32 %v4664, %v5336
    %v5338 = vpop.f32.mrf.mxu0
    %v5339 = vadd.f32 %v4664, %v5338
    %5340 = vdwg.mxu0
    %5341 = vmatpush.bf16.msra.mxu0 %v5116
    %5342 = vmatpush.bf16.msra.mxu0 %v5112
    %5343 = vmatpush.bf16.msra.mxu0 %v5108
    %5344 = vmatpush.bf16.msra.mxu0 %v5104
    %5345 = vmatpush.bf16.msra.mxu0 %v5100
    %5346 = vmatpush.bf16.msra.mxu0 %v5096
    %5347 = vmatpush.bf16.msra.mxu0 %v5092
    %5348 = vmatpush.bf16.msra.mxu0 %v5088
    %5349 = vmatmul.bf16.gmra.mxu0 %v4519
    %v5350 = vpop.f32.mrf.mxu0
    %v5351 = vadd.f32 %v5322, %v5350
    %v5352 = vpop.f32.mrf.mxu0
    %v5353 = vadd.f32 %v5324, %v5352
    %5354 = vmatmul.bf16.gmra.mxu0 %v4523
    %v5355 = vpop.f32.mrf.mxu0
    %v5356 = vadd.f32 %v5327, %v5355
    %v5357 = vpop.f32.mrf.mxu0
    %v5358 = vadd.f32 %v5329, %v5357
    %5359 = vmatmul.bf16.gmra.mxu0 %v4527
    %v5360 = vpop.f32.mrf.mxu0
    %v5361 = vadd.f32 %v5332, %v5360
    %v5362 = vpop.f32.mrf.mxu0
    %v5363 = vadd.f32 %v5334, %v5362
    %5364 = vmatmul.bf16.gmra.mxu0 %v4531
    %v5365 = vpop.f32.mrf.mxu0
    %v5366 = vadd.f32 %v5337, %v5365
    %v5367 = vpop.f32.mrf.mxu0
    %v5368 = vadd.f32 %v5339, %v5367
    %5369 = vdwg.mxu0
    %5370 = vmatpush.bf16.msra.mxu0 %v5148
    %5371 = vmatpush.bf16.msra.mxu0 %v5144
    %5372 = vmatpush.bf16.msra.mxu0 %v5140
    %5373 = vmatpush.bf16.msra.mxu0 %v5136
    %5374 = vmatpush.bf16.msra.mxu0 %v5132
    %5375 = vmatpush.bf16.msra.mxu0 %v5128
    %5376 = vmatpush.bf16.msra.mxu0 %v5124
    %5377 = vmatpush.bf16.msra.mxu0 %v5120
    %5378 = vmatmul.bf16.gmra.mxu0 %v4520
    %v5379 = vpop.f32.mrf.mxu0
    %v5380 = vadd.f32 %v5351, %v5379
    %v5381 = vpop.f32.mrf.mxu0
    %v5382 = vadd.f32 %v5353, %v5381
    %5383 = vmatmul.bf16.gmra.mxu0 %v4524
    %v5384 = vpop.f32.mrf.mxu0
    %v5385 = vadd.f32 %v5356, %v5384
    %v5386 = vpop.f32.mrf.mxu0
    %v5387 = vadd.f32 %v5358, %v5386
    %5388 = vmatmul.bf16.gmra.mxu0 %v4528
    %v5389 = vpop.f32.mrf.mxu0
    %v5390 = vadd.f32 %v5361, %v5389
    %v5391 = vpop.f32.mrf.mxu0
    %v5392 = vadd.f32 %v5363, %v5391
    %5393 = vmatmul.bf16.gmra.mxu0 %v4532
    %v5394 = vpop.f32.mrf.mxu0
    %v5395 = vadd.f32 %v5366, %v5394
    %v5396 = vpop.f32.mrf.mxu0
    %v5397 = vadd.f32 %v5368, %v5396
    %5398 = vdwg.mxu0
    %5399 = vmatpush.bf16.msra.mxu0 %v5180
    %5400 = vmatpush.bf16.msra.mxu0 %v5176
    %5401 = vmatpush.bf16.msra.mxu0 %v5172
    %5402 = vmatpush.bf16.msra.mxu0 %v5168
    %5403 = vmatpush.bf16.msra.mxu0 %v5164
    %5404 = vmatpush.bf16.msra.mxu0 %v5160
    %5405 = vmatpush.bf16.msra.mxu0 %v5156
    %5406 = vmatpush.bf16.msra.mxu0 %v5152
    %5407 = vmatmul.bf16.gmra.mxu0 %v4521
    %v5408 = vpop.f32.mrf.mxu0
    %v5409 = vadd.f32 %v5380, %v5408
    %v5410 = vpop.f32.mrf.mxu0
    %v5411 = vadd.f32 %v5382, %v5410
    %5412 = vmatmul.bf16.gmra.mxu0 %v4525
    %v5413 = vpop.f32.mrf.mxu0
    %v5414 = vadd.f32 %v5385, %v5413
    %v5415 = vpop.f32.mrf.mxu0
    %v5416 = vadd.f32 %v5387, %v5415
    %5417 = vmatmul.bf16.gmra.mxu0 %v4529
    %v5418 = vpop.f32.mrf.mxu0
    %v5419 = vadd.f32 %v5390, %v5418
    %v5420 = vpop.f32.mrf.mxu0
    %v5421 = vadd.f32 %v5392, %v5420
    %5422 = vmatmul.bf16.gmra.mxu0 %v4533
    %v5423 = vpop.f32.mrf.mxu0
    %v5424 = vadd.f32 %v5395, %v5423
    %v5425 = vpop.f32.mrf.mxu0
    %v5426 = vadd.f32 %v5397, %v5425
    %5427 = vdwg.mxu0
    %5428 = vmatpush.bf16.msra.mxu0 %v5085
    %5429 = vmatpush.bf16.msra.mxu0 %v5081
    %5430 = vmatpush.bf16.msra.mxu0 %v5077
    %5431 = vmatpush.bf16.msra.mxu0 %v5073
    %5432 = vmatpush.bf16.msra.mxu0 %v5069
    %5433 = vmatpush.bf16.msra.mxu0 %v5065
    %5434 = vmatpush.bf16.msra.mxu0 %v5061
    %5435 = vmatpush.bf16.msra.mxu0 %v5057
    %5436 = vmatmul.bf16.gmra.mxu0 %v4518
    %v5437 = vpop.f32.mrf.mxu0
    %v5438 = vadd.f32 %v4665, %v5437
    %v5439 = vpop.f32.mrf.mxu0
    %v5440 = vadd.f32 %v4665, %v5439
    %5441 = vmatmul.bf16.gmra.mxu0 %v4522
    %v5442 = vpop.f32.mrf.mxu0
    %v5443 = vadd.f32 %v4665, %v5442
    %v5444 = vpop.f32.mrf.mxu0
    %v5445 = vadd.f32 %v4665, %v5444
    %5446 = vmatmul.bf16.gmra.mxu0 %v4526
    %v5447 = vpop.f32.mrf.mxu0
    %v5448 = vadd.f32 %v4665, %v5447
    %v5449 = vpop.f32.mrf.mxu0
    %v5450 = vadd.f32 %v4665, %v5449
    %5451 = vmatmul.bf16.gmra.mxu0 %v4530
    %v5452 = vpop.f32.mrf.mxu0
    %v5453 = vadd.f32 %v4665, %v5452
    %v5454 = vpop.f32.mrf.mxu0
    %v5455 = vadd.f32 %v4665, %v5454
    %5456 = vdwg.mxu0
    %5457 = vmatpush.bf16.msra.mxu0 %v5117
    %5458 = vmatpush.bf16.msra.mxu0 %v5113
    %5459 = vmatpush.bf16.msra.mxu0 %v5109
    %5460 = vmatpush.bf16.msra.mxu0 %v5105
    %5461 = vmatpush.bf16.msra.mxu0 %v5101
    %5462 = vmatpush.bf16.msra.mxu0 %v5097
    %5463 = vmatpush.bf16.msra.mxu0 %v5093
    %5464 = vmatpush.bf16.msra.mxu0 %v5089
    %5465 = vmatmul.bf16.gmra.mxu0 %v4519
    %v5466 = vpop.f32.mrf.mxu0
    %v5467 = vadd.f32 %v5438, %v5466
    %v5468 = vpop.f32.mrf.mxu0
    %v5469 = vadd.f32 %v5440, %v5468
    %5470 = vmatmul.bf16.gmra.mxu0 %v4523
    %v5471 = vpop.f32.mrf.mxu0
    %v5472 = vadd.f32 %v5443, %v5471
    %v5473 = vpop.f32.mrf.mxu0
    %v5474 = vadd.f32 %v5445, %v5473
    %5475 = vmatmul.bf16.gmra.mxu0 %v4527
    %v5476 = vpop.f32.mrf.mxu0
    %v5477 = vadd.f32 %v5448, %v5476
    %v5478 = vpop.f32.mrf.mxu0
    %v5479 = vadd.f32 %v5450, %v5478
    %5480 = vmatmul.bf16.gmra.mxu0 %v4531
    %v5481 = vpop.f32.mrf.mxu0
    %v5482 = vadd.f32 %v5453, %v5481
    %v5483 = vpop.f32.mrf.mxu0
    %v5484 = vadd.f32 %v5455, %v5483
    %5485 = vdwg.mxu0
    %5486 = vmatpush.bf16.msra.mxu0 %v5149
    %5487 = vmatpush.bf16.msra.mxu0 %v5145
    %5488 = vmatpush.bf16.msra.mxu0 %v5141
    %5489 = vmatpush.bf16.msra.mxu0 %v5137
    %5490 = vmatpush.bf16.msra.mxu0 %v5133
    %5491 = vmatpush.bf16.msra.mxu0 %v5129
    %5492 = vmatpush.bf16.msra.mxu0 %v5125
    %5493 = vmatpush.bf16.msra.mxu0 %v5121
    %5494 = vmatmul.bf16.gmra.mxu0 %v4520
    %v5495 = vpop.f32.mrf.mxu0
    %v5496 = vadd.f32 %v5467, %v5495
    %v5497 = vpop.f32.mrf.mxu0
    %v5498 = vadd.f32 %v5469, %v5497
    %5499 = vmatmul.bf16.gmra.mxu0 %v4524
    %v5500 = vpop.f32.mrf.mxu0
    %v5501 = vadd.f32 %v5472, %v5500
    %v5502 = vpop.f32.mrf.mxu0
    %v5503 = vadd.f32 %v5474, %v5502
    %5504 = vmatmul.bf16.gmra.mxu0 %v4528
    %v5505 = vpop.f32.mrf.mxu0
    %v5506 = vadd.f32 %v5477, %v5505
    %v5507 = vpop.f32.mrf.mxu0
    %v5508 = vadd.f32 %v5479, %v5507
    %5509 = vmatmul.bf16.gmra.mxu0 %v4532
    %v5510 = vpop.f32.mrf.mxu0
    %v5511 = vadd.f32 %v5482, %v5510
    %v5512 = vpop.f32.mrf.mxu0
    %v5513 = vadd.f32 %v5484, %v5512
    %5514 = vdwg.mxu0
    %5515 = vmatpush.bf16.msra.mxu0 %v5181
    %5516 = vmatpush.bf16.msra.mxu0 %v5177
    %5517 = vmatpush.bf16.msra.mxu0 %v5173
    %5518 = vmatpush.bf16.msra.mxu0 %v5169
    %5519 = vmatpush.bf16.msra.mxu0 %v5165
    %5520 = vmatpush.bf16.msra.mxu0 %v5161
    %5521 = vmatpush.bf16.msra.mxu0 %v5157
    %5522 = vmatpush.bf16.msra.mxu0 %v5153
    %5523 = vmatmul.bf16.gmra.mxu0 %v4521
    %v5524 = vpop.f32.mrf.mxu0
    %v5525 = vadd.f32 %v5496, %v5524
    %v5526 = vpop.f32.mrf.mxu0
    %v5527 = vadd.f32 %v5498, %v5526
    %5528 = vmatmul.bf16.gmra.mxu0 %v4525
    %v5529 = vpop.f32.mrf.mxu0
    %v5530 = vadd.f32 %v5501, %v5529
    %v5531 = vpop.f32.mrf.mxu0
    %v5532 = vadd.f32 %v5503, %v5531
    %5533 = vmatmul.bf16.gmra.mxu0 %v4529
    %v5534 = vpop.f32.mrf.mxu0
    %v5535 = vadd.f32 %v5506, %v5534
    %v5536 = vpop.f32.mrf.mxu0
    %v5537 = vadd.f32 %v5508, %v5536
    %5538 = vmatmul.bf16.gmra.mxu0 %v4533
    %v5539 = vpop.f32.mrf.mxu0
    %v5540 = vadd.f32 %v5511, %v5539
    %v5541 = vpop.f32.mrf.mxu0
    %v5542 = vadd.f32 %v5513, %v5541
    %5543 = vdwg.mxu0
    %5544 = vmatpush.bf16.msra.mxu0 %v5086
    %5545 = vmatpush.bf16.msra.mxu0 %v5082
    %5546 = vmatpush.bf16.msra.mxu0 %v5078
    %5547 = vmatpush.bf16.msra.mxu0 %v5074
    %5548 = vmatpush.bf16.msra.mxu0 %v5070
    %5549 = vmatpush.bf16.msra.mxu0 %v5066
    %5550 = vmatpush.bf16.msra.mxu0 %v5062
    %5551 = vmatpush.bf16.msra.mxu0 %v5058
    %5552 = vmatmul.bf16.gmra.mxu0 %v4518
    %v5553 = vpop.f32.mrf.mxu0
    %v5554 = vadd.f32 %v4666, %v5553
    %v5555 = vpop.f32.mrf.mxu0
    %v5556 = vadd.f32 %v4666, %v5555
    %5557 = vmatmul.bf16.gmra.mxu0 %v4522
    %v5558 = vpop.f32.mrf.mxu0
    %v5559 = vadd.f32 %v4666, %v5558
    %v5560 = vpop.f32.mrf.mxu0
    %v5561 = vadd.f32 %v4666, %v5560
    %5562 = vmatmul.bf16.gmra.mxu0 %v4526
    %v5563 = vpop.f32.mrf.mxu0
    %v5564 = vadd.f32 %v4666, %v5563
    %v5565 = vpop.f32.mrf.mxu0
    %v5566 = vadd.f32 %v4666, %v5565
    %5567 = vmatmul.bf16.gmra.mxu0 %v4530
    %v5568 = vpop.f32.mrf.mxu0
    %v5569 = vadd.f32 %v4666, %v5568
    %v5570 = vpop.f32.mrf.mxu0
    %v5571 = vadd.f32 %v4666, %v5570
    %5572 = vdwg.mxu0
    %5573 = vmatpush.bf16.msra.mxu0 %v5118
    %5574 = vmatpush.bf16.msra.mxu0 %v5114
    %5575 = vmatpush.bf16.msra.mxu0 %v5110
    %5576 = vmatpush.bf16.msra.mxu0 %v5106
    %5577 = vmatpush.bf16.msra.mxu0 %v5102
    %5578 = vmatpush.bf16.msra.mxu0 %v5098
    %5579 = vmatpush.bf16.msra.mxu0 %v5094
    %5580 = vmatpush.bf16.msra.mxu0 %v5090
    %5581 = vmatmul.bf16.gmra.mxu0 %v4519
    %v5582 = vpop.f32.mrf.mxu0
    %v5583 = vadd.f32 %v5554, %v5582
    %v5584 = vpop.f32.mrf.mxu0
    %v5585 = vadd.f32 %v5556, %v5584
    %5586 = vmatmul.bf16.gmra.mxu0 %v4523
    %v5587 = vpop.f32.mrf.mxu0
    %v5588 = vadd.f32 %v5559, %v5587
    %v5589 = vpop.f32.mrf.mxu0
    %v5590 = vadd.f32 %v5561, %v5589
    %5591 = vmatmul.bf16.gmra.mxu0 %v4527
    %v5592 = vpop.f32.mrf.mxu0
    %v5593 = vadd.f32 %v5564, %v5592
    %v5594 = vpop.f32.mrf.mxu0
    %v5595 = vadd.f32 %v5566, %v5594
    %5596 = vmatmul.bf16.gmra.mxu0 %v4531
    %v5597 = vpop.f32.mrf.mxu0
    %v5598 = vadd.f32 %v5569, %v5597
    %v5599 = vpop.f32.mrf.mxu0
    %v5600 = vadd.f32 %v5571, %v5599
    %5601 = vdwg.mxu0
    %5602 = vmatpush.bf16.msra.mxu0 %v5150
    %5603 = vmatpush.bf16.msra.mxu0 %v5146
    %5604 = vmatpush.bf16.msra.mxu0 %v5142
    %5605 = vmatpush.bf16.msra.mxu0 %v5138
    %5606 = vmatpush.bf16.msra.mxu0 %v5134
    %5607 = vmatpush.bf16.msra.mxu0 %v5130
    %5608 = vmatpush.bf16.msra.mxu0 %v5126
    %5609 = vmatpush.bf16.msra.mxu0 %v5122
    %5610 = vmatmul.bf16.gmra.mxu0 %v4520
    %v5611 = vpop.f32.mrf.mxu0
    %v5612 = vadd.f32 %v5583, %v5611
    %v5613 = vpop.f32.mrf.mxu0
    %v5614 = vadd.f32 %v5585, %v5613
    %5615 = vmatmul.bf16.gmra.mxu0 %v4524
    %v5616 = vpop.f32.mrf.mxu0
    %v5617 = vadd.f32 %v5588, %v5616
    %v5618 = vpop.f32.mrf.mxu0
    %v5619 = vadd.f32 %v5590, %v5618
    %5620 = vmatmul.bf16.gmra.mxu0 %v4528
    %v5621 = vpop.f32.mrf.mxu0
    %v5622 = vadd.f32 %v5593, %v5621
    %v5623 = vpop.f32.mrf.mxu0
    %v5624 = vadd.f32 %v5595, %v5623
    %5625 = vmatmul.bf16.gmra.mxu0 %v4532
    %v5626 = vpop.f32.mrf.mxu0
    %v5627 = vadd.f32 %v5598, %v5626
    %v5628 = vpop.f32.mrf.mxu0
    %v5629 = vadd.f32 %v5600, %v5628
    %5630 = vdwg.mxu0
    %5631 = vmatpush.bf16.msra.mxu0 %v5182
    %5632 = vmatpush.bf16.msra.mxu0 %v5178
    %5633 = vmatpush.bf16.msra.mxu0 %v5174
    %5634 = vmatpush.bf16.msra.mxu0 %v5170
    %5635 = vmatpush.bf16.msra.mxu0 %v5166
    %5636 = vmatpush.bf16.msra.mxu0 %v5162
    %5637 = vmatpush.bf16.msra.mxu0 %v5158
    %5638 = vmatpush.bf16.msra.mxu0 %v5154
    %5639 = vmatmul.bf16.gmra.mxu0 %v4521
    %v5640 = vpop.f32.mrf.mxu0
    %v5641 = vadd.f32 %v5612, %v5640
    %v5642 = vpop.f32.mrf.mxu0
    %v5643 = vadd.f32 %v5614, %v5642
    %5644 = vmatmul.bf16.gmra.mxu0 %v4525
    %v5645 = vpop.f32.mrf.mxu0
    %v5646 = vadd.f32 %v5617, %v5645
    %v5647 = vpop.f32.mrf.mxu0
    %v5648 = vadd.f32 %v5619, %v5647
    %5649 = vmatmul.bf16.gmra.mxu0 %v4529
    %v5650 = vpop.f32.mrf.mxu0
    %v5651 = vadd.f32 %v5622, %v5650
    %v5652 = vpop.f32.mrf.mxu0
    %v5653 = vadd.f32 %v5624, %v5652
    %5654 = vmatmul.bf16.gmra.mxu0 %v4533
    %v5655 = vpop.f32.mrf.mxu0
    %v5656 = vadd.f32 %v5627, %v5655
    %v5657 = vpop.f32.mrf.mxu0
    %v5658 = vadd.f32 %v5629, %v5657
    %5659 = vdwg.mxu0
    %5660 = vmatpush.bf16.msra.mxu0 %v5087
    %5661 = vmatpush.bf16.msra.mxu0 %v5083
    %5662 = vmatpush.bf16.msra.mxu0 %v5079
    %5663 = vmatpush.bf16.msra.mxu0 %v5075
    %5664 = vmatpush.bf16.msra.mxu0 %v5071
    %5665 = vmatpush.bf16.msra.mxu0 %v5067
    %5666 = vmatpush.bf16.msra.mxu0 %v5063
    %5667 = vmatpush.bf16.msra.mxu0 %v5059
    %5668 = vmatmul.bf16.gmra.mxu0 %v4518
    %v5669 = vpop.f32.mrf.mxu0
    %v5670 = vadd.f32 %v4667, %v5669
    %v5671 = vpop.f32.mrf.mxu0
    %v5672 = vadd.f32 %v4667, %v5671
    %5673 = vmatmul.bf16.gmra.mxu0 %v4522
    %v5674 = vpop.f32.mrf.mxu0
    %v5675 = vadd.f32 %v4667, %v5674
    %v5676 = vpop.f32.mrf.mxu0
    %v5677 = vadd.f32 %v4667, %v5676
    %5678 = vmatmul.bf16.gmra.mxu0 %v4526
    %v5679 = vpop.f32.mrf.mxu0
    %v5680 = vadd.f32 %v4667, %v5679
    %v5681 = vpop.f32.mrf.mxu0
    %v5682 = vadd.f32 %v4667, %v5681
    %5683 = vmatmul.bf16.gmra.mxu0 %v4530
    %v5684 = vpop.f32.mrf.mxu0
    %v5685 = vadd.f32 %v4667, %v5684
    %v5686 = vpop.f32.mrf.mxu0
    %v5687 = vadd.f32 %v4667, %v5686
    %5688 = vdwg.mxu0
    %5689 = vmatpush.bf16.msra.mxu0 %v5119
    %5690 = vmatpush.bf16.msra.mxu0 %v5115
    %5691 = vmatpush.bf16.msra.mxu0 %v5111
    %5692 = vmatpush.bf16.msra.mxu0 %v5107
    %5693 = vmatpush.bf16.msra.mxu0 %v5103
    %5694 = vmatpush.bf16.msra.mxu0 %v5099
    %5695 = vmatpush.bf16.msra.mxu0 %v5095
    %5696 = vmatpush.bf16.msra.mxu0 %v5091
    %5697 = vmatmul.bf16.gmra.mxu0 %v4519
    %v5698 = vpop.f32.mrf.mxu0
    %v5699 = vadd.f32 %v5670, %v5698
    %v5700 = vpop.f32.mrf.mxu0
    %v5701 = vadd.f32 %v5672, %v5700
    %5702 = vmatmul.bf16.gmra.mxu0 %v4523
    %v5703 = vpop.f32.mrf.mxu0
    %v5704 = vadd.f32 %v5675, %v5703
    %v5705 = vpop.f32.mrf.mxu0
    %v5706 = vadd.f32 %v5677, %v5705
    %5707 = vmatmul.bf16.gmra.mxu0 %v4527
    %v5708 = vpop.f32.mrf.mxu0
    %v5709 = vadd.f32 %v5680, %v5708
    %v5710 = vpop.f32.mrf.mxu0
    %v5711 = vadd.f32 %v5682, %v5710
    %5712 = vmatmul.bf16.gmra.mxu0 %v4531
    %v5713 = vpop.f32.mrf.mxu0
    %v5714 = vadd.f32 %v5685, %v5713
    %v5715 = vpop.f32.mrf.mxu0
    %v5716 = vadd.f32 %v5687, %v5715
    %5717 = vdwg.mxu0
    %5718 = vmatpush.bf16.msra.mxu0 %v5151
    %5719 = vmatpush.bf16.msra.mxu0 %v5147
    %5720 = vmatpush.bf16.msra.mxu0 %v5143
    %5721 = vmatpush.bf16.msra.mxu0 %v5139
    %5722 = vmatpush.bf16.msra.mxu0 %v5135
    %5723 = vmatpush.bf16.msra.mxu0 %v5131
    %5724 = vmatpush.bf16.msra.mxu0 %v5127
    %5725 = vmatpush.bf16.msra.mxu0 %v5123
    %5726 = vmatmul.bf16.gmra.mxu0 %v4520
    %v5727 = vpop.f32.mrf.mxu0
    %v5728 = vadd.f32 %v5699, %v5727
    %v5729 = vpop.f32.mrf.mxu0
    %v5730 = vadd.f32 %v5701, %v5729
    %5731 = vmatmul.bf16.gmra.mxu0 %v4524
    %v5732 = vpop.f32.mrf.mxu0
    %v5733 = vadd.f32 %v5704, %v5732
    %v5734 = vpop.f32.mrf.mxu0
    %v5735 = vadd.f32 %v5706, %v5734
    %5736 = vmatmul.bf16.gmra.mxu0 %v4528
    %v5737 = vpop.f32.mrf.mxu0
    %v5738 = vadd.f32 %v5709, %v5737
    %v5739 = vpop.f32.mrf.mxu0
    %v5740 = vadd.f32 %v5711, %v5739
    %5741 = vmatmul.bf16.gmra.mxu0 %v4532
    %v5742 = vpop.f32.mrf.mxu0
    %v5743 = vadd.f32 %v5714, %v5742
    %v5744 = vpop.f32.mrf.mxu0
    %v5745 = vadd.f32 %v5716, %v5744
    %5746 = vdwg.mxu0
    %5747 = vmatpush.bf16.msra.mxu0 %v5183
    %5748 = vmatpush.bf16.msra.mxu0 %v5179
    %5749 = vmatpush.bf16.msra.mxu0 %v5175
    %5750 = vmatpush.bf16.msra.mxu0 %v5171
    %5751 = vmatpush.bf16.msra.mxu0 %v5167
    %5752 = vmatpush.bf16.msra.mxu0 %v5163
    %5753 = vmatpush.bf16.msra.mxu0 %v5159
    %5754 = vmatpush.bf16.msra.mxu0 %v5155
    %5755 = vmatmul.bf16.gmra.mxu0 %v4521
    %v5756 = vpop.f32.mrf.mxu0
    %v5757 = vadd.f32 %v5728, %v5756
    %v5758 = vpop.f32.mrf.mxu0
    %v5759 = vadd.f32 %v5730, %v5758
    %5760 = vmatmul.bf16.gmra.mxu0 %v4525
    %v5761 = vpop.f32.mrf.mxu0
    %v5762 = vadd.f32 %v5733, %v5761
    %v5763 = vpop.f32.mrf.mxu0
    %v5764 = vadd.f32 %v5735, %v5763
    %5765 = vmatmul.bf16.gmra.mxu0 %v4529
    %v5766 = vpop.f32.mrf.mxu0
    %v5767 = vadd.f32 %v5738, %v5766
    %v5768 = vpop.f32.mrf.mxu0
    %v5769 = vadd.f32 %v5740, %v5768
    %5770 = vmatmul.bf16.gmra.mxu0 %v4533
    %v5771 = vpop.f32.mrf.mxu0
    %v5772 = vadd.f32 %v5743, %v5771
    %v5773 = vpop.f32.mrf.mxu0
    %v5774 = vadd.f32 %v5745, %v5773
    %5775 = vdwg.mxu0
    %v5776 = vadd.f32 %v5409, %v5525
    %v5777 = vadd.f32 %v5776, %v5641
    %v5778 = vadd.f32 %v5777, %v5757
    %5779 = vadd.xlane.f32.xlu0 %v5778
    %v5780 = vpop.xlane.xlu0 %5779
    %v5781 = vadd.f32 %v5411, %v5527
    %v5782 = vadd.f32 %v5781, %v5643
    %v5783 = vadd.f32 %v5782, %v5759
    %5784 = vadd.xlane.f32.xlu0 %v5783
    %v5785 = vpop.xlane.xlu0 %5784
    %v5786 = vadd.f32 %v5414, %v5530
    %v5787 = vadd.f32 %v5786, %v5646
    %v5788 = vadd.f32 %v5787, %v5762
    %5789 = vadd.xlane.f32.xlu0 %v5788
    %v5790 = vpop.xlane.xlu0 %5789
    %v5791 = vadd.f32 %v5416, %v5532
    %v5792 = vadd.f32 %v5791, %v5648
    %v5793 = vadd.f32 %v5792, %v5764
    %5794 = vadd.xlane.f32.xlu0 %v5793
    %v5795 = vpop.xlane.xlu0 %5794
    %v5796 = vadd.f32 %v5419, %v5535
    %v5797 = vadd.f32 %v5796, %v5651
    %v5798 = vadd.f32 %v5797, %v5767
    %5799 = vadd.xlane.f32.xlu0 %v5798
    %v5800 = vpop.xlane.xlu0 %5799
    %v5801 = vadd.f32 %v5421, %v5537
    %v5802 = vadd.f32 %v5801, %v5653
    %v5803 = vadd.f32 %v5802, %v5769
    %5804 = vadd.xlane.f32.xlu0 %v5803
    %v5805 = vpop.xlane.xlu0 %5804
    %v5806 = vadd.f32 %v5424, %v5540
    %v5807 = vadd.f32 %v5806, %v5656
    %v5808 = vadd.f32 %v5807, %v5772
    %5809 = vadd.xlane.f32.xlu0 %v5808
    %v5810 = vpop.xlane.xlu0 %5809
    %v5811 = vadd.f32 %v5426, %v5542
    %v5812 = vadd.f32 %v5811, %v5658
    %v5813 = vadd.f32 %v5812, %v5774
    %5814 = vadd.xlane.f32.xlu0 %v5813
    %v5815 = vpop.xlane.xlu0 %5814
    %v5816 = vrcp.pop 512.0
    %v5817 = vmul.f32 512.0, %v5816
    %v5818 = vsub.f32 1.0, %v5817
    %v5819 = vmul.f32 %v5816, %v5818
    %v5820 = vadd.f32 %v5816, %v5819
    %vm5821 = vweird.f32 %v5816
    %v5822 = vsel %vm5821, %v5816, %v5820
    %v5823 = vmul.f32 %v5780, %v5822
    %v5824 = vmul.f32 %v5785, %v5822
    %v5825 = vmul.f32 %v5790, %v5822
    %v5826 = vmul.f32 %v5795, %v5822
    %v5827 = vmul.f32 %v5800, %v5822
    %v5828 = vmul.f32 %v5805, %v5822
    %v5829 = vmul.f32 %v5810, %v5822
    %v5830 = vmul.f32 %v5815, %v5822
    %v5831 = vsub.f32 %v5409, %v5823
    %v5832 = vsub.f32 %v5525, %v5823
    %v5833 = vsub.f32 %v5641, %v5823
    %v5834 = vsub.f32 %v5757, %v5823
    %v5835 = vsub.f32 %v5411, %v5824
    %v5836 = vsub.f32 %v5527, %v5824
    %v5837 = vsub.f32 %v5643, %v5824
    %v5838 = vsub.f32 %v5759, %v5824
    %v5839 = vsub.f32 %v5414, %v5825
    %v5840 = vsub.f32 %v5530, %v5825
    %v5841 = vsub.f32 %v5646, %v5825
    %v5842 = vsub.f32 %v5762, %v5825
    %v5843 = vsub.f32 %v5416, %v5826
    %v5844 = vsub.f32 %v5532, %v5826
    %v5845 = vsub.f32 %v5648, %v5826
    %v5846 = vsub.f32 %v5764, %v5826
    %v5847 = vsub.f32 %v5419, %v5827
    %v5848 = vsub.f32 %v5535, %v5827
    %v5849 = vsub.f32 %v5651, %v5827
    %v5850 = vsub.f32 %v5767, %v5827
    %v5851 = vsub.f32 %v5421, %v5828
    %v5852 = vsub.f32 %v5537, %v5828
    %v5853 = vsub.f32 %v5653, %v5828
    %v5854 = vsub.f32 %v5769, %v5828
    %v5855 = vsub.f32 %v5424, %v5829
    %v5856 = vsub.f32 %v5540, %v5829
    %v5857 = vsub.f32 %v5656, %v5829
    %v5858 = vsub.f32 %v5772, %v5829
    %v5859 = vsub.f32 %v5426, %v5830
    %v5860 = vsub.f32 %v5542, %v5830
    %v5861 = vsub.f32 %v5658, %v5830
    %v5862 = vsub.f32 %v5774, %v5830
    %v5863 = vmul.f32 %v5831, %v5831
    %v5864 = vmul.f32 %v5832, %v5832
    %v5865 = vmul.f32 %v5833, %v5833
    %v5866 = vmul.f32 %v5834, %v5834
    %v5867 = vmul.f32 %v5835, %v5835
    %v5868 = vmul.f32 %v5836, %v5836
    %v5869 = vmul.f32 %v5837, %v5837
    %v5870 = vmul.f32 %v5838, %v5838
    %v5871 = vmul.f32 %v5839, %v5839
    %v5872 = vmul.f32 %v5840, %v5840
    %v5873 = vmul.f32 %v5841, %v5841
    %v5874 = vmul.f32 %v5842, %v5842
    %v5875 = vmul.f32 %v5843, %v5843
    %v5876 = vmul.f32 %v5844, %v5844
    %v5877 = vmul.f32 %v5845, %v5845
    %v5878 = vmul.f32 %v5846, %v5846
    %v5879 = vmul.f32 %v5847, %v5847
    %v5880 = vmul.f32 %v5848, %v5848
    %v5881 = vmul.f32 %v5849, %v5849
    %v5882 = vmul.f32 %v5850, %v5850
    %v5883 = vmul.f32 %v5851, %v5851
    %v5884 = vmul.f32 %v5852, %v5852
    %v5885 = vmul.f32 %v5853, %v5853
    %v5886 = vmul.f32 %v5854, %v5854
    %v5887 = vmul.f32 %v5855, %v5855
    %v5888 = vmul.f32 %v5856, %v5856
    %v5889 = vmul.f32 %v5857, %v5857
    %v5890 = vmul.f32 %v5858, %v5858
    %v5891 = vmul.f32 %v5859, %v5859
    %v5892 = vmul.f32 %v5860, %v5860
    %v5893 = vmul.f32 %v5861, %v5861
    %v5894 = vmul.f32 %v5862, %v5862
    %v5895 = vadd.f32 %v5863, %v5864
    %v5896 = vadd.f32 %v5895, %v5865
    %v5897 = vadd.f32 %v5896, %v5866
    %5898 = vadd.xlane.f32.xlu0 %v5897
    %v5899 = vpop.xlane.xlu0 %5898
    %v5900 = vadd.f32 %v5867, %v5868
    %v5901 = vadd.f32 %v5900, %v5869
    %v5902 = vadd.f32 %v5901, %v5870
    %5903 = vadd.xlane.f32.xlu0 %v5902
    %v5904 = vpop.xlane.xlu0 %5903
    %v5905 = vadd.f32 %v5871, %v5872
    %v5906 = vadd.f32 %v5905, %v5873
    %v5907 = vadd.f32 %v5906, %v5874
    %5908 = vadd.xlane.f32.xlu0 %v5907
    %v5909 = vpop.xlane.xlu0 %5908
    %v5910 = vadd.f32 %v5875, %v5876
    %v5911 = vadd.f32 %v5910, %v5877
    %v5912 = vadd.f32 %v5911, %v5878
    %5913 = vadd.xlane.f32.xlu0 %v5912
    %v5914 = vpop.xlane.xlu0 %5913
    %v5915 = vadd.f32 %v5879, %v5880
    %v5916 = vadd.f32 %v5915, %v5881
    %v5917 = vadd.f32 %v5916, %v5882
    %5918 = vadd.xlane.f32.xlu0 %v5917
    %v5919 = vpop.xlane.xlu0 %5918
    %v5920 = vadd.f32 %v5883, %v5884
    %v5921 = vadd.f32 %v5920, %v5885
    %v5922 = vadd.f32 %v5921, %v5886
    %5923 = vadd.xlane.f32.xlu0 %v5922
    %v5924 = vpop.xlane.xlu0 %5923
    %v5925 = vadd.f32 %v5887, %v5888
    %v5926 = vadd.f32 %v5925, %v5889
    %v5927 = vadd.f32 %v5926, %v5890
    %5928 = vadd.xlane.f32.xlu0 %v5927
    %v5929 = vpop.xlane.xlu0 %5928
    %v5930 = vadd.f32 %v5891, %v5892
    %v5931 = vadd.f32 %v5930, %v5893
    %v5932 = vadd.f32 %v5931, %v5894
    %5933 = vadd.xlane.f32.xlu0 %v5932
    %v5934 = vpop.xlane.xlu0 %5933
    %v5935 = vmul.f32 %v5899, %v5822
    %v5936 = vmul.f32 %v5904, %v5822
    %v5937 = vmul.f32 %v5909, %v5822
    %v5938 = vmul.f32 %v5914, %v5822
    %v5939 = vmul.f32 %v5919, %v5822
    %v5940 = vmul.f32 %v5924, %v5822
    %v5941 = vmul.f32 %v5929, %v5822
    %v5942 = vmul.f32 %v5934, %v5822
    %v5943 = vadd.f32 %v5935, 1e-05
    %v5944 = vadd.f32 %v5936, 1e-05
    %v5945 = vadd.f32 %v5937, 1e-05
    %v5946 = vadd.f32 %v5938, 1e-05
    %v5947 = vadd.f32 %v5939, 1e-05
    %v5948 = vadd.f32 %v5940, 1e-05
    %v5949 = vadd.f32 %v5941, 1e-05
    %v5950 = vadd.f32 %v5942, 1e-05
    %v5951 = vrsqrt.pop %v5943
    %v5952 = vmul.f32 %v5951, %v5943
    %v5953 = vmul.f32 %v5952, %v5951
    %v5954 = vmul.f32 0.5, %v5953
    %v5955 = vsub.f32 1.5, %v5954
    %v5956 = vmul.f32 %v5951, %v5955
    %vm5957 = vweird.f32 %v5943
    %vm5958 = vweird.f32 %v5951
    %vm5959 = vmor %vm5957, %vm5958
    %v5960 = vsel %vm5959, %v5951, %v5956
    %v5961 = vrsqrt.pop %v5944
    %v5962 = vmul.f32 %v5961, %v5944
    %v5963 = vmul.f32 %v5962, %v5961
    %v5964 = vmul.f32 0.5, %v5963
    %v5965 = vsub.f32 1.5, %v5964
    %v5966 = vmul.f32 %v5961, %v5965
    %vm5967 = vweird.f32 %v5944
    %vm5968 = vweird.f32 %v5961
    %vm5969 = vmor %vm5967, %vm5968
    %v5970 = vsel %vm5969, %v5961, %v5966
    %v5971 = vrsqrt.pop %v5945
    %v5972 = vmul.f32 %v5971, %v5945
    %v5973 = vmul.f32 %v5972, %v5971
    %v5974 = vmul.f32 0.5, %v5973
    %v5975 = vsub.f32 1.5, %v5974
    %v5976 = vmul.f32 %v5971, %v5975
    %vm5977 = vweird.f32 %v5945
    %vm5978 = vweird.f32 %v5971
    %vm5979 = vmor %vm5977, %vm5978
    %v5980 = vsel %vm5979, %v5971, %v5976
    %v5981 = vrsqrt.pop %v5946
    %v5982 = vmul.f32 %v5981, %v5946
    %v5983 = vmul.f32 %v5982, %v5981
    %v5984 = vmul.f32 0.5, %v5983
    %v5985 = vsub.f32 1.5, %v5984
    %v5986 = vmul.f32 %v5981, %v5985
    %vm5987 = vweird.f32 %v5946
    %vm5988 = vweird.f32 %v5981
    %vm5989 = vmor %vm5987, %vm5988
    %v5990 = vsel %vm5989, %v5981, %v5986
    %v5991 = vrsqrt.pop %v5947
    %v5992 = vmul.f32 %v5991, %v5947
    %v5993 = vmul.f32 %v5992, %v5991
    %v5994 = vmul.f32 0.5, %v5993
    %v5995 = vsub.f32 1.5, %v5994
    %v5996 = vmul.f32 %v5991, %v5995
    %vm5997 = vweird.f32 %v5947
    %vm5998 = vweird.f32 %v5991
    %vm5999 = vmor %vm5997, %vm5998
    %v6000 = vsel %vm5999, %v5991, %v5996
    %v6001 = vrsqrt.pop %v5948
    %v6002 = vmul.f32 %v6001, %v5948
    %v6003 = vmul.f32 %v6002, %v6001
    %v6004 = vmul.f32 0.5, %v6003
    %v6005 = vsub.f32 1.5, %v6004
    %v6006 = vmul.f32 %v6001, %v6005
    %vm6007 = vweird.f32 %v5948
    %vm6008 = vweird.f32 %v6001
    %vm6009 = vmor %vm6007, %vm6008
    %v6010 = vsel %vm6009, %v6001, %v6006
    %v6011 = vrsqrt.pop %v5949
    %v6012 = vmul.f32 %v6011, %v5949
    %v6013 = vmul.f32 %v6012, %v6011
    %v6014 = vmul.f32 0.5, %v6013
    %v6015 = vsub.f32 1.5, %v6014
    %v6016 = vmul.f32 %v6011, %v6015
    %vm6017 = vweird.f32 %v5949
    %vm6018 = vweird.f32 %v6011
    %vm6019 = vmor %vm6017, %vm6018
    %v6020 = vsel %vm6019, %v6011, %v6016
    %v6021 = vrsqrt.pop %v5950
    %v6022 = vmul.f32 %v6021, %v5950
    %v6023 = vmul.f32 %v6022, %v6021
    %v6024 = vmul.f32 0.5, %v6023
    %v6025 = vsub.f32 1.5, %v6024
    %v6026 = vmul.f32 %v6021, %v6025
    %vm6027 = vweird.f32 %v5950
    %vm6028 = vweird.f32 %v6021
    %vm6029 = vmor %vm6027, %vm6028
    %v6030 = vsel %vm6029, %v6021, %v6026
    %v6031 = vmul.f32 %v5831, %v5960
    %v6032 = vmul.f32 %v5832, %v5960
    %v6033 = vmul.f32 %v5833, %v5960
    %v6034 = vmul.f32 %v5834, %v5960
    %v6035 = vmul.f32 %v5835, %v5970
    %v6036 = vmul.f32 %v5836, %v5970
    %v6037 = vmul.f32 %v5837, %v5970
    %v6038 = vmul.f32 %v5838, %v5970
    %v6039 = vmul.f32 %v5839, %v5980
    %v6040 = vmul.f32 %v5840, %v5980
    %v6041 = vmul.f32 %v5841, %v5980
    %v6042 = vmul.f32 %v5842, %v5980
    %v6043 = vmul.f32 %v5843, %v5990
    %v6044 = vmul.f32 %v5844, %v5990
    %v6045 = vmul.f32 %v5845, %v5990
    %v6046 = vmul.f32 %v5846, %v5990
    %v6047 = vmul.f32 %v5847, %v6000
    %v6048 = vmul.f32 %v5848, %v6000
    %v6049 = vmul.f32 %v5849, %v6000
    %v6050 = vmul.f32 %v5850, %v6000
    %v6051 = vmul.f32 %v5851, %v6010
    %v6052 = vmul.f32 %v5852, %v6010
    %v6053 = vmul.f32 %v5853, %v6010
    %v6054 = vmul.f32 %v5854, %v6010
    %v6055 = vmul.f32 %v5855, %v6020
    %v6056 = vmul.f32 %v5856, %v6020
    %v6057 = vmul.f32 %v5857, %v6020
    %v6058 = vmul.f32 %v5858, %v6020
    %v6059 = vmul.f32 %v5859, %v6030
    %v6060 = vmul.f32 %v5860, %v6030
    %v6061 = vmul.f32 %v5861, %v6030
    %v6062 = vmul.f32 %v5862, %v6030
    %v6063 = vpack.c.bf16 %v6035, %v6031
    %v6064 = vpack.c.bf16 %v6036, %v6032
    %v6065 = vpack.c.bf16 %v6037, %v6033
    %v6066 = vpack.c.bf16 %v6038, %v6034
    %v6067 = vpack.c.bf16 %v6043, %v6039
    %v6068 = vpack.c.bf16 %v6044, %v6040
    %v6069 = vpack.c.bf16 %v6045, %v6041
    %v6070 = vpack.c.bf16 %v6046, %v6042
    %v6071 = vpack.c.bf16 %v6051, %v6047
    %v6072 = vpack.c.bf16 %v6052, %v6048
    %v6073 = vpack.c.bf16 %v6053, %v6049
    %v6074 = vpack.c.bf16 %v6054, %v6050
    %v6075 = vpack.c.bf16 %v6059, %v6055
    %v6076 = vpack.c.bf16 %v6060, %v6056
    %v6077 = vpack.c.bf16 %v6061, %v6057
    %v6078 = vpack.c.bf16 %v6062, %v6058
    %v6079 = vld [vmem:[#allocation18] sm:$0xff]
    %v6080 = vld [vmem:[#allocation18 + $0x8] sm:$0xff]
    %v6081 = vld [vmem:[#allocation18 + $0x10] sm:$0xff]
    %v6082 = vld [vmem:[#allocation18 + $0x18] sm:$0xff]
    %v6083 = vld [vmem:[#allocation18 + $0x20] sm:$0xff]
    %v6084 = vld [vmem:[#allocation18 + $0x28] sm:$0xff]
    %v6085 = vld [vmem:[#allocation18 + $0x30] sm:$0xff]
    %v6086 = vld [vmem:[#allocation18 + $0x38] sm:$0xff]
    %v6087 = vld [vmem:[#allocation18 + $0x40] sm:$0xff]
    %v6088 = vld [vmem:[#allocation18 + $0x48] sm:$0xff]
    %v6089 = vld [vmem:[#allocation18 + $0x50] sm:$0xff]
    %v6090 = vld [vmem:[#allocation18 + $0x58] sm:$0xff]
    %v6091 = vld [vmem:[#allocation18 + $0x60] sm:$0xff]
    %v6092 = vld [vmem:[#allocation18 + $0x68] sm:$0xff]
    %v6093 = vld [vmem:[#allocation18 + $0x70] sm:$0xff]
    %v6094 = vld [vmem:[#allocation18 + $0x78] sm:$0xff]
    %v6095 = vld [vmem:[#allocation18 + $0x80] sm:$0xff]
    %v6096 = vld [vmem:[#allocation18 + $0x88] sm:$0xff]
    %v6097 = vld [vmem:[#allocation18 + $0x90] sm:$0xff]
    %v6098 = vld [vmem:[#allocation18 + $0x98] sm:$0xff]
    %v6099 = vld [vmem:[#allocation18 + $0xa0] sm:$0xff]
    %v6100 = vld [vmem:[#allocation18 + $0xa8] sm:$0xff]
    %v6101 = vld [vmem:[#allocation18 + $0xb0] sm:$0xff]
    %v6102 = vld [vmem:[#allocation18 + $0xb8] sm:$0xff]
    %v6103 = vld [vmem:[#allocation18 + $0xc0] sm:$0xff]
    %v6104 = vld [vmem:[#allocation18 + $0xc8] sm:$0xff]
    %v6105 = vld [vmem:[#allocation18 + $0xd0] sm:$0xff]
    %v6106 = vld [vmem:[#allocation18 + $0xd8] sm:$0xff]
    %v6107 = vld [vmem:[#allocation18 + $0xe0] sm:$0xff]
    %v6108 = vld [vmem:[#allocation18 + $0xe8] sm:$0xff]
    %v6109 = vld [vmem:[#allocation18 + $0xf0] sm:$0xff]
    %v6110 = vld [vmem:[#allocation18 + $0xf8] sm:$0xff]
    %v6111 = vld [vmem:[#allocation18 + $0x100] sm:$0xff]
    %v6112 = vld [vmem:[#allocation18 + $0x108] sm:$0xff]
    %v6113 = vld [vmem:[#allocation18 + $0x110] sm:$0xff]
    %v6114 = vld [vmem:[#allocation18 + $0x118] sm:$0xff]
    %v6115 = vld [vmem:[#allocation18 + $0x120] sm:$0xff]
    %v6116 = vld [vmem:[#allocation18 + $0x128] sm:$0xff]
    %v6117 = vld [vmem:[#allocation18 + $0x130] sm:$0xff]
    %v6118 = vld [vmem:[#allocation18 + $0x138] sm:$0xff]
    %v6119 = vld [vmem:[#allocation18 + $0x140] sm:$0xff]
    %v6120 = vld [vmem:[#allocation18 + $0x148] sm:$0xff]
    %v6121 = vld [vmem:[#allocation18 + $0x150] sm:$0xff]
    %v6122 = vld [vmem:[#allocation18 + $0x158] sm:$0xff]
    %v6123 = vld [vmem:[#allocation18 + $0x160] sm:$0xff]
    %v6124 = vld [vmem:[#allocation18 + $0x168] sm:$0xff]
    %v6125 = vld [vmem:[#allocation18 + $0x170] sm:$0xff]
    %v6126 = vld [vmem:[#allocation18 + $0x178] sm:$0xff]
    %v6127 = vld [vmem:[#allocation18 + $0x180] sm:$0xff]
    %v6128 = vld [vmem:[#allocation18 + $0x188] sm:$0xff]
    %v6129 = vld [vmem:[#allocation18 + $0x190] sm:$0xff]
    %v6130 = vld [vmem:[#allocation18 + $0x198] sm:$0xff]
    %v6131 = vld [vmem:[#allocation18 + $0x1a0] sm:$0xff]
    %v6132 = vld [vmem:[#allocation18 + $0x1a8] sm:$0xff]
    %v6133 = vld [vmem:[#allocation18 + $0x1b0] sm:$0xff]
    %v6134 = vld [vmem:[#allocation18 + $0x1b8] sm:$0xff]
    %v6135 = vld [vmem:[#allocation18 + $0x1c0] sm:$0xff]
    %v6136 = vld [vmem:[#allocation18 + $0x1c8] sm:$0xff]
    %v6137 = vld [vmem:[#allocation18 + $0x1d0] sm:$0xff]
    %v6138 = vld [vmem:[#allocation18 + $0x1d8] sm:$0xff]
    %v6139 = vld [vmem:[#allocation18 + $0x1e0] sm:$0xff]
    %v6140 = vld [vmem:[#allocation18 + $0x1e8] sm:$0xff]
    %v6141 = vld [vmem:[#allocation18 + $0x1f0] sm:$0xff]
    %v6142 = vld [vmem:[#allocation18 + $0x1f8] sm:$0xff]
    %v6143 = vld [vmem:[%s12] sm:$0x3]
    %v6145 = vperm.slane %v6143, 0
    %v6146 = vperm.slane %v6143, 1
    %v6213 = vunpack.c.l.b16 %v6079
    %v6214 = vunpack.c.h.b16 %v6079
    %v6215 = vunpack.c.l.b16 %v6080
    %v6216 = vunpack.c.h.b16 %v6080
    %v6217 = vunpack.c.l.b16 %v6081
    %v6218 = vunpack.c.h.b16 %v6081
    %v6219 = vunpack.c.l.b16 %v6082
    %v6220 = vunpack.c.h.b16 %v6082
    %v6221 = vunpack.c.l.b16 %v6083
    %v6222 = vunpack.c.h.b16 %v6083
    %v6223 = vunpack.c.l.b16 %v6084
    %v6224 = vunpack.c.h.b16 %v6084
    %v6225 = vunpack.c.l.b16 %v6085
    %v6226 = vunpack.c.h.b16 %v6085
    %v6227 = vunpack.c.l.b16 %v6086
    %v6228 = vunpack.c.h.b16 %v6086
    %v6229 = vunpack.c.l.b16 %v6087
    %v6230 = vunpack.c.h.b16 %v6087
    %v6231 = vunpack.c.l.b16 %v6088
    %v6232 = vunpack.c.h.b16 %v6088
    %v6233 = vunpack.c.l.b16 %v6089
    %v6234 = vunpack.c.h.b16 %v6089
    %v6235 = vunpack.c.l.b16 %v6090
    %v6236 = vunpack.c.h.b16 %v6090
    %v6237 = vunpack.c.l.b16 %v6091
    %v6238 = vunpack.c.h.b16 %v6091
    %v6239 = vunpack.c.l.b16 %v6092
    %v6240 = vunpack.c.h.b16 %v6092
    %v6241 = vunpack.c.l.b16 %v6093
    %v6242 = vunpack.c.h.b16 %v6093
    %v6243 = vunpack.c.l.b16 %v6094
    %v6244 = vunpack.c.h.b16 %v6094
    %v6245 = vunpack.c.l.b16 %v6095
    %v6246 = vunpack.c.h.b16 %v6095
    %v6247 = vunpack.c.l.b16 %v6096
    %v6248 = vunpack.c.h.b16 %v6096
    %v6249 = vunpack.c.l.b16 %v6097
    %v6250 = vunpack.c.h.b16 %v6097
    %v6251 = vunpack.c.l.b16 %v6098
    %v6252 = vunpack.c.h.b16 %v6098
    %v6253 = vunpack.c.l.b16 %v6099
    %v6254 = vunpack.c.h.b16 %v6099
    %v6255 = vunpack.c.l.b16 %v6100
    %v6256 = vunpack.c.h.b16 %v6100
    %v6257 = vunpack.c.l.b16 %v6101
    %v6258 = vunpack.c.h.b16 %v6101
    %v6259 = vunpack.c.l.b16 %v6102
    %v6260 = vunpack.c.h.b16 %v6102
    %v6261 = vunpack.c.l.b16 %v6103
    %v6262 = vunpack.c.h.b16 %v6103
    %v6263 = vunpack.c.l.b16 %v6104
    %v6264 = vunpack.c.h.b16 %v6104
    %v6265 = vunpack.c.l.b16 %v6105
    %v6266 = vunpack.c.h.b16 %v6105
    %v6267 = vunpack.c.l.b16 %v6106
    %v6268 = vunpack.c.h.b16 %v6106
    %v6269 = vunpack.c.l.b16 %v6107
    %v6270 = vunpack.c.h.b16 %v6107
    %v6271 = vunpack.c.l.b16 %v6108
    %v6272 = vunpack.c.h.b16 %v6108
    %v6273 = vunpack.c.l.b16 %v6109
    %v6274 = vunpack.c.h.b16 %v6109
    %v6275 = vunpack.c.l.b16 %v6110
    %v6276 = vunpack.c.h.b16 %v6110
    %v6277 = vunpack.c.l.b16 %v6111
    %v6278 = vunpack.c.h.b16 %v6111
    %v6279 = vunpack.c.l.b16 %v6112
    %v6280 = vunpack.c.h.b16 %v6112
    %v6281 = vunpack.c.l.b16 %v6113
    %v6282 = vunpack.c.h.b16 %v6113
    %v6283 = vunpack.c.l.b16 %v6114
    %v6284 = vunpack.c.h.b16 %v6114
    %v6285 = vunpack.c.l.b16 %v6115
    %v6286 = vunpack.c.h.b16 %v6115
    %v6287 = vunpack.c.l.b16 %v6116
    %v6288 = vunpack.c.h.b16 %v6116
    %v6289 = vunpack.c.l.b16 %v6117
    %v6290 = vunpack.c.h.b16 %v6117
    %v6291 = vunpack.c.l.b16 %v6118
    %v6292 = vunpack.c.h.b16 %v6118
    %v6293 = vunpack.c.l.b16 %v6119
    %v6294 = vunpack.c.h.b16 %v6119
    %v6295 = vunpack.c.l.b16 %v6120
    %v6296 = vunpack.c.h.b16 %v6120
    %v6297 = vunpack.c.l.b16 %v6121
    %v6298 = vunpack.c.h.b16 %v6121
    %v6299 = vunpack.c.l.b16 %v6122
    %v6300 = vunpack.c.h.b16 %v6122
    %v6301 = vunpack.c.l.b16 %v6123
    %v6302 = vunpack.c.h.b16 %v6123
    %v6303 = vunpack.c.l.b16 %v6124
    %v6304 = vunpack.c.h.b16 %v6124
    %v6305 = vunpack.c.l.b16 %v6125
    %v6306 = vunpack.c.h.b16 %v6125
    %v6307 = vunpack.c.l.b16 %v6126
    %v6308 = vunpack.c.h.b16 %v6126
    %v6309 = vunpack.c.l.b16 %v6127
    %v6310 = vunpack.c.h.b16 %v6127
    %v6311 = vunpack.c.l.b16 %v6128
    %v6312 = vunpack.c.h.b16 %v6128
    %v6313 = vunpack.c.l.b16 %v6129
    %v6314 = vunpack.c.h.b16 %v6129
    %v6315 = vunpack.c.l.b16 %v6130
    %v6316 = vunpack.c.h.b16 %v6130
    %v6317 = vunpack.c.l.b16 %v6131
    %v6318 = vunpack.c.h.b16 %v6131
    %v6319 = vunpack.c.l.b16 %v6132
    %v6320 = vunpack.c.h.b16 %v6132
    %v6321 = vunpack.c.l.b16 %v6133
    %v6322 = vunpack.c.h.b16 %v6133
    %v6323 = vunpack.c.l.b16 %v6134
    %v6324 = vunpack.c.h.b16 %v6134
    %v6325 = vunpack.c.l.b16 %v6135
    %v6326 = vunpack.c.h.b16 %v6135
    %v6327 = vunpack.c.l.b16 %v6136
    %v6328 = vunpack.c.h.b16 %v6136
    %v6329 = vunpack.c.l.b16 %v6137
    %v6330 = vunpack.c.h.b16 %v6137
    %v6331 = vunpack.c.l.b16 %v6138
    %v6332 = vunpack.c.h.b16 %v6138
    %v6333 = vunpack.c.l.b16 %v6139
    %v6334 = vunpack.c.h.b16 %v6139
    %v6335 = vunpack.c.l.b16 %v6140
    %v6336 = vunpack.c.h.b16 %v6140
    %v6337 = vunpack.c.l.b16 %v6141
    %v6338 = vunpack.c.h.b16 %v6141
    %v6339 = vunpack.c.l.b16 %v6142
    %v6340 = vunpack.c.h.b16 %v6142
    %v6341 = vpack.c.b16 %v6215, %v6213
    %v6342 = vpack.c.b16 %v6216, %v6214
    %v6343 = vpack.c.b16 %v6219, %v6217
    %v6344 = vpack.c.b16 %v6220, %v6218
    %v6345 = vpack.c.b16 %v6223, %v6221
    %v6346 = vpack.c.b16 %v6224, %v6222
    %v6347 = vpack.c.b16 %v6227, %v6225
    %v6348 = vpack.c.b16 %v6228, %v6226
    %v6349 = vpack.c.b16 %v6231, %v6229
    %v6350 = vpack.c.b16 %v6232, %v6230
    %v6351 = vpack.c.b16 %v6235, %v6233
    %v6352 = vpack.c.b16 %v6236, %v6234
    %v6353 = vpack.c.b16 %v6239, %v6237
    %v6354 = vpack.c.b16 %v6240, %v6238
    %v6355 = vpack.c.b16 %v6243, %v6241
    %v6356 = vpack.c.b16 %v6244, %v6242
    %v6357 = vpack.c.b16 %v6247, %v6245
    %v6358 = vpack.c.b16 %v6248, %v6246
    %v6359 = vpack.c.b16 %v6251, %v6249
    %v6360 = vpack.c.b16 %v6252, %v6250
    %v6361 = vpack.c.b16 %v6255, %v6253
    %v6362 = vpack.c.b16 %v6256, %v6254
    %v6363 = vpack.c.b16 %v6259, %v6257
    %v6364 = vpack.c.b16 %v6260, %v6258
    %v6365 = vpack.c.b16 %v6263, %v6261
    %v6366 = vpack.c.b16 %v6264, %v6262
    %v6367 = vpack.c.b16 %v6267, %v6265
    %v6368 = vpack.c.b16 %v6268, %v6266
    %v6369 = vpack.c.b16 %v6271, %v6269
    %v6370 = vpack.c.b16 %v6272, %v6270
    %v6371 = vpack.c.b16 %v6275, %v6273
    %v6372 = vpack.c.b16 %v6276, %v6274
    %v6373 = vpack.c.b16 %v6279, %v6277
    %v6374 = vpack.c.b16 %v6280, %v6278
    %v6375 = vpack.c.b16 %v6283, %v6281
    %v6376 = vpack.c.b16 %v6284, %v6282
    %v6377 = vpack.c.b16 %v6287, %v6285
    %v6378 = vpack.c.b16 %v6288, %v6286
    %v6379 = vpack.c.b16 %v6291, %v6289
    %v6380 = vpack.c.b16 %v6292, %v6290
    %v6381 = vpack.c.b16 %v6295, %v6293
    %v6382 = vpack.c.b16 %v6296, %v6294
    %v6383 = vpack.c.b16 %v6299, %v6297
    %v6384 = vpack.c.b16 %v6300, %v6298
    %v6385 = vpack.c.b16 %v6303, %v6301
    %v6386 = vpack.c.b16 %v6304, %v6302
    %v6387 = vpack.c.b16 %v6307, %v6305
    %v6388 = vpack.c.b16 %v6308, %v6306
    %v6389 = vpack.c.b16 %v6311, %v6309
    %v6390 = vpack.c.b16 %v6312, %v6310
    %v6391 = vpack.c.b16 %v6315, %v6313
    %v6392 = vpack.c.b16 %v6316, %v6314
    %v6393 = vpack.c.b16 %v6319, %v6317
    %v6394 = vpack.c.b16 %v6320, %v6318
    %v6395 = vpack.c.b16 %v6323, %v6321
    %v6396 = vpack.c.b16 %v6324, %v6322
    %v6397 = vpack.c.b16 %v6327, %v6325
    %v6398 = vpack.c.b16 %v6328, %v6326
    %v6399 = vpack.c.b16 %v6331, %v6329
    %v6400 = vpack.c.b16 %v6332, %v6330
    %v6401 = vpack.c.b16 %v6335, %v6333
    %v6402 = vpack.c.b16 %v6336, %v6334
    %v6403 = vpack.c.b16 %v6339, %v6337
    %v6404 = vpack.c.b16 %v6340, %v6338
    %6469 = vmatpush.bf16.msra.mxu0 %v6355
    %6470 = vmatpush.bf16.msra.mxu0 %v6353
    %6471 = vmatpush.bf16.msra.mxu0 %v6351
    %6472 = vmatpush.bf16.msra.mxu0 %v6349
    %6473 = vmatpush.bf16.msra.mxu0 %v6347
    %6474 = vmatpush.bf16.msra.mxu0 %v6345
    %6475 = vmatpush.bf16.msra.mxu0 %v6343
    %6476 = vmatpush.bf16.msra.mxu0 %v6341
    %6477 = vmatmul.bf16.gmra.mxu0 %v6063
    %v6478 = vpop.f32.mrf.mxu0
    %v6479 = vadd.f32 %v6145, %v6478
    %v6480 = vpop.f32.mrf.mxu0
    %v6481 = vadd.f32 %v6145, %v6480
    %6482 = vmatmul.bf16.gmra.mxu0 %v6067
    %v6483 = vpop.f32.mrf.mxu0
    %v6484 = vadd.f32 %v6145, %v6483
    %v6485 = vpop.f32.mrf.mxu0
    %v6486 = vadd.f32 %v6145, %v6485
    %6487 = vmatmul.bf16.gmra.mxu0 %v6071
    %v6488 = vpop.f32.mrf.mxu0
    %v6489 = vadd.f32 %v6145, %v6488
    %v6490 = vpop.f32.mrf.mxu0
    %v6491 = vadd.f32 %v6145, %v6490
    %6492 = vmatmul.bf16.gmra.mxu0 %v6075
    %v6493 = vpop.f32.mrf.mxu0
    %v6494 = vadd.f32 %v6145, %v6493
    %v6495 = vpop.f32.mrf.mxu0
    %v6496 = vadd.f32 %v6145, %v6495
    %6497 = vdwg.mxu0
    %6498 = vmatpush.bf16.msra.mxu0 %v6371
    %6499 = vmatpush.bf16.msra.mxu0 %v6369
    %6500 = vmatpush.bf16.msra.mxu0 %v6367
    %6501 = vmatpush.bf16.msra.mxu0 %v6365
    %6502 = vmatpush.bf16.msra.mxu0 %v6363
    %6503 = vmatpush.bf16.msra.mxu0 %v6361
    %6504 = vmatpush.bf16.msra.mxu0 %v6359
    %6505 = vmatpush.bf16.msra.mxu0 %v6357
    %6506 = vmatmul.bf16.gmra.mxu0 %v6064
    %v6507 = vpop.f32.mrf.mxu0
    %v6508 = vadd.f32 %v6479, %v6507
    %v6509 = vpop.f32.mrf.mxu0
    %v6510 = vadd.f32 %v6481, %v6509
    %6511 = vmatmul.bf16.gmra.mxu0 %v6068
    %v6512 = vpop.f32.mrf.mxu0
    %v6513 = vadd.f32 %v6484, %v6512
    %v6514 = vpop.f32.mrf.mxu0
    %v6515 = vadd.f32 %v6486, %v6514
    %6516 = vmatmul.bf16.gmra.mxu0 %v6072
    %v6517 = vpop.f32.mrf.mxu0
    %v6518 = vadd.f32 %v6489, %v6517
    %v6519 = vpop.f32.mrf.mxu0
    %v6520 = vadd.f32 %v6491, %v6519
    %6521 = vmatmul.bf16.gmra.mxu0 %v6076
    %v6522 = vpop.f32.mrf.mxu0
    %v6523 = vadd.f32 %v6494, %v6522
    %v6524 = vpop.f32.mrf.mxu0
    %v6525 = vadd.f32 %v6496, %v6524
    %6526 = vdwg.mxu0
    %6527 = vmatpush.bf16.msra.mxu0 %v6387
    %6528 = vmatpush.bf16.msra.mxu0 %v6385
    %6529 = vmatpush.bf16.msra.mxu0 %v6383
    %6530 = vmatpush.bf16.msra.mxu0 %v6381
    %6531 = vmatpush.bf16.msra.mxu0 %v6379
    %6532 = vmatpush.bf16.msra.mxu0 %v6377
    %6533 = vmatpush.bf16.msra.mxu0 %v6375
    %6534 = vmatpush.bf16.msra.mxu0 %v6373
    %6535 = vmatmul.bf16.gmra.mxu0 %v6065
    %v6536 = vpop.f32.mrf.mxu0
    %v6537 = vadd.f32 %v6508, %v6536
    %v6538 = vpop.f32.mrf.mxu0
    %v6539 = vadd.f32 %v6510, %v6538
    %6540 = vmatmul.bf16.gmra.mxu0 %v6069
    %v6541 = vpop.f32.mrf.mxu0
    %v6542 = vadd.f32 %v6513, %v6541
    %v6543 = vpop.f32.mrf.mxu0
    %v6544 = vadd.f32 %v6515, %v6543
    %6545 = vmatmul.bf16.gmra.mxu0 %v6073
    %v6546 = vpop.f32.mrf.mxu0
    %v6547 = vadd.f32 %v6518, %v6546
    %v6548 = vpop.f32.mrf.mxu0
    %v6549 = vadd.f32 %v6520, %v6548
    %6550 = vmatmul.bf16.gmra.mxu0 %v6077
    %v6551 = vpop.f32.mrf.mxu0
    %v6552 = vadd.f32 %v6523, %v6551
    %v6553 = vpop.f32.mrf.mxu0
    %v6554 = vadd.f32 %v6525, %v6553
    %6555 = vdwg.mxu0
    %6556 = vmatpush.bf16.msra.mxu0 %v6403
    %6557 = vmatpush.bf16.msra.mxu0 %v6401
    %6558 = vmatpush.bf16.msra.mxu0 %v6399
    %6559 = vmatpush.bf16.msra.mxu0 %v6397
    %6560 = vmatpush.bf16.msra.mxu0 %v6395
    %6561 = vmatpush.bf16.msra.mxu0 %v6393
    %6562 = vmatpush.bf16.msra.mxu0 %v6391
    %6563 = vmatpush.bf16.msra.mxu0 %v6389
    %6564 = vmatmul.bf16.gmra.mxu0 %v6066
    %v6565 = vpop.f32.mrf.mxu0
    %v6566 = vadd.f32 %v6537, %v6565
    %v6567 = vpop.f32.mrf.mxu0
    %v6568 = vadd.f32 %v6539, %v6567
    %6569 = vmatmul.bf16.gmra.mxu0 %v6070
    %v6570 = vpop.f32.mrf.mxu0
    %v6571 = vadd.f32 %v6542, %v6570
    %v6572 = vpop.f32.mrf.mxu0
    %v6573 = vadd.f32 %v6544, %v6572
    %6574 = vmatmul.bf16.gmra.mxu0 %v6074
    %v6575 = vpop.f32.mrf.mxu0
    %v6576 = vadd.f32 %v6547, %v6575
    %v6577 = vpop.f32.mrf.mxu0
    %v6578 = vadd.f32 %v6549, %v6577
    %6579 = vmatmul.bf16.gmra.mxu0 %v6078
    %v6580 = vpop.f32.mrf.mxu0
    %v6581 = vadd.f32 %v6552, %v6580
    %v6582 = vpop.f32.mrf.mxu0
    %v6583 = vadd.f32 %v6554, %v6582
    %6584 = vdwg.mxu0
    %6585 = vmatpush.bf16.msra.mxu0 %v6356
    %6586 = vmatpush.bf16.msra.mxu0 %v6354
    %6587 = vmatpush.bf16.msra.mxu0 %v6352
    %6588 = vmatpush.bf16.msra.mxu0 %v6350
    %6589 = vmatpush.bf16.msra.mxu0 %v6348
    %6590 = vmatpush.bf16.msra.mxu0 %v6346
    %6591 = vmatpush.bf16.msra.mxu0 %v6344
    %6592 = vmatpush.bf16.msra.mxu0 %v6342
    %6593 = vmatmul.bf16.gmra.mxu0 %v6063
    %v6594 = vpop.f32.mrf.mxu0
    %v6595 = vadd.f32 %v6146, %v6594
    %v6596 = vpop.f32.mrf.mxu0
    %v6597 = vadd.f32 %v6146, %v6596
    %6598 = vmatmul.bf16.gmra.mxu0 %v6067
    %v6599 = vpop.f32.mrf.mxu0
    %v6600 = vadd.f32 %v6146, %v6599
    %v6601 = vpop.f32.mrf.mxu0
    %v6602 = vadd.f32 %v6146, %v6601
    %6603 = vmatmul.bf16.gmra.mxu0 %v6071
    %v6604 = vpop.f32.mrf.mxu0
    %v6605 = vadd.f32 %v6146, %v6604
    %v6606 = vpop.f32.mrf.mxu0
    %v6607 = vadd.f32 %v6146, %v6606
    %6608 = vmatmul.bf16.gmra.mxu0 %v6075
    %v6609 = vpop.f32.mrf.mxu0
    %v6610 = vadd.f32 %v6146, %v6609
    %v6611 = vpop.f32.mrf.mxu0
    %v6612 = vadd.f32 %v6146, %v6611
    %6613 = vdwg.mxu0
    %6614 = vmatpush.bf16.msra.mxu0 %v6372
    %6615 = vmatpush.bf16.msra.mxu0 %v6370
    %6616 = vmatpush.bf16.msra.mxu0 %v6368
    %6617 = vmatpush.bf16.msra.mxu0 %v6366
    %6618 = vmatpush.bf16.msra.mxu0 %v6364
    %6619 = vmatpush.bf16.msra.mxu0 %v6362
    %6620 = vmatpush.bf16.msra.mxu0 %v6360
    %6621 = vmatpush.bf16.msra.mxu0 %v6358
    %6622 = vmatmul.bf16.gmra.mxu0 %v6064
    %v6623 = vpop.f32.mrf.mxu0
    %v6624 = vadd.f32 %v6595, %v6623
    %v6625 = vpop.f32.mrf.mxu0
    %v6626 = vadd.f32 %v6597, %v6625
    %6627 = vmatmul.bf16.gmra.mxu0 %v6068
    %v6628 = vpop.f32.mrf.mxu0
    %v6629 = vadd.f32 %v6600, %v6628
    %v6630 = vpop.f32.mrf.mxu0
    %v6631 = vadd.f32 %v6602, %v6630
    %6632 = vmatmul.bf16.gmra.mxu0 %v6072
    %v6633 = vpop.f32.mrf.mxu0
    %v6634 = vadd.f32 %v6605, %v6633
    %v6635 = vpop.f32.mrf.mxu0
    %v6636 = vadd.f32 %v6607, %v6635
    %6637 = vmatmul.bf16.gmra.mxu0 %v6076
    %v6638 = vpop.f32.mrf.mxu0
    %v6639 = vadd.f32 %v6610, %v6638
    %v6640 = vpop.f32.mrf.mxu0
    %v6641 = vadd.f32 %v6612, %v6640
    %6642 = vdwg.mxu0
    %6643 = vmatpush.bf16.msra.mxu0 %v6388
    %6644 = vmatpush.bf16.msra.mxu0 %v6386
    %6645 = vmatpush.bf16.msra.mxu0 %v6384
    %6646 = vmatpush.bf16.msra.mxu0 %v6382
    %6647 = vmatpush.bf16.msra.mxu0 %v6380
    %6648 = vmatpush.bf16.msra.mxu0 %v6378
    %6649 = vmatpush.bf16.msra.mxu0 %v6376
    %6650 = vmatpush.bf16.msra.mxu0 %v6374
    %6651 = vmatmul.bf16.gmra.mxu0 %v6065
    %v6652 = vpop.f32.mrf.mxu0
    %v6653 = vadd.f32 %v6624, %v6652
    %v6654 = vpop.f32.mrf.mxu0
    %v6655 = vadd.f32 %v6626, %v6654
    %6656 = vmatmul.bf16.gmra.mxu0 %v6069
    %v6657 = vpop.f32.mrf.mxu0
    %v6658 = vadd.f32 %v6629, %v6657
    %v6659 = vpop.f32.mrf.mxu0
    %v6660 = vadd.f32 %v6631, %v6659
    %6661 = vmatmul.bf16.gmra.mxu0 %v6073
    %v6662 = vpop.f32.mrf.mxu0
    %v6663 = vadd.f32 %v6634, %v6662
    %v6664 = vpop.f32.mrf.mxu0
    %v6665 = vadd.f32 %v6636, %v6664
    %6666 = vmatmul.bf16.gmra.mxu0 %v6077
    %v6667 = vpop.f32.mrf.mxu0
    %v6668 = vadd.f32 %v6639, %v6667
    %v6669 = vpop.f32.mrf.mxu0
    %v6670 = vadd.f32 %v6641, %v6669
    %6671 = vdwg.mxu0
    %6672 = vmatpush.bf16.msra.mxu0 %v6404
    %6673 = vmatpush.bf16.msra.mxu0 %v6402
    %6674 = vmatpush.bf16.msra.mxu0 %v6400
    %6675 = vmatpush.bf16.msra.mxu0 %v6398
    %6676 = vmatpush.bf16.msra.mxu0 %v6396
    %6677 = vmatpush.bf16.msra.mxu0 %v6394
    %6678 = vmatpush.bf16.msra.mxu0 %v6392
    %6679 = vmatpush.bf16.msra.mxu0 %v6390
    %6680 = vmatmul.bf16.gmra.mxu0 %v6066
    %v6681 = vpop.f32.mrf.mxu0
    %v6682 = vadd.f32 %v6653, %v6681
    %v6683 = vpop.f32.mrf.mxu0
    %v6684 = vadd.f32 %v6655, %v6683
    %6685 = vmatmul.bf16.gmra.mxu0 %v6070
    %v6686 = vpop.f32.mrf.mxu0
    %v6687 = vadd.f32 %v6658, %v6686
    %v6688 = vpop.f32.mrf.mxu0
    %v6689 = vadd.f32 %v6660, %v6688
    %6690 = vmatmul.bf16.gmra.mxu0 %v6074
    %v6691 = vpop.f32.mrf.mxu0
    %v6692 = vadd.f32 %v6663, %v6691
    %v6693 = vpop.f32.mrf.mxu0
    %v6694 = vadd.f32 %v6665, %v6693
    %6695 = vmatmul.bf16.gmra.mxu0 %v6078
    %v6696 = vpop.f32.mrf.mxu0
    %v6697 = vadd.f32 %v6668, %v6696
    %v6698 = vpop.f32.mrf.mxu0
    %v6699 = vadd.f32 %v6670, %v6698
    %6700 = vdwg.mxu0
    %v6701 = vmul.f32 %v6566, 0.5
    %v6702 = vmul.f32 %v6682, 0.5
    %v6703 = vmul.f32 %v6568, 0.5
    %v6704 = vmul.f32 %v6684, 0.5
    %v6705 = vmul.f32 %v6571, 0.5
    %v6706 = vmul.f32 %v6687, 0.5
    %v6707 = vmul.f32 %v6573, 0.5
    %v6708 = vmul.f32 %v6689, 0.5
    %v6709 = vmul.f32 %v6576, 0.5
    %v6710 = vmul.f32 %v6692, 0.5
    %v6711 = vmul.f32 %v6578, 0.5
    %v6712 = vmul.f32 %v6694, 0.5
    %v6713 = vmul.f32 %v6581, 0.5
    %v6714 = vmul.f32 %v6697, 0.5
    %v6715 = vmul.f32 %v6583, 0.5
    %v6716 = vmul.f32 %v6699, 0.5
    %v6717 = vmul.f32 %v6566, 0.70710677
    %v6718 = vmul.f32 %v6682, 0.70710677
    %v6719 = vmul.f32 %v6568, 0.70710677
    %v6720 = vmul.f32 %v6684, 0.70710677
    %v6721 = vmul.f32 %v6571, 0.70710677
    %v6722 = vmul.f32 %v6687, 0.70710677
    %v6723 = vmul.f32 %v6573, 0.70710677
    %v6724 = vmul.f32 %v6689, 0.70710677
    %v6725 = vmul.f32 %v6576, 0.70710677
    %v6726 = vmul.f32 %v6692, 0.70710677
    %v6727 = vmul.f32 %v6578, 0.70710677
    %v6728 = vmul.f32 %v6694, 0.70710677
    %v6729 = vmul.f32 %v6581, 0.70710677
    %v6730 = vmul.f32 %v6697, 0.70710677
    %v6731 = vmul.f32 %v6583, 0.70710677
    %v6732 = vmul.f32 %v6699, 0.70710677
    %v6733 = vmul.f32 %v6717, %v6717
    %v6734 = vmin.f32 16.0, %v6733
    %v6735 = vmul.f32 %v6734, 2.1237322e-06
    %v6736 = vadd.f32 %v6735, 0.00028619796
    %v6737 = vmul.f32 %v6734, %v6736
    %v6738 = vadd.f32 %v6737, 0.0036580483
    %v6739 = vmul.f32 %v6734, %v6738
    %v6740 = vadd.f32 %v6739, 0.05243302
    %v6741 = vmul.f32 %v6734, %v6740
    %v6742 = vadd.f32 %v6741, 0.18741608
    %v6743 = vmul.f32 %v6734, %v6742
    %v6744 = vadd.f32 %v6743, 1.1283791
    %v6745 = vmul.f32 %v6717, %v6744
    %v6746 = vmul.f32 %v6734, 3.8918573e-05
    %v6747 = vadd.f32 %v6746, 0.001143296
    %v6748 = vmul.f32 %v6734, %v6747
    %v6749 = vadd.f32 %v6748, 0.014752088
    %v6750 = vmul.f32 %v6734, %v6749
    %v6751 = vadd.f32 %v6750, 0.112945676
    %v6752 = vmul.f32 %v6734, %v6751
    %v6753 = vadd.f32 %v6752, 0.4994258
    %v6754 = vmul.f32 %v6734, %v6753
    %v6755 = vadd.f32 %v6754, 1.0
    %v6756 = vrcp.pop %v6755
    %v6757 = vmul.f32 %v6755, %v6756
    %v6758 = vsub.f32 1.0, %v6757
    %v6759 = vmul.f32 %v6756, %v6758
    %v6760 = vadd.f32 %v6756, %v6759
    %vm6761 = vweird.f32 %v6755
    %vm6762 = vweird.f32 %v6756
    %vm6763 = vmor %vm6761, %vm6762
    %v6764 = vsel %vm6763, %v6756, %v6760
    %v6765 = vand.u32 2147483647, %v6755
    %vm6766 = vcmp.eq.f32.partialorder %v6765, 8.507059e+37
    %v6767 = vand.u32 %v6755, 2147483648
    %v6768 = vor.u32 1.1754944e-38, %v6767
    %v6769 = vsel %vm6766, %v6768, %v6764
    %v6770 = vmul.f32 %v6745, %v6769
    %v6771 = vmin.f32 %v6770, 1.0
    %v6772 = vmax.f32 %v6771, -1.0
    %v6773 = vmul.f32 %v6718, %v6718
    %v6774 = vmin.f32 16.0, %v6773
    %v6775 = vmul.f32 %v6774, 2.1237322e-06
    %v6776 = vadd.f32 %v6775, 0.00028619796
    %v6777 = vmul.f32 %v6774, %v6776
    %v6778 = vadd.f32 %v6777, 0.0036580483
    %v6779 = vmul.f32 %v6774, %v6778
    %v6780 = vadd.f32 %v6779, 0.05243302
    %v6781 = vmul.f32 %v6774, %v6780
    %v6782 = vadd.f32 %v6781, 0.18741608
    %v6783 = vmul.f32 %v6774, %v6782
    %v6784 = vadd.f32 %v6783, 1.1283791
    %v6785 = vmul.f32 %v6718, %v6784
    %v6786 = vmul.f32 %v6774, 3.8918573e-05
    %v6787 = vadd.f32 %v6786, 0.001143296
    %v6788 = vmul.f32 %v6774, %v6787
    %v6789 = vadd.f32 %v6788, 0.014752088
    %v6790 = vmul.f32 %v6774, %v6789
    %v6791 = vadd.f32 %v6790, 0.112945676
    %v6792 = vmul.f32 %v6774, %v6791
    %v6793 = vadd.f32 %v6792, 0.4994258
    %v6794 = vmul.f32 %v6774, %v6793
    %v6795 = vadd.f32 %v6794, 1.0
    %v6796 = vrcp.pop %v6795
    %v6797 = vmul.f32 %v6795, %v6796
    %v6798 = vsub.f32 1.0, %v6797
    %v6799 = vmul.f32 %v6796, %v6798
    %v6800 = vadd.f32 %v6796, %v6799
    %vm6801 = vweird.f32 %v6795
    %vm6802 = vweird.f32 %v6796
    %vm6803 = vmor %vm6801, %vm6802
    %v6804 = vsel %vm6803, %v6796, %v6800
    %v6805 = vand.u32 2147483647, %v6795
    %vm6806 = vcmp.eq.f32.partialorder %v6805, 8.507059e+37
    %v6807 = vand.u32 %v6795, 2147483648
    %v6808 = vor.u32 1.1754944e-38, %v6807
    %v6809 = vsel %vm6806, %v6808, %v6804
    %v6810 = vmul.f32 %v6785, %v6809
    %v6811 = vmin.f32 %v6810, 1.0
    %v6812 = vmax.f32 %v6811, -1.0
    %v6813 = vmul.f32 %v6719, %v6719
    %v6814 = vmin.f32 16.0, %v6813
    %v6815 = vmul.f32 %v6814, 2.1237322e-06
    %v6816 = vadd.f32 %v6815, 0.00028619796
    %v6817 = vmul.f32 %v6814, %v6816
    %v6818 = vadd.f32 %v6817, 0.0036580483
    %v6819 = vmul.f32 %v6814, %v6818
    %v6820 = vadd.f32 %v6819, 0.05243302
    %v6821 = vmul.f32 %v6814, %v6820
    %v6822 = vadd.f32 %v6821, 0.18741608
    %v6823 = vmul.f32 %v6814, %v6822
    %v6824 = vadd.f32 %v6823, 1.1283791
    %v6825 = vmul.f32 %v6719, %v6824
    %v6826 = vmul.f32 %v6814, 3.8918573e-05
    %v6827 = vadd.f32 %v6826, 0.001143296
    %v6828 = vmul.f32 %v6814, %v6827
    %v6829 = vadd.f32 %v6828, 0.014752088
    %v6830 = vmul.f32 %v6814, %v6829
    %v6831 = vadd.f32 %v6830, 0.112945676
    %v6832 = vmul.f32 %v6814, %v6831
    %v6833 = vadd.f32 %v6832, 0.4994258
    %v6834 = vmul.f32 %v6814, %v6833
    %v6835 = vadd.f32 %v6834, 1.0
    %v6836 = vrcp.pop %v6835
    %v6837 = vmul.f32 %v6835, %v6836
    %v6838 = vsub.f32 1.0, %v6837
    %v6839 = vmul.f32 %v6836, %v6838
    %v6840 = vadd.f32 %v6836, %v6839
    %vm6841 = vweird.f32 %v6835
    %vm6842 = vweird.f32 %v6836
    %vm6843 = vmor %vm6841, %vm6842
    %v6844 = vsel %vm6843, %v6836, %v6840
    %v6845 = vand.u32 2147483647, %v6835
    %vm6846 = vcmp.eq.f32.partialorder %v6845, 8.507059e+37
    %v6847 = vand.u32 %v6835, 2147483648
    %v6848 = vor.u32 1.1754944e-38, %v6847
    %v6849 = vsel %vm6846, %v6848, %v6844
    %v6850 = vmul.f32 %v6825, %v6849
    %v6851 = vmin.f32 %v6850, 1.0
    %v6852 = vmax.f32 %v6851, -1.0
    %v6853 = vmul.f32 %v6720, %v6720
    %v6854 = vmin.f32 16.0, %v6853
    %v6855 = vmul.f32 %v6854, 2.1237322e-06
    %v6856 = vadd.f32 %v6855, 0.00028619796
    %v6857 = vmul.f32 %v6854, %v6856
    %v6858 = vadd.f32 %v6857, 0.0036580483
    %v6859 = vmul.f32 %v6854, %v6858
    %v6860 = vadd.f32 %v6859, 0.05243302
    %v6861 = vmul.f32 %v6854, %v6860
    %v6862 = vadd.f32 %v6861, 0.18741608
    %v6863 = vmul.f32 %v6854, %v6862
    %v6864 = vadd.f32 %v6863, 1.1283791
    %v6865 = vmul.f32 %v6720, %v6864
    %v6866 = vmul.f32 %v6854, 3.8918573e-05
    %v6867 = vadd.f32 %v6866, 0.001143296
    %v6868 = vmul.f32 %v6854, %v6867
    %v6869 = vadd.f32 %v6868, 0.014752088
    %v6870 = vmul.f32 %v6854, %v6869
    %v6871 = vadd.f32 %v6870, 0.112945676
    %v6872 = vmul.f32 %v6854, %v6871
    %v6873 = vadd.f32 %v6872, 0.4994258
    %v6874 = vmul.f32 %v6854, %v6873
    %v6875 = vadd.f32 %v6874, 1.0
    %v6876 = vrcp.pop %v6875
    %v6877 = vmul.f32 %v6875, %v6876
    %v6878 = vsub.f32 1.0, %v6877
    %v6879 = vmul.f32 %v6876, %v6878
    %v6880 = vadd.f32 %v6876, %v6879
    %vm6881 = vweird.f32 %v6875
    %vm6882 = vweird.f32 %v6876
    %vm6883 = vmor %vm6881, %vm6882
    %v6884 = vsel %vm6883, %v6876, %v6880
    %v6885 = vand.u32 2147483647, %v6875
    %vm6886 = vcmp.eq.f32.partialorder %v6885, 8.507059e+37
    %v6887 = vand.u32 %v6875, 2147483648
    %v6888 = vor.u32 1.1754944e-38, %v6887
    %v6889 = vsel %vm6886, %v6888, %v6884
    %v6890 = vmul.f32 %v6865, %v6889
    %v6891 = vmin.f32 %v6890, 1.0
    %v6892 = vmax.f32 %v6891, -1.0
    %v6893 = vmul.f32 %v6721, %v6721
    %v6894 = vmin.f32 16.0, %v6893
    %v6895 = vmul.f32 %v6894, 2.1237322e-06
    %v6896 = vadd.f32 %v6895, 0.00028619796
    %v6897 = vmul.f32 %v6894, %v6896
    %v6898 = vadd.f32 %v6897, 0.0036580483
    %v6899 = vmul.f32 %v6894, %v6898
    %v6900 = vadd.f32 %v6899, 0.05243302
    %v6901 = vmul.f32 %v6894, %v6900
    %v6902 = vadd.f32 %v6901, 0.18741608
    %v6903 = vmul.f32 %v6894, %v6902
    %v6904 = vadd.f32 %v6903, 1.1283791
    %v6905 = vmul.f32 %v6721, %v6904
    %v6906 = vmul.f32 %v6894, 3.8918573e-05
    %v6907 = vadd.f32 %v6906, 0.001143296
    %v6908 = vmul.f32 %v6894, %v6907
    %v6909 = vadd.f32 %v6908, 0.014752088
    %v6910 = vmul.f32 %v6894, %v6909
    %v6911 = vadd.f32 %v6910, 0.112945676
    %v6912 = vmul.f32 %v6894, %v6911
    %v6913 = vadd.f32 %v6912, 0.4994258
    %v6914 = vmul.f32 %v6894, %v6913
    %v6915 = vadd.f32 %v6914, 1.0
    %v6916 = vrcp.pop %v6915
    %v6917 = vmul.f32 %v6915, %v6916
    %v6918 = vsub.f32 1.0, %v6917
    %v6919 = vmul.f32 %v6916, %v6918
    %v6920 = vadd.f32 %v6916, %v6919
    %vm6921 = vweird.f32 %v6915
    %vm6922 = vweird.f32 %v6916
    %vm6923 = vmor %vm6921, %vm6922
    %v6924 = vsel %vm6923, %v6916, %v6920
    %v6925 = vand.u32 2147483647, %v6915
    %vm6926 = vcmp.eq.f32.partialorder %v6925, 8.507059e+37
    %v6927 = vand.u32 %v6915, 2147483648
    %v6928 = vor.u32 1.1754944e-38, %v6927
    %v6929 = vsel %vm6926, %v6928, %v6924
    %v6930 = vmul.f32 %v6905, %v6929
    %v6931 = vmin.f32 %v6930, 1.0
    %v6932 = vmax.f32 %v6931, -1.0
    %v6933 = vmul.f32 %v6722, %v6722
    %v6934 = vmin.f32 16.0, %v6933
    %v6935 = vmul.f32 %v6934, 2.1237322e-06
    %v6936 = vadd.f32 %v6935, 0.00028619796
    %v6937 = vmul.f32 %v6934, %v6936
    %v6938 = vadd.f32 %v6937, 0.0036580483
    %v6939 = vmul.f32 %v6934, %v6938
    %v6940 = vadd.f32 %v6939, 0.05243302
    %v6941 = vmul.f32 %v6934, %v6940
    %v6942 = vadd.f32 %v6941, 0.18741608
    %v6943 = vmul.f32 %v6934, %v6942
    %v6944 = vadd.f32 %v6943, 1.1283791
    %v6945 = vmul.f32 %v6722, %v6944
    %v6946 = vmul.f32 %v6934, 3.8918573e-05
    %v6947 = vadd.f32 %v6946, 0.001143296
    %v6948 = vmul.f32 %v6934, %v6947
    %v6949 = vadd.f32 %v6948, 0.014752088
    %v6950 = vmul.f32 %v6934, %v6949
    %v6951 = vadd.f32 %v6950, 0.112945676
    %v6952 = vmul.f32 %v6934, %v6951
    %v6953 = vadd.f32 %v6952, 0.4994258
    %v6954 = vmul.f32 %v6934, %v6953
    %v6955 = vadd.f32 %v6954, 1.0
    %v6956 = vrcp.pop %v6955
    %v6957 = vmul.f32 %v6955, %v6956
    %v6958 = vsub.f32 1.0, %v6957
    %v6959 = vmul.f32 %v6956, %v6958
    %v6960 = vadd.f32 %v6956, %v6959
    %vm6961 = vweird.f32 %v6955
    %vm6962 = vweird.f32 %v6956
    %vm6963 = vmor %vm6961, %vm6962
    %v6964 = vsel %vm6963, %v6956, %v6960
    %v6965 = vand.u32 2147483647, %v6955
    %vm6966 = vcmp.eq.f32.partialorder %v6965, 8.507059e+37
    %v6967 = vand.u32 %v6955, 2147483648
    %v6968 = vor.u32 1.1754944e-38, %v6967
    %v6969 = vsel %vm6966, %v6968, %v6964
    %v6970 = vmul.f32 %v6945, %v6969
    %v6971 = vmin.f32 %v6970, 1.0
    %v6972 = vmax.f32 %v6971, -1.0
    %v6973 = vmul.f32 %v6723, %v6723
    %v6974 = vmin.f32 16.0, %v6973
    %v6975 = vmul.f32 %v6974, 2.1237322e-06
    %v6976 = vadd.f32 %v6975, 0.00028619796
    %v6977 = vmul.f32 %v6974, %v6976
    %v6978 = vadd.f32 %v6977, 0.0036580483
    %v6979 = vmul.f32 %v6974, %v6978
    %v6980 = vadd.f32 %v6979, 0.05243302
    %v6981 = vmul.f32 %v6974, %v6980
    %v6982 = vadd.f32 %v6981, 0.18741608
    %v6983 = vmul.f32 %v6974, %v6982
    %v6984 = vadd.f32 %v6983, 1.1283791
    %v6985 = vmul.f32 %v6723, %v6984
    %v6986 = vmul.f32 %v6974, 3.8918573e-05
    %v6987 = vadd.f32 %v6986, 0.001143296
    %v6988 = vmul.f32 %v6974, %v6987
    %v6989 = vadd.f32 %v6988, 0.014752088
    %v6990 = vmul.f32 %v6974, %v6989
    %v6991 = vadd.f32 %v6990, 0.112945676
    %v6992 = vmul.f32 %v6974, %v6991
    %v6993 = vadd.f32 %v6992, 0.4994258
    %v6994 = vmul.f32 %v6974, %v6993
    %v6995 = vadd.f32 %v6994, 1.0
    %v6996 = vrcp.pop %v6995
    %v6997 = vmul.f32 %v6995, %v6996
    %v6998 = vsub.f32 1.0, %v6997
    %v6999 = vmul.f32 %v6996, %v6998
    %v7000 = vadd.f32 %v6996, %v6999
    %vm7001 = vweird.f32 %v6995
    %vm7002 = vweird.f32 %v6996
    %vm7003 = vmor %vm7001, %vm7002
    %v7004 = vsel %vm7003, %v6996, %v7000
    %v7005 = vand.u32 2147483647, %v6995
    %vm7006 = vcmp.eq.f32.partialorder %v7005, 8.507059e+37
    %v7007 = vand.u32 %v6995, 2147483648
    %v7008 = vor.u32 1.1754944e-38, %v7007
    %v7009 = vsel %vm7006, %v7008, %v7004
    %v7010 = vmul.f32 %v6985, %v7009
    %v7011 = vmin.f32 %v7010, 1.0
    %v7012 = vmax.f32 %v7011, -1.0
    %v7013 = vmul.f32 %v6724, %v6724
    %v7014 = vmin.f32 16.0, %v7013
    %v7015 = vmul.f32 %v7014, 2.1237322e-06
    %v7016 = vadd.f32 %v7015, 0.00028619796
    %v7017 = vmul.f32 %v7014, %v7016
    %v7018 = vadd.f32 %v7017, 0.0036580483
    %v7019 = vmul.f32 %v7014, %v7018
    %v7020 = vadd.f32 %v7019, 0.05243302
    %v7021 = vmul.f32 %v7014, %v7020
    %v7022 = vadd.f32 %v7021, 0.18741608
    %v7023 = vmul.f32 %v7014, %v7022
    %v7024 = vadd.f32 %v7023, 1.1283791
    %v7025 = vmul.f32 %v6724, %v7024
    %v7026 = vmul.f32 %v7014, 3.8918573e-05
    %v7027 = vadd.f32 %v7026, 0.001143296
    %v7028 = vmul.f32 %v7014, %v7027
    %v7029 = vadd.f32 %v7028, 0.014752088
    %v7030 = vmul.f32 %v7014, %v7029
    %v7031 = vadd.f32 %v7030, 0.112945676
    %v7032 = vmul.f32 %v7014, %v7031
    %v7033 = vadd.f32 %v7032, 0.4994258
    %v7034 = vmul.f32 %v7014, %v7033
    %v7035 = vadd.f32 %v7034, 1.0
    %v7036 = vrcp.pop %v7035
    %v7037 = vmul.f32 %v7035, %v7036
    %v7038 = vsub.f32 1.0, %v7037
    %v7039 = vmul.f32 %v7036, %v7038
    %v7040 = vadd.f32 %v7036, %v7039
    %vm7041 = vweird.f32 %v7035
    %vm7042 = vweird.f32 %v7036
    %vm7043 = vmor %vm7041, %vm7042
    %v7044 = vsel %vm7043, %v7036, %v7040
    %v7045 = vand.u32 2147483647, %v7035
    %vm7046 = vcmp.eq.f32.partialorder %v7045, 8.507059e+37
    %v7047 = vand.u32 %v7035, 2147483648
    %v7048 = vor.u32 1.1754944e-38, %v7047
    %v7049 = vsel %vm7046, %v7048, %v7044
    %v7050 = vmul.f32 %v7025, %v7049
    %v7051 = vmin.f32 %v7050, 1.0
    %v7052 = vmax.f32 %v7051, -1.0
    %v7053 = vmul.f32 %v6725, %v6725
    %v7054 = vmin.f32 16.0, %v7053
    %v7055 = vmul.f32 %v7054, 2.1237322e-06
    %v7056 = vadd.f32 %v7055, 0.00028619796
    %v7057 = vmul.f32 %v7054, %v7056
    %v7058 = vadd.f32 %v7057, 0.0036580483
    %v7059 = vmul.f32 %v7054, %v7058
    %v7060 = vadd.f32 %v7059, 0.05243302
    %v7061 = vmul.f32 %v7054, %v7060
    %v7062 = vadd.f32 %v7061, 0.18741608
    %v7063 = vmul.f32 %v7054, %v7062
    %v7064 = vadd.f32 %v7063, 1.1283791
    %v7065 = vmul.f32 %v6725, %v7064
    %v7066 = vmul.f32 %v7054, 3.8918573e-05
    %v7067 = vadd.f32 %v7066, 0.001143296
    %v7068 = vmul.f32 %v7054, %v7067
    %v7069 = vadd.f32 %v7068, 0.014752088
    %v7070 = vmul.f32 %v7054, %v7069
    %v7071 = vadd.f32 %v7070, 0.112945676
    %v7072 = vmul.f32 %v7054, %v7071
    %v7073 = vadd.f32 %v7072, 0.4994258
    %v7074 = vmul.f32 %v7054, %v7073
    %v7075 = vadd.f32 %v7074, 1.0
    %v7076 = vrcp.pop %v7075
    %v7077 = vmul.f32 %v7075, %v7076
    %v7078 = vsub.f32 1.0, %v7077
    %v7079 = vmul.f32 %v7076, %v7078
    %v7080 = vadd.f32 %v7076, %v7079
    %vm7081 = vweird.f32 %v7075
    %vm7082 = vweird.f32 %v7076
    %vm7083 = vmor %vm7081, %vm7082
    %v7084 = vsel %vm7083, %v7076, %v7080
    %v7085 = vand.u32 2147483647, %v7075
    %vm7086 = vcmp.eq.f32.partialorder %v7085, 8.507059e+37
    %v7087 = vand.u32 %v7075, 2147483648
    %v7088 = vor.u32 1.1754944e-38, %v7087
    %v7089 = vsel %vm7086, %v7088, %v7084
    %v7090 = vmul.f32 %v7065, %v7089
    %v7091 = vmin.f32 %v7090, 1.0
    %v7092 = vmax.f32 %v7091, -1.0
    %v7093 = vmul.f32 %v6726, %v6726
    %v7094 = vmin.f32 16.0, %v7093
    %v7095 = vmul.f32 %v7094, 2.1237322e-06
    %v7096 = vadd.f32 %v7095, 0.00028619796
    %v7097 = vmul.f32 %v7094, %v7096
    %v7098 = vadd.f32 %v7097, 0.0036580483
    %v7099 = vmul.f32 %v7094, %v7098
    %v7100 = vadd.f32 %v7099, 0.05243302
    %v7101 = vmul.f32 %v7094, %v7100
    %v7102 = vadd.f32 %v7101, 0.18741608
    %v7103 = vmul.f32 %v7094, %v7102
    %v7104 = vadd.f32 %v7103, 1.1283791
    %v7105 = vmul.f32 %v6726, %v7104
    %v7106 = vmul.f32 %v7094, 3.8918573e-05
    %v7107 = vadd.f32 %v7106, 0.001143296
    %v7108 = vmul.f32 %v7094, %v7107
    %v7109 = vadd.f32 %v7108, 0.014752088
    %v7110 = vmul.f32 %v7094, %v7109
    %v7111 = vadd.f32 %v7110, 0.112945676
    %v7112 = vmul.f32 %v7094, %v7111
    %v7113 = vadd.f32 %v7112, 0.4994258
    %v7114 = vmul.f32 %v7094, %v7113
    %v7115 = vadd.f32 %v7114, 1.0
    %v7116 = vrcp.pop %v7115
    %v7117 = vmul.f32 %v7115, %v7116
    %v7118 = vsub.f32 1.0, %v7117
    %v7119 = vmul.f32 %v7116, %v7118
    %v7120 = vadd.f32 %v7116, %v7119
    %vm7121 = vweird.f32 %v7115
    %vm7122 = vweird.f32 %v7116
    %vm7123 = vmor %vm7121, %vm7122
    %v7124 = vsel %vm7123, %v7116, %v7120
    %v7125 = vand.u32 2147483647, %v7115
    %vm7126 = vcmp.eq.f32.partialorder %v7125, 8.507059e+37
    %v7127 = vand.u32 %v7115, 2147483648
    %v7128 = vor.u32 1.1754944e-38, %v7127
    %v7129 = vsel %vm7126, %v7128, %v7124
    %v7130 = vmul.f32 %v7105, %v7129
    %v7131 = vmin.f32 %v7130, 1.0
    %v7132 = vmax.f32 %v7131, -1.0
    %v7133 = vmul.f32 %v6727, %v6727
    %v7134 = vmin.f32 16.0, %v7133
    %v7135 = vmul.f32 %v7134, 2.1237322e-06
    %v7136 = vadd.f32 %v7135, 0.00028619796
    %v7137 = vmul.f32 %v7134, %v7136
    %v7138 = vadd.f32 %v7137, 0.0036580483
    %v7139 = vmul.f32 %v7134, %v7138
    %v7140 = vadd.f32 %v7139, 0.05243302
    %v7141 = vmul.f32 %v7134, %v7140
    %v7142 = vadd.f32 %v7141, 0.18741608
    %v7143 = vmul.f32 %v7134, %v7142
    %v7144 = vadd.f32 %v7143, 1.1283791
    %v7145 = vmul.f32 %v6727, %v7144
    %v7146 = vmul.f32 %v7134, 3.8918573e-05
    %v7147 = vadd.f32 %v7146, 0.001143296
    %v7148 = vmul.f32 %v7134, %v7147
    %v7149 = vadd.f32 %v7148, 0.014752088
    %v7150 = vmul.f32 %v7134, %v7149
    %v7151 = vadd.f32 %v7150, 0.112945676
    %v7152 = vmul.f32 %v7134, %v7151
    %v7153 = vadd.f32 %v7152, 0.4994258
    %v7154 = vmul.f32 %v7134, %v7153
    %v7155 = vadd.f32 %v7154, 1.0
    %v7156 = vrcp.pop %v7155
    %v7157 = vmul.f32 %v7155, %v7156
    %v7158 = vsub.f32 1.0, %v7157
    %v7159 = vmul.f32 %v7156, %v7158
    %v7160 = vadd.f32 %v7156, %v7159
    %vm7161 = vweird.f32 %v7155
    %vm7162 = vweird.f32 %v7156
    %vm7163 = vmor %vm7161, %vm7162
    %v7164 = vsel %vm7163, %v7156, %v7160
    %v7165 = vand.u32 2147483647, %v7155
    %vm7166 = vcmp.eq.f32.partialorder %v7165, 8.507059e+37
    %v7167 = vand.u32 %v7155, 2147483648
    %v7168 = vor.u32 1.1754944e-38, %v7167
    %v7169 = vsel %vm7166, %v7168, %v7164
    %v7170 = vmul.f32 %v7145, %v7169
    %v7171 = vmin.f32 %v7170, 1.0
    %v7172 = vmax.f32 %v7171, -1.0
    %v7173 = vmul.f32 %v6728, %v6728
    %v7174 = vmin.f32 16.0, %v7173
    %v7175 = vmul.f32 %v7174, 2.1237322e-06
    %v7176 = vadd.f32 %v7175, 0.00028619796
    %v7177 = vmul.f32 %v7174, %v7176
    %v7178 = vadd.f32 %v7177, 0.0036580483
    %v7179 = vmul.f32 %v7174, %v7178
    %v7180 = vadd.f32 %v7179, 0.05243302
    %v7181 = vmul.f32 %v7174, %v7180
    %v7182 = vadd.f32 %v7181, 0.18741608
    %v7183 = vmul.f32 %v7174, %v7182
    %v7184 = vadd.f32 %v7183, 1.1283791
    %v7185 = vmul.f32 %v6728, %v7184
    %v7186 = vmul.f32 %v7174, 3.8918573e-05
    %v7187 = vadd.f32 %v7186, 0.001143296
    %v7188 = vmul.f32 %v7174, %v7187
    %v7189 = vadd.f32 %v7188, 0.014752088
    %v7190 = vmul.f32 %v7174, %v7189
    %v7191 = vadd.f32 %v7190, 0.112945676
    %v7192 = vmul.f32 %v7174, %v7191
    %v7193 = vadd.f32 %v7192, 0.4994258
    %v7194 = vmul.f32 %v7174, %v7193
    %v7195 = vadd.f32 %v7194, 1.0
    %v7196 = vrcp.pop %v7195
    %v7197 = vmul.f32 %v7195, %v7196
    %v7198 = vsub.f32 1.0, %v7197
    %v7199 = vmul.f32 %v7196, %v7198
    %v7200 = vadd.f32 %v7196, %v7199
    %vm7201 = vweird.f32 %v7195
    %vm7202 = vweird.f32 %v7196
    %vm7203 = vmor %vm7201, %vm7202
    %v7204 = vsel %vm7203, %v7196, %v7200
    %v7205 = vand.u32 2147483647, %v7195
    %vm7206 = vcmp.eq.f32.partialorder %v7205, 8.507059e+37
    %v7207 = vand.u32 %v7195, 2147483648
    %v7208 = vor.u32 1.1754944e-38, %v7207
    %v7209 = vsel %vm7206, %v7208, %v7204
    %v7210 = vmul.f32 %v7185, %v7209
    %v7211 = vmin.f32 %v7210, 1.0
    %v7212 = vmax.f32 %v7211, -1.0
    %v7213 = vmul.f32 %v6729, %v6729
    %v7214 = vmin.f32 16.0, %v7213
    %v7215 = vmul.f32 %v7214, 2.1237322e-06
    %v7216 = vadd.f32 %v7215, 0.00028619796
    %v7217 = vmul.f32 %v7214, %v7216
    %v7218 = vadd.f32 %v7217, 0.0036580483
    %v7219 = vmul.f32 %v7214, %v7218
    %v7220 = vadd.f32 %v7219, 0.05243302
    %v7221 = vmul.f32 %v7214, %v7220
    %v7222 = vadd.f32 %v7221, 0.18741608
    %v7223 = vmul.f32 %v7214, %v7222
    %v7224 = vadd.f32 %v7223, 1.1283791
    %v7225 = vmul.f32 %v6729, %v7224
    %v7226 = vmul.f32 %v7214, 3.8918573e-05
    %v7227 = vadd.f32 %v7226, 0.001143296
    %v7228 = vmul.f32 %v7214, %v7227
    %v7229 = vadd.f32 %v7228, 0.014752088
    %v7230 = vmul.f32 %v7214, %v7229
    %v7231 = vadd.f32 %v7230, 0.112945676
    %v7232 = vmul.f32 %v7214, %v7231
    %v7233 = vadd.f32 %v7232, 0.4994258
    %v7234 = vmul.f32 %v7214, %v7233
    %v7235 = vadd.f32 %v7234, 1.0
    %v7236 = vrcp.pop %v7235
    %v7237 = vmul.f32 %v7235, %v7236
    %v7238 = vsub.f32 1.0, %v7237
    %v7239 = vmul.f32 %v7236, %v7238
    %v7240 = vadd.f32 %v7236, %v7239
    %vm7241 = vweird.f32 %v7235
    %vm7242 = vweird.f32 %v7236
    %vm7243 = vmor %vm7241, %vm7242
    %v7244 = vsel %vm7243, %v7236, %v7240
    %v7245 = vand.u32 2147483647, %v7235
    %vm7246 = vcmp.eq.f32.partialorder %v7245, 8.507059e+37
    %v7247 = vand.u32 %v7235, 2147483648
    %v7248 = vor.u32 1.1754944e-38, %v7247
    %v7249 = vsel %vm7246, %v7248, %v7244
    %v7250 = vmul.f32 %v7225, %v7249
    %v7251 = vmin.f32 %v7250, 1.0
    %v7252 = vmax.f32 %v7251, -1.0
    %v7253 = vmul.f32 %v6730, %v6730
    %v7254 = vmin.f32 16.0, %v7253
    %v7255 = vmul.f32 %v7254, 2.1237322e-06
    %v7256 = vadd.f32 %v7255, 0.00028619796
    %v7257 = vmul.f32 %v7254, %v7256
    %v7258 = vadd.f32 %v7257, 0.0036580483
    %v7259 = vmul.f32 %v7254, %v7258
    %v7260 = vadd.f32 %v7259, 0.05243302
    %v7261 = vmul.f32 %v7254, %v7260
    %v7262 = vadd.f32 %v7261, 0.18741608
    %v7263 = vmul.f32 %v7254, %v7262
    %v7264 = vadd.f32 %v7263, 1.1283791
    %v7265 = vmul.f32 %v6730, %v7264
    %v7266 = vmul.f32 %v7254, 3.8918573e-05
    %v7267 = vadd.f32 %v7266, 0.001143296
    %v7268 = vmul.f32 %v7254, %v7267
    %v7269 = vadd.f32 %v7268, 0.014752088
    %v7270 = vmul.f32 %v7254, %v7269
    %v7271 = vadd.f32 %v7270, 0.112945676
    %v7272 = vmul.f32 %v7254, %v7271
    %v7273 = vadd.f32 %v7272, 0.4994258
    %v7274 = vmul.f32 %v7254, %v7273
    %v7275 = vadd.f32 %v7274, 1.0
    %v7276 = vrcp.pop %v7275
    %v7277 = vmul.f32 %v7275, %v7276
    %v7278 = vsub.f32 1.0, %v7277
    %v7279 = vmul.f32 %v7276, %v7278
    %v7280 = vadd.f32 %v7276, %v7279
    %vm7281 = vweird.f32 %v7275
    %vm7282 = vweird.f32 %v7276
    %vm7283 = vmor %vm7281, %vm7282
    %v7284 = vsel %vm7283, %v7276, %v7280
    %v7285 = vand.u32 2147483647, %v7275
    %vm7286 = vcmp.eq.f32.partialorder %v7285, 8.507059e+37
    %v7287 = vand.u32 %v7275, 2147483648
    %v7288 = vor.u32 1.1754944e-38, %v7287
    %v7289 = vsel %vm7286, %v7288, %v7284
    %v7290 = vmul.f32 %v7265, %v7289
    %v7291 = vmin.f32 %v7290, 1.0
    %v7292 = vmax.f32 %v7291, -1.0
    %v7293 = vmul.f32 %v6731, %v6731
    %v7294 = vmin.f32 16.0, %v7293
    %v7295 = vmul.f32 %v7294, 2.1237322e-06
    %v7296 = vadd.f32 %v7295, 0.00028619796
    %v7297 = vmul.f32 %v7294, %v7296
    %v7298 = vadd.f32 %v7297, 0.0036580483
    %v7299 = vmul.f32 %v7294, %v7298
    %v7300 = vadd.f32 %v7299, 0.05243302
    %v7301 = vmul.f32 %v7294, %v7300
    %v7302 = vadd.f32 %v7301, 0.18741608
    %v7303 = vmul.f32 %v7294, %v7302
    %v7304 = vadd.f32 %v7303, 1.1283791
    %v7305 = vmul.f32 %v6731, %v7304
    %v7306 = vmul.f32 %v7294, 3.8918573e-05
    %v7307 = vadd.f32 %v7306, 0.001143296
    %v7308 = vmul.f32 %v7294, %v7307
    %v7309 = vadd.f32 %v7308, 0.014752088
    %v7310 = vmul.f32 %v7294, %v7309
    %v7311 = vadd.f32 %v7310, 0.112945676
    %v7312 = vmul.f32 %v7294, %v7311
    %v7313 = vadd.f32 %v7312, 0.4994258
    %v7314 = vmul.f32 %v7294, %v7313
    %v7315 = vadd.f32 %v7314, 1.0
    %v7316 = vrcp.pop %v7315
    %v7317 = vmul.f32 %v7315, %v7316
    %v7318 = vsub.f32 1.0, %v7317
    %v7319 = vmul.f32 %v7316, %v7318
    %v7320 = vadd.f32 %v7316, %v7319
    %vm7321 = vweird.f32 %v7315
    %vm7322 = vweird.f32 %v7316
    %vm7323 = vmor %vm7321, %vm7322
    %v7324 = vsel %vm7323, %v7316, %v7320
    %v7325 = vand.u32 2147483647, %v7315
    %vm7326 = vcmp.eq.f32.partialorder %v7325, 8.507059e+37
    %v7327 = vand.u32 %v7315, 2147483648
    %v7328 = vor.u32 1.1754944e-38, %v7327
    %v7329 = vsel %vm7326, %v7328, %v7324
    %v7330 = vmul.f32 %v7305, %v7329
    %v7331 = vmin.f32 %v7330, 1.0
    %v7332 = vmax.f32 %v7331, -1.0
    %v7333 = vmul.f32 %v6732, %v6732
    %v7334 = vmin.f32 16.0, %v7333
    %v7335 = vmul.f32 %v7334, 2.1237322e-06
    %v7336 = vadd.f32 %v7335, 0.00028619796
    %v7337 = vmul.f32 %v7334, %v7336
    %v7338 = vadd.f32 %v7337, 0.0036580483
    %v7339 = vmul.f32 %v7334, %v7338
    %v7340 = vadd.f32 %v7339, 0.05243302
    %v7341 = vmul.f32 %v7334, %v7340
    %v7342 = vadd.f32 %v7341, 0.18741608
    %v7343 = vmul.f32 %v7334, %v7342
    %v7344 = vadd.f32 %v7343, 1.1283791
    %v7345 = vmul.f32 %v6732, %v7344
    %v7346 = vmul.f32 %v7334, 3.8918573e-05
    %v7347 = vadd.f32 %v7346, 0.001143296
    %v7348 = vmul.f32 %v7334, %v7347
    %v7349 = vadd.f32 %v7348, 0.014752088
    %v7350 = vmul.f32 %v7334, %v7349
    %v7351 = vadd.f32 %v7350, 0.112945676
    %v7352 = vmul.f32 %v7334, %v7351
    %v7353 = vadd.f32 %v7352, 0.4994258
    %v7354 = vmul.f32 %v7334, %v7353
    %v7355 = vadd.f32 %v7354, 1.0
    %v7356 = vrcp.pop %v7355
    %v7357 = vmul.f32 %v7355, %v7356
    %v7358 = vsub.f32 1.0, %v7357
    %v7359 = vmul.f32 %v7356, %v7358
    %v7360 = vadd.f32 %v7356, %v7359
    %vm7361 = vweird.f32 %v7355
    %vm7362 = vweird.f32 %v7356
    %vm7363 = vmor %vm7361, %vm7362
    %v7364 = vsel %vm7363, %v7356, %v7360
    %v7365 = vand.u32 2147483647, %v7355
    %vm7366 = vcmp.eq.f32.partialorder %v7365, 8.507059e+37
    %v7367 = vand.u32 %v7355, 2147483648
    %v7368 = vor.u32 1.1754944e-38, %v7367
    %v7369 = vsel %vm7366, %v7368, %v7364
    %v7370 = vmul.f32 %v7345, %v7369
    %v7371 = vmin.f32 %v7370, 1.0
    %v7372 = vmax.f32 %v7371, -1.0
    %v7373 = vadd.f32 %v6772, 1.0
    %v7374 = vadd.f32 %v6812, 1.0
    %v7375 = vadd.f32 %v6852, 1.0
    %v7376 = vadd.f32 %v6892, 1.0
    %v7377 = vadd.f32 %v6932, 1.0
    %v7378 = vadd.f32 %v6972, 1.0
    %v7379 = vadd.f32 %v7012, 1.0
    %v7380 = vadd.f32 %v7052, 1.0
    %v7381 = vadd.f32 %v7092, 1.0
    %v7382 = vadd.f32 %v7132, 1.0
    %v7383 = vadd.f32 %v7172, 1.0
    %v7384 = vadd.f32 %v7212, 1.0
    %v7385 = vadd.f32 %v7252, 1.0
    %v7386 = vadd.f32 %v7292, 1.0
    %v7387 = vadd.f32 %v7332, 1.0
    %v7388 = vadd.f32 %v7372, 1.0
    %v7389 = vmul.f32 %v6701, %v7373
    %v7390 = vmul.f32 %v6702, %v7374
    %v7391 = vmul.f32 %v6703, %v7375
    %v7392 = vmul.f32 %v6704, %v7376
    %v7393 = vmul.f32 %v6705, %v7377
    %v7394 = vmul.f32 %v6706, %v7378
    %v7395 = vmul.f32 %v6707, %v7379
    %v7396 = vmul.f32 %v6708, %v7380
    %v7397 = vmul.f32 %v6709, %v7381
    %v7398 = vmul.f32 %v6710, %v7382
    %v7399 = vmul.f32 %v6711, %v7383
    %v7400 = vmul.f32 %v6712, %v7384
    %v7401 = vmul.f32 %v6713, %v7385
    %v7402 = vmul.f32 %v6714, %v7386
    %v7403 = vmul.f32 %v6715, %v7387
    %v7404 = vmul.f32 %v6716, %v7388
    %v7405 = vpack.c.bf16 %v7391, %v7389
    %v7406 = vpack.c.bf16 %v7392, %v7390
    %v7407 = vpack.c.bf16 %v7395, %v7393
    %v7408 = vpack.c.bf16 %v7396, %v7394
    %v7409 = vpack.c.bf16 %v7399, %v7397
    %v7410 = vpack.c.bf16 %v7400, %v7398
    %v7411 = vpack.c.bf16 %v7403, %v7401
    %v7412 = vpack.c.bf16 %v7404, %v7402
    %v7413 = vld [vmem:[#allocation20] sm:$0xf]
    %v7414 = vld [vmem:[#allocation20 + $0x4] sm:$0xf]
    %v7415 = vld [vmem:[#allocation20 + $0x8] sm:$0xf]
    %v7416 = vld [vmem:[#allocation20 + $0xc] sm:$0xf]
    %v7417 = vld [vmem:[#allocation20 + $0x10] sm:$0xf]
    %v7418 = vld [vmem:[#allocation20 + $0x14] sm:$0xf]
    %v7419 = vld [vmem:[#allocation20 + $0x18] sm:$0xf]
    %v7420 = vld [vmem:[#allocation20 + $0x1c] sm:$0xf]
    %v7421 = vld [vmem:[#allocation20 + $0x20] sm:$0xf]
    %v7422 = vld [vmem:[#allocation20 + $0x24] sm:$0xf]
    %v7423 = vld [vmem:[#allocation20 + $0x28] sm:$0xf]
    %v7424 = vld [vmem:[#allocation20 + $0x2c] sm:$0xf]
    %v7425 = vld [vmem:[#allocation20 + $0x30] sm:$0xf]
    %v7426 = vld [vmem:[#allocation20 + $0x34] sm:$0xf]
    %v7427 = vld [vmem:[#allocation20 + $0x38] sm:$0xf]
    %v7428 = vld [vmem:[#allocation20 + $0x3c] sm:$0xf]
    %v7429 = vld [vmem:[#allocation20 + $0x40] sm:$0xf]
    %v7430 = vld [vmem:[#allocation20 + $0x44] sm:$0xf]
    %v7431 = vld [vmem:[#allocation20 + $0x48] sm:$0xf]
    %v7432 = vld [vmem:[#allocation20 + $0x4c] sm:$0xf]
    %v7433 = vld [vmem:[#allocation20 + $0x50] sm:$0xf]
    %v7434 = vld [vmem:[#allocation20 + $0x54] sm:$0xf]
    %v7435 = vld [vmem:[#allocation20 + $0x58] sm:$0xf]
    %v7436 = vld [vmem:[#allocation20 + $0x5c] sm:$0xf]
    %v7437 = vld [vmem:[#allocation20 + $0x60] sm:$0xf]
    %v7438 = vld [vmem:[#allocation20 + $0x64] sm:$0xf]
    %v7439 = vld [vmem:[#allocation20 + $0x68] sm:$0xf]
    %v7440 = vld [vmem:[#allocation20 + $0x6c] sm:$0xf]
    %v7441 = vld [vmem:[#allocation20 + $0x70] sm:$0xf]
    %v7442 = vld [vmem:[#allocation20 + $0x74] sm:$0xf]
    %v7443 = vld [vmem:[#allocation20 + $0x78] sm:$0xf]
    %v7444 = vld [vmem:[#allocation20 + $0x7c] sm:$0xf]
    %v7445 = vld [vmem:[%s14] sm:$0x1]
    %v7447 = vperm.slane %v7445, 0
    %v7481 = vunpack.c.l.b16 %v7413
    %v7482 = vunpack.c.l.b16 %v7414
    %v7483 = vunpack.c.l.b16 %v7415
    %v7484 = vunpack.c.l.b16 %v7416
    %v7485 = vunpack.c.l.b16 %v7417
    %v7486 = vunpack.c.l.b16 %v7418
    %v7487 = vunpack.c.l.b16 %v7419
    %v7488 = vunpack.c.l.b16 %v7420
    %v7489 = vunpack.c.l.b16 %v7421
    %v7490 = vunpack.c.l.b16 %v7422
    %v7491 = vunpack.c.l.b16 %v7423
    %v7492 = vunpack.c.l.b16 %v7424
    %v7493 = vunpack.c.l.b16 %v7425
    %v7494 = vunpack.c.l.b16 %v7426
    %v7495 = vunpack.c.l.b16 %v7427
    %v7496 = vunpack.c.l.b16 %v7428
    %v7497 = vunpack.c.l.b16 %v7429
    %v7498 = vunpack.c.l.b16 %v7430
    %v7499 = vunpack.c.l.b16 %v7431
    %v7500 = vunpack.c.l.b16 %v7432
    %v7501 = vunpack.c.l.b16 %v7433
    %v7502 = vunpack.c.l.b16 %v7434
    %v7503 = vunpack.c.l.b16 %v7435
    %v7504 = vunpack.c.l.b16 %v7436
    %v7505 = vunpack.c.l.b16 %v7437
    %v7506 = vunpack.c.l.b16 %v7438
    %v7507 = vunpack.c.l.b16 %v7439
    %v7508 = vunpack.c.l.b16 %v7440
    %v7509 = vunpack.c.l.b16 %v7441
    %v7510 = vunpack.c.l.b16 %v7442
    %v7511 = vunpack.c.l.b16 %v7443
    %v7512 = vunpack.c.l.b16 %v7444
    %v7513 = vpack.c.b16 %v7482, %v7481
    %v7514 = vpack.c.b16 %v7484, %v7483
    %v7515 = vpack.c.b16 %v7486, %v7485
    %v7516 = vpack.c.b16 %v7488, %v7487
    %v7517 = vpack.c.b16 %v7490, %v7489
    %v7518 = vpack.c.b16 %v7492, %v7491
    %v7519 = vpack.c.b16 %v7494, %v7493
    %v7520 = vpack.c.b16 %v7496, %v7495
    %v7521 = vpack.c.b16 %v7498, %v7497
    %v7522 = vpack.c.b16 %v7500, %v7499
    %v7523 = vpack.c.b16 %v7502, %v7501
    %v7524 = vpack.c.b16 %v7504, %v7503
    %v7525 = vpack.c.b16 %v7506, %v7505
    %v7526 = vpack.c.b16 %v7508, %v7507
    %v7527 = vpack.c.b16 %v7510, %v7509
    %v7528 = vpack.c.b16 %v7512, %v7511
    %7545 = vmatpush.bf16.msra.mxu0 %v7520
    %7546 = vmatpush.bf16.msra.mxu0 %v7519
    %7547 = vmatpush.bf16.msra.mxu0 %v7518
    %7548 = vmatpush.bf16.msra.mxu0 %v7517
    %7549 = vmatpush.bf16.msra.mxu0 %v7516
    %7550 = vmatpush.bf16.msra.mxu0 %v7515
    %7551 = vmatpush.bf16.msra.mxu0 %v7514
    %7552 = vmatpush.bf16.msra.mxu0 %v7513
    %7553 = vmatmul.bf16.gmra.mxu0 %v7405
    %v7554 = vpop.f32.mrf.mxu0
    %v7555 = vadd.f32 %v7447, %v7554
    %v7556 = vpop.f32.mrf.mxu0
    %v7557 = vadd.f32 %v7447, %v7556
    %7558 = vmatmul.bf16.gmra.mxu0 %v7407
    %v7559 = vpop.f32.mrf.mxu0
    %v7560 = vadd.f32 %v7447, %v7559
    %v7561 = vpop.f32.mrf.mxu0
    %v7562 = vadd.f32 %v7447, %v7561
    %7563 = vmatmul.bf16.gmra.mxu0 %v7409
    %v7564 = vpop.f32.mrf.mxu0
    %v7565 = vadd.f32 %v7447, %v7564
    %v7566 = vpop.f32.mrf.mxu0
    %v7567 = vadd.f32 %v7447, %v7566
    %7568 = vmatmul.bf16.gmra.mxu0 %v7411
    %v7569 = vpop.f32.mrf.mxu0
    %v7570 = vadd.f32 %v7447, %v7569
    %v7571 = vpop.f32.mrf.mxu0
    %v7572 = vadd.f32 %v7447, %v7571
    %7573 = vdwg.mxu0
    %7574 = vmatpush.bf16.msra.mxu0 %v7528
    %7575 = vmatpush.bf16.msra.mxu0 %v7527
    %7576 = vmatpush.bf16.msra.mxu0 %v7526
    %7577 = vmatpush.bf16.msra.mxu0 %v7525
    %7578 = vmatpush.bf16.msra.mxu0 %v7524
    %7579 = vmatpush.bf16.msra.mxu0 %v7523
    %7580 = vmatpush.bf16.msra.mxu0 %v7522
    %7581 = vmatpush.bf16.msra.mxu0 %v7521
    %7582 = vmatmul.bf16.gmra.mxu0 %v7406
    %v7583 = vpop.f32.mrf.mxu0
    %v7584 = vadd.f32 %v7555, %v7583
    %v7585 = vpop.f32.mrf.mxu0
    %v7586 = vadd.f32 %v7557, %v7585
    %7587 = vmatmul.bf16.gmra.mxu0 %v7408
    %v7588 = vpop.f32.mrf.mxu0
    %v7589 = vadd.f32 %v7560, %v7588
    %v7590 = vpop.f32.mrf.mxu0
    %v7591 = vadd.f32 %v7562, %v7590
    %7592 = vmatmul.bf16.gmra.mxu0 %v7410
    %v7593 = vpop.f32.mrf.mxu0
    %v7594 = vadd.f32 %v7565, %v7593
    %v7595 = vpop.f32.mrf.mxu0
    %v7596 = vadd.f32 %v7567, %v7595
    %7597 = vmatmul.bf16.gmra.mxu0 %v7412
    %v7598 = vpop.f32.mrf.mxu0
    %v7599 = vadd.f32 %v7570, %v7598
    %v7600 = vpop.f32.mrf.mxu0
    %v7601 = vadd.f32 %v7572, %v7600
    %7602 = vdwg.mxu0
    %7603 = vadd.xlane.f32.xlu0 %v7584
    %v7604 = vpop.xlane.xlu0 %7603
    %7605 = vadd.xlane.f32.xlu0 %v7586
    %v7606 = vpop.xlane.xlu0 %7605
    %7607 = vadd.xlane.f32.xlu0 %v7589
    %v7608 = vpop.xlane.xlu0 %7607
    %7609 = vadd.xlane.f32.xlu0 %v7591
    %v7610 = vpop.xlane.xlu0 %7609
    %7611 = vadd.xlane.f32.xlu0 %v7594
    %v7612 = vpop.xlane.xlu0 %7611
    %7613 = vadd.xlane.f32.xlu0 %v7596
    %v7614 = vpop.xlane.xlu0 %7613
    %7615 = vadd.xlane.f32.xlu0 %v7599
    %v7616 = vpop.xlane.xlu0 %7615
    %7617 = vadd.xlane.f32.xlu0 %v7601
    %v7618 = vpop.xlane.xlu0 %7617
    %v7619 = vrcp.pop 128.0
    %v7620 = vmul.f32 128.0, %v7619
    %v7621 = vsub.f32 1.0, %v7620
    %v7622 = vmul.f32 %v7619, %v7621
    %v7623 = vadd.f32 %v7619, %v7622
    %vm7624 = vweird.f32 %v7619
    %v7625 = vsel %vm7624, %v7619, %v7623
    %v7626 = vmul.f32 %v7604, %v7625
    %v7627 = vmul.f32 %v7606, %v7625
    %v7628 = vmul.f32 %v7608, %v7625
    %v7629 = vmul.f32 %v7610, %v7625
    %v7630 = vmul.f32 %v7612, %v7625
    %v7631 = vmul.f32 %v7614, %v7625
    %v7632 = vmul.f32 %v7616, %v7625
    %v7633 = vmul.f32 %v7618, %v7625
    %v7634 = vsub.f32 %v7584, %v7626
    %v7635 = vsub.f32 %v7586, %v7627
    %v7636 = vsub.f32 %v7589, %v7628
    %v7637 = vsub.f32 %v7591, %v7629
    %v7638 = vsub.f32 %v7594, %v7630
    %v7639 = vsub.f32 %v7596, %v7631
    %v7640 = vsub.f32 %v7599, %v7632
    %v7641 = vsub.f32 %v7601, %v7633
    %v7642 = vmul.f32 %v7634, %v7634
    %v7643 = vmul.f32 %v7635, %v7635
    %v7644 = vmul.f32 %v7636, %v7636
    %v7645 = vmul.f32 %v7637, %v7637
    %v7646 = vmul.f32 %v7638, %v7638
    %v7647 = vmul.f32 %v7639, %v7639
    %v7648 = vmul.f32 %v7640, %v7640
    %v7649 = vmul.f32 %v7641, %v7641
    %7650 = vadd.xlane.f32.xlu0 %v7642
    %v7651 = vpop.xlane.xlu0 %7650
    %7652 = vadd.xlane.f32.xlu0 %v7643
    %v7653 = vpop.xlane.xlu0 %7652
    %7654 = vadd.xlane.f32.xlu0 %v7644
    %v7655 = vpop.xlane.xlu0 %7654
    %7656 = vadd.xlane.f32.xlu0 %v7645
    %v7657 = vpop.xlane.xlu0 %7656
    %7658 = vadd.xlane.f32.xlu0 %v7646
    %v7659 = vpop.xlane.xlu0 %7658
    %7660 = vadd.xlane.f32.xlu0 %v7647
    %v7661 = vpop.xlane.xlu0 %7660
    %7662 = vadd.xlane.f32.xlu0 %v7648
    %v7663 = vpop.xlane.xlu0 %7662
    %7664 = vadd.xlane.f32.xlu0 %v7649
    %v7665 = vpop.xlane.xlu0 %7664
    %v7666 = vmul.f32 %v7651, %v7625
    %v7667 = vmul.f32 %v7653, %v7625
    %v7668 = vmul.f32 %v7655, %v7625
    %v7669 = vmul.f32 %v7657, %v7625
    %v7670 = vmul.f32 %v7659, %v7625
    %v7671 = vmul.f32 %v7661, %v7625
    %v7672 = vmul.f32 %v7663, %v7625
    %v7673 = vmul.f32 %v7665, %v7625
    %v7674 = vadd.f32 %v7666, 1e-05
    %v7675 = vadd.f32 %v7667, 1e-05
    %v7676 = vadd.f32 %v7668, 1e-05
    %v7677 = vadd.f32 %v7669, 1e-05
    %v7678 = vadd.f32 %v7670, 1e-05
    %v7679 = vadd.f32 %v7671, 1e-05
    %v7680 = vadd.f32 %v7672, 1e-05
    %v7681 = vadd.f32 %v7673, 1e-05
    %v7682 = vrsqrt.pop %v7674
    %v7683 = vmul.f32 %v7682, %v7674
    %v7684 = vmul.f32 %v7683, %v7682
    %v7685 = vmul.f32 0.5, %v7684
    %v7686 = vsub.f32 1.5, %v7685
    %v7687 = vmul.f32 %v7682, %v7686
    %vm7688 = vweird.f32 %v7674
    %vm7689 = vweird.f32 %v7682
    %vm7690 = vmor %vm7688, %vm7689
    %v7691 = vsel %vm7690, %v7682, %v7687
    %v7692 = vrsqrt.pop %v7675
    %v7693 = vmul.f32 %v7692, %v7675
    %v7694 = vmul.f32 %v7693, %v7692
    %v7695 = vmul.f32 0.5, %v7694
    %v7696 = vsub.f32 1.5, %v7695
    %v7697 = vmul.f32 %v7692, %v7696
    %vm7698 = vweird.f32 %v7675
    %vm7699 = vweird.f32 %v7692
    %vm7700 = vmor %vm7698, %vm7699
    %v7701 = vsel %vm7700, %v7692, %v7697
    %v7702 = vrsqrt.pop %v7676
    %v7703 = vmul.f32 %v7702, %v7676
    %v7704 = vmul.f32 %v7703, %v7702
    %v7705 = vmul.f32 0.5, %v7704
    %v7706 = vsub.f32 1.5, %v7705
    %v7707 = vmul.f32 %v7702, %v7706
    %vm7708 = vweird.f32 %v7676
    %vm7709 = vweird.f32 %v7702
    %vm7710 = vmor %vm7708, %vm7709
    %v7711 = vsel %vm7710, %v7702, %v7707
    %v7712 = vrsqrt.pop %v7677
    %v7713 = vmul.f32 %v7712, %v7677
    %v7714 = vmul.f32 %v7713, %v7712
    %v7715 = vmul.f32 0.5, %v7714
    %v7716 = vsub.f32 1.5, %v7715
    %v7717 = vmul.f32 %v7712, %v7716
    %vm7718 = vweird.f32 %v7677
    %vm7719 = vweird.f32 %v7712
    %vm7720 = vmor %vm7718, %vm7719
    %v7721 = vsel %vm7720, %v7712, %v7717
    %v7722 = vrsqrt.pop %v7678
    %v7723 = vmul.f32 %v7722, %v7678
    %v7724 = vmul.f32 %v7723, %v7722
    %v7725 = vmul.f32 0.5, %v7724
    %v7726 = vsub.f32 1.5, %v7725
    %v7727 = vmul.f32 %v7722, %v7726
    %vm7728 = vweird.f32 %v7678
    %vm7729 = vweird.f32 %v7722
    %vm7730 = vmor %vm7728, %vm7729
    %v7731 = vsel %vm7730, %v7722, %v7727
    %v7732 = vrsqrt.pop %v7679
    %v7733 = vmul.f32 %v7732, %v7679
    %v7734 = vmul.f32 %v7733, %v7732
    %v7735 = vmul.f32 0.5, %v7734
    %v7736 = vsub.f32 1.5, %v7735
    %v7737 = vmul.f32 %v7732, %v7736
    %vm7738 = vweird.f32 %v7679
    %vm7739 = vweird.f32 %v7732
    %vm7740 = vmor %vm7738, %vm7739
    %v7741 = vsel %vm7740, %v7732, %v7737
    %v7742 = vrsqrt.pop %v7680
    %v7743 = vmul.f32 %v7742, %v7680
    %v7744 = vmul.f32 %v7743, %v7742
    %v7745 = vmul.f32 0.5, %v7744
    %v7746 = vsub.f32 1.5, %v7745
    %v7747 = vmul.f32 %v7742, %v7746
    %vm7748 = vweird.f32 %v7680
    %vm7749 = vweird.f32 %v7742
    %vm7750 = vmor %vm7748, %vm7749
    %v7751 = vsel %vm7750, %v7742, %v7747
    %v7752 = vrsqrt.pop %v7681
    %v7753 = vmul.f32 %v7752, %v7681
    %v7754 = vmul.f32 %v7753, %v7752
    %v7755 = vmul.f32 0.5, %v7754
    %v7756 = vsub.f32 1.5, %v7755
    %v7757 = vmul.f32 %v7752, %v7756
    %vm7758 = vweird.f32 %v7681
    %vm7759 = vweird.f32 %v7752
    %vm7760 = vmor %vm7758, %vm7759
    %v7761 = vsel %vm7760, %v7752, %v7757
    %v7762 = vmul.f32 %v7634, %v7691
    %v7763 = vmul.f32 %v7635, %v7701
    %v7764 = vmul.f32 %v7636, %v7711
    %v7765 = vmul.f32 %v7637, %v7721
    %v7766 = vmul.f32 %v7638, %v7731
    %v7767 = vmul.f32 %v7639, %v7741
    %v7768 = vmul.f32 %v7640, %v7751
    %v7769 = vmul.f32 %v7641, %v7761
    %v7770 = vld [vmem:[%s15] sm:$0x1]
    %v7772 = vperm.slane %v7770, 0
    %v7774 = vmul.f32 %v7762, %v7772
    %v7775 = vmul.f32 %v7763, %v7772
    %v7776 = vmul.f32 %v7764, %v7772
    %v7777 = vmul.f32 %v7765, %v7772
    %v7778 = vmul.f32 %v7766, %v7772
    %v7779 = vmul.f32 %v7767, %v7772
    %v7780 = vmul.f32 %v7768, %v7772
    %v7781 = vmul.f32 %v7769, %v7772
    %7782 = vadd.xlane.f32.xlu0 %v7774
    %v7783 = vpop.xlane.xlu0 %7782
    %7784 = vadd.xlane.f32.xlu0 %v7775
    %v7785 = vpop.xlane.xlu0 %7784
    %7786 = vadd.xlane.f32.xlu0 %v7776
    %v7787 = vpop.xlane.xlu0 %7786
    %7788 = vadd.xlane.f32.xlu0 %v7777
    %v7789 = vpop.xlane.xlu0 %7788
    %7790 = vadd.xlane.f32.xlu0 %v7778
    %v7791 = vpop.xlane.xlu0 %7790
    %7792 = vadd.xlane.f32.xlu0 %v7779
    %v7793 = vpop.xlane.xlu0 %7792
    %7794 = vadd.xlane.f32.xlu0 %v7780
    %v7795 = vpop.xlane.xlu0 %7794
    %7796 = vadd.xlane.f32.xlu0 %v7781
    %v7797 = vpop.xlane.xlu0 %7796
    %v7798 = vld [vmem:[#allocation2] sm:$0x1]
    %v7800 = vperm.slane %v7798, 0
    %7801 = vset.pattern.permute.xlu0 0
    %7802 = vperm.xlu0 %7801, %v7800
    %v7803 = vpop.permute.xlu0 %7802
    %v7805 = vadd.f32 %v7783, %v7803
    %v7806 = vadd.f32 %v7785, %v7803
    %v7807 = vadd.f32 %v7787, %v7803
    %v7808 = vadd.f32 %v7789, %v7803
    %v7809 = vadd.f32 %v7791, %v7803
    %v7810 = vadd.f32 %v7793, %v7803
    %v7811 = vadd.f32 %v7795, %v7803
    %v7812 = vadd.f32 %v7797, %v7803
    %v7821 = vperm.slane %v7805, %v4255
    %v7822 = vperm.slane %v7806, %v4255
    %v7823 = vperm.slane %v7807, %v4255
    %v7824 = vperm.slane %v7808, %v4255
    %v7825 = vperm.slane %v7809, %v4255
    %v7826 = vperm.slane %v7810, %v4255
    %v7827 = vperm.slane %v7811, %v4255
    %v7828 = vperm.slane %v7812, %v4255
    %vm7829 = vcmask 1041409
    %v7830 = vsel %vm7829, %v7822, %v7821
    %vm7831 = vcmask 1042434
    %v7832 = vsel %vm7831, %v7823, %v7830
    %vm7833 = vcmask 1043459
    %v7834 = vsel %vm7833, %v7824, %v7832
    %vm7835 = vcmask 1044484
    %v7836 = vsel %vm7835, %v7825, %v7834
    %vm7837 = vcmask 1045509
    %v7838 = vsel %vm7837, %v7826, %v7836
    %vm7839 = vcmask 1046534
    %v7840 = vsel %vm7839, %v7827, %v7838
    %vm7841 = vcmask 1047559
    %v7842 = vsel %vm7841, %v7828, %v7840
    %vm7844 = vcmask 64512
    %7845 = vst.msk [vmem:[#allocation21] sm:$0xff] %vm7844, %v7842
    // Predicated region
    $region114: #{tpu_custom_call.1} parent=1 // pred_check
      _
    $region115: #{tpu_custom_call.1} parent=1 // pred_check_branch
      %7847 = sbr.rel (0) target = $region117
    $region116: #{tpu_custom_call.1} parent=1 // pred_region
      %7849 = vsyncadd [#allocation5], 0
      %s7851 = sshll.u32 [#allocation21], 4
      %s7852 = int_to_ptr.vmem [resolvable:$true] %s7851
      %s7853 = sshll.u32 %s17, 4
      %s7854 = int_to_ptr.hbm [resolvable:$true] %s7853
      %7856 = dma.vmem_to_hbm [thread:$0]  %s7852, 128, %s7854, [#allocation5]
    $region117: #{tpu_custom_call.1} parent=1 // pred_fallthru
      _
    // Predicated region
    $region118: #{tpu_custom_call.1} parent=1 // pred_check
      _
    $region119: #{tpu_custom_call.1} parent=1 // pred_check_branch
      %7858 = sbr.rel (0) target = $region121
    $region120: #{tpu_custom_call.1} parent=1 // pred_region
      %7860 = dma.done [#allocation5], 128
    $region121: #{tpu_custom_call.1} parent=1 // pred_fallthru
      _
    %7861 = vsyncpa [#allocation4], 1
    %7862 = vsyncpa [#allocation7], 1
    %7863 = vsyncpa [#allocation10], 1
    %7864 = vsyncpa [#allocation13], 1
    %7865 = vsyncpa [#allocation16], 1
    %7866 = vsyncpa [#allocation19], 1
    %7867 = vsyncpa [#allocation5], 1

</llo_original>
